<compile_context>
chip_gen: v7x
topology: tpu7x:2x2x1
jax: 0.10.0
libtpu: 0.0.40
codegen_flags: <defaults>
</compile_context>

<pallas_src>
import functools

import jax
import jax.numpy as jnp
from jax import lax
from jax.experimental import pallas as pl
from jax.experimental.pallas import tpu as pltpu


# ---------------------------------------------------------------------------
# Tiling constants / VMEM budgets
# ---------------------------------------------------------------------------
LANE = 128                 # hidden dim padded to a multiple of the lane width
NODE_PAD = 512             # node dims padded to a multiple of this (divides all tile picks)
TM_MAX = 1024              # max adjacency-tile rows
TK_MAX = 2048              # max adjacency-tile contraction width
VMEM_LIMIT = 48 * 1024 * 1024          # <= v7x physical 64 MiB, with headroom
RESIDENT_B_BUDGET = 24 * 1024 * 1024   # 2x-buffered embedding slab budget (bytes)
SOCIAL_RESIDENT_BUDGET = 8 * 1024 * 1024   # bf16 S bytes for adjacency-resident multi-hop
FUSED_BIPARTITE_BUDGET = 24 * 1024 * 1024  # resident item acc + cur_i budget (bytes)


def _round_up(x, m):
    return ((x + m - 1) // m) * m


def _pad2d(x, rows, cols):
    r, c = x.shape
    return jnp.pad(x, ((0, rows - r), (0, cols - c)))


def _pick_tile(dim, max_tile):
    """Largest multiple of NODE_PAD that divides `dim` and is <= max_tile."""
    best = NODE_PAD
    t = NODE_PAD
    while t <= max_tile:
        if dim % t == 0:
            best = t
        t += NODE_PAD
    return best


@functools.lru_cache(maxsize=None)
def _use_core_parallel():
    try:
        return "v7" in jax.devices()[0].device_kind.lower()
    except Exception:  # pragma: no cover - defensive
        return False


def _mm_dim_semantics():
    if _use_core_parallel():
        # v7x has 2 TensorCores per chip: split the independent M axis across
        # them; the K axis carries the resident accumulator -> arbitrary.
        return (pltpu.CORE_PARALLEL, pltpu.ARBITRARY)
    return ("parallel", "arbitrary")


# ---------------------------------------------------------------------------
# Kernel 1: streamed adjacency matmul  O[i,:] (+)= A[i,k] @ B[k,:]
# ---------------------------------------------------------------------------
def _matmul_kernel(a_ref, b_ref, o_ref, *, tk, b_resident):
    kk = pl.program_id(1)

    # Output block index is constant along K -> o_ref is the resident f32
    # accumulator (no extra scratch).
    @pl.when(kk == 0)
    def _():
        o_ref[...] = jnp.zeros_like(o_ref)

    if b_resident:
        b = b_ref[pl.ds(pl.multiple_of(kk * tk, tk), tk), :]
    else:
        b = b_ref[...]
    o_ref[...] += jnp.dot(a_ref[...], b, preferred_element_type=jnp.float32)


def prop_matmul(adj_bf16, cur_bf16):
    """f32 (M, H) = adj_bf16 (M, K) @ cur_bf16 (K, H); tiled + pipelined on MXU."""
    m, k = adj_bf16.shape
    k2, h = cur_bf16.shape
    assert k == k2, (adj_bf16.shape, cur_bf16.shape)
    assert m % NODE_PAD == 0 and k % NODE_PAD == 0 and h % LANE == 0

    tm = _pick_tile(m, TM_MAX)
    tk = _pick_tile(k, TK_MAX)

    # Keep the whole embedding slab VMEM-resident when it fits (avoids
    # re-streaming it once per M tile); otherwise stream (tk, h) blocks.
    b_resident = (2 * k * h * cur_bf16.dtype.itemsize) <= RESIDENT_B_BUDGET
    if b_resident:
        b_spec = pl.BlockSpec((k, h), lambda i, kk: (0, 0))
    else:
        b_spec = pl.BlockSpec((tk, h), lambda i, kk: (kk, 0))

    flops = 2 * m * k * h
    bytes_accessed = m * k * 2 + k * h * 2 + m * h * 4

    return pl.pallas_call(
        functools.partial(_matmul_kernel, tk=tk, b_resident=b_resident),
        out_shape=jax.ShapeDtypeStruct((m, h), jnp.float32),
        grid_spec=pltpu.PrefetchScalarGridSpec(
            num_scalar_prefetch=0,
            grid=(m // tm, k // tk),
            in_specs=[pl.BlockSpec((tm, tk), lambda i, kk: (i, kk)), b_spec],
            out_specs=pl.BlockSpec((tm, h), lambda i, kk: (i, 0)),
        ),
        compiler_params=pltpu.CompilerParams(
            dimension_semantics=_mm_dim_semantics(),
            vmem_limit_bytes=VMEM_LIMIT,
        ),
        cost_estimate=pl.CostEstimate(flops=flops, transcendentals=0,
                                      bytes_accessed=bytes_accessed),
    )(adj_bf16, cur_bf16)


# ---------------------------------------------------------------------------
# Kernel 2: adjacency-resident multi-hop SocialGCN (S stays in VMEM across hops)
# ---------------------------------------------------------------------------
def _social_multihop_kernel(s_ref, e_ref, out_ref, cur_ref, *, hop):
    out_ref[...] = e_ref[...]                       # f32 accumulator (hop 0 term)
    cur_ref[...] = e_ref[...].astype(jnp.bfloat16)  # current hop input (bf16)
    for _ in range(hop):
        nxt = jnp.dot(s_ref[...], cur_ref[...], preferred_element_type=jnp.float32)
        out_ref[...] += nxt
        cur_ref[...] = nxt.astype(jnp.bfloat16)
    out_ref[...] *= 1.0 / float(hop + 1)


def social_propagate_resident(s_pad_bf16, e_pad_f32, hop):
    n_p, h = e_pad_f32.shape
    assert s_pad_bf16.shape == (n_p, n_p)
    flops = 2 * hop * n_p * n_p * h
    return pl.pallas_call(
        functools.partial(_social_multihop_kernel, hop=hop),
        out_shape=jax.ShapeDtypeStruct((n_p, h), jnp.float32),
        grid_spec=pltpu.PrefetchScalarGridSpec(
            num_scalar_prefetch=0,
            grid=(1,),
            in_specs=[pl.BlockSpec((n_p, n_p), lambda i: (0, 0)),
                      pl.BlockSpec((n_p, h), lambda i: (0, 0))],
            out_specs=pl.BlockSpec((n_p, h), lambda i: (0, 0)),
            scratch_shapes=[pltpu.VMEM((n_p, h), jnp.bfloat16)],
        ),
        compiler_params=pltpu.CompilerParams(
            dimension_semantics=("arbitrary",),
            vmem_limit_bytes=VMEM_LIMIT,
        ),
        cost_estimate=pl.CostEstimate(flops=flops, transcendentals=0,
                                      bytes_accessed=n_p * n_p * 2 + n_p * h * 8),
    )(s_pad_bf16, e_pad_f32)


# ---------------------------------------------------------------------------
# Kernel 3: fused bipartite hop — each R tile is read once and feeds
#           new_u[i] += R[i,j] @ cur_i[j]  and  new_i[j] += R[i,j]^T @ cur_u[i]
# ---------------------------------------------------------------------------
def _bipartite_hop_kernel(r_ref, cu_ref, ci_ref, nu_ref, ni_ref, *, tn):
    i = pl.program_id(0)
    j = pl.program_id(1)

    @pl.when(j == 0)
    def _():
        nu_ref[...] = jnp.zeros_like(nu_ref)

    @pl.when(jnp.logical_and(i == 0, j == 0))
    def _():
        ni_ref[...] = jnp.zeros_like(ni_ref)

    r = r_ref[...]                                               # (tm, tn) bf16
    sl = pl.ds(pl.multiple_of(j * tn, tn), tn)

    # users:  new_u[i] += R[i, j] @ cur_i[j]
    ci = ci_ref[sl, :]                                           # (tn, h)
    nu_ref[...] += jnp.dot(r, ci, preferred_element_type=jnp.float32)

    # items:  new_i[j] += R[i, j]^T @ cur_u[i]
    # Contract LHS dim 0 directly (in-tile transpose, no R^T DMA/materialization).
    contrib = lax.dot_general(r, cu_ref[...], (((0,), (0,)), ((), ())),
                              preferred_element_type=jnp.float32)  # (tn, h)
    ni_ref[sl, :] = ni_ref[sl, :] + contrib


def bipartite_hop_fused(r_pad_bf16, cur_u_bf16, cur_i_bf16):
    nu_p, ni_p = r_pad_bf16.shape
    h = cur_u_bf16.shape[1]
    assert cur_u_bf16.shape == (nu_p, h) and cur_i_bf16.shape == (ni_p, h)

    tm = _pick_tile(nu_p, TM_MAX)
    tn = _pick_tile(ni_p, TM_MAX)
    flops = 2 * 2 * nu_p * ni_p * h
    bytes_accessed = nu_p * ni_p * 2 + (nu_p + ni_p) * h * 2 + (nu_p + ni_p) * h * 4

    return pl.pallas_call(
        functools.partial(_bipartite_hop_kernel, tn=tn),
        out_shape=(jax.ShapeDtypeStruct((nu_p, h), jnp.float32),
                   jax.ShapeDtypeStruct((ni_p, h), jnp.float32)),
        grid_spec=pltpu.PrefetchScalarGridSpec(
            num_scalar_prefetch=0,
            grid=(nu_p // tm, ni_p // tn),
            in_specs=[
                pl.BlockSpec((tm, tn), lambda i, j: (i, j)),   # R tile (streamed once)
                pl.BlockSpec((tm, h), lambda i, j: (i, 0)),    # cur_u rows (per i tile)
                pl.BlockSpec((ni_p, h), lambda i, j: (0, 0)),  # cur_i (VMEM-resident)
            ],
            out_specs=(
                pl.BlockSpec((tm, h), lambda i, j: (i, 0)),    # new_u acc (resident over j)
                pl.BlockSpec((ni_p, h), lambda i, j: (0, 0)),  # new_i acc (resident over grid)
            ),
        ),
        compiler_params=pltpu.CompilerParams(
            # Both grid axes feed the resident item-side accumulator.
            dimension_semantics=("arbitrary", "arbitrary"),
            vmem_limit_bytes=VMEM_LIMIT,
        ),
        cost_estimate=pl.CostEstimate(flops=flops, transcendentals=0,
                                      bytes_accessed=bytes_accessed),
    )(r_pad_bf16, cur_u_bf16, cur_i_bf16)


# ---------------------------------------------------------------------------
# One-time graph preparation (hoisted out of the forward hot path)
# ---------------------------------------------------------------------------
def prepare_graphs(S, R_hat):
    n_users = S.shape[0]
    n_items = R_hat.shape[1]
    nu_p = _round_up(n_users, NODE_PAD)
    ni_p = _round_up(n_items, NODE_PAD)
    S_pad = _pad2d(S.astype(jnp.float32), nu_p, nu_p).astype(jnp.bfloat16)
    R_pad = _pad2d(R_hat.astype(jnp.float32), nu_p, ni_p).astype(jnp.bfloat16)
    # R^T is only needed by the large-graph split fallback; it is built once
    # here (never per forward).
    RT_pad = jnp.asarray(R_pad.T)
    return {"S_pad": S_pad, "R_pad": R_pad, "RT_pad": RT_pad}


# ---------------------------------------------------------------------------
# GCN encoders
# ---------------------------------------------------------------------------
def gcn_propagate_square(s_pad_bf16, embs, hop):
    """SocialGCN: E_out = mean_{t=0..hop} S^t @ E."""
    n, h = embs.shape
    n_p = s_pad_bf16.shape[0]
    h_p = _round_up(h, LANE)
    cur = _pad2d(embs.astype(jnp.float32), n_p, h_p)

    if hop == 0:
        return embs

    if s_pad_bf16.size * 2 <= SOCIAL_RESIDENT_BUDGET:
        # Adjacency-resident multi-hop: S is read from HBM once for all hops.
        out = social_propagate_resident(s_pad_bf16, cur, hop)
        return out[:n, :h]

    # Large-graph streamed fallback: one tiled matmul per hop.
    acc = cur
    for _ in range(hop):
        cur = prop_matmul(s_pad_bf16, cur.astype(jnp.bfloat16))
        acc = acc + cur
    return (acc * (1.0 / float(hop + 1)))[:n, :h]


def gcn_propagate_bipartite(r_pad_bf16, rt_pad_bf16, user_embs, item_embs, hop):
    """InteractionGCN (LightGCN) over A = [[0, R],[R^T, 0]] without building A."""
    nu, h = user_embs.shape
    ni = item_embs.shape[0]
    nu_p, ni_p = r_pad_bf16.shape
    h_p = _round_up(h, LANE)

    cur_u = _pad2d(user_embs.astype(jnp.float32), nu_p, h_p)
    cur_i = _pad2d(item_embs.astype(jnp.float32), ni_p, h_p)
    acc_u, acc_i = cur_u, cur_i

    # Fused hop needs the (ni_p, h) item accumulator + cur_i resident in VMEM.
    use_fused = ni_p * h_p * 12 <= FUSED_BIPARTITE_BUDGET

    for _ in range(hop):
        if use_fused:
            new_u, new_i = bipartite_hop_fused(
                r_pad_bf16, cur_u.astype(jnp.bfloat16), cur_i.astype(jnp.bfloat16))
        else:
            new_u = prop_matmul(r_pad_bf16, cur_i.astype(jnp.bfloat16))
            new_i = prop_matmul(rt_pad_bf16, cur_u.astype(jnp.bfloat16))
        acc_u = acc_u + new_u
        acc_i = acc_i + new_i
        cur_u, cur_i = new_u, new_i

    scale = 1.0 / float(hop + 1)
    return (acc_u * scale)[:nu, :h], (acc_i * scale)[:ni, :h]


# ---------------------------------------------------------------------------
# Shadow_Model forward
# ---------------------------------------------------------------------------
def shadow_model_forward(params, graphs, users, pos, neg, hop):
    user1, item1 = params["user1_embs"], params["item1_embs"]
    user2, item2 = params["user2_embs"], params["item2_embs"]

    all_user_social = gcn_propagate_square(graphs["S_pad"], user1, hop)
    all_item_social = item1
    all_user_rating, all_item_rating = gcn_propagate_bipartite(
        graphs["R_pad"], graphs["RT_pad"], user2, item2, hop)

    return (all_user_social[users], all_item_social[pos], all_item_social[neg],
            all_user_rating[users], all_item_rating[pos], all_item_rating[neg])


shadow_model_forward_jit = jax.jit(shadow_model_forward, static_argnames=("hop",))


# ---------------------------------------------------------------------------
# Deterministic parameter / graph construction
# ---------------------------------------------------------------------------
def xavier_uniform(key, shape):
    fan_in, fan_out = shape[0], shape[1]
    a = (6.0 / (fan_in + fan_out)) ** 0.5
    return jax.random.uniform(key, shape, jnp.float32, -a, a)


def row_normalize(m):
    s = m.sum(axis=1, keepdims=True)
    return m / jnp.maximum(s, 1e-8)


def build_params(key, n_users, n_items, hidden):
    ks = jax.random.split(key, 6)
    s_raw = (jax.random.uniform(ks[0], (n_users, n_users)) < 0.15).astype(jnp.float32)
    S = row_normalize(s_raw + jnp.eye(n_users, dtype=jnp.float32))
    R = (jax.random.uniform(ks[1], (n_users, n_items)) < 0.15).astype(jnp.float32)
    du = jnp.maximum(R.sum(axis=1), 1.0)
    di = jnp.maximum(R.sum(axis=0), 1.0)
    R_hat = R / jnp.sqrt(du)[:, None] / jnp.sqrt(di)[None, :]
    return {
        "S": S,
        "R_hat": R_hat,
        "user1_embs": xavier_uniform(ks[2], (n_users, hidden)),
        "item1_embs": xavier_uniform(ks[3], (n_items, hidden)),
        "user2_embs": xavier_uniform(ks[4], (n_users, hidden)),
        "item2_embs": xavier_uniform(ks[5], (n_items, hidden)),
    }


# ---------------------------------------------------------------------------
# Pure-JAX reference (matches the kernels' bf16-operand / f32-accumulate math)
# ---------------------------------------------------------------------------
def gcn_propagate_ref(adj, embs, hop):
    adj_b = adj.astype(jnp.bfloat16).astype(jnp.float32)
    cur = embs.astype(jnp.float32)
    acc = cur
    for _ in range(hop):
        cur = adj_b @ cur.astype(jnp.bfloat16).astype(jnp.float32)
        acc = acc + cur
    return acc / (hop + 1)


if __name__ == "__main__":
    n_users, n_items, hidden, hop = 64, 64, 32, 2
    B, n_neg = 4, 1

    key = jax.random.PRNGKey(0)
    k_params, k_u, k_p, k_n = jax.random.split(key, 4)
    params = build_params(k_params, n_users, n_items, hidden)
    graphs = prepare_graphs(params["S"], params["R_hat"])   # one-time, out of hot path

    users = jax.random.randint(k_u, (B,), 0, n_users)
    pos = jax.random.randint(k_p, (B,), 0, n_items)
    neg = jax.random.randint(k_n, (B, n_neg), 0, n_items)

    outs = shadow_model_forward_jit(params, graphs, users, pos, neg, hop)
    outs = jax.block_until_ready(outs)

    # --- Correctness checks against pure-JAX references ---------------------
    ref_user_social = gcn_propagate_ref(params["S"], params["user1_embs"], hop)
    n = n_users + n_items
    A = jnp.zeros((n, n), jnp.float32)
    A = A.at[:n_users, n_users:].set(params["R_hat"])
    A = A.at[n_users:, :n_users].set(params["R_hat"].T)
    ego = jnp.concatenate([params["user2_embs"], params["item2_embs"]], axis=0)
    ref_rating = gcn_propagate_ref(A, ego, hop)

    atol, rtol = 1e-3, 1e-3
    assert jnp.allclose(outs[0], ref_user_social[users], atol=atol, rtol=rtol)
    assert jnp.allclose(outs[1], params["item1_embs"][pos], atol=atol, rtol=rtol)
    assert jnp.allclose(outs[2], params["item1_embs"][neg], atol=atol, rtol=rtol)
    assert jnp.allclose(outs[3], ref_rating[:n_users][users], atol=atol, rtol=rtol)
    assert jnp.allclose(outs[4], ref_rating[n_users:][pos], atol=atol, rtol=rtol)
    assert jnp.allclose(outs[5], ref_rating[n_users:][neg], atol=atol, rtol=rtol)
    assert outs[2].shape == (B, n_neg, hidden)
    assert outs[5].shape == (B, n_neg, hidden)

    # Also exercise the large-graph streaming matmul path (the tiny test above
    # uses the adjacency-resident / fused kernels instead).
    n_p = graphs["S_pad"].shape[0]
    e_pad = _pad2d(params["user1_embs"].astype(jnp.float32), n_p, LANE)
    y = prop_matmul(graphs["S_pad"], e_pad.astype(jnp.bfloat16))
    y = jax.block_until_ready(y)
    y_ref = graphs["S_pad"].astype(jnp.float32) @ e_pad.astype(jnp.bfloat16).astype(jnp.float32)
    assert jnp.allclose(y, y_ref, atol=atol, rtol=rtol)

    print("KERNEL_OK")
</pallas_src>

<mosaic_0001>
module attributes {stable_mosaic.version = 11 : i64} {
  func.func @_bipartite_hop_kernel(%arg0: i32, %arg1: i32, %arg2: memref<512x512xbf16, #tpu.memory_space<vmem>>, %arg3: memref<512x128xbf16, #tpu.memory_space<vmem>>, %arg4: memref<512x128xbf16, #tpu.memory_space<vmem>>, %arg5: memref<512x128xf32, #tpu.memory_space<vmem>>, %arg6: memref<512x128xf32, #tpu.memory_space<vmem>>) attributes {dimension_semantics = [#tpu.dimension_semantics<arbitrary>, #tpu.dimension_semantics<arbitrary>], iteration_bounds = array<i64: 1, 1>, scalar_prefetch = 0 : i64, scratch_operands = 0 : i64, tpu.core_type = #tpu.core_type<tc>, window_params = [{transform_indices = @transform_0, window_bounds = array<i64: 512, 512>}, {transform_indices = @transform_1, window_bounds = array<i64: 512, 128>}, {pipeline_mode = #tpu.pipeline_mode<synchronous>, transform_indices = @transform_2, window_bounds = array<i64: 512, 128>}, {transform_indices = @transform_3, window_bounds = array<i64: 512, 128>}, {pipeline_mode = #tpu.pipeline_mode<synchronous>, transform_indices = @transform_4, window_bounds = array<i64: 512, 128>}]} {
    %c0_i32 = arith.constant 0 : i32
    %0 = arith.cmpi eq, %arg1, %c0_i32 : i32
    %1 = arith.extui %0 : i1 to i32
    %c0_i32_0 = arith.constant 0 : i32
    %2 = arith.cmpi ne, %1, %c0_i32_0 : i32
    scf.if %2 {
      %cst_15 = arith.constant 0.000000e+00 : f32
      %24 = vector.broadcast %cst_15 : f32 to vector<512x128xf32>
      %c0_16 = arith.constant 0 : index
      %c0_17 = arith.constant 0 : index
      %25 = vector.load %arg5[%c0_16, %c0_17] : memref<512x128xf32, #tpu.memory_space<vmem>>, vector<512x128xf32>
      tpu.vector_store %arg5[%c0_16, %c0_17], %24 {strides = array<i32>} : memref<512x128xf32, #tpu.memory_space<vmem>>, vector<512x128xf32>,
    } else {
    }
    %c0_i32_1 = arith.constant 0 : i32
    %3 = arith.cmpi eq, %arg0, %c0_i32_1 : i32
    %c0_i32_2 = arith.constant 0 : i32
    %4 = arith.cmpi eq, %arg1, %c0_i32_2 : i32
    %5 = arith.andi %3, %4 : i1
    %6 = arith.extui %5 : i1 to i32
    %c0_i32_3 = arith.constant 0 : i32
    %7 = arith.cmpi ne, %6, %c0_i32_3 : i32
    scf.if %7 {
      %cst_15 = arith.constant 0.000000e+00 : f32
      %24 = vector.broadcast %cst_15 : f32 to vector<512x128xf32>
      %c0_16 = arith.constant 0 : index
      %c0_17 = arith.constant 0 : index
      %25 = vector.load %arg6[%c0_16, %c0_17] : memref<512x128xf32, #tpu.memory_space<vmem>>, vector<512x128xf32>
      tpu.vector_store %arg6[%c0_16, %c0_17], %24 {strides = array<i32>} : memref<512x128xf32, #tpu.memory_space<vmem>>, vector<512x128xf32>,
    } else {
    }
    %c0 = arith.constant 0 : index
    %c0_4 = arith.constant 0 : index
    %8 = vector.load %arg2[%c0, %c0_4] : memref<512x512xbf16, #tpu.memory_space<vmem>>, vector<512x512xbf16>
    %c512_i32 = arith.constant 512 : i32
    %9 = arith.muli %arg1, %c512_i32 : i32
    %10 = tpu.assume_multiple %9, 512 : i32
    %11 = arith.index_cast %10 : i32 to index
    %c0_5 = arith.constant 0 : index
    %12 = vector.load %arg4[%11, %c0_5] : memref<512x128xbf16, #tpu.memory_space<vmem>>, vector<512x128xbf16>
    %c0_6 = arith.constant 0 : index
    %c0_7 = arith.constant 0 : index
    %13 = vector.load %arg5[%c0_6, %c0_7] : memref<512x128xf32, #tpu.memory_space<vmem>>, vector<512x128xf32>
    %cst = arith.constant dense<0.000000e+00> : vector<512x128xf32>
    %14 = tpu.matmul %8, %12, %cst {dimension_numbers = #tpu.dot_dimension_numbers<[1], [0], [0], [1], [0, 0, 1, 1], [], []>} : vector<512x512xbf16>, vector<512x128xbf16>, vector<512x128xf32> -> vector<512x128xf32>
    %15 = arith.addf %13, %14 : vector<512x128xf32>
    %c0_8 = arith.constant 0 : index
    %c0_9 = arith.constant 0 : index
    %16 = vector.load %arg5[%c0_8, %c0_9] : memref<512x128xf32, #tpu.memory_space<vmem>>, vector<512x128xf32>
    tpu.vector_store %arg5[%c0_8, %c0_9], %15 {strides = array<i32>} : memref<512x128xf32, #tpu.memory_space<vmem>>, vector<512x128xf32>,
    %c0_10 = arith.constant 0 : index
    %c0_11 = arith.constant 0 : index
    %17 = vector.load %arg3[%c0_10, %c0_11] : memref<512x128xbf16, #tpu.memory_space<vmem>>, vector<512x128xbf16>
    %cst_12 = arith.constant dense<0.000000e+00> : vector<512x128xf32>
    %18 = tpu.matmul %8, %17, %cst_12 {dimension_numbers = #tpu.dot_dimension_numbers<[0], [0], [1], [1], [0, 1, 1, 1], [], []>} : vector<512x512xbf16>, vector<512x128xbf16>, vector<512x128xf32> -> vector<512x128xf32>
    %19 = arith.index_cast %10 : i32 to index
    %c0_13 = arith.constant 0 : index
    %20 = vector.load %arg6[%19, %c0_13] : memref<512x128xf32, #tpu.memory_space<vmem>>, vector<512x128xf32>
    %21 = arith.addf %20, %18 : vector<512x128xf32>
    %22 = arith.index_cast %10 : i32 to index
    %c0_14 = arith.constant 0 : index
    %23 = vector.load %arg6[%22, %c0_14] : memref<512x128xf32, #tpu.memory_space<vmem>>, vector<512x128xf32>
    tpu.vector_store %arg6[%22, %c0_14], %21 {strides = array<i32>} : memref<512x128xf32, #tpu.memory_space<vmem>>, vector<512x128xf32>,
    return
  }
  func.func @transform_0(%arg0: i32, %arg1: i32) -> (i32, i32) {
    %c0_i32 = arith.constant 0 : i32
    return %arg0, %arg1 : i32, i32
  }
  func.func @transform_1(%arg0: i32, %arg1: i32) -> (i32, i32) {
    %c0_i32 = arith.constant 0 : i32
    %c0_i32_0 = arith.constant 0 : i32
    return %arg0, %c0_i32 : i32, i32
  }
  func.func @transform_2(%arg0: i32, %arg1: i32) -> (i32, i32) {
    %c0_i32 = arith.constant 0 : i32
    %c0_i32_0 = arith.constant 0 : i32
    %c0_i32_1 = arith.constant 0 : i32
    return %c0_i32, %c0_i32_0 : i32, i32
  }
  func.func @transform_3(%arg0: i32, %arg1: i32) -> (i32, i32) {
    %c0_i32 = arith.constant 0 : i32
    %c0_i32_0 = arith.constant 0 : i32
    return %arg0, %c0_i32 : i32, i32
  }
  func.func @transform_4(%arg0: i32, %arg1: i32) -> (i32, i32) {
    %c0_i32 = arith.constant 0 : i32
    %c0_i32_0 = arith.constant 0 : i32
    %c0_i32_1 = arith.constant 0 : i32
    return %c0_i32, %c0_i32_0 : i32, i32
  }
}

module attributes {stable_mosaic.version = 11 : i64} {
  func.func @_bipartite_hop_kernel(%arg0: i32, %arg1: i32, %arg2: memref<512x512xbf16, #tpu.memory_space<vmem>>, %arg3: memref<512x128xbf16, #tpu.memory_space<vmem>>, %arg4: memref<512x128xbf16, #tpu.memory_space<vmem>>, %arg5: memref<512x128xf32, #tpu.memory_space<vmem>>, %arg6: memref<512x128xf32, #tpu.memory_space<vmem>>) attributes {dimension_semantics = [#tpu.dimension_semantics<arbitrary>, #tpu.dimension_semantics<arbitrary>], iteration_bounds = array<i64: 1, 1>, scalar_prefetch = 0 : i64, scratch_operands = 0 : i64, tpu.core_type = #tpu.core_type<tc>, window_params = [{transform_indices = @transform_0, window_bounds = array<i64: 512, 512>}, {transform_indices = @transform_1, window_bounds = array<i64: 512, 128>}, {pipeline_mode = #tpu.pipeline_mode<synchronous>, transform_indices = @transform_2, window_bounds = array<i64: 512, 128>}, {transform_indices = @transform_3, window_bounds = array<i64: 512, 128>}, {pipeline_mode = #tpu.pipeline_mode<synchronous>, transform_indices = @transform_4, window_bounds = array<i64: 512, 128>}]} {
    %c0_i32 = arith.constant 0 : i32
    %0 = arith.cmpi eq, %arg1, %c0_i32 : i32
    %1 = arith.extui %0 : i1 to i32
    %c0_i32_0 = arith.constant 0 : i32
    %2 = arith.cmpi ne, %1, %c0_i32_0 : i32
    scf.if %2 {
      %cst_15 = arith.constant 0.000000e+00 : f32
      %24 = vector.broadcast %cst_15 : f32 to vector<512x128xf32>
      %c0_16 = arith.constant 0 : index
      %c0_17 = arith.constant 0 : index
      %25 = vector.load %arg5[%c0_16, %c0_17] : memref<512x128xf32, #tpu.memory_space<vmem>>, vector<512x128xf32>
      tpu.vector_store %arg5[%c0_16, %c0_17], %24 {strides = array<i32>} : memref<512x128xf32, #tpu.memory_space<vmem>>, vector<512x128xf32>,
    } else {
    }
    %c0_i32_1 = arith.constant 0 : i32
    %3 = arith.cmpi eq, %arg0, %c0_i32_1 : i32
    %c0_i32_2 = arith.constant 0 : i32
    %4 = arith.cmpi eq, %arg1, %c0_i32_2 : i32
    %5 = arith.andi %3, %4 : i1
    %6 = arith.extui %5 : i1 to i32
    %c0_i32_3 = arith.constant 0 : i32
    %7 = arith.cmpi ne, %6, %c0_i32_3 : i32
    scf.if %7 {
      %cst_15 = arith.constant 0.000000e+00 : f32
      %24 = vector.broadcast %cst_15 : f32 to vector<512x128xf32>
      %c0_16 = arith.constant 0 : index
      %c0_17 = arith.constant 0 : index
      %25 = vector.load %arg6[%c0_16, %c0_17] : memref<512x128xf32, #tpu.memory_space<vmem>>, vector<512x128xf32>
      tpu.vector_store %arg6[%c0_16, %c0_17], %24 {strides = array<i32>} : memref<512x128xf32, #tpu.memory_space<vmem>>, vector<512x128xf32>,
    } else {
    }
    %c0 = arith.constant 0 : index
    %c0_4 = arith.constant 0 : index
    %8 = vector.load %arg2[%c0, %c0_4] : memref<512x512xbf16, #tpu.memory_space<vmem>>, vector<512x512xbf16>
    %c512_i32 = arith.constant 512 : i32
    %9 = arith.muli %arg1, %c512_i32 : i32
    %10 = tpu.assume_multiple %9, 512 : i32
    %11 = arith.index_cast %10 : i32 to index
    %c0_5 = arith.constant 0 : index
    %12 = vector.load %arg4[%11, %c0_5] : memref<512x128xbf16, #tpu.memory_space<vmem>>, vector<512x128xbf16>
    %c0_6 = arith.constant 0 : index
    %c0_7 = arith.constant 0 : index
    %13 = vector.load %arg5[%c0_6, %c0_7] : memref<512x128xf32, #tpu.memory_space<vmem>>, vector<512x128xf32>
    %cst = arith.constant dense<0.000000e+00> : vector<512x128xf32>
    %14 = tpu.matmul %8, %12, %cst {dimension_numbers = #tpu.dot_dimension_numbers<[1], [0], [0], [1], [0, 0, 1, 1], [], []>} : vector<512x512xbf16>, vector<512x128xbf16>, vector<512x128xf32> -> vector<512x128xf32>
    %15 = arith.addf %13, %14 : vector<512x128xf32>
    %c0_8 = arith.constant 0 : index
    %c0_9 = arith.constant 0 : index
    %16 = vector.load %arg5[%c0_8, %c0_9] : memref<512x128xf32, #tpu.memory_space<vmem>>, vector<512x128xf32>
    tpu.vector_store %arg5[%c0_8, %c0_9], %15 {strides = array<i32>} : memref<512x128xf32, #tpu.memory_space<vmem>>, vector<512x128xf32>,
    %c0_10 = arith.constant 0 : index
    %c0_11 = arith.constant 0 : index
    %17 = vector.load %arg3[%c0_10, %c0_11] : memref<512x128xbf16, #tpu.memory_space<vmem>>, vector<512x128xbf16>
    %cst_12 = arith.constant dense<0.000000e+00> : vector<512x128xf32>
    %18 = tpu.matmul %8, %17, %cst_12 {dimension_numbers = #tpu.dot_dimension_numbers<[0], [0], [1], [1], [0, 1, 1, 1], [], []>} : vector<512x512xbf16>, vector<512x128xbf16>, vector<512x128xf32> -> vector<512x128xf32>
    %19 = arith.index_cast %10 : i32 to index
    %c0_13 = arith.constant 0 : index
    %20 = vector.load %arg6[%19, %c0_13] : memref<512x128xf32, #tpu.memory_space<vmem>>, vector<512x128xf32>
    %21 = arith.addf %20, %18 : vector<512x128xf32>
    %22 = arith.index_cast %10 : i32 to index
    %c0_14 = arith.constant 0 : index
    %23 = vector.load %arg6[%22, %c0_14] : memref<512x128xf32, #tpu.memory_space<vmem>>, vector<512x128xf32>
    tpu.vector_store %arg6[%22, %c0_14], %21 {strides = array<i32>} : memref<512x128xf32, #tpu.memory_space<vmem>>, vector<512x128xf32>,
    return
  }
  func.func @transform_0(%arg0: i32, %arg1: i32) -> (i32, i32) {
    %c0_i32 = arith.constant 0 : i32
    return %arg0, %arg1 : i32, i32
  }
  func.func @transform_1(%arg0: i32, %arg1: i32) -> (i32, i32) {
    %c0_i32 = arith.constant 0 : i32
    %c0_i32_0 = arith.constant 0 : i32
    return %arg0, %c0_i32 : i32, i32
  }
  func.func @transform_2(%arg0: i32, %arg1: i32) -> (i32, i32) {
    %c0_i32 = arith.constant 0 : i32
    %c0_i32_0 = arith.constant 0 : i32
    %c0_i32_1 = arith.constant 0 : i32
    return %c0_i32, %c0_i32_0 : i32, i32
  }
  func.func @transform_3(%arg0: i32, %arg1: i32) -> (i32, i32) {
    %c0_i32 = arith.constant 0 : i32
    %c0_i32_0 = arith.constant 0 : i32
    return %arg0, %c0_i32 : i32, i32
  }
  func.func @transform_4(%arg0: i32, %arg1: i32) -> (i32, i32) {
    %c0_i32 = arith.constant 0 : i32
    %c0_i32_0 = arith.constant 0 : i32
    %c0_i32_1 = arith.constant 0 : i32
    return %c0_i32, %c0_i32_0 : i32, i32
  }
}

module attributes {stable_mosaic.version = 11 : i64} {
  func.func @_social_multihop_kernel(%arg0: i32, %arg1: memref<512x512xbf16, #tpu.memory_space<vmem>>, %arg2: memref<512x128xf32, #tpu.memory_space<vmem>>, %arg3: memref<512x128xf32, #tpu.memory_space<vmem>>, %arg4: memref<512x128xbf16, #tpu.memory_space<vmem>>) attributes {dimension_semantics = [#tpu.dimension_semantics<arbitrary>], iteration_bounds = array<i64: 1>, scalar_prefetch = 0 : i64, scratch_operands = 1 : i64, tpu.core_type = #tpu.core_type<tc>, window_params = [{pipeline_mode = #tpu.pipeline_mode<synchronous>, transform_indices = @transform_0, window_bounds = array<i64: 512, 512>}, {pipeline_mode = #tpu.pipeline_mode<synchronous>, transform_indices = @transform_1, window_bounds = array<i64: 512, 128>}, {pipeline_mode = #tpu.pipeline_mode<synchronous>, transform_indices = @transform_2, window_bounds = array<i64: 512, 128>}]} {
    %c0 = arith.constant 0 : index
    %c0_0 = arith.constant 0 : index
    %0 = vector.load %arg2[%c0, %c0_0] : memref<512x128xf32, #tpu.memory_space<vmem>>, vector<512x128xf32>
    %c0_1 = arith.constant 0 : index
    %c0_2 = arith.constant 0 : index
    %1 = vector.load %arg3[%c0_1, %c0_2] : memref<512x128xf32, #tpu.memory_space<vmem>>, vector<512x128xf32>
    tpu.vector_store %arg3[%c0_1, %c0_2], %0 {strides = array<i32>} : memref<512x128xf32, #tpu.memory_space<vmem>>, vector<512x128xf32>,
    %c0_3 = arith.constant 0 : index
    %c0_4 = arith.constant 0 : index
    %2 = vector.load %arg2[%c0_3, %c0_4] : memref<512x128xf32, #tpu.memory_space<vmem>>, vector<512x128xf32>
    %3 = arith.truncf %2 : vector<512x128xf32> to vector<512x128xbf16>
    %c0_5 = arith.constant 0 : index
    %c0_6 = arith.constant 0 : index
    %4 = vector.load %arg4[%c0_5, %c0_6] : memref<512x128xbf16, #tpu.memory_space<vmem>>, vector<512x128xbf16>
    tpu.vector_store %arg4[%c0_5, %c0_6], %3 {strides = array<i32>} : memref<512x128xbf16, #tpu.memory_space<vmem>>, vector<512x128xbf16>,
    %c0_7 = arith.constant 0 : index
    %c0_8 = arith.constant 0 : index
    %5 = vector.load %arg1[%c0_7, %c0_8] : memref<512x512xbf16, #tpu.memory_space<vmem>>, vector<512x512xbf16>
    %c0_9 = arith.constant 0 : index
    %c0_10 = arith.constant 0 : index
    %6 = vector.load %arg4[%c0_9, %c0_10] : memref<512x128xbf16, #tpu.memory_space<vmem>>, vector<512x128xbf16>
    %cst = arith.constant dense<0.000000e+00> : vector<512x128xf32>
    %7 = tpu.matmul %5, %6, %cst {dimension_numbers = #tpu.dot_dimension_numbers<[1], [0], [0], [1], [0, 0, 1, 1], [], []>} : vector<512x512xbf16>, vector<512x128xbf16>, vector<512x128xf32> -> vector<512x128xf32>
    %c0_11 = arith.constant 0 : index
    %c0_12 = arith.constant 0 : index
    %8 = vector.load %arg3[%c0_11, %c0_12] : memref<512x128xf32, #tpu.memory_space<vmem>>, vector<512x128xf32>
    %9 = arith.addf %8, %7 : vector<512x128xf32>
    %c0_13 = arith.constant 0 : index
    %c0_14 = arith.constant 0 : index
    %10 = vector.load %arg3[%c0_13, %c0_14] : memref<512x128xf32, #tpu.memory_space<vmem>>, vector<512x128xf32>
    tpu.vector_store %arg3[%c0_13, %c0_14], %9 {strides = array<i32>} : memref<512x128xf32, #tpu.memory_space<vmem>>, vector<512x128xf32>,
    %11 = arith.truncf %7 : vector<512x128xf32> to vector<512x128xbf16>
    %c0_15 = arith.constant 0 : index
    %c0_16 = arith.constant 0 : index
    %12 = vector.load %arg4[%c0_15, %c0_16] : memref<512x128xbf16, #tpu.memory_space<vmem>>, vector<512x128xbf16>
    tpu.vector_store %arg4[%c0_15, %c0_16], %11 {strides = array<i32>} : memref<512x128xbf16, #tpu.memory_space<vmem>>, vector<512x128xbf16>,
    %c0_17 = arith.constant 0 : index
    %c0_18 = arith.constant 0 : index
    %13 = vector.load %arg1[%c0_17, %c0_18] : memref<512x512xbf16, #tpu.memory_space<vmem>>, vector<512x512xbf16>
    %c0_19 = arith.constant 0 : index
    %c0_20 = arith.constant 0 : index
    %14 = vector.load %arg4[%c0_19, %c0_20] : memref<512x128xbf16, #tpu.memory_space<vmem>>, vector<512x128xbf16>
    %cst_21 = arith.constant dense<0.000000e+00> : vector<512x128xf32>
    %15 = tpu.matmul %13, %14, %cst_21 {dimension_numbers = #tpu.dot_dimension_numbers<[1], [0], [0], [1], [0, 0, 1, 1], [], []>} : vector<512x512xbf16>, vector<512x128xbf16>, vector<512x128xf32> -> vector<512x128xf32>
    %c0_22 = arith.constant 0 : index
    %c0_23 = arith.constant 0 : index
    %16 = vector.load %arg3[%c0_22, %c0_23] : memref<512x128xf32, #tpu.memory_space<vmem>>, vector<512x128xf32>
    %17 = arith.addf %16, %15 : vector<512x128xf32>
    %c0_24 = arith.constant 0 : index
    %c0_25 = arith.constant 0 : index
    %18 = vector.load %arg3[%c0_24, %c0_25] : memref<512x128xf32, #tpu.memory_space<vmem>>, vector<512x128xf32>
    tpu.vector_store %arg3[%c0_24, %c0_25], %17 {strides = array<i32>} : memref<512x128xf32, #tpu.memory_space<vmem>>, vector<512x128xf32>,
    %19 = arith.truncf %15 : vector<512x128xf32> to vector<512x128xbf16>
    %c0_26 = arith.constant 0 : index
    %c0_27 = arith.constant 0 : index
    %20 = vector.load %arg4[%c0_26, %c0_27] : memref<512x128xbf16, #tpu.memory_space<vmem>>, vector<512x128xbf16>
    tpu.vector_store %arg4[%c0_26, %c0_27], %19 {strides = array<i32>} : memref<512x128xbf16, #tpu.memory_space<vmem>>, vector<512x128xbf16>,
    %c0_28 = arith.constant 0 : index
    %c0_29 = arith.constant 0 : index
    %21 = vector.load %arg3[%c0_28, %c0_29] : memref<512x128xf32, #tpu.memory_space<vmem>>, vector<512x128xf32>
    %cst_30 = arith.constant 0.333333343 : f32
    %22 = vector.broadcast %cst_30 : f32 to vector<512x128xf32>
    %23 = arith.mulf %21, %22 : vector<512x128xf32>
    %c0_31 = arith.constant 0 : index
    %c0_32 = arith.constant 0 : index
    %24 = vector.load %arg3[%c0_31, %c0_32] : memref<512x128xf32, #tpu.memory_space<vmem>>, vector<512x128xf32>
    tpu.vector_store %arg3[%c0_31, %c0_32], %23 {strides = array<i32>} : memref<512x128xf32, #tpu.memory_space<vmem>>, vector<512x128xf32>,
    return
  }
  func.func @transform_0(%arg0: i32) -> (i32, i32) {
    %c0_i32 = arith.constant 0 : i32
    %c0_i32_0 = arith.constant 0 : i32
    %c0_i32_1 = arith.constant 0 : i32
    return %c0_i32, %c0_i32_0 : i32, i32
  }
  func.func @transform_1(%arg0: i32) -> (i32, i32) {
    %c0_i32 = arith.constant 0 : i32
    %c0_i32_0 = arith.constant 0 : i32
    %c0_i32_1 = arith.constant 0 : i32
    return %c0_i32, %c0_i32_0 : i32, i32
  }
  func.func @transform_2(%arg0: i32) -> (i32, i32) {
    %c0_i32 = arith.constant 0 : i32
    %c0_i32_0 = arith.constant 0 : i32
    %c0_i32_1 = arith.constant 0 : i32
    return %c0_i32, %c0_i32_0 : i32, i32
  }
}

</mosaic_0001>

<llo_original>
// kernel: shadow_model_forward.4
$region0: #{shadow_model_forward.4}
  #allocation0 [shape = 'u32[]', space=smem, size = 0x4, offset = 0x4, fixed_abs, tag = 'smem constant byte address 0x4 - core index']
  #allocation1 [shape = 'u32[144,128]{1,0:T(1,128)}', space=vmem, size = 0x12000, scoped, tag = 'internal scratch']
  %s0 = inlined_call_operand.hbm [shape: bf16[512,512], index: 0, kind: input, shape index: {}]
  %s1 = inlined_call_operand.vmem [shape: bf16[512,128], index: 1, kind: input, shape index: {}]
  %s2 = inlined_call_operand.vmem [shape: bf16[512,128], index: 2, kind: input, shape index: {}]
  %s3 = inlined_call_operand.vmem [shape: f32[512,128], index: 3, kind: output, shape index: {0}]
  %s4 = inlined_call_operand.vmem [shape: f32[512,128], index: 4, kind: output, shape index: {1}]
  %5 = xla_tuple %s3, %s4
  %s6 = sld [smem:[#allocation0]]
  $region42: #{shadow_model_forward.4} parent=0
    _
  %s8 = ssub.s32 1, %s6
  %s9 = scalar_select 0, %s8, %s6
  $region1: #{shadow_model_forward.4} parent=0
    #allocation2 [shape = 'u8[524288]{0}', space=vmem, size = 0x80000, scoped, tag = 'input window, operand 0, single buffered']
    #allocation3 [shape = 's32[1]{0}', space=sflag, size = 0x4, scoped, tag = 'scoped memory for shadow_model_forward.4']
    %10 = vsyncpa [#allocation3], 0
    // Predicated region
    $region2: #{shadow_model_forward.4} parent=1 // pred_check
      _
    $region3: #{shadow_model_forward.4} parent=1 // pred_check_branch
      %12 = sbr.rel (0) target = $region5
    $region4: #{shadow_model_forward.4} parent=1 // pred_region
      %s14 = ssub.s32 16384, 16384
      %15 = vsyncadd [#allocation3], %s14
      %s16 = sshll.u32 [#allocation2], 4
      %s17 = int_to_ptr.vmem [resolvable:$true] %s16
      %22 = dma.hbm_to_vmem [thread:$0]  %s0, 16384, %s17, [#allocation3], 256, 256, 16
    $region5: #{shadow_model_forward.4} parent=1 // pred_fallthru
      _
    // Predicated region
    $region6: #{shadow_model_forward.4} parent=1 // pred_check
      _
    $region7: #{shadow_model_forward.4} parent=1 // pred_check_branch
      %24 = sbr.rel (0) target = $region9
    $region8: #{shadow_model_forward.4} parent=1 // pred_region
      _
    $region9: #{shadow_model_forward.4} parent=1 // pred_fallthru
      _
    // Predicated region
    $region10: #{shadow_model_forward.4} parent=1 // pred_check
      _
    $region11: #{shadow_model_forward.4} parent=1 // pred_check_branch
      %26 = sbr.rel (0) target = $region13
    $region12: #{shadow_model_forward.4} parent=1 // pred_region
      _
    $region13: #{shadow_model_forward.4} parent=1 // pred_fallthru
      _
    // Predicated region
    $region14: #{shadow_model_forward.4} parent=1 // pred_check
      _
    $region15: #{shadow_model_forward.4} parent=1 // pred_check_branch
      %28 = sbr.rel (0) target = $region17
    $region16: #{shadow_model_forward.4} parent=1 // pred_region
      %29 = dma.done [#allocation3], 16384
    $region17: #{shadow_model_forward.4} parent=1 // pred_fallthru
      _
    %p31 = scmp.eq.s32.totalorder 0, 0
    // Predicated region
    $region18: #{shadow_model_forward.4} parent=1 // pred_check
      %p32 = pneg %p31
    $region19: #{shadow_model_forward.4} parent=1 // pred_check_branch
      %34 = sbr.rel (%p32) target = $region21
    $region20: #{shadow_model_forward.4} parent=1 // pred_region
      %35 = vst [vmem:[%s3] sm:$0xff] 0.0
      %36 = vst [vmem:[%s3 + $0x8] sm:$0xff] 0.0
      %37 = vst [vmem:[%s3 + $0x10] sm:$0xff] 0.0
      %38 = vst [vmem:[%s3 + $0x18] sm:$0xff] 0.0
      %39 = vst [vmem:[%s3 + $0x20] sm:$0xff] 0.0
      %40 = vst [vmem:[%s3 + $0x28] sm:$0xff] 0.0
      %41 = vst [vmem:[%s3 + $0x30] sm:$0xff] 0.0
      %42 = vst [vmem:[%s3 + $0x38] sm:$0xff] 0.0
      %43 = vst [vmem:[%s3 + $0x40] sm:$0xff] 0.0
      %44 = vst [vmem:[%s3 + $0x48] sm:$0xff] 0.0
      %45 = vst [vmem:[%s3 + $0x50] sm:$0xff] 0.0
      %46 = vst [vmem:[%s3 + $0x58] sm:$0xff] 0.0
      %47 = vst [vmem:[%s3 + $0x60] sm:$0xff] 0.0
      %48 = vst [vmem:[%s3 + $0x68] sm:$0xff] 0.0
      %49 = vst [vmem:[%s3 + $0x70] sm:$0xff] 0.0
      %50 = vst [vmem:[%s3 + $0x78] sm:$0xff] 0.0
      %51 = vst [vmem:[%s3 + $0x80] sm:$0xff] 0.0
      %52 = vst [vmem:[%s3 + $0x88] sm:$0xff] 0.0
      %53 = vst [vmem:[%s3 + $0x90] sm:$0xff] 0.0
      %54 = vst [vmem:[%s3 + $0x98] sm:$0xff] 0.0
      %55 = vst [vmem:[%s3 + $0xa0] sm:$0xff] 0.0
      %56 = vst [vmem:[%s3 + $0xa8] sm:$0xff] 0.0
      %57 = vst [vmem:[%s3 + $0xb0] sm:$0xff] 0.0
      %58 = vst [vmem:[%s3 + $0xb8] sm:$0xff] 0.0
      %59 = vst [vmem:[%s3 + $0xc0] sm:$0xff] 0.0
      %60 = vst [vmem:[%s3 + $0xc8] sm:$0xff] 0.0
      %61 = vst [vmem:[%s3 + $0xd0] sm:$0xff] 0.0
      %62 = vst [vmem:[%s3 + $0xd8] sm:$0xff] 0.0
      %63 = vst [vmem:[%s3 + $0xe0] sm:$0xff] 0.0
      %64 = vst [vmem:[%s3 + $0xe8] sm:$0xff] 0.0
      %65 = vst [vmem:[%s3 + $0xf0] sm:$0xff] 0.0
      %66 = vst [vmem:[%s3 + $0xf8] sm:$0xff] 0.0
      %67 = vst [vmem:[%s3 + $0x100] sm:$0xff] 0.0
      %68 = vst [vmem:[%s3 + $0x108] sm:$0xff] 0.0
      %69 = vst [vmem:[%s3 + $0x110] sm:$0xff] 0.0
      %70 = vst [vmem:[%s3 + $0x118] sm:$0xff] 0.0
      %71 = vst [vmem:[%s3 + $0x120] sm:$0xff] 0.0
      %72 = vst [vmem:[%s3 + $0x128] sm:$0xff] 0.0
      %73 = vst [vmem:[%s3 + $0x130] sm:$0xff] 0.0
      %74 = vst [vmem:[%s3 + $0x138] sm:$0xff] 0.0
      %75 = vst [vmem:[%s3 + $0x140] sm:$0xff] 0.0
      %76 = vst [vmem:[%s3 + $0x148] sm:$0xff] 0.0
      %77 = vst [vmem:[%s3 + $0x150] sm:$0xff] 0.0
      %78 = vst [vmem:[%s3 + $0x158] sm:$0xff] 0.0
      %79 = vst [vmem:[%s3 + $0x160] sm:$0xff] 0.0
      %80 = vst [vmem:[%s3 + $0x168] sm:$0xff] 0.0
      %81 = vst [vmem:[%s3 + $0x170] sm:$0xff] 0.0
      %82 = vst [vmem:[%s3 + $0x178] sm:$0xff] 0.0
      %83 = vst [vmem:[%s3 + $0x180] sm:$0xff] 0.0
      %84 = vst [vmem:[%s3 + $0x188] sm:$0xff] 0.0
      %85 = vst [vmem:[%s3 + $0x190] sm:$0xff] 0.0
      %86 = vst [vmem:[%s3 + $0x198] sm:$0xff] 0.0
      %87 = vst [vmem:[%s3 + $0x1a0] sm:$0xff] 0.0
      %88 = vst [vmem:[%s3 + $0x1a8] sm:$0xff] 0.0
      %89 = vst [vmem:[%s3 + $0x1b0] sm:$0xff] 0.0
      %90 = vst [vmem:[%s3 + $0x1b8] sm:$0xff] 0.0
      %91 = vst [vmem:[%s3 + $0x1c0] sm:$0xff] 0.0
      %92 = vst [vmem:[%s3 + $0x1c8] sm:$0xff] 0.0
      %93 = vst [vmem:[%s3 + $0x1d0] sm:$0xff] 0.0
      %94 = vst [vmem:[%s3 + $0x1d8] sm:$0xff] 0.0
      %95 = vst [vmem:[%s3 + $0x1e0] sm:$0xff] 0.0
      %96 = vst [vmem:[%s3 + $0x1e8] sm:$0xff] 0.0
      %97 = vst [vmem:[%s3 + $0x1f0] sm:$0xff] 0.0
      %98 = vst [vmem:[%s3 + $0x1f8] sm:$0xff] 0.0
    $region21: #{shadow_model_forward.4} parent=1 // pred_fallthru
      _
    %p99 = scmp.eq.s32.totalorder 0, 0
    %p100 = pnand %p99, %p31
    %p101 = pneg %p100
    // Predicated region
    $region22: #{shadow_model_forward.4} parent=1 // pred_check
      _
    $region23: #{shadow_model_forward.4} parent=1 // pred_check_branch
      %103 = sbr.rel (%p100) target = $region25
    $region24: #{shadow_model_forward.4} parent=1 // pred_region
      %104 = vst [vmem:[%s4] sm:$0xff] 0.0
      %105 = vst [vmem:[%s4 + $0x8] sm:$0xff] 0.0
      %106 = vst [vmem:[%s4 + $0x10] sm:$0xff] 0.0
      %107 = vst [vmem:[%s4 + $0x18] sm:$0xff] 0.0
      %108 = vst [vmem:[%s4 + $0x20] sm:$0xff] 0.0
      %109 = vst [vmem:[%s4 + $0x28] sm:$0xff] 0.0
      %110 = vst [vmem:[%s4 + $0x30] sm:$0xff] 0.0
      %111 = vst [vmem:[%s4 + $0x38] sm:$0xff] 0.0
      %112 = vst [vmem:[%s4 + $0x40] sm:$0xff] 0.0
      %113 = vst [vmem:[%s4 + $0x48] sm:$0xff] 0.0
      %114 = vst [vmem:[%s4 + $0x50] sm:$0xff] 0.0
      %115 = vst [vmem:[%s4 + $0x58] sm:$0xff] 0.0
      %116 = vst [vmem:[%s4 + $0x60] sm:$0xff] 0.0
      %117 = vst [vmem:[%s4 + $0x68] sm:$0xff] 0.0
      %118 = vst [vmem:[%s4 + $0x70] sm:$0xff] 0.0
      %119 = vst [vmem:[%s4 + $0x78] sm:$0xff] 0.0
      %120 = vst [vmem:[%s4 + $0x80] sm:$0xff] 0.0
      %121 = vst [vmem:[%s4 + $0x88] sm:$0xff] 0.0
      %122 = vst [vmem:[%s4 + $0x90] sm:$0xff] 0.0
      %123 = vst [vmem:[%s4 + $0x98] sm:$0xff] 0.0
      %124 = vst [vmem:[%s4 + $0xa0] sm:$0xff] 0.0
      %125 = vst [vmem:[%s4 + $0xa8] sm:$0xff] 0.0
      %126 = vst [vmem:[%s4 + $0xb0] sm:$0xff] 0.0
      %127 = vst [vmem:[%s4 + $0xb8] sm:$0xff] 0.0
      %128 = vst [vmem:[%s4 + $0xc0] sm:$0xff] 0.0
      %129 = vst [vmem:[%s4 + $0xc8] sm:$0xff] 0.0
      %130 = vst [vmem:[%s4 + $0xd0] sm:$0xff] 0.0
      %131 = vst [vmem:[%s4 + $0xd8] sm:$0xff] 0.0
      %132 = vst [vmem:[%s4 + $0xe0] sm:$0xff] 0.0
      %133 = vst [vmem:[%s4 + $0xe8] sm:$0xff] 0.0
      %134 = vst [vmem:[%s4 + $0xf0] sm:$0xff] 0.0
      %135 = vst [vmem:[%s4 + $0xf8] sm:$0xff] 0.0
      %136 = vst [vmem:[%s4 + $0x100] sm:$0xff] 0.0
      %137 = vst [vmem:[%s4 + $0x108] sm:$0xff] 0.0
      %138 = vst [vmem:[%s4 + $0x110] sm:$0xff] 0.0
      %139 = vst [vmem:[%s4 + $0x118] sm:$0xff] 0.0
      %140 = vst [vmem:[%s4 + $0x120] sm:$0xff] 0.0
      %141 = vst [vmem:[%s4 + $0x128] sm:$0xff] 0.0
      %142 = vst [vmem:[%s4 + $0x130] sm:$0xff] 0.0
      %143 = vst [vmem:[%s4 + $0x138] sm:$0xff] 0.0
      %144 = vst [vmem:[%s4 + $0x140] sm:$0xff] 0.0
      %145 = vst [vmem:[%s4 + $0x148] sm:$0xff] 0.0
      %146 = vst [vmem:[%s4 + $0x150] sm:$0xff] 0.0
      %147 = vst [vmem:[%s4 + $0x158] sm:$0xff] 0.0
      %148 = vst [vmem:[%s4 + $0x160] sm:$0xff] 0.0
      %149 = vst [vmem:[%s4 + $0x168] sm:$0xff] 0.0
      %150 = vst [vmem:[%s4 + $0x170] sm:$0xff] 0.0
      %151 = vst [vmem:[%s4 + $0x178] sm:$0xff] 0.0
      %152 = vst [vmem:[%s4 + $0x180] sm:$0xff] 0.0
      %153 = vst [vmem:[%s4 + $0x188] sm:$0xff] 0.0
      %154 = vst [vmem:[%s4 + $0x190] sm:$0xff] 0.0
      %155 = vst [vmem:[%s4 + $0x198] sm:$0xff] 0.0
      %156 = vst [vmem:[%s4 + $0x1a0] sm:$0xff] 0.0
      %157 = vst [vmem:[%s4 + $0x1a8] sm:$0xff] 0.0
      %158 = vst [vmem:[%s4 + $0x1b0] sm:$0xff] 0.0
      %159 = vst [vmem:[%s4 + $0x1b8] sm:$0xff] 0.0
      %160 = vst [vmem:[%s4 + $0x1c0] sm:$0xff] 0.0
      %161 = vst [vmem:[%s4 + $0x1c8] sm:$0xff] 0.0
      %162 = vst [vmem:[%s4 + $0x1d0] sm:$0xff] 0.0
      %163 = vst [vmem:[%s4 + $0x1d8] sm:$0xff] 0.0
      %164 = vst [vmem:[%s4 + $0x1e0] sm:$0xff] 0.0
      %165 = vst [vmem:[%s4 + $0x1e8] sm:$0xff] 0.0
      %166 = vst [vmem:[%s4 + $0x1f0] sm:$0xff] 0.0
      %167 = vst [vmem:[%s4 + $0x1f8] sm:$0xff] 0.0
    $region25: #{shadow_model_forward.4} parent=1 // pred_fallthru
      _
    %v168 = vld [vmem:[#allocation2] sm:$0xff]
    %v169 = vld [vmem:[#allocation2 + $0x8] sm:$0xff]
    %v170 = vld [vmem:[#allocation2 + $0x10] sm:$0xff]
    %v171 = vld [vmem:[#allocation2 + $0x18] sm:$0xff]
    %v172 = vld [vmem:[#allocation2 + $0x20] sm:$0xff]
    %v173 = vld [vmem:[#allocation2 + $0x28] sm:$0xff]
    %v174 = vld [vmem:[#allocation2 + $0x30] sm:$0xff]
    %v175 = vld [vmem:[#allocation2 + $0x38] sm:$0xff]
    %v176 = vld [vmem:[#allocation2 + $0x40] sm:$0xff]
    %v177 = vld [vmem:[#allocation2 + $0x48] sm:$0xff]
    %v178 = vld [vmem:[#allocation2 + $0x50] sm:$0xff]
    %v179 = vld [vmem:[#allocation2 + $0x58] sm:$0xff]
    %v180 = vld [vmem:[#allocation2 + $0x60] sm:$0xff]
    %v181 = vld [vmem:[#allocation2 + $0x68] sm:$0xff]
    %v182 = vld [vmem:[#allocation2 + $0x70] sm:$0xff]
    %v183 = vld [vmem:[#allocation2 + $0x78] sm:$0xff]
    %v184 = vld [vmem:[#allocation2 + $0x80] sm:$0xff]
    %v185 = vld [vmem:[#allocation2 + $0x88] sm:$0xff]
    %v186 = vld [vmem:[#allocation2 + $0x90] sm:$0xff]
    %v187 = vld [vmem:[#allocation2 + $0x98] sm:$0xff]
    %v188 = vld [vmem:[#allocation2 + $0xa0] sm:$0xff]
    %v189 = vld [vmem:[#allocation2 + $0xa8] sm:$0xff]
    %v190 = vld [vmem:[#allocation2 + $0xb0] sm:$0xff]
    %v191 = vld [vmem:[#allocation2 + $0xb8] sm:$0xff]
    %v192 = vld [vmem:[#allocation2 + $0xc0] sm:$0xff]
    %v193 = vld [vmem:[#allocation2 + $0xc8] sm:$0xff]
    %v194 = vld [vmem:[#allocation2 + $0xd0] sm:$0xff]
    %v195 = vld [vmem:[#allocation2 + $0xd8] sm:$0xff]
    %v196 = vld [vmem:[#allocation2 + $0xe0] sm:$0xff]
    %v197 = vld [vmem:[#allocation2 + $0xe8] sm:$0xff]
    %v198 = vld [vmem:[#allocation2 + $0xf0] sm:$0xff]
    %v199 = vld [vmem:[#allocation2 + $0xf8] sm:$0xff]
    %v200 = vld [vmem:[#allocation2 + $0x100] sm:$0xff]
    %v201 = vld [vmem:[#allocation2 + $0x108] sm:$0xff]
    %v202 = vld [vmem:[#allocation2 + $0x110] sm:$0xff]
    %v203 = vld [vmem:[#allocation2 + $0x118] sm:$0xff]
    %v204 = vld [vmem:[#allocation2 + $0x120] sm:$0xff]
    %v205 = vld [vmem:[#allocation2 + $0x128] sm:$0xff]
    %v206 = vld [vmem:[#allocation2 + $0x130] sm:$0xff]
    %v207 = vld [vmem:[#allocation2 + $0x138] sm:$0xff]
    %v208 = vld [vmem:[#allocation2 + $0x140] sm:$0xff]
    %v209 = vld [vmem:[#allocation2 + $0x148] sm:$0xff]
    %v210 = vld [vmem:[#allocation2 + $0x150] sm:$0xff]
    %v211 = vld [vmem:[#allocation2 + $0x158] sm:$0xff]
    %v212 = vld [vmem:[#allocation2 + $0x160] sm:$0xff]
    %v213 = vld [vmem:[#allocation2 + $0x168] sm:$0xff]
    %v214 = vld [vmem:[#allocation2 + $0x170] sm:$0xff]
    %v215 = vld [vmem:[#allocation2 + $0x178] sm:$0xff]
    %v216 = vld [vmem:[#allocation2 + $0x180] sm:$0xff]
    %v217 = vld [vmem:[#allocation2 + $0x188] sm:$0xff]
    %v218 = vld [vmem:[#allocation2 + $0x190] sm:$0xff]
    %v219 = vld [vmem:[#allocation2 + $0x198] sm:$0xff]
    %v220 = vld [vmem:[#allocation2 + $0x1a0] sm:$0xff]
    %v221 = vld [vmem:[#allocation2 + $0x1a8] sm:$0xff]
    %v222 = vld [vmem:[#allocation2 + $0x1b0] sm:$0xff]
    %v223 = vld [vmem:[#allocation2 + $0x1b8] sm:$0xff]
    %v224 = vld [vmem:[#allocation2 + $0x1c0] sm:$0xff]
    %v225 = vld [vmem:[#allocation2 + $0x1c8] sm:$0xff]
    %v226 = vld [vmem:[#allocation2 + $0x1d0] sm:$0xff]
    %v227 = vld [vmem:[#allocation2 + $0x1d8] sm:$0xff]
    %v228 = vld [vmem:[#allocation2 + $0x1e0] sm:$0xff]
    %v229 = vld [vmem:[#allocation2 + $0x1e8] sm:$0xff]
    %v230 = vld [vmem:[#allocation2 + $0x1f0] sm:$0xff]
    %v231 = vld [vmem:[#allocation2 + $0x1f8] sm:$0xff]
    %v232 = vld [vmem:[#allocation2 + $0x200] sm:$0xff]
    %v233 = vld [vmem:[#allocation2 + $0x208] sm:$0xff]
    %v234 = vld [vmem:[#allocation2 + $0x210] sm:$0xff]
    %v235 = vld [vmem:[#allocation2 + $0x218] sm:$0xff]
    %v236 = vld [vmem:[#allocation2 + $0x220] sm:$0xff]
    %v237 = vld [vmem:[#allocation2 + $0x228] sm:$0xff]
    %v238 = vld [vmem:[#allocation2 + $0x230] sm:$0xff]
    %v239 = vld [vmem:[#allocation2 + $0x238] sm:$0xff]
    %v240 = vld [vmem:[#allocation2 + $0x240] sm:$0xff]
    %v241 = vld [vmem:[#allocation2 + $0x248] sm:$0xff]
    %v242 = vld [vmem:[#allocation2 + $0x250] sm:$0xff]
    %v243 = vld [vmem:[#allocation2 + $0x258] sm:$0xff]
    %v244 = vld [vmem:[#allocation2 + $0x260] sm:$0xff]
    %v245 = vld [vmem:[#allocation2 + $0x268] sm:$0xff]
    %v246 = vld [vmem:[#allocation2 + $0x270] sm:$0xff]
    %v247 = vld [vmem:[#allocation2 + $0x278] sm:$0xff]
    %v248 = vld [vmem:[#allocation2 + $0x280] sm:$0xff]
    %v249 = vld [vmem:[#allocation2 + $0x288] sm:$0xff]
    %v250 = vld [vmem:[#allocation2 + $0x290] sm:$0xff]
    %v251 = vld [vmem:[#allocation2 + $0x298] sm:$0xff]
    %v252 = vld [vmem:[#allocation2 + $0x2a0] sm:$0xff]
    %v253 = vld [vmem:[#allocation2 + $0x2a8] sm:$0xff]
    %v254 = vld [vmem:[#allocation2 + $0x2b0] sm:$0xff]
    %v255 = vld [vmem:[#allocation2 + $0x2b8] sm:$0xff]
    %v256 = vld [vmem:[#allocation2 + $0x2c0] sm:$0xff]
    %v257 = vld [vmem:[#allocation2 + $0x2c8] sm:$0xff]
    %v258 = vld [vmem:[#allocation2 + $0x2d0] sm:$0xff]
    %v259 = vld [vmem:[#allocation2 + $0x2d8] sm:$0xff]
    %v260 = vld [vmem:[#allocation2 + $0x2e0] sm:$0xff]
    %v261 = vld [vmem:[#allocation2 + $0x2e8] sm:$0xff]
    %v262 = vld [vmem:[#allocation2 + $0x2f0] sm:$0xff]
    %v263 = vld [vmem:[#allocation2 + $0x2f8] sm:$0xff]
    %v264 = vld [vmem:[#allocation2 + $0x300] sm:$0xff]
    %v265 = vld [vmem:[#allocation2 + $0x308] sm:$0xff]
    %v266 = vld [vmem:[#allocation2 + $0x310] sm:$0xff]
    %v267 = vld [vmem:[#allocation2 + $0x318] sm:$0xff]
    %v268 = vld [vmem:[#allocation2 + $0x320] sm:$0xff]
    %v269 = vld [vmem:[#allocation2 + $0x328] sm:$0xff]
    %v270 = vld [vmem:[#allocation2 + $0x330] sm:$0xff]
    %v271 = vld [vmem:[#allocation2 + $0x338] sm:$0xff]
    %v272 = vld [vmem:[#allocation2 + $0x340] sm:$0xff]
    %v273 = vld [vmem:[#allocation2 + $0x348] sm:$0xff]
    %v274 = vld [vmem:[#allocation2 + $0x350] sm:$0xff]
    %v275 = vld [vmem:[#allocation2 + $0x358] sm:$0xff]
    %v276 = vld [vmem:[#allocation2 + $0x360] sm:$0xff]
    %v277 = vld [vmem:[#allocation2 + $0x368] sm:$0xff]
    %v278 = vld [vmem:[#allocation2 + $0x370] sm:$0xff]
    %v279 = vld [vmem:[#allocation2 + $0x378] sm:$0xff]
    %v280 = vld [vmem:[#allocation2 + $0x380] sm:$0xff]
    %v281 = vld [vmem:[#allocation2 + $0x388] sm:$0xff]
    %v282 = vld [vmem:[#allocation2 + $0x390] sm:$0xff]
    %v283 = vld [vmem:[#allocation2 + $0x398] sm:$0xff]
    %v284 = vld [vmem:[#allocation2 + $0x3a0] sm:$0xff]
    %v285 = vld [vmem:[#allocation2 + $0x3a8] sm:$0xff]
    %v286 = vld [vmem:[#allocation2 + $0x3b0] sm:$0xff]
    %v287 = vld [vmem:[#allocation2 + $0x3b8] sm:$0xff]
    %v288 = vld [vmem:[#allocation2 + $0x3c0] sm:$0xff]
    %v289 = vld [vmem:[#allocation2 + $0x3c8] sm:$0xff]
    %v290 = vld [vmem:[#allocation2 + $0x3d0] sm:$0xff]
    %v291 = vld [vmem:[#allocation2 + $0x3d8] sm:$0xff]
    %v292 = vld [vmem:[#allocation2 + $0x3e0] sm:$0xff]
    %v293 = vld [vmem:[#allocation2 + $0x3e8] sm:$0xff]
    %v294 = vld [vmem:[#allocation2 + $0x3f0] sm:$0xff]
    %v295 = vld [vmem:[#allocation2 + $0x3f8] sm:$0xff]
    %s296 = smul.u32 0, 512
    %s297 = sshra.s32 %s296, 3
    %s298 = sand.u32 %s296, 7
    %s299 = smul.addr %s297, 4
    %s300 = scalar_lea.vmem %s2, %s299
    %v301 = vld [vmem:[%s300] sm:$0xf]
    %v302 = vld [vmem:[%s300 + $0x4] sm:$0xf]
    %v303 = vld [vmem:[%s300 + $0x8] sm:$0xf]
    %v304 = vld [vmem:[%s300 + $0xc] sm:$0xf]
    %v305 = vld [vmem:[%s300 + $0x10] sm:$0xf]
    %v306 = vld [vmem:[%s300 + $0x14] sm:$0xf]
    %v307 = vld [vmem:[%s300 + $0x18] sm:$0xf]
    %v308 = vld [vmem:[%s300 + $0x1c] sm:$0xf]
    %v309 = vld [vmem:[%s300 + $0x20] sm:$0xf]
    %v310 = vld [vmem:[%s300 + $0x24] sm:$0xf]
    %v311 = vld [vmem:[%s300 + $0x28] sm:$0xf]
    %v312 = vld [vmem:[%s300 + $0x2c] sm:$0xf]
    %v313 = vld [vmem:[%s300 + $0x30] sm:$0xf]
    %v314 = vld [vmem:[%s300 + $0x34] sm:$0xf]
    %v315 = vld [vmem:[%s300 + $0x38] sm:$0xf]
    %v316 = vld [vmem:[%s300 + $0x3c] sm:$0xf]
    %v317 = vld [vmem:[%s300 + $0x40] sm:$0xf]
    %v318 = vld [vmem:[%s300 + $0x44] sm:$0xf]
    %v319 = vld [vmem:[%s300 + $0x48] sm:$0xf]
    %v320 = vld [vmem:[%s300 + $0x4c] sm:$0xf]
    %v321 = vld [vmem:[%s300 + $0x50] sm:$0xf]
    %v322 = vld [vmem:[%s300 + $0x54] sm:$0xf]
    %v323 = vld [vmem:[%s300 + $0x58] sm:$0xf]
    %v324 = vld [vmem:[%s300 + $0x5c] sm:$0xf]
    %v325 = vld [vmem:[%s300 + $0x60] sm:$0xf]
    %v326 = vld [vmem:[%s300 + $0x64] sm:$0xf]
    %v327 = vld [vmem:[%s300 + $0x68] sm:$0xf]
    %v328 = vld [vmem:[%s300 + $0x6c] sm:$0xf]
    %v329 = vld [vmem:[%s300 + $0x70] sm:$0xf]
    %v330 = vld [vmem:[%s300 + $0x74] sm:$0xf]
    %v331 = vld [vmem:[%s300 + $0x78] sm:$0xf]
    %v332 = vld [vmem:[%s300 + $0x7c] sm:$0xf]
    %v333 = vld [vmem:[%s300 + $0x80] sm:$0xf]
    %v334 = vld [vmem:[%s300 + $0x84] sm:$0xf]
    %v335 = vld [vmem:[%s300 + $0x88] sm:$0xf]
    %v336 = vld [vmem:[%s300 + $0x8c] sm:$0xf]
    %v337 = vld [vmem:[%s300 + $0x90] sm:$0xf]
    %v338 = vld [vmem:[%s300 + $0x94] sm:$0xf]
    %v339 = vld [vmem:[%s300 + $0x98] sm:$0xf]
    %v340 = vld [vmem:[%s300 + $0x9c] sm:$0xf]
    %v341 = vld [vmem:[%s300 + $0xa0] sm:$0xf]
    %v342 = vld [vmem:[%s300 + $0xa4] sm:$0xf]
    %v343 = vld [vmem:[%s300 + $0xa8] sm:$0xf]
    %v344 = vld [vmem:[%s300 + $0xac] sm:$0xf]
    %v345 = vld [vmem:[%s300 + $0xb0] sm:$0xf]
    %v346 = vld [vmem:[%s300 + $0xb4] sm:$0xf]
    %v347 = vld [vmem:[%s300 + $0xb8] sm:$0xf]
    %v348 = vld [vmem:[%s300 + $0xbc] sm:$0xf]
    %v349 = vld [vmem:[%s300 + $0xc0] sm:$0xf]
    %v350 = vld [vmem:[%s300 + $0xc4] sm:$0xf]
    %v351 = vld [vmem:[%s300 + $0xc8] sm:$0xf]
    %v352 = vld [vmem:[%s300 + $0xcc] sm:$0xf]
    %v353 = vld [vmem:[%s300 + $0xd0] sm:$0xf]
    %v354 = vld [vmem:[%s300 + $0xd4] sm:$0xf]
    %v355 = vld [vmem:[%s300 + $0xd8] sm:$0xf]
    %v356 = vld [vmem:[%s300 + $0xdc] sm:$0xf]
    %v357 = vld [vmem:[%s300 + $0xe0] sm:$0xf]
    %v358 = vld [vmem:[%s300 + $0xe4] sm:$0xf]
    %v359 = vld [vmem:[%s300 + $0xe8] sm:$0xf]
    %v360 = vld [vmem:[%s300 + $0xec] sm:$0xf]
    %v361 = vld [vmem:[%s300 + $0xf0] sm:$0xf]
    %v362 = vld [vmem:[%s300 + $0xf4] sm:$0xf]
    %v363 = vld [vmem:[%s300 + $0xf8] sm:$0xf]
    %v364 = vld [vmem:[%s300 + $0xfc] sm:$0xf]
    %v365 = vld [vmem:[%s3] sm:$0xff]
    %v366 = vld [vmem:[%s3 + $0x8] sm:$0xff]
    %v367 = vld [vmem:[%s3 + $0x10] sm:$0xff]
    %v368 = vld [vmem:[%s3 + $0x18] sm:$0xff]
    %v369 = vld [vmem:[%s3 + $0x20] sm:$0xff]
    %v370 = vld [vmem:[%s3 + $0x28] sm:$0xff]
    %v371 = vld [vmem:[%s3 + $0x30] sm:$0xff]
    %v372 = vld [vmem:[%s3 + $0x38] sm:$0xff]
    %v373 = vld [vmem:[%s3 + $0x40] sm:$0xff]
    %v374 = vld [vmem:[%s3 + $0x48] sm:$0xff]
    %v375 = vld [vmem:[%s3 + $0x50] sm:$0xff]
    %v376 = vld [vmem:[%s3 + $0x58] sm:$0xff]
    %v377 = vld [vmem:[%s3 + $0x60] sm:$0xff]
    %v378 = vld [vmem:[%s3 + $0x68] sm:$0xff]
    %v379 = vld [vmem:[%s3 + $0x70] sm:$0xff]
    %v380 = vld [vmem:[%s3 + $0x78] sm:$0xff]
    %v381 = vld [vmem:[%s3 + $0x80] sm:$0xff]
    %v382 = vld [vmem:[%s3 + $0x88] sm:$0xff]
    %v383 = vld [vmem:[%s3 + $0x90] sm:$0xff]
    %v384 = vld [vmem:[%s3 + $0x98] sm:$0xff]
    %v385 = vld [vmem:[%s3 + $0xa0] sm:$0xff]
    %v386 = vld [vmem:[%s3 + $0xa8] sm:$0xff]
    %v387 = vld [vmem:[%s3 + $0xb0] sm:$0xff]
    %v388 = vld [vmem:[%s3 + $0xb8] sm:$0xff]
    %v389 = vld [vmem:[%s3 + $0xc0] sm:$0xff]
    %v390 = vld [vmem:[%s3 + $0xc8] sm:$0xff]
    %v391 = vld [vmem:[%s3 + $0xd0] sm:$0xff]
    %v392 = vld [vmem:[%s3 + $0xd8] sm:$0xff]
    %v393 = vld [vmem:[%s3 + $0xe0] sm:$0xff]
    %v394 = vld [vmem:[%s3 + $0xe8] sm:$0xff]
    %v395 = vld [vmem:[%s3 + $0xf0] sm:$0xff]
    %v396 = vld [vmem:[%s3 + $0xf8] sm:$0xff]
    %v397 = vld [vmem:[%s3 + $0x100] sm:$0xff]
    %v398 = vld [vmem:[%s3 + $0x108] sm:$0xff]
    %v399 = vld [vmem:[%s3 + $0x110] sm:$0xff]
    %v400 = vld [vmem:[%s3 + $0x118] sm:$0xff]
    %v401 = vld [vmem:[%s3 + $0x120] sm:$0xff]
    %v402 = vld [vmem:[%s3 + $0x128] sm:$0xff]
    %v403 = vld [vmem:[%s3 + $0x130] sm:$0xff]
    %v404 = vld [vmem:[%s3 + $0x138] sm:$0xff]
    %v405 = vld [vmem:[%s3 + $0x140] sm:$0xff]
    %v406 = vld [vmem:[%s3 + $0x148] sm:$0xff]
    %v407 = vld [vmem:[%s3 + $0x150] sm:$0xff]
    %v408 = vld [vmem:[%s3 + $0x158] sm:$0xff]
    %v409 = vld [vmem:[%s3 + $0x160] sm:$0xff]
    %v410 = vld [vmem:[%s3 + $0x168] sm:$0xff]
    %v411 = vld [vmem:[%s3 + $0x170] sm:$0xff]
    %v412 = vld [vmem:[%s3 + $0x178] sm:$0xff]
    %v413 = vld [vmem:[%s3 + $0x180] sm:$0xff]
    %v414 = vld [vmem:[%s3 + $0x188] sm:$0xff]
    %v415 = vld [vmem:[%s3 + $0x190] sm:$0xff]
    %v416 = vld [vmem:[%s3 + $0x198] sm:$0xff]
    %v417 = vld [vmem:[%s3 + $0x1a0] sm:$0xff]
    %v418 = vld [vmem:[%s3 + $0x1a8] sm:$0xff]
    %v419 = vld [vmem:[%s3 + $0x1b0] sm:$0xff]
    %v420 = vld [vmem:[%s3 + $0x1b8] sm:$0xff]
    %v421 = vld [vmem:[%s3 + $0x1c0] sm:$0xff]
    %v422 = vld [vmem:[%s3 + $0x1c8] sm:$0xff]
    %v423 = vld [vmem:[%s3 + $0x1d0] sm:$0xff]
    %v424 = vld [vmem:[%s3 + $0x1d8] sm:$0xff]
    %v425 = vld [vmem:[%s3 + $0x1e0] sm:$0xff]
    %v426 = vld [vmem:[%s3 + $0x1e8] sm:$0xff]
    %v427 = vld [vmem:[%s3 + $0x1f0] sm:$0xff]
    %v428 = vld [vmem:[%s3 + $0x1f8] sm:$0xff]
    %v557 = vunpack.c.l.b16 %v168
    %v558 = vunpack.c.h.b16 %v168
    %v559 = vunpack.c.l.b16 %v169
    %v560 = vunpack.c.h.b16 %v169
    %v561 = vunpack.c.l.b16 %v170
    %v562 = vunpack.c.h.b16 %v170
    %v563 = vunpack.c.l.b16 %v171
    %v564 = vunpack.c.h.b16 %v171
    %v565 = vunpack.c.l.b16 %v172
    %v566 = vunpack.c.h.b16 %v172
    %v567 = vunpack.c.l.b16 %v173
    %v568 = vunpack.c.h.b16 %v173
    %v569 = vunpack.c.l.b16 %v174
    %v570 = vunpack.c.h.b16 %v174
    %v571 = vunpack.c.l.b16 %v175
    %v572 = vunpack.c.h.b16 %v175
    %v573 = vunpack.c.l.b16 %v176
    %v574 = vunpack.c.h.b16 %v176
    %v575 = vunpack.c.l.b16 %v177
    %v576 = vunpack.c.h.b16 %v177
    %v577 = vunpack.c.l.b16 %v178
    %v578 = vunpack.c.h.b16 %v178
    %v579 = vunpack.c.l.b16 %v179
    %v580 = vunpack.c.h.b16 %v179
    %v581 = vunpack.c.l.b16 %v180
    %v582 = vunpack.c.h.b16 %v180
    %v583 = vunpack.c.l.b16 %v181
    %v584 = vunpack.c.h.b16 %v181
    %v585 = vunpack.c.l.b16 %v182
    %v586 = vunpack.c.h.b16 %v182
    %v587 = vunpack.c.l.b16 %v183
    %v588 = vunpack.c.h.b16 %v183
    %v589 = vunpack.c.l.b16 %v184
    %v590 = vunpack.c.h.b16 %v184
    %v591 = vunpack.c.l.b16 %v185
    %v592 = vunpack.c.h.b16 %v185
    %v593 = vunpack.c.l.b16 %v186
    %v594 = vunpack.c.h.b16 %v186
    %v595 = vunpack.c.l.b16 %v187
    %v596 = vunpack.c.h.b16 %v187
    %v597 = vunpack.c.l.b16 %v188
    %v598 = vunpack.c.h.b16 %v188
    %v599 = vunpack.c.l.b16 %v189
    %v600 = vunpack.c.h.b16 %v189
    %v601 = vunpack.c.l.b16 %v190
    %v602 = vunpack.c.h.b16 %v190
    %v603 = vunpack.c.l.b16 %v191
    %v604 = vunpack.c.h.b16 %v191
    %v605 = vunpack.c.l.b16 %v192
    %v606 = vunpack.c.h.b16 %v192
    %v607 = vunpack.c.l.b16 %v193
    %v608 = vunpack.c.h.b16 %v193
    %v609 = vunpack.c.l.b16 %v194
    %v610 = vunpack.c.h.b16 %v194
    %v611 = vunpack.c.l.b16 %v195
    %v612 = vunpack.c.h.b16 %v195
    %v613 = vunpack.c.l.b16 %v196
    %v614 = vunpack.c.h.b16 %v196
    %v615 = vunpack.c.l.b16 %v197
    %v616 = vunpack.c.h.b16 %v197
    %v617 = vunpack.c.l.b16 %v198
    %v618 = vunpack.c.h.b16 %v198
    %v619 = vunpack.c.l.b16 %v199
    %v620 = vunpack.c.h.b16 %v199
    %v621 = vunpack.c.l.b16 %v200
    %v622 = vunpack.c.h.b16 %v200
    %v623 = vunpack.c.l.b16 %v201
    %v624 = vunpack.c.h.b16 %v201
    %v625 = vunpack.c.l.b16 %v202
    %v626 = vunpack.c.h.b16 %v202
    %v627 = vunpack.c.l.b16 %v203
    %v628 = vunpack.c.h.b16 %v203
    %v629 = vunpack.c.l.b16 %v204
    %v630 = vunpack.c.h.b16 %v204
    %v631 = vunpack.c.l.b16 %v205
    %v632 = vunpack.c.h.b16 %v205
    %v633 = vunpack.c.l.b16 %v206
    %v634 = vunpack.c.h.b16 %v206
    %v635 = vunpack.c.l.b16 %v207
    %v636 = vunpack.c.h.b16 %v207
    %v637 = vunpack.c.l.b16 %v208
    %v638 = vunpack.c.h.b16 %v208
    %v639 = vunpack.c.l.b16 %v209
    %v640 = vunpack.c.h.b16 %v209
    %v641 = vunpack.c.l.b16 %v210
    %v642 = vunpack.c.h.b16 %v210
    %v643 = vunpack.c.l.b16 %v211
    %v644 = vunpack.c.h.b16 %v211
    %v645 = vunpack.c.l.b16 %v212
    %v646 = vunpack.c.h.b16 %v212
    %v647 = vunpack.c.l.b16 %v213
    %v648 = vunpack.c.h.b16 %v213
    %v649 = vunpack.c.l.b16 %v214
    %v650 = vunpack.c.h.b16 %v214
    %v651 = vunpack.c.l.b16 %v215
    %v652 = vunpack.c.h.b16 %v215
    %v653 = vunpack.c.l.b16 %v216
    %v654 = vunpack.c.h.b16 %v216
    %v655 = vunpack.c.l.b16 %v217
    %v656 = vunpack.c.h.b16 %v217
    %v657 = vunpack.c.l.b16 %v218
    %v658 = vunpack.c.h.b16 %v218
    %v659 = vunpack.c.l.b16 %v219
    %v660 = vunpack.c.h.b16 %v219
    %v661 = vunpack.c.l.b16 %v220
    %v662 = vunpack.c.h.b16 %v220
    %v663 = vunpack.c.l.b16 %v221
    %v664 = vunpack.c.h.b16 %v221
    %v665 = vunpack.c.l.b16 %v222
    %v666 = vunpack.c.h.b16 %v222
    %v667 = vunpack.c.l.b16 %v223
    %v668 = vunpack.c.h.b16 %v223
    %v669 = vunpack.c.l.b16 %v224
    %v670 = vunpack.c.h.b16 %v224
    %v671 = vunpack.c.l.b16 %v225
    %v672 = vunpack.c.h.b16 %v225
    %v673 = vunpack.c.l.b16 %v226
    %v674 = vunpack.c.h.b16 %v226
    %v675 = vunpack.c.l.b16 %v227
    %v676 = vunpack.c.h.b16 %v227
    %v677 = vunpack.c.l.b16 %v228
    %v678 = vunpack.c.h.b16 %v228
    %v679 = vunpack.c.l.b16 %v229
    %v680 = vunpack.c.h.b16 %v229
    %v681 = vunpack.c.l.b16 %v230
    %v682 = vunpack.c.h.b16 %v230
    %v683 = vunpack.c.l.b16 %v231
    %v684 = vunpack.c.h.b16 %v231
    %v685 = vunpack.c.l.b16 %v232
    %v686 = vunpack.c.h.b16 %v232
    %v687 = vunpack.c.l.b16 %v233
    %v688 = vunpack.c.h.b16 %v233
    %v689 = vunpack.c.l.b16 %v234
    %v690 = vunpack.c.h.b16 %v234
    %v691 = vunpack.c.l.b16 %v235
    %v692 = vunpack.c.h.b16 %v235
    %v693 = vunpack.c.l.b16 %v236
    %v694 = vunpack.c.h.b16 %v236
    %v695 = vunpack.c.l.b16 %v237
    %v696 = vunpack.c.h.b16 %v237
    %v697 = vunpack.c.l.b16 %v238
    %v698 = vunpack.c.h.b16 %v238
    %v699 = vunpack.c.l.b16 %v239
    %v700 = vunpack.c.h.b16 %v239
    %v701 = vunpack.c.l.b16 %v240
    %v702 = vunpack.c.h.b16 %v240
    %v703 = vunpack.c.l.b16 %v241
    %v704 = vunpack.c.h.b16 %v241
    %v705 = vunpack.c.l.b16 %v242
    %v706 = vunpack.c.h.b16 %v242
    %v707 = vunpack.c.l.b16 %v243
    %v708 = vunpack.c.h.b16 %v243
    %v709 = vunpack.c.l.b16 %v244
    %v710 = vunpack.c.h.b16 %v244
    %v711 = vunpack.c.l.b16 %v245
    %v712 = vunpack.c.h.b16 %v245
    %v713 = vunpack.c.l.b16 %v246
    %v714 = vunpack.c.h.b16 %v246
    %v715 = vunpack.c.l.b16 %v247
    %v716 = vunpack.c.h.b16 %v247
    %v717 = vunpack.c.l.b16 %v248
    %v718 = vunpack.c.h.b16 %v248
    %v719 = vunpack.c.l.b16 %v249
    %v720 = vunpack.c.h.b16 %v249
    %v721 = vunpack.c.l.b16 %v250
    %v722 = vunpack.c.h.b16 %v250
    %v723 = vunpack.c.l.b16 %v251
    %v724 = vunpack.c.h.b16 %v251
    %v725 = vunpack.c.l.b16 %v252
    %v726 = vunpack.c.h.b16 %v252
    %v727 = vunpack.c.l.b16 %v253
    %v728 = vunpack.c.h.b16 %v253
    %v729 = vunpack.c.l.b16 %v254
    %v730 = vunpack.c.h.b16 %v254
    %v731 = vunpack.c.l.b16 %v255
    %v732 = vunpack.c.h.b16 %v255
    %v733 = vunpack.c.l.b16 %v256
    %v734 = vunpack.c.h.b16 %v256
    %v735 = vunpack.c.l.b16 %v257
    %v736 = vunpack.c.h.b16 %v257
    %v737 = vunpack.c.l.b16 %v258
    %v738 = vunpack.c.h.b16 %v258
    %v739 = vunpack.c.l.b16 %v259
    %v740 = vunpack.c.h.b16 %v259
    %v741 = vunpack.c.l.b16 %v260
    %v742 = vunpack.c.h.b16 %v260
    %v743 = vunpack.c.l.b16 %v261
    %v744 = vunpack.c.h.b16 %v261
    %v745 = vunpack.c.l.b16 %v262
    %v746 = vunpack.c.h.b16 %v262
    %v747 = vunpack.c.l.b16 %v263
    %v748 = vunpack.c.h.b16 %v263
    %v749 = vunpack.c.l.b16 %v264
    %v750 = vunpack.c.h.b16 %v264
    %v751 = vunpack.c.l.b16 %v265
    %v752 = vunpack.c.h.b16 %v265
    %v753 = vunpack.c.l.b16 %v266
    %v754 = vunpack.c.h.b16 %v266
    %v755 = vunpack.c.l.b16 %v267
    %v756 = vunpack.c.h.b16 %v267
    %v757 = vunpack.c.l.b16 %v268
    %v758 = vunpack.c.h.b16 %v268
    %v759 = vunpack.c.l.b16 %v269
    %v760 = vunpack.c.h.b16 %v269
    %v761 = vunpack.c.l.b16 %v270
    %v762 = vunpack.c.h.b16 %v270
    %v763 = vunpack.c.l.b16 %v271
    %v764 = vunpack.c.h.b16 %v271
    %v765 = vunpack.c.l.b16 %v272
    %v766 = vunpack.c.h.b16 %v272
    %v767 = vunpack.c.l.b16 %v273
    %v768 = vunpack.c.h.b16 %v273
    %v769 = vunpack.c.l.b16 %v274
    %v770 = vunpack.c.h.b16 %v274
    %v771 = vunpack.c.l.b16 %v275
    %v772 = vunpack.c.h.b16 %v275
    %v773 = vunpack.c.l.b16 %v276
    %v774 = vunpack.c.h.b16 %v276
    %v775 = vunpack.c.l.b16 %v277
    %v776 = vunpack.c.h.b16 %v277
    %v777 = vunpack.c.l.b16 %v278
    %v778 = vunpack.c.h.b16 %v278
    %v779 = vunpack.c.l.b16 %v279
    %v780 = vunpack.c.h.b16 %v279
    %v781 = vunpack.c.l.b16 %v280
    %v782 = vunpack.c.h.b16 %v280
    %v783 = vunpack.c.l.b16 %v281
    %v784 = vunpack.c.h.b16 %v281
    %v785 = vunpack.c.l.b16 %v282
    %v786 = vunpack.c.h.b16 %v282
    %v787 = vunpack.c.l.b16 %v283
    %v788 = vunpack.c.h.b16 %v283
    %v789 = vunpack.c.l.b16 %v284
    %v790 = vunpack.c.h.b16 %v284
    %v791 = vunpack.c.l.b16 %v285
    %v792 = vunpack.c.h.b16 %v285
    %v793 = vunpack.c.l.b16 %v286
    %v794 = vunpack.c.h.b16 %v286
    %v795 = vunpack.c.l.b16 %v287
    %v796 = vunpack.c.h.b16 %v287
    %v797 = vunpack.c.l.b16 %v288
    %v798 = vunpack.c.h.b16 %v288
    %v799 = vunpack.c.l.b16 %v289
    %v800 = vunpack.c.h.b16 %v289
    %v801 = vunpack.c.l.b16 %v290
    %v802 = vunpack.c.h.b16 %v290
    %v803 = vunpack.c.l.b16 %v291
    %v804 = vunpack.c.h.b16 %v291
    %v805 = vunpack.c.l.b16 %v292
    %v806 = vunpack.c.h.b16 %v292
    %v807 = vunpack.c.l.b16 %v293
    %v808 = vunpack.c.h.b16 %v293
    %v809 = vunpack.c.l.b16 %v294
    %v810 = vunpack.c.h.b16 %v294
    %v811 = vunpack.c.l.b16 %v295
    %v812 = vunpack.c.h.b16 %v295
    %v813 = vpack.c.b16 %v561, %v557
    %v814 = vpack.c.b16 %v562, %v558
    %v815 = vpack.c.b16 %v563, %v559
    %v816 = vpack.c.b16 %v564, %v560
    %v817 = vpack.c.b16 %v569, %v565
    %v818 = vpack.c.b16 %v570, %v566
    %v819 = vpack.c.b16 %v571, %v567
    %v820 = vpack.c.b16 %v572, %v568
    %v821 = vpack.c.b16 %v577, %v573
    %v822 = vpack.c.b16 %v578, %v574
    %v823 = vpack.c.b16 %v579, %v575
    %v824 = vpack.c.b16 %v580, %v576
    %v825 = vpack.c.b16 %v585, %v581
    %v826 = vpack.c.b16 %v586, %v582
    %v827 = vpack.c.b16 %v587, %v583
    %v828 = vpack.c.b16 %v588, %v584
    %v829 = vpack.c.b16 %v593, %v589
    %v830 = vpack.c.b16 %v594, %v590
    %v831 = vpack.c.b16 %v595, %v591
    %v832 = vpack.c.b16 %v596, %v592
    %v833 = vpack.c.b16 %v601, %v597
    %v834 = vpack.c.b16 %v602, %v598
    %v835 = vpack.c.b16 %v603, %v599
    %v836 = vpack.c.b16 %v604, %v600
    %v837 = vpack.c.b16 %v609, %v605
    %v838 = vpack.c.b16 %v610, %v606
    %v839 = vpack.c.b16 %v611, %v607
    %v840 = vpack.c.b16 %v612, %v608
    %v841 = vpack.c.b16 %v617, %v613
    %v842 = vpack.c.b16 %v618, %v614
    %v843 = vpack.c.b16 %v619, %v615
    %v844 = vpack.c.b16 %v620, %v616
    %v845 = vpack.c.b16 %v625, %v621
    %v846 = vpack.c.b16 %v626, %v622
    %v847 = vpack.c.b16 %v627, %v623
    %v848 = vpack.c.b16 %v628, %v624
    %v849 = vpack.c.b16 %v633, %v629
    %v850 = vpack.c.b16 %v634, %v630
    %v851 = vpack.c.b16 %v635, %v631
    %v852 = vpack.c.b16 %v636, %v632
    %v853 = vpack.c.b16 %v641, %v637
    %v854 = vpack.c.b16 %v642, %v638
    %v855 = vpack.c.b16 %v643, %v639
    %v856 = vpack.c.b16 %v644, %v640
    %v857 = vpack.c.b16 %v649, %v645
    %v858 = vpack.c.b16 %v650, %v646
    %v859 = vpack.c.b16 %v651, %v647
    %v860 = vpack.c.b16 %v652, %v648
    %v861 = vpack.c.b16 %v657, %v653
    %v862 = vpack.c.b16 %v658, %v654
    %v863 = vpack.c.b16 %v659, %v655
    %v864 = vpack.c.b16 %v660, %v656
    %v865 = vpack.c.b16 %v665, %v661
    %v866 = vpack.c.b16 %v666, %v662
    %v867 = vpack.c.b16 %v667, %v663
    %v868 = vpack.c.b16 %v668, %v664
    %v869 = vpack.c.b16 %v673, %v669
    %v870 = vpack.c.b16 %v674, %v670
    %v871 = vpack.c.b16 %v675, %v671
    %v872 = vpack.c.b16 %v676, %v672
    %v873 = vpack.c.b16 %v681, %v677
    %v874 = vpack.c.b16 %v682, %v678
    %v875 = vpack.c.b16 %v683, %v679
    %v876 = vpack.c.b16 %v684, %v680
    %v877 = vpack.c.b16 %v689, %v685
    %v878 = vpack.c.b16 %v690, %v686
    %v879 = vpack.c.b16 %v691, %v687
    %v880 = vpack.c.b16 %v692, %v688
    %v881 = vpack.c.b16 %v697, %v693
    %v882 = vpack.c.b16 %v698, %v694
    %v883 = vpack.c.b16 %v699, %v695
    %v884 = vpack.c.b16 %v700, %v696
    %v885 = vpack.c.b16 %v705, %v701
    %v886 = vpack.c.b16 %v706, %v702
    %v887 = vpack.c.b16 %v707, %v703
    %v888 = vpack.c.b16 %v708, %v704
    %v889 = vpack.c.b16 %v713, %v709
    %v890 = vpack.c.b16 %v714, %v710
    %v891 = vpack.c.b16 %v715, %v711
    %v892 = vpack.c.b16 %v716, %v712
    %v893 = vpack.c.b16 %v721, %v717
    %v894 = vpack.c.b16 %v722, %v718
    %v895 = vpack.c.b16 %v723, %v719
    %v896 = vpack.c.b16 %v724, %v720
    %v897 = vpack.c.b16 %v729, %v725
    %v898 = vpack.c.b16 %v730, %v726
    %v899 = vpack.c.b16 %v731, %v727
    %v900 = vpack.c.b16 %v732, %v728
    %v901 = vpack.c.b16 %v737, %v733
    %v902 = vpack.c.b16 %v738, %v734
    %v903 = vpack.c.b16 %v739, %v735
    %v904 = vpack.c.b16 %v740, %v736
    %v905 = vpack.c.b16 %v745, %v741
    %v906 = vpack.c.b16 %v746, %v742
    %v907 = vpack.c.b16 %v747, %v743
    %v908 = vpack.c.b16 %v748, %v744
    %v909 = vpack.c.b16 %v753, %v749
    %v910 = vpack.c.b16 %v754, %v750
    %v911 = vpack.c.b16 %v755, %v751
    %v912 = vpack.c.b16 %v756, %v752
    %v913 = vpack.c.b16 %v761, %v757
    %v914 = vpack.c.b16 %v762, %v758
    %v915 = vpack.c.b16 %v763, %v759
    %v916 = vpack.c.b16 %v764, %v760
    %v917 = vpack.c.b16 %v769, %v765
    %v918 = vpack.c.b16 %v770, %v766
    %v919 = vpack.c.b16 %v771, %v767
    %v920 = vpack.c.b16 %v772, %v768
    %v921 = vpack.c.b16 %v777, %v773
    %v922 = vpack.c.b16 %v778, %v774
    %v923 = vpack.c.b16 %v779, %v775
    %v924 = vpack.c.b16 %v780, %v776
    %v925 = vpack.c.b16 %v785, %v781
    %v926 = vpack.c.b16 %v786, %v782
    %v927 = vpack.c.b16 %v787, %v783
    %v928 = vpack.c.b16 %v788, %v784
    %v929 = vpack.c.b16 %v793, %v789
    %v930 = vpack.c.b16 %v794, %v790
    %v931 = vpack.c.b16 %v795, %v791
    %v932 = vpack.c.b16 %v796, %v792
    %v933 = vpack.c.b16 %v801, %v797
    %v934 = vpack.c.b16 %v802, %v798
    %v935 = vpack.c.b16 %v803, %v799
    %v936 = vpack.c.b16 %v804, %v800
    %v937 = vpack.c.b16 %v809, %v805
    %v938 = vpack.c.b16 %v810, %v806
    %v939 = vpack.c.b16 %v811, %v807
    %v940 = vpack.c.b16 %v812, %v808
    %v1133 = vunpack.c.l.b16 %v301
    %v1134 = vunpack.c.l.b16 %v302
    %v1135 = vunpack.c.l.b16 %v303
    %v1136 = vunpack.c.l.b16 %v304
    %v1137 = vunpack.c.l.b16 %v305
    %v1138 = vunpack.c.l.b16 %v306
    %v1139 = vunpack.c.l.b16 %v307
    %v1140 = vunpack.c.l.b16 %v308
    %v1141 = vunpack.c.l.b16 %v309
    %v1142 = vunpack.c.l.b16 %v310
    %v1143 = vunpack.c.l.b16 %v311
    %v1144 = vunpack.c.l.b16 %v312
    %v1145 = vunpack.c.l.b16 %v313
    %v1146 = vunpack.c.l.b16 %v314
    %v1147 = vunpack.c.l.b16 %v315
    %v1148 = vunpack.c.l.b16 %v316
    %v1149 = vunpack.c.l.b16 %v317
    %v1150 = vunpack.c.l.b16 %v318
    %v1151 = vunpack.c.l.b16 %v319
    %v1152 = vunpack.c.l.b16 %v320
    %v1153 = vunpack.c.l.b16 %v321
    %v1154 = vunpack.c.l.b16 %v322
    %v1155 = vunpack.c.l.b16 %v323
    %v1156 = vunpack.c.l.b16 %v324
    %v1157 = vunpack.c.l.b16 %v325
    %v1158 = vunpack.c.l.b16 %v326
    %v1159 = vunpack.c.l.b16 %v327
    %v1160 = vunpack.c.l.b16 %v328
    %v1161 = vunpack.c.l.b16 %v329
    %v1162 = vunpack.c.l.b16 %v330
    %v1163 = vunpack.c.l.b16 %v331
    %v1164 = vunpack.c.l.b16 %v332
    %v1165 = vunpack.c.l.b16 %v333
    %v1166 = vunpack.c.l.b16 %v334
    %v1167 = vunpack.c.l.b16 %v335
    %v1168 = vunpack.c.l.b16 %v336
    %v1169 = vunpack.c.l.b16 %v337
    %v1170 = vunpack.c.l.b16 %v338
    %v1171 = vunpack.c.l.b16 %v339
    %v1172 = vunpack.c.l.b16 %v340
    %v1173 = vunpack.c.l.b16 %v341
    %v1174 = vunpack.c.l.b16 %v342
    %v1175 = vunpack.c.l.b16 %v343
    %v1176 = vunpack.c.l.b16 %v344
    %v1177 = vunpack.c.l.b16 %v345
    %v1178 = vunpack.c.l.b16 %v346
    %v1179 = vunpack.c.l.b16 %v347
    %v1180 = vunpack.c.l.b16 %v348
    %v1181 = vunpack.c.l.b16 %v349
    %v1182 = vunpack.c.l.b16 %v350
    %v1183 = vunpack.c.l.b16 %v351
    %v1184 = vunpack.c.l.b16 %v352
    %v1185 = vunpack.c.l.b16 %v353
    %v1186 = vunpack.c.l.b16 %v354
    %v1187 = vunpack.c.l.b16 %v355
    %v1188 = vunpack.c.l.b16 %v356
    %v1189 = vunpack.c.l.b16 %v357
    %v1190 = vunpack.c.l.b16 %v358
    %v1191 = vunpack.c.l.b16 %v359
    %v1192 = vunpack.c.l.b16 %v360
    %v1193 = vunpack.c.l.b16 %v361
    %v1194 = vunpack.c.l.b16 %v362
    %v1195 = vunpack.c.l.b16 %v363
    %v1196 = vunpack.c.l.b16 %v364
    %v1197 = vpack.c.b16 %v1134, %v1133
    %v1198 = vpack.c.b16 %v1136, %v1135
    %v1199 = vpack.c.b16 %v1138, %v1137
    %v1200 = vpack.c.b16 %v1140, %v1139
    %v1201 = vpack.c.b16 %v1142, %v1141
    %v1202 = vpack.c.b16 %v1144, %v1143
    %v1203 = vpack.c.b16 %v1146, %v1145
    %v1204 = vpack.c.b16 %v1148, %v1147
    %v1205 = vpack.c.b16 %v1150, %v1149
    %v1206 = vpack.c.b16 %v1152, %v1151
    %v1207 = vpack.c.b16 %v1154, %v1153
    %v1208 = vpack.c.b16 %v1156, %v1155
    %v1209 = vpack.c.b16 %v1158, %v1157
    %v1210 = vpack.c.b16 %v1160, %v1159
    %v1211 = vpack.c.b16 %v1162, %v1161
    %v1212 = vpack.c.b16 %v1164, %v1163
    %v1213 = vpack.c.b16 %v1166, %v1165
    %v1214 = vpack.c.b16 %v1168, %v1167
    %v1215 = vpack.c.b16 %v1170, %v1169
    %v1216 = vpack.c.b16 %v1172, %v1171
    %v1217 = vpack.c.b16 %v1174, %v1173
    %v1218 = vpack.c.b16 %v1176, %v1175
    %v1219 = vpack.c.b16 %v1178, %v1177
    %v1220 = vpack.c.b16 %v1180, %v1179
    %v1221 = vpack.c.b16 %v1182, %v1181
    %v1222 = vpack.c.b16 %v1184, %v1183
    %v1223 = vpack.c.b16 %v1186, %v1185
    %v1224 = vpack.c.b16 %v1188, %v1187
    %v1225 = vpack.c.b16 %v1190, %v1189
    %v1226 = vpack.c.b16 %v1192, %v1191
    %v1227 = vpack.c.b16 %v1194, %v1193
    %v1228 = vpack.c.b16 %v1196, %v1195
    %1261 = vmatprep.subr.bf16.mxu0 0
    %1262 = vmatpush1.bf16.msra.mxu0 %v1197
    %1263 = vmatprep.subr.bf16.mxu0 0
    %1264 = vmatpush1.bf16.msra.mxu0 %v1198
    %1265 = vmatprep.subr.bf16.mxu0 0
    %1266 = vmatpush1.bf16.msra.mxu0 %v1199
    %1267 = vmatprep.subr.bf16.mxu0 0
    %1268 = vmatpush1.bf16.msra.mxu0 %v1200
    %1269 = vmatprep.subr.bf16.mxu0 0
    %1270 = vmatpush1.bf16.msra.mxu0 %v1201
    %1271 = vmatprep.subr.bf16.mxu0 0
    %1272 = vmatpush1.bf16.msra.mxu0 %v1202
    %1273 = vmatprep.subr.bf16.mxu0 0
    %1274 = vmatpush1.bf16.msra.mxu0 %v1203
    %1275 = vmatprep.subr.bf16.mxu0 0
    %1276 = vmatpush1.bf16.msra.mxu0 %v1204
    %1277 = vmatprep.subr.bf16.mxu0 0
    %1278 = vmatpush1.bf16.msra.mxu0 %v1205
    %1279 = vmatprep.subr.bf16.mxu0 0
    %1280 = vmatpush1.bf16.msra.mxu0 %v1206
    %1281 = vmatprep.subr.bf16.mxu0 0
    %1282 = vmatpush1.bf16.msra.mxu0 %v1207
    %1283 = vmatprep.subr.bf16.mxu0 0
    %1284 = vmatpush1.bf16.msra.mxu0 %v1208
    %1285 = vmatprep.subr.bf16.mxu0 0
    %1286 = vmatpush1.bf16.msra.mxu0 %v1209
    %1287 = vmatprep.subr.bf16.mxu0 0
    %1288 = vmatpush1.bf16.msra.mxu0 %v1210
    %1289 = vmatprep.subr.bf16.mxu0 0
    %1290 = vmatpush1.bf16.msra.mxu0 %v1211
    %1291 = vmatprep.subr.bf16.mxu0 0
    %1292 = vmatpush1.bf16.msra.mxu0 %v1212
    %1293 = vmatprep.mubr.bf16.mxu0 %v814
    %1294 = vmatmul.mubr.bf16.gmra.mrb[0].mxu0 %v813
    %v1295 = vpop.f32.mrb[0].mxu0
    %v1296 = vadd.f32 0.0, %v1295
    %v1297 = vpop.f32.mrb[0].mxu0
    %v1298 = vpop.f32.mrb[0].mxu0
    %v1299 = vadd.f32 0.0, %v1298
    %v1300 = vpop.f32.mrb[0].mxu0
    %1301 = vmatprep.mubr.bf16.mxu0 %v818
    %1302 = vmatmul.mubr.bf16.gmra.mrb[0].mxu0 %v817
    %v1303 = vpop.f32.mrb[0].mxu0
    %v1304 = vadd.f32 0.0, %v1303
    %v1305 = vpop.f32.mrb[0].mxu0
    %v1306 = vpop.f32.mrb[0].mxu0
    %v1307 = vadd.f32 0.0, %v1306
    %v1308 = vpop.f32.mrb[0].mxu0
    %1309 = vmatprep.mubr.bf16.mxu0 %v822
    %1310 = vmatmul.mubr.bf16.gmra.mrb[0].mxu0 %v821
    %v1311 = vpop.f32.mrb[0].mxu0
    %v1312 = vadd.f32 0.0, %v1311
    %v1313 = vpop.f32.mrb[0].mxu0
    %v1314 = vpop.f32.mrb[0].mxu0
    %v1315 = vadd.f32 0.0, %v1314
    %v1316 = vpop.f32.mrb[0].mxu0
    %1317 = vmatprep.mubr.bf16.mxu0 %v826
    %1318 = vmatmul.mubr.bf16.gmra.mrb[0].mxu0 %v825
    %v1319 = vpop.f32.mrb[0].mxu0
    %v1320 = vadd.f32 0.0, %v1319
    %v1321 = vpop.f32.mrb[0].mxu0
    %v1322 = vpop.f32.mrb[0].mxu0
    %v1323 = vadd.f32 0.0, %v1322
    %v1324 = vpop.f32.mrb[0].mxu0
    %1325 = vmatprep.mubr.bf16.mxu0 %v830
    %1326 = vmatmul.mubr.bf16.gmra.mrb[0].mxu0 %v829
    %v1327 = vpop.f32.mrb[0].mxu0
    %v1328 = vadd.f32 0.0, %v1327
    %v1329 = vpop.f32.mrb[0].mxu0
    %v1330 = vpop.f32.mrb[0].mxu0
    %v1331 = vadd.f32 0.0, %v1330
    %v1332 = vpop.f32.mrb[0].mxu0
    %1333 = vmatprep.mubr.bf16.mxu0 %v834
    %1334 = vmatmul.mubr.bf16.gmra.mrb[0].mxu0 %v833
    %v1335 = vpop.f32.mrb[0].mxu0
    %v1336 = vadd.f32 0.0, %v1335
    %v1337 = vpop.f32.mrb[0].mxu0
    %v1338 = vpop.f32.mrb[0].mxu0
    %v1339 = vadd.f32 0.0, %v1338
    %v1340 = vpop.f32.mrb[0].mxu0
    %1341 = vmatprep.mubr.bf16.mxu0 %v838
    %1342 = vmatmul.mubr.bf16.gmra.mrb[0].mxu0 %v837
    %v1343 = vpop.f32.mrb[0].mxu0
    %v1344 = vadd.f32 0.0, %v1343
    %v1345 = vpop.f32.mrb[0].mxu0
    %v1346 = vpop.f32.mrb[0].mxu0
    %v1347 = vadd.f32 0.0, %v1346
    %v1348 = vpop.f32.mrb[0].mxu0
    %1349 = vmatprep.mubr.bf16.mxu0 %v842
    %1350 = vmatmul.mubr.bf16.gmra.mrb[0].mxu0 %v841
    %v1351 = vpop.f32.mrb[0].mxu0
    %v1352 = vadd.f32 0.0, %v1351
    %v1353 = vpop.f32.mrb[0].mxu0
    %v1354 = vpop.f32.mrb[0].mxu0
    %v1355 = vadd.f32 0.0, %v1354
    %v1356 = vpop.f32.mrb[0].mxu0
    %1357 = vmatprep.mubr.bf16.mxu0 %v846
    %1358 = vmatmul.mubr.bf16.gmra.mrb[0].mxu0 %v845
    %v1359 = vpop.f32.mrb[0].mxu0
    %v1360 = vadd.f32 0.0, %v1359
    %v1361 = vpop.f32.mrb[0].mxu0
    %v1362 = vpop.f32.mrb[0].mxu0
    %v1363 = vadd.f32 0.0, %v1362
    %v1364 = vpop.f32.mrb[0].mxu0
    %1365 = vmatprep.mubr.bf16.mxu0 %v850
    %1366 = vmatmul.mubr.bf16.gmra.mrb[0].mxu0 %v849
    %v1367 = vpop.f32.mrb[0].mxu0
    %v1368 = vadd.f32 0.0, %v1367
    %v1369 = vpop.f32.mrb[0].mxu0
    %v1370 = vpop.f32.mrb[0].mxu0
    %v1371 = vadd.f32 0.0, %v1370
    %v1372 = vpop.f32.mrb[0].mxu0
    %1373 = vmatprep.mubr.bf16.mxu0 %v854
    %1374 = vmatmul.mubr.bf16.gmra.mrb[0].mxu0 %v853
    %v1375 = vpop.f32.mrb[0].mxu0
    %v1376 = vadd.f32 0.0, %v1375
    %v1377 = vpop.f32.mrb[0].mxu0
    %v1378 = vpop.f32.mrb[0].mxu0
    %v1379 = vadd.f32 0.0, %v1378
    %v1380 = vpop.f32.mrb[0].mxu0
    %1381 = vmatprep.mubr.bf16.mxu0 %v858
    %1382 = vmatmul.mubr.bf16.gmra.mrb[0].mxu0 %v857
    %v1383 = vpop.f32.mrb[0].mxu0
    %v1384 = vadd.f32 0.0, %v1383
    %v1385 = vpop.f32.mrb[0].mxu0
    %v1386 = vpop.f32.mrb[0].mxu0
    %v1387 = vadd.f32 0.0, %v1386
    %v1388 = vpop.f32.mrb[0].mxu0
    %1389 = vmatprep.mubr.bf16.mxu0 %v862
    %1390 = vmatmul.mubr.bf16.gmra.mrb[0].mxu0 %v861
    %v1391 = vpop.f32.mrb[0].mxu0
    %v1392 = vadd.f32 0.0, %v1391
    %v1393 = vpop.f32.mrb[0].mxu0
    %v1394 = vpop.f32.mrb[0].mxu0
    %v1395 = vadd.f32 0.0, %v1394
    %v1396 = vpop.f32.mrb[0].mxu0
    %1397 = vmatprep.mubr.bf16.mxu0 %v866
    %1398 = vmatmul.mubr.bf16.gmra.mrb[0].mxu0 %v865
    %v1399 = vpop.f32.mrb[0].mxu0
    %v1400 = vadd.f32 0.0, %v1399
    %v1401 = vpop.f32.mrb[0].mxu0
    %v1402 = vpop.f32.mrb[0].mxu0
    %v1403 = vadd.f32 0.0, %v1402
    %v1404 = vpop.f32.mrb[0].mxu0
    %1405 = vmatprep.mubr.bf16.mxu0 %v870
    %1406 = vmatmul.mubr.bf16.gmra.mrb[0].mxu0 %v869
    %v1407 = vpop.f32.mrb[0].mxu0
    %v1408 = vadd.f32 0.0, %v1407
    %v1409 = vpop.f32.mrb[0].mxu0
    %v1410 = vpop.f32.mrb[0].mxu0
    %v1411 = vadd.f32 0.0, %v1410
    %v1412 = vpop.f32.mrb[0].mxu0
    %1413 = vmatprep.mubr.bf16.mxu0 %v874
    %1414 = vmatmul.mubr.bf16.gmra.mrb[0].mxu0 %v873
    %v1415 = vpop.f32.mrb[0].mxu0
    %v1416 = vadd.f32 0.0, %v1415
    %v1417 = vpop.f32.mrb[0].mxu0
    %v1418 = vpop.f32.mrb[0].mxu0
    %v1419 = vadd.f32 0.0, %v1418
    %v1420 = vpop.f32.mrb[0].mxu0
    %1421 = vmatprep.mubr.bf16.mxu0 %v878
    %1422 = vmatmul.mubr.bf16.gmra.mrb[0].mxu0 %v877
    %v1423 = vpop.f32.mrb[0].mxu0
    %v1424 = vadd.f32 0.0, %v1423
    %v1425 = vpop.f32.mrb[0].mxu0
    %v1426 = vpop.f32.mrb[0].mxu0
    %v1427 = vadd.f32 0.0, %v1426
    %v1428 = vpop.f32.mrb[0].mxu0
    %1429 = vmatprep.mubr.bf16.mxu0 %v882
    %1430 = vmatmul.mubr.bf16.gmra.mrb[0].mxu0 %v881
    %v1431 = vpop.f32.mrb[0].mxu0
    %v1432 = vadd.f32 0.0, %v1431
    %v1433 = vpop.f32.mrb[0].mxu0
    %v1434 = vpop.f32.mrb[0].mxu0
    %v1435 = vadd.f32 0.0, %v1434
    %v1436 = vpop.f32.mrb[0].mxu0
    %1437 = vmatprep.mubr.bf16.mxu0 %v886
    %1438 = vmatmul.mubr.bf16.gmra.mrb[0].mxu0 %v885
    %v1439 = vpop.f32.mrb[0].mxu0
    %v1440 = vadd.f32 0.0, %v1439
    %v1441 = vpop.f32.mrb[0].mxu0
    %v1442 = vpop.f32.mrb[0].mxu0
    %v1443 = vadd.f32 0.0, %v1442
    %v1444 = vpop.f32.mrb[0].mxu0
    %1445 = vmatprep.mubr.bf16.mxu0 %v890
    %1446 = vmatmul.mubr.bf16.gmra.mrb[0].mxu0 %v889
    %v1447 = vpop.f32.mrb[0].mxu0
    %v1448 = vadd.f32 0.0, %v1447
    %v1449 = vpop.f32.mrb[0].mxu0
    %v1450 = vpop.f32.mrb[0].mxu0
    %v1451 = vadd.f32 0.0, %v1450
    %v1452 = vpop.f32.mrb[0].mxu0
    %1453 = vmatprep.mubr.bf16.mxu0 %v894
    %1454 = vmatmul.mubr.bf16.gmra.mrb[0].mxu0 %v893
    %v1455 = vpop.f32.mrb[0].mxu0
    %v1456 = vadd.f32 0.0, %v1455
    %v1457 = vpop.f32.mrb[0].mxu0
    %v1458 = vpop.f32.mrb[0].mxu0
    %v1459 = vadd.f32 0.0, %v1458
    %v1460 = vpop.f32.mrb[0].mxu0
    %1461 = vmatprep.mubr.bf16.mxu0 %v898
    %1462 = vmatmul.mubr.bf16.gmra.mrb[0].mxu0 %v897
    %v1463 = vpop.f32.mrb[0].mxu0
    %v1464 = vadd.f32 0.0, %v1463
    %v1465 = vpop.f32.mrb[0].mxu0
    %v1466 = vpop.f32.mrb[0].mxu0
    %v1467 = vadd.f32 0.0, %v1466
    %v1468 = vpop.f32.mrb[0].mxu0
    %1469 = vmatprep.mubr.bf16.mxu0 %v902
    %1470 = vmatmul.mubr.bf16.gmra.mrb[0].mxu0 %v901
    %v1471 = vpop.f32.mrb[0].mxu0
    %v1472 = vadd.f32 0.0, %v1471
    %v1473 = vpop.f32.mrb[0].mxu0
    %v1474 = vpop.f32.mrb[0].mxu0
    %v1475 = vadd.f32 0.0, %v1474
    %v1476 = vpop.f32.mrb[0].mxu0
    %1477 = vmatprep.mubr.bf16.mxu0 %v906
    %1478 = vmatmul.mubr.bf16.gmra.mrb[0].mxu0 %v905
    %v1479 = vpop.f32.mrb[0].mxu0
    %v1480 = vadd.f32 0.0, %v1479
    %v1481 = vpop.f32.mrb[0].mxu0
    %v1482 = vpop.f32.mrb[0].mxu0
    %v1483 = vadd.f32 0.0, %v1482
    %v1484 = vpop.f32.mrb[0].mxu0
    %1485 = vmatprep.mubr.bf16.mxu0 %v910
    %1486 = vmatmul.mubr.bf16.gmra.mrb[0].mxu0 %v909
    %v1487 = vpop.f32.mrb[0].mxu0
    %v1488 = vadd.f32 0.0, %v1487
    %v1489 = vpop.f32.mrb[0].mxu0
    %v1490 = vpop.f32.mrb[0].mxu0
    %v1491 = vadd.f32 0.0, %v1490
    %v1492 = vpop.f32.mrb[0].mxu0
    %1493 = vmatprep.mubr.bf16.mxu0 %v914
    %1494 = vmatmul.mubr.bf16.gmra.mrb[0].mxu0 %v913
    %v1495 = vpop.f32.mrb[0].mxu0
    %v1496 = vadd.f32 0.0, %v1495
    %v1497 = vpop.f32.mrb[0].mxu0
    %v1498 = vpop.f32.mrb[0].mxu0
    %v1499 = vadd.f32 0.0, %v1498
    %v1500 = vpop.f32.mrb[0].mxu0
    %1501 = vmatprep.mubr.bf16.mxu0 %v918
    %1502 = vmatmul.mubr.bf16.gmra.mrb[0].mxu0 %v917
    %v1503 = vpop.f32.mrb[0].mxu0
    %v1504 = vadd.f32 0.0, %v1503
    %v1505 = vpop.f32.mrb[0].mxu0
    %v1506 = vpop.f32.mrb[0].mxu0
    %v1507 = vadd.f32 0.0, %v1506
    %v1508 = vpop.f32.mrb[0].mxu0
    %1509 = vmatprep.mubr.bf16.mxu0 %v922
    %1510 = vmatmul.mubr.bf16.gmra.mrb[0].mxu0 %v921
    %v1511 = vpop.f32.mrb[0].mxu0
    %v1512 = vadd.f32 0.0, %v1511
    %v1513 = vpop.f32.mrb[0].mxu0
    %v1514 = vpop.f32.mrb[0].mxu0
    %v1515 = vadd.f32 0.0, %v1514
    %v1516 = vpop.f32.mrb[0].mxu0
    %1517 = vmatprep.mubr.bf16.mxu0 %v926
    %1518 = vmatmul.mubr.bf16.gmra.mrb[0].mxu0 %v925
    %v1519 = vpop.f32.mrb[0].mxu0
    %v1520 = vadd.f32 0.0, %v1519
    %v1521 = vpop.f32.mrb[0].mxu0
    %v1522 = vpop.f32.mrb[0].mxu0
    %v1523 = vadd.f32 0.0, %v1522
    %v1524 = vpop.f32.mrb[0].mxu0
    %1525 = vmatprep.mubr.bf16.mxu0 %v930
    %1526 = vmatmul.mubr.bf16.gmra.mrb[0].mxu0 %v929
    %v1527 = vpop.f32.mrb[0].mxu0
    %v1528 = vadd.f32 0.0, %v1527
    %v1529 = vpop.f32.mrb[0].mxu0
    %v1530 = vpop.f32.mrb[0].mxu0
    %v1531 = vadd.f32 0.0, %v1530
    %v1532 = vpop.f32.mrb[0].mxu0
    %1533 = vmatprep.mubr.bf16.mxu0 %v934
    %1534 = vmatmul.mubr.bf16.gmra.mrb[0].mxu0 %v933
    %v1535 = vpop.f32.mrb[0].mxu0
    %v1536 = vadd.f32 0.0, %v1535
    %v1537 = vpop.f32.mrb[0].mxu0
    %v1538 = vpop.f32.mrb[0].mxu0
    %v1539 = vadd.f32 0.0, %v1538
    %v1540 = vpop.f32.mrb[0].mxu0
    %1541 = vmatprep.mubr.bf16.mxu0 %v938
    %1542 = vmatmul.mubr.bf16.gmra.mrb[0].mxu0 %v937
    %v1543 = vpop.f32.mrb[0].mxu0
    %v1544 = vadd.f32 0.0, %v1543
    %v1545 = vpop.f32.mrb[0].mxu0
    %v1546 = vpop.f32.mrb[0].mxu0
    %v1547 = vadd.f32 0.0, %v1546
    %v1548 = vpop.f32.mrb[0].mxu0
    %1549 = vdwg.mxu0
    %1550 = vmatprep.subr.bf16.mxu0 0
    %1551 = vmatpush1.bf16.msra.mxu0 %v1213
    %1552 = vmatprep.subr.bf16.mxu0 0
    %1553 = vmatpush1.bf16.msra.mxu0 %v1214
    %1554 = vmatprep.subr.bf16.mxu0 0
    %1555 = vmatpush1.bf16.msra.mxu0 %v1215
    %1556 = vmatprep.subr.bf16.mxu0 0
    %1557 = vmatpush1.bf16.msra.mxu0 %v1216
    %1558 = vmatprep.subr.bf16.mxu0 0
    %1559 = vmatpush1.bf16.msra.mxu0 %v1217
    %1560 = vmatprep.subr.bf16.mxu0 0
    %1561 = vmatpush1.bf16.msra.mxu0 %v1218
    %1562 = vmatprep.subr.bf16.mxu0 0
    %1563 = vmatpush1.bf16.msra.mxu0 %v1219
    %1564 = vmatprep.subr.bf16.mxu0 0
    %1565 = vmatpush1.bf16.msra.mxu0 %v1220
    %1566 = vmatprep.subr.bf16.mxu0 0
    %1567 = vmatpush1.bf16.msra.mxu0 %v1221
    %1568 = vmatprep.subr.bf16.mxu0 0
    %1569 = vmatpush1.bf16.msra.mxu0 %v1222
    %1570 = vmatprep.subr.bf16.mxu0 0
    %1571 = vmatpush1.bf16.msra.mxu0 %v1223
    %1572 = vmatprep.subr.bf16.mxu0 0
    %1573 = vmatpush1.bf16.msra.mxu0 %v1224
    %1574 = vmatprep.subr.bf16.mxu0 0
    %1575 = vmatpush1.bf16.msra.mxu0 %v1225
    %1576 = vmatprep.subr.bf16.mxu0 0
    %1577 = vmatpush1.bf16.msra.mxu0 %v1226
    %1578 = vmatprep.subr.bf16.mxu0 0
    %1579 = vmatpush1.bf16.msra.mxu0 %v1227
    %1580 = vmatprep.subr.bf16.mxu0 0
    %1581 = vmatpush1.bf16.msra.mxu0 %v1228
    %1582 = vmatprep.mubr.bf16.mxu0 %v816
    %1583 = vmatmul.mubr.bf16.gmra.mrb[0].mxu0 %v815
    %v1584 = vpop.f32.mrb[0].mxu0
    %v1585 = vadd.f32 %v1296, %v1584
    %v1586 = vpop.f32.mrb[0].mxu0
    %v1587 = vpop.f32.mrb[0].mxu0
    %v1588 = vadd.f32 %v1299, %v1587
    %v1589 = vpop.f32.mrb[0].mxu0
    %1590 = vmatprep.mubr.bf16.mxu0 %v820
    %1591 = vmatmul.mubr.bf16.gmra.mrb[0].mxu0 %v819
    %v1592 = vpop.f32.mrb[0].mxu0
    %v1593 = vadd.f32 %v1304, %v1592
    %v1594 = vpop.f32.mrb[0].mxu0
    %v1595 = vpop.f32.mrb[0].mxu0
    %v1596 = vadd.f32 %v1307, %v1595
    %v1597 = vpop.f32.mrb[0].mxu0
    %1598 = vmatprep.mubr.bf16.mxu0 %v824
    %1599 = vmatmul.mubr.bf16.gmra.mrb[0].mxu0 %v823
    %v1600 = vpop.f32.mrb[0].mxu0
    %v1601 = vadd.f32 %v1312, %v1600
    %v1602 = vpop.f32.mrb[0].mxu0
    %v1603 = vpop.f32.mrb[0].mxu0
    %v1604 = vadd.f32 %v1315, %v1603
    %v1605 = vpop.f32.mrb[0].mxu0
    %1606 = vmatprep.mubr.bf16.mxu0 %v828
    %1607 = vmatmul.mubr.bf16.gmra.mrb[0].mxu0 %v827
    %v1608 = vpop.f32.mrb[0].mxu0
    %v1609 = vadd.f32 %v1320, %v1608
    %v1610 = vpop.f32.mrb[0].mxu0
    %v1611 = vpop.f32.mrb[0].mxu0
    %v1612 = vadd.f32 %v1323, %v1611
    %v1613 = vpop.f32.mrb[0].mxu0
    %1614 = vmatprep.mubr.bf16.mxu0 %v832
    %1615 = vmatmul.mubr.bf16.gmra.mrb[0].mxu0 %v831
    %v1616 = vpop.f32.mrb[0].mxu0
    %v1617 = vadd.f32 %v1328, %v1616
    %v1618 = vpop.f32.mrb[0].mxu0
    %v1619 = vpop.f32.mrb[0].mxu0
    %v1620 = vadd.f32 %v1331, %v1619
    %v1621 = vpop.f32.mrb[0].mxu0
    %1622 = vmatprep.mubr.bf16.mxu0 %v836
    %1623 = vmatmul.mubr.bf16.gmra.mrb[0].mxu0 %v835
    %v1624 = vpop.f32.mrb[0].mxu0
    %v1625 = vadd.f32 %v1336, %v1624
    %v1626 = vpop.f32.mrb[0].mxu0
    %v1627 = vpop.f32.mrb[0].mxu0
    %v1628 = vadd.f32 %v1339, %v1627
    %v1629 = vpop.f32.mrb[0].mxu0
    %1630 = vmatprep.mubr.bf16.mxu0 %v840
    %1631 = vmatmul.mubr.bf16.gmra.mrb[0].mxu0 %v839
    %v1632 = vpop.f32.mrb[0].mxu0
    %v1633 = vadd.f32 %v1344, %v1632
    %v1634 = vpop.f32.mrb[0].mxu0
    %v1635 = vpop.f32.mrb[0].mxu0
    %v1636 = vadd.f32 %v1347, %v1635
    %v1637 = vpop.f32.mrb[0].mxu0
    %1638 = vmatprep.mubr.bf16.mxu0 %v844
    %1639 = vmatmul.mubr.bf16.gmra.mrb[0].mxu0 %v843
    %v1640 = vpop.f32.mrb[0].mxu0
    %v1641 = vadd.f32 %v1352, %v1640
    %v1642 = vpop.f32.mrb[0].mxu0
    %v1643 = vpop.f32.mrb[0].mxu0
    %v1644 = vadd.f32 %v1355, %v1643
    %v1645 = vpop.f32.mrb[0].mxu0
    %1646 = vmatprep.mubr.bf16.mxu0 %v848
    %1647 = vmatmul.mubr.bf16.gmra.mrb[0].mxu0 %v847
    %v1648 = vpop.f32.mrb[0].mxu0
    %v1649 = vadd.f32 %v1360, %v1648
    %v1650 = vpop.f32.mrb[0].mxu0
    %v1651 = vpop.f32.mrb[0].mxu0
    %v1652 = vadd.f32 %v1363, %v1651
    %v1653 = vpop.f32.mrb[0].mxu0
    %1654 = vmatprep.mubr.bf16.mxu0 %v852
    %1655 = vmatmul.mubr.bf16.gmra.mrb[0].mxu0 %v851
    %v1656 = vpop.f32.mrb[0].mxu0
    %v1657 = vadd.f32 %v1368, %v1656
    %v1658 = vpop.f32.mrb[0].mxu0
    %v1659 = vpop.f32.mrb[0].mxu0
    %v1660 = vadd.f32 %v1371, %v1659
    %v1661 = vpop.f32.mrb[0].mxu0
    %1662 = vmatprep.mubr.bf16.mxu0 %v856
    %1663 = vmatmul.mubr.bf16.gmra.mrb[0].mxu0 %v855
    %v1664 = vpop.f32.mrb[0].mxu0
    %v1665 = vadd.f32 %v1376, %v1664
    %v1666 = vpop.f32.mrb[0].mxu0
    %v1667 = vpop.f32.mrb[0].mxu0
    %v1668 = vadd.f32 %v1379, %v1667
    %v1669 = vpop.f32.mrb[0].mxu0
    %1670 = vmatprep.mubr.bf16.mxu0 %v860
    %1671 = vmatmul.mubr.bf16.gmra.mrb[0].mxu0 %v859
    %v1672 = vpop.f32.mrb[0].mxu0
    %v1673 = vadd.f32 %v1384, %v1672
    %v1674 = vpop.f32.mrb[0].mxu0
    %v1675 = vpop.f32.mrb[0].mxu0
    %v1676 = vadd.f32 %v1387, %v1675
    %v1677 = vpop.f32.mrb[0].mxu0
    %1678 = vmatprep.mubr.bf16.mxu0 %v864
    %1679 = vmatmul.mubr.bf16.gmra.mrb[0].mxu0 %v863
    %v1680 = vpop.f32.mrb[0].mxu0
    %v1681 = vadd.f32 %v1392, %v1680
    %v1682 = vpop.f32.mrb[0].mxu0
    %v1683 = vpop.f32.mrb[0].mxu0
    %v1684 = vadd.f32 %v1395, %v1683
    %v1685 = vpop.f32.mrb[0].mxu0
    %1686 = vmatprep.mubr.bf16.mxu0 %v868
    %1687 = vmatmul.mubr.bf16.gmra.mrb[0].mxu0 %v867
    %v1688 = vpop.f32.mrb[0].mxu0
    %v1689 = vadd.f32 %v1400, %v1688
    %v1690 = vpop.f32.mrb[0].mxu0
    %v1691 = vpop.f32.mrb[0].mxu0
    %v1692 = vadd.f32 %v1403, %v1691
    %v1693 = vpop.f32.mrb[0].mxu0
    %1694 = vmatprep.mubr.bf16.mxu0 %v872
    %1695 = vmatmul.mubr.bf16.gmra.mrb[0].mxu0 %v871
    %v1696 = vpop.f32.mrb[0].mxu0
    %v1697 = vadd.f32 %v1408, %v1696
    %v1698 = vpop.f32.mrb[0].mxu0
    %v1699 = vpop.f32.mrb[0].mxu0
    %v1700 = vadd.f32 %v1411, %v1699
    %v1701 = vpop.f32.mrb[0].mxu0
    %1702 = vmatprep.mubr.bf16.mxu0 %v876
    %1703 = vmatmul.mubr.bf16.gmra.mrb[0].mxu0 %v875
    %v1704 = vpop.f32.mrb[0].mxu0
    %v1705 = vadd.f32 %v1416, %v1704
    %v1706 = vpop.f32.mrb[0].mxu0
    %v1707 = vpop.f32.mrb[0].mxu0
    %v1708 = vadd.f32 %v1419, %v1707
    %v1709 = vpop.f32.mrb[0].mxu0
    %1710 = vmatprep.mubr.bf16.mxu0 %v880
    %1711 = vmatmul.mubr.bf16.gmra.mrb[0].mxu0 %v879
    %v1712 = vpop.f32.mrb[0].mxu0
    %v1713 = vadd.f32 %v1424, %v1712
    %v1714 = vpop.f32.mrb[0].mxu0
    %v1715 = vpop.f32.mrb[0].mxu0
    %v1716 = vadd.f32 %v1427, %v1715
    %v1717 = vpop.f32.mrb[0].mxu0
    %1718 = vmatprep.mubr.bf16.mxu0 %v884
    %1719 = vmatmul.mubr.bf16.gmra.mrb[0].mxu0 %v883
    %v1720 = vpop.f32.mrb[0].mxu0
    %v1721 = vadd.f32 %v1432, %v1720
    %v1722 = vpop.f32.mrb[0].mxu0
    %v1723 = vpop.f32.mrb[0].mxu0
    %v1724 = vadd.f32 %v1435, %v1723
    %v1725 = vpop.f32.mrb[0].mxu0
    %1726 = vmatprep.mubr.bf16.mxu0 %v888
    %1727 = vmatmul.mubr.bf16.gmra.mrb[0].mxu0 %v887
    %v1728 = vpop.f32.mrb[0].mxu0
    %v1729 = vadd.f32 %v1440, %v1728
    %v1730 = vpop.f32.mrb[0].mxu0
    %v1731 = vpop.f32.mrb[0].mxu0
    %v1732 = vadd.f32 %v1443, %v1731
    %v1733 = vpop.f32.mrb[0].mxu0
    %1734 = vmatprep.mubr.bf16.mxu0 %v892
    %1735 = vmatmul.mubr.bf16.gmra.mrb[0].mxu0 %v891
    %v1736 = vpop.f32.mrb[0].mxu0
    %v1737 = vadd.f32 %v1448, %v1736
    %v1738 = vpop.f32.mrb[0].mxu0
    %v1739 = vpop.f32.mrb[0].mxu0
    %v1740 = vadd.f32 %v1451, %v1739
    %v1741 = vpop.f32.mrb[0].mxu0
    %1742 = vmatprep.mubr.bf16.mxu0 %v896
    %1743 = vmatmul.mubr.bf16.gmra.mrb[0].mxu0 %v895
    %v1744 = vpop.f32.mrb[0].mxu0
    %v1745 = vadd.f32 %v1456, %v1744
    %v1746 = vpop.f32.mrb[0].mxu0
    %v1747 = vpop.f32.mrb[0].mxu0
    %v1748 = vadd.f32 %v1459, %v1747
    %v1749 = vpop.f32.mrb[0].mxu0
    %1750 = vmatprep.mubr.bf16.mxu0 %v900
    %1751 = vmatmul.mubr.bf16.gmra.mrb[0].mxu0 %v899
    %v1752 = vpop.f32.mrb[0].mxu0
    %v1753 = vadd.f32 %v1464, %v1752
    %v1754 = vpop.f32.mrb[0].mxu0
    %v1755 = vpop.f32.mrb[0].mxu0
    %v1756 = vadd.f32 %v1467, %v1755
    %v1757 = vpop.f32.mrb[0].mxu0
    %1758 = vmatprep.mubr.bf16.mxu0 %v904
    %1759 = vmatmul.mubr.bf16.gmra.mrb[0].mxu0 %v903
    %v1760 = vpop.f32.mrb[0].mxu0
    %v1761 = vadd.f32 %v1472, %v1760
    %v1762 = vpop.f32.mrb[0].mxu0
    %v1763 = vpop.f32.mrb[0].mxu0
    %v1764 = vadd.f32 %v1475, %v1763
    %v1765 = vpop.f32.mrb[0].mxu0
    %1766 = vmatprep.mubr.bf16.mxu0 %v908
    %1767 = vmatmul.mubr.bf16.gmra.mrb[0].mxu0 %v907
    %v1768 = vpop.f32.mrb[0].mxu0
    %v1769 = vadd.f32 %v1480, %v1768
    %v1770 = vpop.f32.mrb[0].mxu0
    %v1771 = vpop.f32.mrb[0].mxu0
    %v1772 = vadd.f32 %v1483, %v1771
    %v1773 = vpop.f32.mrb[0].mxu0
    %1774 = vmatprep.mubr.bf16.mxu0 %v912
    %1775 = vmatmul.mubr.bf16.gmra.mrb[0].mxu0 %v911
    %v1776 = vpop.f32.mrb[0].mxu0
    %v1777 = vadd.f32 %v1488, %v1776
    %v1778 = vpop.f32.mrb[0].mxu0
    %v1779 = vpop.f32.mrb[0].mxu0
    %v1780 = vadd.f32 %v1491, %v1779
    %v1781 = vpop.f32.mrb[0].mxu0
    %1782 = vmatprep.mubr.bf16.mxu0 %v916
    %1783 = vmatmul.mubr.bf16.gmra.mrb[0].mxu0 %v915
    %v1784 = vpop.f32.mrb[0].mxu0
    %v1785 = vadd.f32 %v1496, %v1784
    %v1786 = vpop.f32.mrb[0].mxu0
    %v1787 = vpop.f32.mrb[0].mxu0
    %v1788 = vadd.f32 %v1499, %v1787
    %v1789 = vpop.f32.mrb[0].mxu0
    %1790 = vmatprep.mubr.bf16.mxu0 %v920
    %1791 = vmatmul.mubr.bf16.gmra.mrb[0].mxu0 %v919
    %v1792 = vpop.f32.mrb[0].mxu0
    %v1793 = vadd.f32 %v1504, %v1792
    %v1794 = vpop.f32.mrb[0].mxu0
    %v1795 = vpop.f32.mrb[0].mxu0
    %v1796 = vadd.f32 %v1507, %v1795
    %v1797 = vpop.f32.mrb[0].mxu0
    %1798 = vmatprep.mubr.bf16.mxu0 %v924
    %1799 = vmatmul.mubr.bf16.gmra.mrb[0].mxu0 %v923
    %v1800 = vpop.f32.mrb[0].mxu0
    %v1801 = vadd.f32 %v1512, %v1800
    %v1802 = vpop.f32.mrb[0].mxu0
    %v1803 = vpop.f32.mrb[0].mxu0
    %v1804 = vadd.f32 %v1515, %v1803
    %v1805 = vpop.f32.mrb[0].mxu0
    %1806 = vmatprep.mubr.bf16.mxu0 %v928
    %1807 = vmatmul.mubr.bf16.gmra.mrb[0].mxu0 %v927
    %v1808 = vpop.f32.mrb[0].mxu0
    %v1809 = vadd.f32 %v1520, %v1808
    %v1810 = vpop.f32.mrb[0].mxu0
    %v1811 = vpop.f32.mrb[0].mxu0
    %v1812 = vadd.f32 %v1523, %v1811
    %v1813 = vpop.f32.mrb[0].mxu0
    %1814 = vmatprep.mubr.bf16.mxu0 %v932
    %1815 = vmatmul.mubr.bf16.gmra.mrb[0].mxu0 %v931
    %v1816 = vpop.f32.mrb[0].mxu0
    %v1817 = vadd.f32 %v1528, %v1816
    %v1818 = vpop.f32.mrb[0].mxu0
    %v1819 = vpop.f32.mrb[0].mxu0
    %v1820 = vadd.f32 %v1531, %v1819
    %v1821 = vpop.f32.mrb[0].mxu0
    %1822 = vmatprep.mubr.bf16.mxu0 %v936
    %1823 = vmatmul.mubr.bf16.gmra.mrb[0].mxu0 %v935
    %v1824 = vpop.f32.mrb[0].mxu0
    %v1825 = vadd.f32 %v1536, %v1824
    %v1826 = vpop.f32.mrb[0].mxu0
    %v1827 = vpop.f32.mrb[0].mxu0
    %v1828 = vadd.f32 %v1539, %v1827
    %v1829 = vpop.f32.mrb[0].mxu0
    %1830 = vmatprep.mubr.bf16.mxu0 %v940
    %1831 = vmatmul.mubr.bf16.gmra.mrb[0].mxu0 %v939
    %v1832 = vpop.f32.mrb[0].mxu0
    %v1833 = vadd.f32 %v1544, %v1832
    %v1834 = vpop.f32.mrb[0].mxu0
    %v1835 = vpop.f32.mrb[0].mxu0
    %v1836 = vadd.f32 %v1547, %v1835
    %v1837 = vpop.f32.mrb[0].mxu0
    %1838 = vdwg.mxu0
    %v1839 = vadd.f32 %v365, %v1585
    %v1840 = vadd.f32 %v366, %v1588
    %v1841 = vadd.f32 %v367, %v1593
    %v1842 = vadd.f32 %v368, %v1596
    %v1843 = vadd.f32 %v369, %v1601
    %v1844 = vadd.f32 %v370, %v1604
    %v1845 = vadd.f32 %v371, %v1609
    %v1846 = vadd.f32 %v372, %v1612
    %v1847 = vadd.f32 %v373, %v1617
    %v1848 = vadd.f32 %v374, %v1620
    %v1849 = vadd.f32 %v375, %v1625
    %v1850 = vadd.f32 %v376, %v1628
    %v1851 = vadd.f32 %v377, %v1633
    %v1852 = vadd.f32 %v378, %v1636
    %v1853 = vadd.f32 %v379, %v1641
    %v1854 = vadd.f32 %v380, %v1644
    %v1855 = vadd.f32 %v381, %v1649
    %v1856 = vadd.f32 %v382, %v1652
    %v1857 = vadd.f32 %v383, %v1657
    %v1858 = vadd.f32 %v384, %v1660
    %v1859 = vadd.f32 %v385, %v1665
    %v1860 = vadd.f32 %v386, %v1668
    %v1861 = vadd.f32 %v387, %v1673
    %v1862 = vadd.f32 %v388, %v1676
    %v1863 = vadd.f32 %v389, %v1681
    %v1864 = vadd.f32 %v390, %v1684
    %v1865 = vadd.f32 %v391, %v1689
    %v1866 = vadd.f32 %v392, %v1692
    %v1867 = vadd.f32 %v393, %v1697
    %v1868 = vadd.f32 %v394, %v1700
    %v1869 = vadd.f32 %v395, %v1705
    %v1870 = vadd.f32 %v396, %v1708
    %v1871 = vadd.f32 %v397, %v1713
    %v1872 = vadd.f32 %v398, %v1716
    %v1873 = vadd.f32 %v399, %v1721
    %v1874 = vadd.f32 %v400, %v1724
    %v1875 = vadd.f32 %v401, %v1729
    %v1876 = vadd.f32 %v402, %v1732
    %v1877 = vadd.f32 %v403, %v1737
    %v1878 = vadd.f32 %v404, %v1740
    %v1879 = vadd.f32 %v405, %v1745
    %v1880 = vadd.f32 %v406, %v1748
    %v1881 = vadd.f32 %v407, %v1753
    %v1882 = vadd.f32 %v408, %v1756
    %v1883 = vadd.f32 %v409, %v1761
    %v1884 = vadd.f32 %v410, %v1764
    %v1885 = vadd.f32 %v411, %v1769
    %v1886 = vadd.f32 %v412, %v1772
    %v1887 = vadd.f32 %v413, %v1777
    %v1888 = vadd.f32 %v414, %v1780
    %v1889 = vadd.f32 %v415, %v1785
    %v1890 = vadd.f32 %v416, %v1788
    %v1891 = vadd.f32 %v417, %v1793
    %v1892 = vadd.f32 %v418, %v1796
    %v1893 = vadd.f32 %v419, %v1801
    %v1894 = vadd.f32 %v420, %v1804
    %v1895 = vadd.f32 %v421, %v1809
    %v1896 = vadd.f32 %v422, %v1812
    %v1897 = vadd.f32 %v423, %v1817
    %v1898 = vadd.f32 %v424, %v1820
    %v1899 = vadd.f32 %v425, %v1825
    %v1900 = vadd.f32 %v426, %v1828
    %v1901 = vadd.f32 %v427, %v1833
    %v1902 = vadd.f32 %v428, %v1836
    %1903 = vst [vmem:[%s3] sm:$0xff] %v1839
    %1904 = vst [vmem:[%s3 + $0x8] sm:$0xff] %v1840
    %1905 = vst [vmem:[%s3 + $0x10] sm:$0xff] %v1841
    %1906 = vst [vmem:[%s3 + $0x18] sm:$0xff] %v1842
    %1907 = vst [vmem:[%s3 + $0x20] sm:$0xff] %v1843
    %1908 = vst [vmem:[%s3 + $0x28] sm:$0xff] %v1844
    %1909 = vst [vmem:[%s3 + $0x30] sm:$0xff] %v1845
    %1910 = vst [vmem:[%s3 + $0x38] sm:$0xff] %v1846
    %1911 = vst [vmem:[%s3 + $0x40] sm:$0xff] %v1847
    %1912 = vst [vmem:[%s3 + $0x48] sm:$0xff] %v1848
    %1913 = vst [vmem:[%s3 + $0x50] sm:$0xff] %v1849
    %1914 = vst [vmem:[%s3 + $0x58] sm:$0xff] %v1850
    %1915 = vst [vmem:[%s3 + $0x60] sm:$0xff] %v1851
    %1916 = vst [vmem:[%s3 + $0x68] sm:$0xff] %v1852
    %1917 = vst [vmem:[%s3 + $0x70] sm:$0xff] %v1853
    %1918 = vst [vmem:[%s3 + $0x78] sm:$0xff] %v1854
    %1919 = vst [vmem:[%s3 + $0x80] sm:$0xff] %v1855
    %1920 = vst [vmem:[%s3 + $0x88] sm:$0xff] %v1856
    %1921 = vst [vmem:[%s3 + $0x90] sm:$0xff] %v1857
    %1922 = vst [vmem:[%s3 + $0x98] sm:$0xff] %v1858
    %1923 = vst [vmem:[%s3 + $0xa0] sm:$0xff] %v1859
    %1924 = vst [vmem:[%s3 + $0xa8] sm:$0xff] %v1860
    %1925 = vst [vmem:[%s3 + $0xb0] sm:$0xff] %v1861
    %1926 = vst [vmem:[%s3 + $0xb8] sm:$0xff] %v1862
    %1927 = vst [vmem:[%s3 + $0xc0] sm:$0xff] %v1863
    %1928 = vst [vmem:[%s3 + $0xc8] sm:$0xff] %v1864
    %1929 = vst [vmem:[%s3 + $0xd0] sm:$0xff] %v1865
    %1930 = vst [vmem:[%s3 + $0xd8] sm:$0xff] %v1866
    %1931 = vst [vmem:[%s3 + $0xe0] sm:$0xff] %v1867
    %1932 = vst [vmem:[%s3 + $0xe8] sm:$0xff] %v1868
    %1933 = vst [vmem:[%s3 + $0xf0] sm:$0xff] %v1869
    %1934 = vst [vmem:[%s3 + $0xf8] sm:$0xff] %v1870
    %1935 = vst [vmem:[%s3 + $0x100] sm:$0xff] %v1871
    %1936 = vst [vmem:[%s3 + $0x108] sm:$0xff] %v1872
    %1937 = vst [vmem:[%s3 + $0x110] sm:$0xff] %v1873
    %1938 = vst [vmem:[%s3 + $0x118] sm:$0xff] %v1874
    %1939 = vst [vmem:[%s3 + $0x120] sm:$0xff] %v1875
    %1940 = vst [vmem:[%s3 + $0x128] sm:$0xff] %v1876
    %1941 = vst [vmem:[%s3 + $0x130] sm:$0xff] %v1877
    %1942 = vst [vmem:[%s3 + $0x138] sm:$0xff] %v1878
    %1943 = vst [vmem:[%s3 + $0x140] sm:$0xff] %v1879
    %1944 = vst [vmem:[%s3 + $0x148] sm:$0xff] %v1880
    %1945 = vst [vmem:[%s3 + $0x150] sm:$0xff] %v1881
    %1946 = vst [vmem:[%s3 + $0x158] sm:$0xff] %v1882
    %1947 = vst [vmem:[%s3 + $0x160] sm:$0xff] %v1883
    %1948 = vst [vmem:[%s3 + $0x168] sm:$0xff] %v1884
    %1949 = vst [vmem:[%s3 + $0x170] sm:$0xff] %v1885
    %1950 = vst [vmem:[%s3 + $0x178] sm:$0xff] %v1886
    %1951 = vst [vmem:[%s3 + $0x180] sm:$0xff] %v1887
    %1952 = vst [vmem:[%s3 + $0x188] sm:$0xff] %v1888
    %1953 = vst [vmem:[%s3 + $0x190] sm:$0xff] %v1889
    %1954 = vst [vmem:[%s3 + $0x198] sm:$0xff] %v1890
    %1955 = vst [vmem:[%s3 + $0x1a0] sm:$0xff] %v1891
    %1956 = vst [vmem:[%s3 + $0x1a8] sm:$0xff] %v1892
    %1957 = vst [vmem:[%s3 + $0x1b0] sm:$0xff] %v1893
    %1958 = vst [vmem:[%s3 + $0x1b8] sm:$0xff] %v1894
    %1959 = vst [vmem:[%s3 + $0x1c0] sm:$0xff] %v1895
    %1960 = vst [vmem:[%s3 + $0x1c8] sm:$0xff] %v1896
    %1961 = vst [vmem:[%s3 + $0x1d0] sm:$0xff] %v1897
    %1962 = vst [vmem:[%s3 + $0x1d8] sm:$0xff] %v1898
    %1963 = vst [vmem:[%s3 + $0x1e0] sm:$0xff] %v1899
    %1964 = vst [vmem:[%s3 + $0x1e8] sm:$0xff] %v1900
    %1965 = vst [vmem:[%s3 + $0x1f0] sm:$0xff] %v1901
    %1966 = vst [vmem:[%s3 + $0x1f8] sm:$0xff] %v1902
    %v1967 = vld [vmem:[%s1] sm:$0xf]
    %v1968 = vld [vmem:[%s1 + $0x4] sm:$0xf]
    %v1969 = vld [vmem:[%s1 + $0x8] sm:$0xf]
    %v1970 = vld [vmem:[%s1 + $0xc] sm:$0xf]
    %v1971 = vld [vmem:[%s1 + $0x10] sm:$0xf]
    %v1972 = vld [vmem:[%s1 + $0x14] sm:$0xf]
    %v1973 = vld [vmem:[%s1 + $0x18] sm:$0xf]
    %v1974 = vld [vmem:[%s1 + $0x1c] sm:$0xf]
    %v1975 = vld [vmem:[%s1 + $0x20] sm:$0xf]
    %v1976 = vld [vmem:[%s1 + $0x24] sm:$0xf]
    %v1977 = vld [vmem:[%s1 + $0x28] sm:$0xf]
    %v1978 = vld [vmem:[%s1 + $0x2c] sm:$0xf]
    %v1979 = vld [vmem:[%s1 + $0x30] sm:$0xf]
    %v1980 = vld [vmem:[%s1 + $0x34] sm:$0xf]
    %v1981 = vld [vmem:[%s1 + $0x38] sm:$0xf]
    %v1982 = vld [vmem:[%s1 + $0x3c] sm:$0xf]
    %v1983 = vld [vmem:[%s1 + $0x40] sm:$0xf]
    %v1984 = vld [vmem:[%s1 + $0x44] sm:$0xf]
    %v1985 = vld [vmem:[%s1 + $0x48] sm:$0xf]
    %v1986 = vld [vmem:[%s1 + $0x4c] sm:$0xf]
    %v1987 = vld [vmem:[%s1 + $0x50] sm:$0xf]
    %v1988 = vld [vmem:[%s1 + $0x54] sm:$0xf]
    %v1989 = vld [vmem:[%s1 + $0x58] sm:$0xf]
    %v1990 = vld [vmem:[%s1 + $0x5c] sm:$0xf]
    %v1991 = vld [vmem:[%s1 + $0x60] sm:$0xf]
    %v1992 = vld [vmem:[%s1 + $0x64] sm:$0xf]
    %v1993 = vld [vmem:[%s1 + $0x68] sm:$0xf]
    %v1994 = vld [vmem:[%s1 + $0x6c] sm:$0xf]
    %v1995 = vld [vmem:[%s1 + $0x70] sm:$0xf]
    %v1996 = vld [vmem:[%s1 + $0x74] sm:$0xf]
    %v1997 = vld [vmem:[%s1 + $0x78] sm:$0xf]
    %v1998 = vld [vmem:[%s1 + $0x7c] sm:$0xf]
    %v1999 = vld [vmem:[%s1 + $0x80] sm:$0xf]
    %v2000 = vld [vmem:[%s1 + $0x84] sm:$0xf]
    %v2001 = vld [vmem:[%s1 + $0x88] sm:$0xf]
    %v2002 = vld [vmem:[%s1 + $0x8c] sm:$0xf]
    %v2003 = vld [vmem:[%s1 + $0x90] sm:$0xf]
    %v2004 = vld [vmem:[%s1 + $0x94] sm:$0xf]
    %v2005 = vld [vmem:[%s1 + $0x98] sm:$0xf]
    %v2006 = vld [vmem:[%s1 + $0x9c] sm:$0xf]
    %v2007 = vld [vmem:[%s1 + $0xa0] sm:$0xf]
    %v2008 = vld [vmem:[%s1 + $0xa4] sm:$0xf]
    %v2009 = vld [vmem:[%s1 + $0xa8] sm:$0xf]
    %v2010 = vld [vmem:[%s1 + $0xac] sm:$0xf]
    %v2011 = vld [vmem:[%s1 + $0xb0] sm:$0xf]
    %v2012 = vld [vmem:[%s1 + $0xb4] sm:$0xf]
    %v2013 = vld [vmem:[%s1 + $0xb8] sm:$0xf]
    %v2014 = vld [vmem:[%s1 + $0xbc] sm:$0xf]
    %v2015 = vld [vmem:[%s1 + $0xc0] sm:$0xf]
    %v2016 = vld [vmem:[%s1 + $0xc4] sm:$0xf]
    %v2017 = vld [vmem:[%s1 + $0xc8] sm:$0xf]
    %v2018 = vld [vmem:[%s1 + $0xcc] sm:$0xf]
    %v2019 = vld [vmem:[%s1 + $0xd0] sm:$0xf]
    %v2020 = vld [vmem:[%s1 + $0xd4] sm:$0xf]
    %v2021 = vld [vmem:[%s1 + $0xd8] sm:$0xf]
    %v2022 = vld [vmem:[%s1 + $0xdc] sm:$0xf]
    %v2023 = vld [vmem:[%s1 + $0xe0] sm:$0xf]
    %v2024 = vld [vmem:[%s1 + $0xe4] sm:$0xf]
    %v2025 = vld [vmem:[%s1 + $0xe8] sm:$0xf]
    %v2026 = vld [vmem:[%s1 + $0xec] sm:$0xf]
    %v2027 = vld [vmem:[%s1 + $0xf0] sm:$0xf]
    %v2028 = vld [vmem:[%s1 + $0xf4] sm:$0xf]
    %v2029 = vld [vmem:[%s1 + $0xf8] sm:$0xf]
    %v2030 = vld [vmem:[%s1 + $0xfc] sm:$0xf]
    %2031 = vxpose.xlu0.c.b16.start [1/8] %v813, 128
    %2032 = vxpose.xlu0.c.b16.cont [2/8] %v817, 128
    %2033 = vxpose.xlu0.c.b16.cont [3/8] %v821, 128
    %2034 = vxpose.xlu0.c.b16.cont [4/8] %v825, 128
    %2035 = vxpose.xlu0.c.b16.cont [5/8] %v829, 128
    %2036 = vxpose.xlu0.c.b16.cont [6/8] %v833, 128
    %2037 = vxpose.xlu0.c.b16.cont [7/8] %v837, 128
    %2038 = vxpose.xlu0.c.b16.end [8/8] %v841, 128
    %v2039 = vpop.trf.xlu0
    %v2040 = vpop.trf.xlu0
    %v2041 = vpop.trf.xlu0
    %v2042 = vpop.trf.xlu0
    %v2043 = vpop.trf.xlu0
    %v2044 = vpop.trf.xlu0
    %v2045 = vpop.trf.xlu0
    %v2046 = vpop.trf.xlu0
    %2047 = vxpose.xlu0.c.b16.start [1/8] %v814, 128
    %2048 = vxpose.xlu0.c.b16.cont [2/8] %v818, 128
    %2049 = vxpose.xlu0.c.b16.cont [3/8] %v822, 128
    %2050 = vxpose.xlu0.c.b16.cont [4/8] %v826, 128
    %2051 = vxpose.xlu0.c.b16.cont [5/8] %v830, 128
    %2052 = vxpose.xlu0.c.b16.cont [6/8] %v834, 128
    %2053 = vxpose.xlu0.c.b16.cont [7/8] %v838, 128
    %2054 = vxpose.xlu0.c.b16.end [8/8] %v842, 128
    %v2055 = vpop.trf.xlu0
    %v2056 = vpop.trf.xlu0
    %v2057 = vpop.trf.xlu0
    %v2058 = vpop.trf.xlu0
    %v2059 = vpop.trf.xlu0
    %v2060 = vpop.trf.xlu0
    %v2061 = vpop.trf.xlu0
    %v2062 = vpop.trf.xlu0
    %2063 = vxpose.xlu0.c.b16.start [1/8] %v815, 128
    %2064 = vxpose.xlu0.c.b16.cont [2/8] %v819, 128
    %2065 = vxpose.xlu0.c.b16.cont [3/8] %v823, 128
    %2066 = vxpose.xlu0.c.b16.cont [4/8] %v827, 128
    %2067 = vxpose.xlu0.c.b16.cont [5/8] %v831, 128
    %2068 = vxpose.xlu0.c.b16.cont [6/8] %v835, 128
    %2069 = vxpose.xlu0.c.b16.cont [7/8] %v839, 128
    %2070 = vxpose.xlu0.c.b16.end [8/8] %v843, 128
    %v2071 = vpop.trf.xlu0
    %v2072 = vpop.trf.xlu0
    %v2073 = vpop.trf.xlu0
    %v2074 = vpop.trf.xlu0
    %v2075 = vpop.trf.xlu0
    %v2076 = vpop.trf.xlu0
    %v2077 = vpop.trf.xlu0
    %v2078 = vpop.trf.xlu0
    %2079 = vxpose.xlu0.c.b16.start [1/8] %v816, 128
    %2080 = vxpose.xlu0.c.b16.cont [2/8] %v820, 128
    %2081 = vxpose.xlu0.c.b16.cont [3/8] %v824, 128
    %2082 = vxpose.xlu0.c.b16.cont [4/8] %v828, 128
    %2083 = vxpose.xlu0.c.b16.cont [5/8] %v832, 128
    %2084 = vxpose.xlu0.c.b16.cont [6/8] %v836, 128
    %2085 = vxpose.xlu0.c.b16.cont [7/8] %v840, 128
    %2086 = vxpose.xlu0.c.b16.end [8/8] %v844, 128
    %v2087 = vpop.trf.xlu0
    %v2088 = vpop.trf.xlu0
    %v2089 = vpop.trf.xlu0
    %v2090 = vpop.trf.xlu0
    %v2091 = vpop.trf.xlu0
    %v2092 = vpop.trf.xlu0
    %v2093 = vpop.trf.xlu0
    %v2094 = vpop.trf.xlu0
    %2095 = vxpose.xlu0.c.b16.start [1/8] %v845, 128
    %2096 = vxpose.xlu0.c.b16.cont [2/8] %v849, 128
    %2097 = vxpose.xlu0.c.b16.cont [3/8] %v853, 128
    %2098 = vxpose.xlu0.c.b16.cont [4/8] %v857, 128
    %2099 = vxpose.xlu0.c.b16.cont [5/8] %v861, 128
    %2100 = vxpose.xlu0.c.b16.cont [6/8] %v865, 128
    %2101 = vxpose.xlu0.c.b16.cont [7/8] %v869, 128
    %2102 = vxpose.xlu0.c.b16.end [8/8] %v873, 128
    %v2103 = vpop.trf.xlu0
    %v2104 = vpop.trf.xlu0
    %v2105 = vpop.trf.xlu0
    %v2106 = vpop.trf.xlu0
    %v2107 = vpop.trf.xlu0
    %v2108 = vpop.trf.xlu0
    %v2109 = vpop.trf.xlu0
    %v2110 = vpop.trf.xlu0
    %2111 = vxpose.xlu0.c.b16.start [1/8] %v846, 128
    %2112 = vxpose.xlu0.c.b16.cont [2/8] %v850, 128
    %2113 = vxpose.xlu0.c.b16.cont [3/8] %v854, 128
    %2114 = vxpose.xlu0.c.b16.cont [4/8] %v858, 128
    %2115 = vxpose.xlu0.c.b16.cont [5/8] %v862, 128
    %2116 = vxpose.xlu0.c.b16.cont [6/8] %v866, 128
    %2117 = vxpose.xlu0.c.b16.cont [7/8] %v870, 128
    %2118 = vxpose.xlu0.c.b16.end [8/8] %v874, 128
    %v2119 = vpop.trf.xlu0
    %v2120 = vpop.trf.xlu0
    %v2121 = vpop.trf.xlu0
    %v2122 = vpop.trf.xlu0
    %v2123 = vpop.trf.xlu0
    %v2124 = vpop.trf.xlu0
    %v2125 = vpop.trf.xlu0
    %v2126 = vpop.trf.xlu0
    %2127 = vxpose.xlu0.c.b16.start [1/8] %v847, 128
    %2128 = vxpose.xlu0.c.b16.cont [2/8] %v851, 128
    %2129 = vxpose.xlu0.c.b16.cont [3/8] %v855, 128
    %2130 = vxpose.xlu0.c.b16.cont [4/8] %v859, 128
    %2131 = vxpose.xlu0.c.b16.cont [5/8] %v863, 128
    %2132 = vxpose.xlu0.c.b16.cont [6/8] %v867, 128
    %2133 = vxpose.xlu0.c.b16.cont [7/8] %v871, 128
    %2134 = vxpose.xlu0.c.b16.end [8/8] %v875, 128
    %v2135 = vpop.trf.xlu0
    %v2136 = vpop.trf.xlu0
    %v2137 = vpop.trf.xlu0
    %v2138 = vpop.trf.xlu0
    %v2139 = vpop.trf.xlu0
    %v2140 = vpop.trf.xlu0
    %v2141 = vpop.trf.xlu0
    %v2142 = vpop.trf.xlu0
    %2143 = vxpose.xlu0.c.b16.start [1/8] %v848, 128
    %2144 = vxpose.xlu0.c.b16.cont [2/8] %v852, 128
    %2145 = vxpose.xlu0.c.b16.cont [3/8] %v856, 128
    %2146 = vxpose.xlu0.c.b16.cont [4/8] %v860, 128
    %2147 = vxpose.xlu0.c.b16.cont [5/8] %v864, 128
    %2148 = vxpose.xlu0.c.b16.cont [6/8] %v868, 128
    %2149 = vxpose.xlu0.c.b16.cont [7/8] %v872, 128
    %2150 = vxpose.xlu0.c.b16.end [8/8] %v876, 128
    %v2151 = vpop.trf.xlu0
    %v2152 = vpop.trf.xlu0
    %v2153 = vpop.trf.xlu0
    %v2154 = vpop.trf.xlu0
    %v2155 = vpop.trf.xlu0
    %v2156 = vpop.trf.xlu0
    %v2157 = vpop.trf.xlu0
    %v2158 = vpop.trf.xlu0
    %2159 = vxpose.xlu0.c.b16.start [1/8] %v877, 128
    %2160 = vxpose.xlu0.c.b16.cont [2/8] %v881, 128
    %2161 = vxpose.xlu0.c.b16.cont [3/8] %v885, 128
    %2162 = vxpose.xlu0.c.b16.cont [4/8] %v889, 128
    %2163 = vxpose.xlu0.c.b16.cont [5/8] %v893, 128
    %2164 = vxpose.xlu0.c.b16.cont [6/8] %v897, 128
    %2165 = vxpose.xlu0.c.b16.cont [7/8] %v901, 128
    %2166 = vxpose.xlu0.c.b16.end [8/8] %v905, 128
    %v2167 = vpop.trf.xlu0
    %v2168 = vpop.trf.xlu0
    %v2169 = vpop.trf.xlu0
    %v2170 = vpop.trf.xlu0
    %v2171 = vpop.trf.xlu0
    %v2172 = vpop.trf.xlu0
    %v2173 = vpop.trf.xlu0
    %v2174 = vpop.trf.xlu0
    %2175 = vxpose.xlu0.c.b16.start [1/8] %v878, 128
    %2176 = vxpose.xlu0.c.b16.cont [2/8] %v882, 128
    %2177 = vxpose.xlu0.c.b16.cont [3/8] %v886, 128
    %2178 = vxpose.xlu0.c.b16.cont [4/8] %v890, 128
    %2179 = vxpose.xlu0.c.b16.cont [5/8] %v894, 128
    %2180 = vxpose.xlu0.c.b16.cont [6/8] %v898, 128
    %2181 = vxpose.xlu0.c.b16.cont [7/8] %v902, 128
    %2182 = vxpose.xlu0.c.b16.end [8/8] %v906, 128
    %v2183 = vpop.trf.xlu0
    %v2184 = vpop.trf.xlu0
    %v2185 = vpop.trf.xlu0
    %v2186 = vpop.trf.xlu0
    %v2187 = vpop.trf.xlu0
    %v2188 = vpop.trf.xlu0
    %v2189 = vpop.trf.xlu0
    %v2190 = vpop.trf.xlu0
    %2191 = vxpose.xlu0.c.b16.start [1/8] %v879, 128
    %2192 = vxpose.xlu0.c.b16.cont [2/8] %v883, 128
    %2193 = vxpose.xlu0.c.b16.cont [3/8] %v887, 128
    %2194 = vxpose.xlu0.c.b16.cont [4/8] %v891, 128
    %2195 = vxpose.xlu0.c.b16.cont [5/8] %v895, 128
    %2196 = vxpose.xlu0.c.b16.cont [6/8] %v899, 128
    %2197 = vxpose.xlu0.c.b16.cont [7/8] %v903, 128
    %2198 = vxpose.xlu0.c.b16.end [8/8] %v907, 128
    %v2199 = vpop.trf.xlu0
    %v2200 = vpop.trf.xlu0
    %v2201 = vpop.trf.xlu0
    %v2202 = vpop.trf.xlu0
    %v2203 = vpop.trf.xlu0
    %v2204 = vpop.trf.xlu0
    %v2205 = vpop.trf.xlu0
    %v2206 = vpop.trf.xlu0
    %2207 = vxpose.xlu0.c.b16.start [1/8] %v880, 128
    %2208 = vxpose.xlu0.c.b16.cont [2/8] %v884, 128
    %2209 = vxpose.xlu0.c.b16.cont [3/8] %v888, 128
    %2210 = vxpose.xlu0.c.b16.cont [4/8] %v892, 128
    %2211 = vxpose.xlu0.c.b16.cont [5/8] %v896, 128
    %2212 = vxpose.xlu0.c.b16.cont [6/8] %v900, 128
    %2213 = vxpose.xlu0.c.b16.cont [7/8] %v904, 128
    %2214 = vxpose.xlu0.c.b16.end [8/8] %v908, 128
    %v2215 = vpop.trf.xlu0
    %v2216 = vpop.trf.xlu0
    %v2217 = vpop.trf.xlu0
    %v2218 = vpop.trf.xlu0
    %v2219 = vpop.trf.xlu0
    %v2220 = vpop.trf.xlu0
    %v2221 = vpop.trf.xlu0
    %v2222 = vpop.trf.xlu0
    %2223 = vxpose.xlu0.c.b16.start [1/8] %v909, 128
    %2224 = vxpose.xlu0.c.b16.cont [2/8] %v913, 128
    %2225 = vxpose.xlu0.c.b16.cont [3/8] %v917, 128
    %2226 = vxpose.xlu0.c.b16.cont [4/8] %v921, 128
    %2227 = vxpose.xlu0.c.b16.cont [5/8] %v925, 128
    %2228 = vxpose.xlu0.c.b16.cont [6/8] %v929, 128
    %2229 = vxpose.xlu0.c.b16.cont [7/8] %v933, 128
    %2230 = vxpose.xlu0.c.b16.end [8/8] %v937, 128
    %v2231 = vpop.trf.xlu0
    %v2232 = vpop.trf.xlu0
    %v2233 = vpop.trf.xlu0
    %v2234 = vpop.trf.xlu0
    %v2235 = vpop.trf.xlu0
    %v2236 = vpop.trf.xlu0
    %v2237 = vpop.trf.xlu0
    %v2238 = vpop.trf.xlu0
    %2239 = vxpose.xlu0.c.b16.start [1/8] %v910, 128
    %2240 = vxpose.xlu0.c.b16.cont [2/8] %v914, 128
    %2241 = vxpose.xlu0.c.b16.cont [3/8] %v918, 128
    %2242 = vxpose.xlu0.c.b16.cont [4/8] %v922, 128
    %2243 = vxpose.xlu0.c.b16.cont [5/8] %v926, 128
    %2244 = vxpose.xlu0.c.b16.cont [6/8] %v930, 128
    %2245 = vxpose.xlu0.c.b16.cont [7/8] %v934, 128
    %2246 = vxpose.xlu0.c.b16.end [8/8] %v938, 128
    %v2247 = vpop.trf.xlu0
    %v2248 = vpop.trf.xlu0
    %v2249 = vpop.trf.xlu0
    %v2250 = vpop.trf.xlu0
    %v2251 = vpop.trf.xlu0
    %v2252 = vpop.trf.xlu0
    %v2253 = vpop.trf.xlu0
    %v2254 = vpop.trf.xlu0
    %2255 = vxpose.xlu0.c.b16.start [1/8] %v911, 128
    %2256 = vxpose.xlu0.c.b16.cont [2/8] %v915, 128
    %2257 = vxpose.xlu0.c.b16.cont [3/8] %v919, 128
    %2258 = vxpose.xlu0.c.b16.cont [4/8] %v923, 128
    %2259 = vxpose.xlu0.c.b16.cont [5/8] %v927, 128
    %2260 = vxpose.xlu0.c.b16.cont [6/8] %v931, 128
    %2261 = vxpose.xlu0.c.b16.cont [7/8] %v935, 128
    %2262 = vxpose.xlu0.c.b16.end [8/8] %v939, 128
    %v2263 = vpop.trf.xlu0
    %v2264 = vpop.trf.xlu0
    %v2265 = vpop.trf.xlu0
    %v2266 = vpop.trf.xlu0
    %v2267 = vpop.trf.xlu0
    %v2268 = vpop.trf.xlu0
    %v2269 = vpop.trf.xlu0
    %v2270 = vpop.trf.xlu0
    %2271 = vxpose.xlu0.c.b16.start [1/8] %v912, 128
    %2272 = vxpose.xlu0.c.b16.cont [2/8] %v916, 128
    %2273 = vxpose.xlu0.c.b16.cont [3/8] %v920, 128
    %2274 = vxpose.xlu0.c.b16.cont [4/8] %v924, 128
    %2275 = vxpose.xlu0.c.b16.cont [5/8] %v928, 128
    %2276 = vxpose.xlu0.c.b16.cont [6/8] %v932, 128
    %2277 = vxpose.xlu0.c.b16.cont [7/8] %v936, 128
    %2278 = vxpose.xlu0.c.b16.end [8/8] %v940, 128
    %v2279 = vpop.trf.xlu0
    %v2280 = vpop.trf.xlu0
    %v2281 = vpop.trf.xlu0
    %v2282 = vpop.trf.xlu0
    %v2283 = vpop.trf.xlu0
    %v2284 = vpop.trf.xlu0
    %v2285 = vpop.trf.xlu0
    %v2286 = vpop.trf.xlu0
    %v2351 = vunpack.c.l.b16 %v1967
    %v2352 = vunpack.c.l.b16 %v1968
    %v2353 = vunpack.c.l.b16 %v1969
    %v2354 = vunpack.c.l.b16 %v1970
    %v2355 = vunpack.c.l.b16 %v1971
    %v2356 = vunpack.c.l.b16 %v1972
    %v2357 = vunpack.c.l.b16 %v1973
    %v2358 = vunpack.c.l.b16 %v1974
    %v2359 = vunpack.c.l.b16 %v1975
    %v2360 = vunpack.c.l.b16 %v1976
    %v2361 = vunpack.c.l.b16 %v1977
    %v2362 = vunpack.c.l.b16 %v1978
    %v2363 = vunpack.c.l.b16 %v1979
    %v2364 = vunpack.c.l.b16 %v1980
    %v2365 = vunpack.c.l.b16 %v1981
    %v2366 = vunpack.c.l.b16 %v1982
    %v2367 = vunpack.c.l.b16 %v1983
    %v2368 = vunpack.c.l.b16 %v1984
    %v2369 = vunpack.c.l.b16 %v1985
    %v2370 = vunpack.c.l.b16 %v1986
    %v2371 = vunpack.c.l.b16 %v1987
    %v2372 = vunpack.c.l.b16 %v1988
    %v2373 = vunpack.c.l.b16 %v1989
    %v2374 = vunpack.c.l.b16 %v1990
    %v2375 = vunpack.c.l.b16 %v1991
    %v2376 = vunpack.c.l.b16 %v1992
    %v2377 = vunpack.c.l.b16 %v1993
    %v2378 = vunpack.c.l.b16 %v1994
    %v2379 = vunpack.c.l.b16 %v1995
    %v2380 = vunpack.c.l.b16 %v1996
    %v2381 = vunpack.c.l.b16 %v1997
    %v2382 = vunpack.c.l.b16 %v1998
    %v2383 = vunpack.c.l.b16 %v1999
    %v2384 = vunpack.c.l.b16 %v2000
    %v2385 = vunpack.c.l.b16 %v2001
    %v2386 = vunpack.c.l.b16 %v2002
    %v2387 = vunpack.c.l.b16 %v2003
    %v2388 = vunpack.c.l.b16 %v2004
    %v2389 = vunpack.c.l.b16 %v2005
    %v2390 = vunpack.c.l.b16 %v2006
    %v2391 = vunpack.c.l.b16 %v2007
    %v2392 = vunpack.c.l.b16 %v2008
    %v2393 = vunpack.c.l.b16 %v2009
    %v2394 = vunpack.c.l.b16 %v2010
    %v2395 = vunpack.c.l.b16 %v2011
    %v2396 = vunpack.c.l.b16 %v2012
    %v2397 = vunpack.c.l.b16 %v2013
    %v2398 = vunpack.c.l.b16 %v2014
    %v2399 = vunpack.c.l.b16 %v2015
    %v2400 = vunpack.c.l.b16 %v2016
    %v2401 = vunpack.c.l.b16 %v2017
    %v2402 = vunpack.c.l.b16 %v2018
    %v2403 = vunpack.c.l.b16 %v2019
    %v2404 = vunpack.c.l.b16 %v2020
    %v2405 = vunpack.c.l.b16 %v2021
    %v2406 = vunpack.c.l.b16 %v2022
    %v2407 = vunpack.c.l.b16 %v2023
    %v2408 = vunpack.c.l.b16 %v2024
    %v2409 = vunpack.c.l.b16 %v2025
    %v2410 = vunpack.c.l.b16 %v2026
    %v2411 = vunpack.c.l.b16 %v2027
    %v2412 = vunpack.c.l.b16 %v2028
    %v2413 = vunpack.c.l.b16 %v2029
    %v2414 = vunpack.c.l.b16 %v2030
    %v2415 = vpack.c.b16 %v2352, %v2351
    %v2416 = vpack.c.b16 %v2354, %v2353
    %v2417 = vpack.c.b16 %v2356, %v2355
    %v2418 = vpack.c.b16 %v2358, %v2357
    %v2419 = vpack.c.b16 %v2360, %v2359
    %v2420 = vpack.c.b16 %v2362, %v2361
    %v2421 = vpack.c.b16 %v2364, %v2363
    %v2422 = vpack.c.b16 %v2366, %v2365
    %v2423 = vpack.c.b16 %v2368, %v2367
    %v2424 = vpack.c.b16 %v2370, %v2369
    %v2425 = vpack.c.b16 %v2372, %v2371
    %v2426 = vpack.c.b16 %v2374, %v2373
    %v2427 = vpack.c.b16 %v2376, %v2375
    %v2428 = vpack.c.b16 %v2378, %v2377
    %v2429 = vpack.c.b16 %v2380, %v2379
    %v2430 = vpack.c.b16 %v2382, %v2381
    %v2431 = vpack.c.b16 %v2384, %v2383
    %v2432 = vpack.c.b16 %v2386, %v2385
    %v2433 = vpack.c.b16 %v2388, %v2387
    %v2434 = vpack.c.b16 %v2390, %v2389
    %v2435 = vpack.c.b16 %v2392, %v2391
    %v2436 = vpack.c.b16 %v2394, %v2393
    %v2437 = vpack.c.b16 %v2396, %v2395
    %v2438 = vpack.c.b16 %v2398, %v2397
    %v2439 = vpack.c.b16 %v2400, %v2399
    %v2440 = vpack.c.b16 %v2402, %v2401
    %v2441 = vpack.c.b16 %v2404, %v2403
    %v2442 = vpack.c.b16 %v2406, %v2405
    %v2443 = vpack.c.b16 %v2408, %v2407
    %v2444 = vpack.c.b16 %v2410, %v2409
    %v2445 = vpack.c.b16 %v2412, %v2411
    %v2446 = vpack.c.b16 %v2414, %v2413
    %2479 = vmatprep.subr.bf16.mxu0 0
    %2480 = vmatpush1.bf16.msra.mxu0 %v2415
    %2481 = vmatprep.subr.bf16.mxu0 0
    %2482 = vmatpush1.bf16.msra.mxu0 %v2416
    %2483 = vmatprep.subr.bf16.mxu0 0
    %2484 = vmatpush1.bf16.msra.mxu0 %v2417
    %2485 = vmatprep.subr.bf16.mxu0 0
    %2486 = vmatpush1.bf16.msra.mxu0 %v2418
    %2487 = vmatprep.subr.bf16.mxu0 0
    %2488 = vmatpush1.bf16.msra.mxu0 %v2419
    %2489 = vmatprep.subr.bf16.mxu0 0
    %2490 = vmatpush1.bf16.msra.mxu0 %v2420
    %2491 = vmatprep.subr.bf16.mxu0 0
    %2492 = vmatpush1.bf16.msra.mxu0 %v2421
    %2493 = vmatprep.subr.bf16.mxu0 0
    %2494 = vmatpush1.bf16.msra.mxu0 %v2422
    %2495 = vmatprep.subr.bf16.mxu0 0
    %2496 = vmatpush1.bf16.msra.mxu0 %v2423
    %2497 = vmatprep.subr.bf16.mxu0 0
    %2498 = vmatpush1.bf16.msra.mxu0 %v2424
    %2499 = vmatprep.subr.bf16.mxu0 0
    %2500 = vmatpush1.bf16.msra.mxu0 %v2425
    %2501 = vmatprep.subr.bf16.mxu0 0
    %2502 = vmatpush1.bf16.msra.mxu0 %v2426
    %2503 = vmatprep.subr.bf16.mxu0 0
    %2504 = vmatpush1.bf16.msra.mxu0 %v2427
    %2505 = vmatprep.subr.bf16.mxu0 0
    %2506 = vmatpush1.bf16.msra.mxu0 %v2428
    %2507 = vmatprep.subr.bf16.mxu0 0
    %2508 = vmatpush1.bf16.msra.mxu0 %v2429
    %2509 = vmatprep.subr.bf16.mxu0 0
    %2510 = vmatpush1.bf16.msra.mxu0 %v2430
    %2511 = vmatprep.mubr.bf16.mxu0 %v2103
    %2512 = vmatmul.mubr.bf16.gmra.mrb[0].mxu0 %v2039
    %v2513 = vpop.f32.mrb[0].mxu0
    %v2514 = vadd.f32 0.0, %v2513
    %v2515 = vpop.f32.mrb[0].mxu0
    %v2516 = vpop.f32.mrb[0].mxu0
    %v2517 = vadd.f32 0.0, %v2516
    %v2518 = vpop.f32.mrb[0].mxu0
    %2519 = vmatprep.mubr.bf16.mxu0 %v2104
    %2520 = vmatmul.mubr.bf16.gmra.mrb[0].mxu0 %v2040
    %v2521 = vpop.f32.mrb[0].mxu0
    %v2522 = vadd.f32 0.0, %v2521
    %v2523 = vpop.f32.mrb[0].mxu0
    %v2524 = vpop.f32.mrb[0].mxu0
    %v2525 = vadd.f32 0.0, %v2524
    %v2526 = vpop.f32.mrb[0].mxu0
    %2527 = vmatprep.mubr.bf16.mxu0 %v2105
    %2528 = vmatmul.mubr.bf16.gmra.mrb[0].mxu0 %v2041
    %v2529 = vpop.f32.mrb[0].mxu0
    %v2530 = vadd.f32 0.0, %v2529
    %v2531 = vpop.f32.mrb[0].mxu0
    %v2532 = vpop.f32.mrb[0].mxu0
    %v2533 = vadd.f32 0.0, %v2532
    %v2534 = vpop.f32.mrb[0].mxu0
    %2535 = vmatprep.mubr.bf16.mxu0 %v2106
    %2536 = vmatmul.mubr.bf16.gmra.mrb[0].mxu0 %v2042
    %v2537 = vpop.f32.mrb[0].mxu0
    %v2538 = vadd.f32 0.0, %v2537
    %v2539 = vpop.f32.mrb[0].mxu0
    %v2540 = vpop.f32.mrb[0].mxu0
    %v2541 = vadd.f32 0.0, %v2540
    %v2542 = vpop.f32.mrb[0].mxu0
    %2543 = vmatprep.mubr.bf16.mxu0 %v2107
    %2544 = vmatmul.mubr.bf16.gmra.mrb[0].mxu0 %v2043
    %v2545 = vpop.f32.mrb[0].mxu0
    %v2546 = vadd.f32 0.0, %v2545
    %v2547 = vpop.f32.mrb[0].mxu0
    %v2548 = vpop.f32.mrb[0].mxu0
    %v2549 = vadd.f32 0.0, %v2548
    %v2550 = vpop.f32.mrb[0].mxu0
    %2551 = vmatprep.mubr.bf16.mxu0 %v2108
    %2552 = vmatmul.mubr.bf16.gmra.mrb[0].mxu0 %v2044
    %v2553 = vpop.f32.mrb[0].mxu0
    %v2554 = vadd.f32 0.0, %v2553
    %v2555 = vpop.f32.mrb[0].mxu0
    %v2556 = vpop.f32.mrb[0].mxu0
    %v2557 = vadd.f32 0.0, %v2556
    %v2558 = vpop.f32.mrb[0].mxu0
    %2559 = vmatprep.mubr.bf16.mxu0 %v2109
    %2560 = vmatmul.mubr.bf16.gmra.mrb[0].mxu0 %v2045
    %v2561 = vpop.f32.mrb[0].mxu0
    %v2562 = vadd.f32 0.0, %v2561
    %v2563 = vpop.f32.mrb[0].mxu0
    %v2564 = vpop.f32.mrb[0].mxu0
    %v2565 = vadd.f32 0.0, %v2564
    %v2566 = vpop.f32.mrb[0].mxu0
    %2567 = vmatprep.mubr.bf16.mxu0 %v2110
    %2568 = vmatmul.mubr.bf16.gmra.mrb[0].mxu0 %v2046
    %v2569 = vpop.f32.mrb[0].mxu0
    %v2570 = vadd.f32 0.0, %v2569
    %v2571 = vpop.f32.mrb[0].mxu0
    %v2572 = vpop.f32.mrb[0].mxu0
    %v2573 = vadd.f32 0.0, %v2572
    %v2574 = vpop.f32.mrb[0].mxu0
    %2575 = vmatprep.mubr.bf16.mxu0 %v2119
    %2576 = vmatmul.mubr.bf16.gmra.mrb[0].mxu0 %v2055
    %v2577 = vpop.f32.mrb[0].mxu0
    %v2578 = vadd.f32 0.0, %v2577
    %v2579 = vpop.f32.mrb[0].mxu0
    %v2580 = vpop.f32.mrb[0].mxu0
    %v2581 = vadd.f32 0.0, %v2580
    %v2582 = vpop.f32.mrb[0].mxu0
    %2583 = vmatprep.mubr.bf16.mxu0 %v2120
    %2584 = vmatmul.mubr.bf16.gmra.mrb[0].mxu0 %v2056
    %v2585 = vpop.f32.mrb[0].mxu0
    %v2586 = vadd.f32 0.0, %v2585
    %v2587 = vpop.f32.mrb[0].mxu0
    %v2588 = vpop.f32.mrb[0].mxu0
    %v2589 = vadd.f32 0.0, %v2588
    %v2590 = vpop.f32.mrb[0].mxu0
    %2591 = vmatprep.mubr.bf16.mxu0 %v2121
    %2592 = vmatmul.mubr.bf16.gmra.mrb[0].mxu0 %v2057
    %v2593 = vpop.f32.mrb[0].mxu0
    %v2594 = vadd.f32 0.0, %v2593
    %v2595 = vpop.f32.mrb[0].mxu0
    %v2596 = vpop.f32.mrb[0].mxu0
    %v2597 = vadd.f32 0.0, %v2596
    %v2598 = vpop.f32.mrb[0].mxu0
    %2599 = vmatprep.mubr.bf16.mxu0 %v2122
    %2600 = vmatmul.mubr.bf16.gmra.mrb[0].mxu0 %v2058
    %v2601 = vpop.f32.mrb[0].mxu0
    %v2602 = vadd.f32 0.0, %v2601
    %v2603 = vpop.f32.mrb[0].mxu0
    %v2604 = vpop.f32.mrb[0].mxu0
    %v2605 = vadd.f32 0.0, %v2604
    %v2606 = vpop.f32.mrb[0].mxu0
    %2607 = vmatprep.mubr.bf16.mxu0 %v2123
    %2608 = vmatmul.mubr.bf16.gmra.mrb[0].mxu0 %v2059
    %v2609 = vpop.f32.mrb[0].mxu0
    %v2610 = vadd.f32 0.0, %v2609
    %v2611 = vpop.f32.mrb[0].mxu0
    %v2612 = vpop.f32.mrb[0].mxu0
    %v2613 = vadd.f32 0.0, %v2612
    %v2614 = vpop.f32.mrb[0].mxu0
    %2615 = vmatprep.mubr.bf16.mxu0 %v2124
    %2616 = vmatmul.mubr.bf16.gmra.mrb[0].mxu0 %v2060
    %v2617 = vpop.f32.mrb[0].mxu0
    %v2618 = vadd.f32 0.0, %v2617
    %v2619 = vpop.f32.mrb[0].mxu0
    %v2620 = vpop.f32.mrb[0].mxu0
    %v2621 = vadd.f32 0.0, %v2620
    %v2622 = vpop.f32.mrb[0].mxu0
    %2623 = vmatprep.mubr.bf16.mxu0 %v2125
    %2624 = vmatmul.mubr.bf16.gmra.mrb[0].mxu0 %v2061
    %v2625 = vpop.f32.mrb[0].mxu0
    %v2626 = vadd.f32 0.0, %v2625
    %v2627 = vpop.f32.mrb[0].mxu0
    %v2628 = vpop.f32.mrb[0].mxu0
    %v2629 = vadd.f32 0.0, %v2628
    %v2630 = vpop.f32.mrb[0].mxu0
    %2631 = vmatprep.mubr.bf16.mxu0 %v2126
    %2632 = vmatmul.mubr.bf16.gmra.mrb[0].mxu0 %v2062
    %v2633 = vpop.f32.mrb[0].mxu0
    %v2634 = vadd.f32 0.0, %v2633
    %v2635 = vpop.f32.mrb[0].mxu0
    %v2636 = vpop.f32.mrb[0].mxu0
    %v2637 = vadd.f32 0.0, %v2636
    %v2638 = vpop.f32.mrb[0].mxu0
    %2639 = vmatprep.mubr.bf16.mxu0 %v2135
    %2640 = vmatmul.mubr.bf16.gmra.mrb[0].mxu0 %v2071
    %v2641 = vpop.f32.mrb[0].mxu0
    %v2642 = vadd.f32 0.0, %v2641
    %v2643 = vpop.f32.mrb[0].mxu0
    %v2644 = vpop.f32.mrb[0].mxu0
    %v2645 = vadd.f32 0.0, %v2644
    %v2646 = vpop.f32.mrb[0].mxu0
    %2647 = vmatprep.mubr.bf16.mxu0 %v2136
    %2648 = vmatmul.mubr.bf16.gmra.mrb[0].mxu0 %v2072
    %v2649 = vpop.f32.mrb[0].mxu0
    %v2650 = vadd.f32 0.0, %v2649
    %v2651 = vpop.f32.mrb[0].mxu0
    %v2652 = vpop.f32.mrb[0].mxu0
    %v2653 = vadd.f32 0.0, %v2652
    %v2654 = vpop.f32.mrb[0].mxu0
    %2655 = vmatprep.mubr.bf16.mxu0 %v2137
    %2656 = vmatmul.mubr.bf16.gmra.mrb[0].mxu0 %v2073
    %v2657 = vpop.f32.mrb[0].mxu0
    %v2658 = vadd.f32 0.0, %v2657
    %v2659 = vpop.f32.mrb[0].mxu0
    %v2660 = vpop.f32.mrb[0].mxu0
    %v2661 = vadd.f32 0.0, %v2660
    %v2662 = vpop.f32.mrb[0].mxu0
    %2663 = vmatprep.mubr.bf16.mxu0 %v2138
    %2664 = vmatmul.mubr.bf16.gmra.mrb[0].mxu0 %v2074
    %v2665 = vpop.f32.mrb[0].mxu0
    %v2666 = vadd.f32 0.0, %v2665
    %v2667 = vpop.f32.mrb[0].mxu0
    %v2668 = vpop.f32.mrb[0].mxu0
    %v2669 = vadd.f32 0.0, %v2668
    %v2670 = vpop.f32.mrb[0].mxu0
    %2671 = vmatprep.mubr.bf16.mxu0 %v2139
    %2672 = vmatmul.mubr.bf16.gmra.mrb[0].mxu0 %v2075
    %v2673 = vpop.f32.mrb[0].mxu0
    %v2674 = vadd.f32 0.0, %v2673
    %v2675 = vpop.f32.mrb[0].mxu0
    %v2676 = vpop.f32.mrb[0].mxu0
    %v2677 = vadd.f32 0.0, %v2676
    %v2678 = vpop.f32.mrb[0].mxu0
    %2679 = vmatprep.mubr.bf16.mxu0 %v2140
    %2680 = vmatmul.mubr.bf16.gmra.mrb[0].mxu0 %v2076
    %v2681 = vpop.f32.mrb[0].mxu0
    %v2682 = vadd.f32 0.0, %v2681
    %v2683 = vpop.f32.mrb[0].mxu0
    %v2684 = vpop.f32.mrb[0].mxu0
    %v2685 = vadd.f32 0.0, %v2684
    %v2686 = vpop.f32.mrb[0].mxu0
    %2687 = vmatprep.mubr.bf16.mxu0 %v2141
    %2688 = vmatmul.mubr.bf16.gmra.mrb[0].mxu0 %v2077
    %v2689 = vpop.f32.mrb[0].mxu0
    %v2690 = vadd.f32 0.0, %v2689
    %v2691 = vpop.f32.mrb[0].mxu0
    %v2692 = vpop.f32.mrb[0].mxu0
    %v2693 = vadd.f32 0.0, %v2692
    %v2694 = vpop.f32.mrb[0].mxu0
    %2695 = vmatprep.mubr.bf16.mxu0 %v2142
    %2696 = vmatmul.mubr.bf16.gmra.mrb[0].mxu0 %v2078
    %v2697 = vpop.f32.mrb[0].mxu0
    %v2698 = vadd.f32 0.0, %v2697
    %v2699 = vpop.f32.mrb[0].mxu0
    %v2700 = vpop.f32.mrb[0].mxu0
    %v2701 = vadd.f32 0.0, %v2700
    %v2702 = vpop.f32.mrb[0].mxu0
    %2703 = vmatprep.mubr.bf16.mxu0 %v2151
    %2704 = vmatmul.mubr.bf16.gmra.mrb[0].mxu0 %v2087
    %v2705 = vpop.f32.mrb[0].mxu0
    %v2706 = vadd.f32 0.0, %v2705
    %v2707 = vpop.f32.mrb[0].mxu0
    %v2708 = vpop.f32.mrb[0].mxu0
    %v2709 = vadd.f32 0.0, %v2708
    %v2710 = vpop.f32.mrb[0].mxu0
    %2711 = vmatprep.mubr.bf16.mxu0 %v2152
    %2712 = vmatmul.mubr.bf16.gmra.mrb[0].mxu0 %v2088
    %v2713 = vpop.f32.mrb[0].mxu0
    %v2714 = vadd.f32 0.0, %v2713
    %v2715 = vpop.f32.mrb[0].mxu0
    %v2716 = vpop.f32.mrb[0].mxu0
    %v2717 = vadd.f32 0.0, %v2716
    %v2718 = vpop.f32.mrb[0].mxu0
    %2719 = vmatprep.mubr.bf16.mxu0 %v2153
    %2720 = vmatmul.mubr.bf16.gmra.mrb[0].mxu0 %v2089
    %v2721 = vpop.f32.mrb[0].mxu0
    %v2722 = vadd.f32 0.0, %v2721
    %v2723 = vpop.f32.mrb[0].mxu0
    %v2724 = vpop.f32.mrb[0].mxu0
    %v2725 = vadd.f32 0.0, %v2724
    %v2726 = vpop.f32.mrb[0].mxu0
    %2727 = vmatprep.mubr.bf16.mxu0 %v2154
    %2728 = vmatmul.mubr.bf16.gmra.mrb[0].mxu0 %v2090
    %v2729 = vpop.f32.mrb[0].mxu0
    %v2730 = vadd.f32 0.0, %v2729
    %v2731 = vpop.f32.mrb[0].mxu0
    %v2732 = vpop.f32.mrb[0].mxu0
    %v2733 = vadd.f32 0.0, %v2732
    %v2734 = vpop.f32.mrb[0].mxu0
    %2735 = vmatprep.mubr.bf16.mxu0 %v2155
    %2736 = vmatmul.mubr.bf16.gmra.mrb[0].mxu0 %v2091
    %v2737 = vpop.f32.mrb[0].mxu0
    %v2738 = vadd.f32 0.0, %v2737
    %v2739 = vpop.f32.mrb[0].mxu0
    %v2740 = vpop.f32.mrb[0].mxu0
    %v2741 = vadd.f32 0.0, %v2740
    %v2742 = vpop.f32.mrb[0].mxu0
    %2743 = vmatprep.mubr.bf16.mxu0 %v2156
    %2744 = vmatmul.mubr.bf16.gmra.mrb[0].mxu0 %v2092
    %v2745 = vpop.f32.mrb[0].mxu0
    %v2746 = vadd.f32 0.0, %v2745
    %v2747 = vpop.f32.mrb[0].mxu0
    %v2748 = vpop.f32.mrb[0].mxu0
    %v2749 = vadd.f32 0.0, %v2748
    %v2750 = vpop.f32.mrb[0].mxu0
    %2751 = vmatprep.mubr.bf16.mxu0 %v2157
    %2752 = vmatmul.mubr.bf16.gmra.mrb[0].mxu0 %v2093
    %v2753 = vpop.f32.mrb[0].mxu0
    %v2754 = vadd.f32 0.0, %v2753
    %v2755 = vpop.f32.mrb[0].mxu0
    %v2756 = vpop.f32.mrb[0].mxu0
    %v2757 = vadd.f32 0.0, %v2756
    %v2758 = vpop.f32.mrb[0].mxu0
    %2759 = vmatprep.mubr.bf16.mxu0 %v2158
    %2760 = vmatmul.mubr.bf16.gmra.mrb[0].mxu0 %v2094
    %v2761 = vpop.f32.mrb[0].mxu0
    %v2762 = vadd.f32 0.0, %v2761
    %v2763 = vpop.f32.mrb[0].mxu0
    %v2764 = vpop.f32.mrb[0].mxu0
    %v2765 = vadd.f32 0.0, %v2764
    %v2766 = vpop.f32.mrb[0].mxu0
    %2767 = vdwg.mxu0
    %2768 = vmatprep.subr.bf16.mxu0 0
    %2769 = vmatpush1.bf16.msra.mxu0 %v2431
    %2770 = vmatprep.subr.bf16.mxu0 0
    %2771 = vmatpush1.bf16.msra.mxu0 %v2432
    %2772 = vmatprep.subr.bf16.mxu0 0
    %2773 = vmatpush1.bf16.msra.mxu0 %v2433
    %2774 = vmatprep.subr.bf16.mxu0 0
    %2775 = vmatpush1.bf16.msra.mxu0 %v2434
    %2776 = vmatprep.subr.bf16.mxu0 0
    %2777 = vmatpush1.bf16.msra.mxu0 %v2435
    %2778 = vmatprep.subr.bf16.mxu0 0
    %2779 = vmatpush1.bf16.msra.mxu0 %v2436
    %2780 = vmatprep.subr.bf16.mxu0 0
    %2781 = vmatpush1.bf16.msra.mxu0 %v2437
    %2782 = vmatprep.subr.bf16.mxu0 0
    %2783 = vmatpush1.bf16.msra.mxu0 %v2438
    %2784 = vmatprep.subr.bf16.mxu0 0
    %2785 = vmatpush1.bf16.msra.mxu0 %v2439
    %2786 = vmatprep.subr.bf16.mxu0 0
    %2787 = vmatpush1.bf16.msra.mxu0 %v2440
    %2788 = vmatprep.subr.bf16.mxu0 0
    %2789 = vmatpush1.bf16.msra.mxu0 %v2441
    %2790 = vmatprep.subr.bf16.mxu0 0
    %2791 = vmatpush1.bf16.msra.mxu0 %v2442
    %2792 = vmatprep.subr.bf16.mxu0 0
    %2793 = vmatpush1.bf16.msra.mxu0 %v2443
    %2794 = vmatprep.subr.bf16.mxu0 0
    %2795 = vmatpush1.bf16.msra.mxu0 %v2444
    %2796 = vmatprep.subr.bf16.mxu0 0
    %2797 = vmatpush1.bf16.msra.mxu0 %v2445
    %2798 = vmatprep.subr.bf16.mxu0 0
    %2799 = vmatpush1.bf16.msra.mxu0 %v2446
    %2800 = vmatprep.mubr.bf16.mxu0 %v2231
    %2801 = vmatmul.mubr.bf16.gmra.mrb[0].mxu0 %v2167
    %v2802 = vpop.f32.mrb[0].mxu0
    %v2803 = vadd.f32 %v2514, %v2802
    %v2804 = vpop.f32.mrb[0].mxu0
    %v2805 = vpop.f32.mrb[0].mxu0
    %v2806 = vadd.f32 %v2517, %v2805
    %v2807 = vpop.f32.mrb[0].mxu0
    %2808 = vmatprep.mubr.bf16.mxu0 %v2232
    %2809 = vmatmul.mubr.bf16.gmra.mrb[0].mxu0 %v2168
    %v2810 = vpop.f32.mrb[0].mxu0
    %v2811 = vadd.f32 %v2522, %v2810
    %v2812 = vpop.f32.mrb[0].mxu0
    %v2813 = vpop.f32.mrb[0].mxu0
    %v2814 = vadd.f32 %v2525, %v2813
    %v2815 = vpop.f32.mrb[0].mxu0
    %2816 = vmatprep.mubr.bf16.mxu0 %v2233
    %2817 = vmatmul.mubr.bf16.gmra.mrb[0].mxu0 %v2169
    %v2818 = vpop.f32.mrb[0].mxu0
    %v2819 = vadd.f32 %v2530, %v2818
    %v2820 = vpop.f32.mrb[0].mxu0
    %v2821 = vpop.f32.mrb[0].mxu0
    %v2822 = vadd.f32 %v2533, %v2821
    %v2823 = vpop.f32.mrb[0].mxu0
    %2824 = vmatprep.mubr.bf16.mxu0 %v2234
    %2825 = vmatmul.mubr.bf16.gmra.mrb[0].mxu0 %v2170
    %v2826 = vpop.f32.mrb[0].mxu0
    %v2827 = vadd.f32 %v2538, %v2826
    %v2828 = vpop.f32.mrb[0].mxu0
    %v2829 = vpop.f32.mrb[0].mxu0
    %v2830 = vadd.f32 %v2541, %v2829
    %v2831 = vpop.f32.mrb[0].mxu0
    %2832 = vmatprep.mubr.bf16.mxu0 %v2235
    %2833 = vmatmul.mubr.bf16.gmra.mrb[0].mxu0 %v2171
    %v2834 = vpop.f32.mrb[0].mxu0
    %v2835 = vadd.f32 %v2546, %v2834
    %v2836 = vpop.f32.mrb[0].mxu0
    %v2837 = vpop.f32.mrb[0].mxu0
    %v2838 = vadd.f32 %v2549, %v2837
    %v2839 = vpop.f32.mrb[0].mxu0
    %2840 = vmatprep.mubr.bf16.mxu0 %v2236
    %2841 = vmatmul.mubr.bf16.gmra.mrb[0].mxu0 %v2172
    %v2842 = vpop.f32.mrb[0].mxu0
    %v2843 = vadd.f32 %v2554, %v2842
    %v2844 = vpop.f32.mrb[0].mxu0
    %v2845 = vpop.f32.mrb[0].mxu0
    %v2846 = vadd.f32 %v2557, %v2845
    %v2847 = vpop.f32.mrb[0].mxu0
    %2848 = vmatprep.mubr.bf16.mxu0 %v2237
    %2849 = vmatmul.mubr.bf16.gmra.mrb[0].mxu0 %v2173
    %v2850 = vpop.f32.mrb[0].mxu0
    %v2851 = vadd.f32 %v2562, %v2850
    %v2852 = vpop.f32.mrb[0].mxu0
    %v2853 = vpop.f32.mrb[0].mxu0
    %v2854 = vadd.f32 %v2565, %v2853
    %v2855 = vpop.f32.mrb[0].mxu0
    %2856 = vmatprep.mubr.bf16.mxu0 %v2238
    %2857 = vmatmul.mubr.bf16.gmra.mrb[0].mxu0 %v2174
    %v2858 = vpop.f32.mrb[0].mxu0
    %v2859 = vadd.f32 %v2570, %v2858
    %v2860 = vpop.f32.mrb[0].mxu0
    %v2861 = vpop.f32.mrb[0].mxu0
    %v2862 = vadd.f32 %v2573, %v2861
    %v2863 = vpop.f32.mrb[0].mxu0
    %2864 = vmatprep.mubr.bf16.mxu0 %v2247
    %2865 = vmatmul.mubr.bf16.gmra.mrb[0].mxu0 %v2183
    %v2866 = vpop.f32.mrb[0].mxu0
    %v2867 = vadd.f32 %v2578, %v2866
    %v2868 = vpop.f32.mrb[0].mxu0
    %v2869 = vpop.f32.mrb[0].mxu0
    %v2870 = vadd.f32 %v2581, %v2869
    %v2871 = vpop.f32.mrb[0].mxu0
    %2872 = vmatprep.mubr.bf16.mxu0 %v2248
    %2873 = vmatmul.mubr.bf16.gmra.mrb[0].mxu0 %v2184
    %v2874 = vpop.f32.mrb[0].mxu0
    %v2875 = vadd.f32 %v2586, %v2874
    %v2876 = vpop.f32.mrb[0].mxu0
    %v2877 = vpop.f32.mrb[0].mxu0
    %v2878 = vadd.f32 %v2589, %v2877
    %v2879 = vpop.f32.mrb[0].mxu0
    %2880 = vmatprep.mubr.bf16.mxu0 %v2249
    %2881 = vmatmul.mubr.bf16.gmra.mrb[0].mxu0 %v2185
    %v2882 = vpop.f32.mrb[0].mxu0
    %v2883 = vadd.f32 %v2594, %v2882
    %v2884 = vpop.f32.mrb[0].mxu0
    %v2885 = vpop.f32.mrb[0].mxu0
    %v2886 = vadd.f32 %v2597, %v2885
    %v2887 = vpop.f32.mrb[0].mxu0
    %2888 = vmatprep.mubr.bf16.mxu0 %v2250
    %2889 = vmatmul.mubr.bf16.gmra.mrb[0].mxu0 %v2186
    %v2890 = vpop.f32.mrb[0].mxu0
    %v2891 = vadd.f32 %v2602, %v2890
    %v2892 = vpop.f32.mrb[0].mxu0
    %v2893 = vpop.f32.mrb[0].mxu0
    %v2894 = vadd.f32 %v2605, %v2893
    %v2895 = vpop.f32.mrb[0].mxu0
    %2896 = vmatprep.mubr.bf16.mxu0 %v2251
    %2897 = vmatmul.mubr.bf16.gmra.mrb[0].mxu0 %v2187
    %v2898 = vpop.f32.mrb[0].mxu0
    %v2899 = vadd.f32 %v2610, %v2898
    %v2900 = vpop.f32.mrb[0].mxu0
    %v2901 = vpop.f32.mrb[0].mxu0
    %v2902 = vadd.f32 %v2613, %v2901
    %v2903 = vpop.f32.mrb[0].mxu0
    %2904 = vmatprep.mubr.bf16.mxu0 %v2252
    %2905 = vmatmul.mubr.bf16.gmra.mrb[0].mxu0 %v2188
    %v2906 = vpop.f32.mrb[0].mxu0
    %v2907 = vadd.f32 %v2618, %v2906
    %v2908 = vpop.f32.mrb[0].mxu0
    %v2909 = vpop.f32.mrb[0].mxu0
    %v2910 = vadd.f32 %v2621, %v2909
    %v2911 = vpop.f32.mrb[0].mxu0
    %2912 = vmatprep.mubr.bf16.mxu0 %v2253
    %2913 = vmatmul.mubr.bf16.gmra.mrb[0].mxu0 %v2189
    %v2914 = vpop.f32.mrb[0].mxu0
    %v2915 = vadd.f32 %v2626, %v2914
    %v2916 = vpop.f32.mrb[0].mxu0
    %v2917 = vpop.f32.mrb[0].mxu0
    %v2918 = vadd.f32 %v2629, %v2917
    %v2919 = vpop.f32.mrb[0].mxu0
    %2920 = vmatprep.mubr.bf16.mxu0 %v2254
    %2921 = vmatmul.mubr.bf16.gmra.mrb[0].mxu0 %v2190
    %v2922 = vpop.f32.mrb[0].mxu0
    %v2923 = vadd.f32 %v2634, %v2922
    %v2924 = vpop.f32.mrb[0].mxu0
    %v2925 = vpop.f32.mrb[0].mxu0
    %v2926 = vadd.f32 %v2637, %v2925
    %v2927 = vpop.f32.mrb[0].mxu0
    %2928 = vmatprep.mubr.bf16.mxu0 %v2263
    %2929 = vmatmul.mubr.bf16.gmra.mrb[0].mxu0 %v2199
    %v2930 = vpop.f32.mrb[0].mxu0
    %v2931 = vadd.f32 %v2642, %v2930
    %v2932 = vpop.f32.mrb[0].mxu0
    %v2933 = vpop.f32.mrb[0].mxu0
    %v2934 = vadd.f32 %v2645, %v2933
    %v2935 = vpop.f32.mrb[0].mxu0
    %2936 = vmatprep.mubr.bf16.mxu0 %v2264
    %2937 = vmatmul.mubr.bf16.gmra.mrb[0].mxu0 %v2200
    %v2938 = vpop.f32.mrb[0].mxu0
    %v2939 = vadd.f32 %v2650, %v2938
    %v2940 = vpop.f32.mrb[0].mxu0
    %v2941 = vpop.f32.mrb[0].mxu0
    %v2942 = vadd.f32 %v2653, %v2941
    %v2943 = vpop.f32.mrb[0].mxu0
    %2944 = vmatprep.mubr.bf16.mxu0 %v2265
    %2945 = vmatmul.mubr.bf16.gmra.mrb[0].mxu0 %v2201
    %v2946 = vpop.f32.mrb[0].mxu0
    %v2947 = vadd.f32 %v2658, %v2946
    %v2948 = vpop.f32.mrb[0].mxu0
    %v2949 = vpop.f32.mrb[0].mxu0
    %v2950 = vadd.f32 %v2661, %v2949
    %v2951 = vpop.f32.mrb[0].mxu0
    %2952 = vmatprep.mubr.bf16.mxu0 %v2266
    %2953 = vmatmul.mubr.bf16.gmra.mrb[0].mxu0 %v2202
    %v2954 = vpop.f32.mrb[0].mxu0
    %v2955 = vadd.f32 %v2666, %v2954
    %v2956 = vpop.f32.mrb[0].mxu0
    %v2957 = vpop.f32.mrb[0].mxu0
    %v2958 = vadd.f32 %v2669, %v2957
    %v2959 = vpop.f32.mrb[0].mxu0
    %2960 = vmatprep.mubr.bf16.mxu0 %v2267
    %2961 = vmatmul.mubr.bf16.gmra.mrb[0].mxu0 %v2203
    %v2962 = vpop.f32.mrb[0].mxu0
    %v2963 = vadd.f32 %v2674, %v2962
    %v2964 = vpop.f32.mrb[0].mxu0
    %v2965 = vpop.f32.mrb[0].mxu0
    %v2966 = vadd.f32 %v2677, %v2965
    %v2967 = vpop.f32.mrb[0].mxu0
    %2968 = vmatprep.mubr.bf16.mxu0 %v2268
    %2969 = vmatmul.mubr.bf16.gmra.mrb[0].mxu0 %v2204
    %v2970 = vpop.f32.mrb[0].mxu0
    %v2971 = vadd.f32 %v2682, %v2970
    %v2972 = vpop.f32.mrb[0].mxu0
    %v2973 = vpop.f32.mrb[0].mxu0
    %v2974 = vadd.f32 %v2685, %v2973
    %v2975 = vpop.f32.mrb[0].mxu0
    %2976 = vmatprep.mubr.bf16.mxu0 %v2269
    %2977 = vmatmul.mubr.bf16.gmra.mrb[0].mxu0 %v2205
    %v2978 = vpop.f32.mrb[0].mxu0
    %v2979 = vadd.f32 %v2690, %v2978
    %v2980 = vpop.f32.mrb[0].mxu0
    %v2981 = vpop.f32.mrb[0].mxu0
    %v2982 = vadd.f32 %v2693, %v2981
    %v2983 = vpop.f32.mrb[0].mxu0
    %2984 = vmatprep.mubr.bf16.mxu0 %v2270
    %2985 = vmatmul.mubr.bf16.gmra.mrb[0].mxu0 %v2206
    %v2986 = vpop.f32.mrb[0].mxu0
    %v2987 = vadd.f32 %v2698, %v2986
    %v2988 = vpop.f32.mrb[0].mxu0
    %v2989 = vpop.f32.mrb[0].mxu0
    %v2990 = vadd.f32 %v2701, %v2989
    %v2991 = vpop.f32.mrb[0].mxu0
    %2992 = vmatprep.mubr.bf16.mxu0 %v2279
    %2993 = vmatmul.mubr.bf16.gmra.mrb[0].mxu0 %v2215
    %v2994 = vpop.f32.mrb[0].mxu0
    %v2995 = vadd.f32 %v2706, %v2994
    %v2996 = vpop.f32.mrb[0].mxu0
    %v2997 = vpop.f32.mrb[0].mxu0
    %v2998 = vadd.f32 %v2709, %v2997
    %v2999 = vpop.f32.mrb[0].mxu0
    %3000 = vmatprep.mubr.bf16.mxu0 %v2280
    %3001 = vmatmul.mubr.bf16.gmra.mrb[0].mxu0 %v2216
    %v3002 = vpop.f32.mrb[0].mxu0
    %v3003 = vadd.f32 %v2714, %v3002
    %v3004 = vpop.f32.mrb[0].mxu0
    %v3005 = vpop.f32.mrb[0].mxu0
    %v3006 = vadd.f32 %v2717, %v3005
    %v3007 = vpop.f32.mrb[0].mxu0
    %3008 = vmatprep.mubr.bf16.mxu0 %v2281
    %3009 = vmatmul.mubr.bf16.gmra.mrb[0].mxu0 %v2217
    %v3010 = vpop.f32.mrb[0].mxu0
    %v3011 = vadd.f32 %v2722, %v3010
    %v3012 = vpop.f32.mrb[0].mxu0
    %v3013 = vpop.f32.mrb[0].mxu0
    %v3014 = vadd.f32 %v2725, %v3013
    %v3015 = vpop.f32.mrb[0].mxu0
    %3016 = vmatprep.mubr.bf16.mxu0 %v2282
    %3017 = vmatmul.mubr.bf16.gmra.mrb[0].mxu0 %v2218
    %v3018 = vpop.f32.mrb[0].mxu0
    %v3019 = vadd.f32 %v2730, %v3018
    %v3020 = vpop.f32.mrb[0].mxu0
    %v3021 = vpop.f32.mrb[0].mxu0
    %v3022 = vadd.f32 %v2733, %v3021
    %v3023 = vpop.f32.mrb[0].mxu0
    %3024 = vmatprep.mubr.bf16.mxu0 %v2283
    %3025 = vmatmul.mubr.bf16.gmra.mrb[0].mxu0 %v2219
    %v3026 = vpop.f32.mrb[0].mxu0
    %v3027 = vadd.f32 %v2738, %v3026
    %v3028 = vpop.f32.mrb[0].mxu0
    %v3029 = vpop.f32.mrb[0].mxu0
    %v3030 = vadd.f32 %v2741, %v3029
    %v3031 = vpop.f32.mrb[0].mxu0
    %3032 = vmatprep.mubr.bf16.mxu0 %v2284
    %3033 = vmatmul.mubr.bf16.gmra.mrb[0].mxu0 %v2220
    %v3034 = vpop.f32.mrb[0].mxu0
    %v3035 = vadd.f32 %v2746, %v3034
    %v3036 = vpop.f32.mrb[0].mxu0
    %v3037 = vpop.f32.mrb[0].mxu0
    %v3038 = vadd.f32 %v2749, %v3037
    %v3039 = vpop.f32.mrb[0].mxu0
    %3040 = vmatprep.mubr.bf16.mxu0 %v2285
    %3041 = vmatmul.mubr.bf16.gmra.mrb[0].mxu0 %v2221
    %v3042 = vpop.f32.mrb[0].mxu0
    %v3043 = vadd.f32 %v2754, %v3042
    %v3044 = vpop.f32.mrb[0].mxu0
    %v3045 = vpop.f32.mrb[0].mxu0
    %v3046 = vadd.f32 %v2757, %v3045
    %v3047 = vpop.f32.mrb[0].mxu0
    %3048 = vmatprep.mubr.bf16.mxu0 %v2286
    %3049 = vmatmul.mubr.bf16.gmra.mrb[0].mxu0 %v2222
    %v3050 = vpop.f32.mrb[0].mxu0
    %v3051 = vadd.f32 %v2762, %v3050
    %v3052 = vpop.f32.mrb[0].mxu0
    %v3053 = vpop.f32.mrb[0].mxu0
    %v3054 = vadd.f32 %v2765, %v3053
    %v3055 = vpop.f32.mrb[0].mxu0
    %3056 = vdwg.mxu0
    %s3057 = scalar_lea.vmem %s4, %s296
    %v3058 = vld [vmem:[%s3057] sm:$0xff]
    %v3059 = vld [vmem:[%s3057 + $0x8] sm:$0xff]
    %v3060 = vld [vmem:[%s3057 + $0x10] sm:$0xff]
    %v3061 = vld [vmem:[%s3057 + $0x18] sm:$0xff]
    %v3062 = vld [vmem:[%s3057 + $0x20] sm:$0xff]
    %v3063 = vld [vmem:[%s3057 + $0x28] sm:$0xff]
    %v3064 = vld [vmem:[%s3057 + $0x30] sm:$0xff]
    %v3065 = vld [vmem:[%s3057 + $0x38] sm:$0xff]
    %v3066 = vld [vmem:[%s3057 + $0x40] sm:$0xff]
    %v3067 = vld [vmem:[%s3057 + $0x48] sm:$0xff]
    %v3068 = vld [vmem:[%s3057 + $0x50] sm:$0xff]
    %v3069 = vld [vmem:[%s3057 + $0x58] sm:$0xff]
    %v3070 = vld [vmem:[%s3057 + $0x60] sm:$0xff]
    %v3071 = vld [vmem:[%s3057 + $0x68] sm:$0xff]
    %v3072 = vld [vmem:[%s3057 + $0x70] sm:$0xff]
    %v3073 = vld [vmem:[%s3057 + $0x78] sm:$0xff]
    %v3074 = vld [vmem:[%s3057 + $0x80] sm:$0xff]
    %v3075 = vld [vmem:[%s3057 + $0x88] sm:$0xff]
    %v3076 = vld [vmem:[%s3057 + $0x90] sm:$0xff]
    %v3077 = vld [vmem:[%s3057 + $0x98] sm:$0xff]
    %v3078 = vld [vmem:[%s3057 + $0xa0] sm:$0xff]
    %v3079 = vld [vmem:[%s3057 + $0xa8] sm:$0xff]
    %v3080 = vld [vmem:[%s3057 + $0xb0] sm:$0xff]
    %v3081 = vld [vmem:[%s3057 + $0xb8] sm:$0xff]
    %v3082 = vld [vmem:[%s3057 + $0xc0] sm:$0xff]
    %v3083 = vld [vmem:[%s3057 + $0xc8] sm:$0xff]
    %v3084 = vld [vmem:[%s3057 + $0xd0] sm:$0xff]
    %v3085 = vld [vmem:[%s3057 + $0xd8] sm:$0xff]
    %v3086 = vld [vmem:[%s3057 + $0xe0] sm:$0xff]
    %v3087 = vld [vmem:[%s3057 + $0xe8] sm:$0xff]
    %v3088 = vld [vmem:[%s3057 + $0xf0] sm:$0xff]
    %v3089 = vld [vmem:[%s3057 + $0xf8] sm:$0xff]
    %v3090 = vld [vmem:[%s3057 + $0x100] sm:$0xff]
    %v3091 = vld [vmem:[%s3057 + $0x108] sm:$0xff]
    %v3092 = vld [vmem:[%s3057 + $0x110] sm:$0xff]
    %v3093 = vld [vmem:[%s3057 + $0x118] sm:$0xff]
    %v3094 = vld [vmem:[%s3057 + $0x120] sm:$0xff]
    %v3095 = vld [vmem:[%s3057 + $0x128] sm:$0xff]
    %v3096 = vld [vmem:[%s3057 + $0x130] sm:$0xff]
    %v3097 = vld [vmem:[%s3057 + $0x138] sm:$0xff]
    %v3098 = vld [vmem:[%s3057 + $0x140] sm:$0xff]
    %v3099 = vld [vmem:[%s3057 + $0x148] sm:$0xff]
    %v3100 = vld [vmem:[%s3057 + $0x150] sm:$0xff]
    %v3101 = vld [vmem:[%s3057 + $0x158] sm:$0xff]
    %v3102 = vld [vmem:[%s3057 + $0x160] sm:$0xff]
    %v3103 = vld [vmem:[%s3057 + $0x168] sm:$0xff]
    %v3104 = vld [vmem:[%s3057 + $0x170] sm:$0xff]
    %v3105 = vld [vmem:[%s3057 + $0x178] sm:$0xff]
    %v3106 = vld [vmem:[%s3057 + $0x180] sm:$0xff]
    %v3107 = vld [vmem:[%s3057 + $0x188] sm:$0xff]
    %v3108 = vld [vmem:[%s3057 + $0x190] sm:$0xff]
    %v3109 = vld [vmem:[%s3057 + $0x198] sm:$0xff]
    %v3110 = vld [vmem:[%s3057 + $0x1a0] sm:$0xff]
    %v3111 = vld [vmem:[%s3057 + $0x1a8] sm:$0xff]
    %v3112 = vld [vmem:[%s3057 + $0x1b0] sm:$0xff]
    %v3113 = vld [vmem:[%s3057 + $0x1b8] sm:$0xff]
    %v3114 = vld [vmem:[%s3057 + $0x1c0] sm:$0xff]
    %v3115 = vld [vmem:[%s3057 + $0x1c8] sm:$0xff]
    %v3116 = vld [vmem:[%s3057 + $0x1d0] sm:$0xff]
    %v3117 = vld [vmem:[%s3057 + $0x1d8] sm:$0xff]
    %v3118 = vld [vmem:[%s3057 + $0x1e0] sm:$0xff]
    %v3119 = vld [vmem:[%s3057 + $0x1e8] sm:$0xff]
    %v3120 = vld [vmem:[%s3057 + $0x1f0] sm:$0xff]
    %v3121 = vld [vmem:[%s3057 + $0x1f8] sm:$0xff]
    %v3122 = vadd.f32 %v3058, %v2803
    %v3123 = vadd.f32 %v3059, %v2806
    %v3124 = vadd.f32 %v3060, %v2811
    %v3125 = vadd.f32 %v3061, %v2814
    %v3126 = vadd.f32 %v3062, %v2819
    %v3127 = vadd.f32 %v3063, %v2822
    %v3128 = vadd.f32 %v3064, %v2827
    %v3129 = vadd.f32 %v3065, %v2830
    %v3130 = vadd.f32 %v3066, %v2835
    %v3131 = vadd.f32 %v3067, %v2838
    %v3132 = vadd.f32 %v3068, %v2843
    %v3133 = vadd.f32 %v3069, %v2846
    %v3134 = vadd.f32 %v3070, %v2851
    %v3135 = vadd.f32 %v3071, %v2854
    %v3136 = vadd.f32 %v3072, %v2859
    %v3137 = vadd.f32 %v3073, %v2862
    %v3138 = vadd.f32 %v3074, %v2867
    %v3139 = vadd.f32 %v3075, %v2870
    %v3140 = vadd.f32 %v3076, %v2875
    %v3141 = vadd.f32 %v3077, %v2878
    %v3142 = vadd.f32 %v3078, %v2883
    %v3143 = vadd.f32 %v3079, %v2886
    %v3144 = vadd.f32 %v3080, %v2891
    %v3145 = vadd.f32 %v3081, %v2894
    %v3146 = vadd.f32 %v3082, %v2899
    %v3147 = vadd.f32 %v3083, %v2902
    %v3148 = vadd.f32 %v3084, %v2907
    %v3149 = vadd.f32 %v3085, %v2910
    %v3150 = vadd.f32 %v3086, %v2915
    %v3151 = vadd.f32 %v3087, %v2918
    %v3152 = vadd.f32 %v3088, %v2923
    %v3153 = vadd.f32 %v3089, %v2926
    %v3154 = vadd.f32 %v3090, %v2931
    %v3155 = vadd.f32 %v3091, %v2934
    %v3156 = vadd.f32 %v3092, %v2939
    %v3157 = vadd.f32 %v3093, %v2942
    %v3158 = vadd.f32 %v3094, %v2947
    %v3159 = vadd.f32 %v3095, %v2950
    %v3160 = vadd.f32 %v3096, %v2955
    %v3161 = vadd.f32 %v3097, %v2958
    %v3162 = vadd.f32 %v3098, %v2963
    %v3163 = vadd.f32 %v3099, %v2966
    %v3164 = vadd.f32 %v3100, %v2971
    %v3165 = vadd.f32 %v3101, %v2974
    %v3166 = vadd.f32 %v3102, %v2979
    %v3167 = vadd.f32 %v3103, %v2982
    %v3168 = vadd.f32 %v3104, %v2987
    %v3169 = vadd.f32 %v3105, %v2990
    %v3170 = vadd.f32 %v3106, %v2995
    %v3171 = vadd.f32 %v3107, %v2998
    %v3172 = vadd.f32 %v3108, %v3003
    %v3173 = vadd.f32 %v3109, %v3006
    %v3174 = vadd.f32 %v3110, %v3011
    %v3175 = vadd.f32 %v3111, %v3014
    %v3176 = vadd.f32 %v3112, %v3019
    %v3177 = vadd.f32 %v3113, %v3022
    %v3178 = vadd.f32 %v3114, %v3027
    %v3179 = vadd.f32 %v3115, %v3030
    %v3180 = vadd.f32 %v3116, %v3035
    %v3181 = vadd.f32 %v3117, %v3038
    %v3182 = vadd.f32 %v3118, %v3043
    %v3183 = vadd.f32 %v3119, %v3046
    %v3184 = vadd.f32 %v3120, %v3051
    %v3185 = vadd.f32 %v3121, %v3054
    %3186 = vst [vmem:[%s3057] sm:$0xff] %v3122
    %3187 = vst [vmem:[%s3057 + $0x8] sm:$0xff] %v3123
    %3188 = vst [vmem:[%s3057 + $0x10] sm:$0xff] %v3124
    %3189 = vst [vmem:[%s3057 + $0x18] sm:$0xff] %v3125
    %3190 = vst [vmem:[%s3057 + $0x20] sm:$0xff] %v3126
    %3191 = vst [vmem:[%s3057 + $0x28] sm:$0xff] %v3127
    %3192 = vst [vmem:[%s3057 + $0x30] sm:$0xff] %v3128
    %3193 = vst [vmem:[%s3057 + $0x38] sm:$0xff] %v3129
    %3194 = vst [vmem:[%s3057 + $0x40] sm:$0xff] %v3130
    %3195 = vst [vmem:[%s3057 + $0x48] sm:$0xff] %v3131
    %3196 = vst [vmem:[%s3057 + $0x50] sm:$0xff] %v3132
    %3197 = vst [vmem:[%s3057 + $0x58] sm:$0xff] %v3133
    %3198 = vst [vmem:[%s3057 + $0x60] sm:$0xff] %v3134
    %3199 = vst [vmem:[%s3057 + $0x68] sm:$0xff] %v3135
    %3200 = vst [vmem:[%s3057 + $0x70] sm:$0xff] %v3136
    %3201 = vst [vmem:[%s3057 + $0x78] sm:$0xff] %v3137
    %3202 = vst [vmem:[%s3057 + $0x80] sm:$0xff] %v3138
    %3203 = vst [vmem:[%s3057 + $0x88] sm:$0xff] %v3139
    %3204 = vst [vmem:[%s3057 + $0x90] sm:$0xff] %v3140
    %3205 = vst [vmem:[%s3057 + $0x98] sm:$0xff] %v3141
    %3206 = vst [vmem:[%s3057 + $0xa0] sm:$0xff] %v3142
    %3207 = vst [vmem:[%s3057 + $0xa8] sm:$0xff] %v3143
    %3208 = vst [vmem:[%s3057 + $0xb0] sm:$0xff] %v3144
    %3209 = vst [vmem:[%s3057 + $0xb8] sm:$0xff] %v3145
    %3210 = vst [vmem:[%s3057 + $0xc0] sm:$0xff] %v3146
    %3211 = vst [vmem:[%s3057 + $0xc8] sm:$0xff] %v3147
    %3212 = vst [vmem:[%s3057 + $0xd0] sm:$0xff] %v3148
    %3213 = vst [vmem:[%s3057 + $0xd8] sm:$0xff] %v3149
    %3214 = vst [vmem:[%s3057 + $0xe0] sm:$0xff] %v3150
    %3215 = vst [vmem:[%s3057 + $0xe8] sm:$0xff] %v3151
    %3216 = vst [vmem:[%s3057 + $0xf0] sm:$0xff] %v3152
    %3217 = vst [vmem:[%s3057 + $0xf8] sm:$0xff] %v3153
    %3218 = vst [vmem:[%s3057 + $0x100] sm:$0xff] %v3154
    %3219 = vst [vmem:[%s3057 + $0x108] sm:$0xff] %v3155
    %3220 = vst [vmem:[%s3057 + $0x110] sm:$0xff] %v3156
    %3221 = vst [vmem:[%s3057 + $0x118] sm:$0xff] %v3157
    %3222 = vst [vmem:[%s3057 + $0x120] sm:$0xff] %v3158
    %3223 = vst [vmem:[%s3057 + $0x128] sm:$0xff] %v3159
    %3224 = vst [vmem:[%s3057 + $0x130] sm:$0xff] %v3160
    %3225 = vst [vmem:[%s3057 + $0x138] sm:$0xff] %v3161
    %3226 = vst [vmem:[%s3057 + $0x140] sm:$0xff] %v3162
    %3227 = vst [vmem:[%s3057 + $0x148] sm:$0xff] %v3163
    %3228 = vst [vmem:[%s3057 + $0x150] sm:$0xff] %v3164
    %3229 = vst [vmem:[%s3057 + $0x158] sm:$0xff] %v3165
    %3230 = vst [vmem:[%s3057 + $0x160] sm:$0xff] %v3166
    %3231 = vst [vmem:[%s3057 + $0x168] sm:$0xff] %v3167
    %3232 = vst [vmem:[%s3057 + $0x170] sm:$0xff] %v3168
    %3233 = vst [vmem:[%s3057 + $0x178] sm:$0xff] %v3169
    %3234 = vst [vmem:[%s3057 + $0x180] sm:$0xff] %v3170
    %3235 = vst [vmem:[%s3057 + $0x188] sm:$0xff] %v3171
    %3236 = vst [vmem:[%s3057 + $0x190] sm:$0xff] %v3172
    %3237 = vst [vmem:[%s3057 + $0x198] sm:$0xff] %v3173
    %3238 = vst [vmem:[%s3057 + $0x1a0] sm:$0xff] %v3174
    %3239 = vst [vmem:[%s3057 + $0x1a8] sm:$0xff] %v3175
    %3240 = vst [vmem:[%s3057 + $0x1b0] sm:$0xff] %v3176
    %3241 = vst [vmem:[%s3057 + $0x1b8] sm:$0xff] %v3177
    %3242 = vst [vmem:[%s3057 + $0x1c0] sm:$0xff] %v3178
    %3243 = vst [vmem:[%s3057 + $0x1c8] sm:$0xff] %v3179
    %3244 = vst [vmem:[%s3057 + $0x1d0] sm:$0xff] %v3180
    %3245 = vst [vmem:[%s3057 + $0x1d8] sm:$0xff] %v3181
    %3246 = vst [vmem:[%s3057 + $0x1e0] sm:$0xff] %v3182
    %3247 = vst [vmem:[%s3057 + $0x1e8] sm:$0xff] %v3183
    %3248 = vst [vmem:[%s3057 + $0x1f0] sm:$0xff] %v3184
    %3249 = vst [vmem:[%s3057 + $0x1f8] sm:$0xff] %v3185
    // Predicated region
    $region26: #{shadow_model_forward.4} parent=1 // pred_check
      _
    $region27: #{shadow_model_forward.4} parent=1 // pred_check_branch
      %3251 = sbr.rel (0) target = $region29
    $region28: #{shadow_model_forward.4} parent=1 // pred_region
      _
    $region29: #{shadow_model_forward.4} parent=1 // pred_fallthru
      _
    // Predicated region
    $region30: #{shadow_model_forward.4} parent=1 // pred_check
      _
    $region31: #{shadow_model_forward.4} parent=1 // pred_check_branch
      %3253 = sbr.rel (0) target = $region33
    $region32: #{shadow_model_forward.4} parent=1 // pred_region
      _
    $region33: #{shadow_model_forward.4} parent=1 // pred_fallthru
      _
    // Predicated region
    $region34: #{shadow_model_forward.4} parent=1 // pred_check
      _
    $region35: #{shadow_model_forward.4} parent=1 // pred_check_branch
      %3255 = sbr.rel (0) target = $region37
    $region36: #{shadow_model_forward.4} parent=1 // pred_region
      _
    $region37: #{shadow_model_forward.4} parent=1 // pred_fallthru
      _
    // Predicated region
    $region38: #{shadow_model_forward.4} parent=1 // pred_check
      _
    $region39: #{shadow_model_forward.4} parent=1 // pred_check_branch
      %3257 = sbr.rel (0) target = $region41
    $region40: #{shadow_model_forward.4} parent=1 // pred_region
      _
    $region41: #{shadow_model_forward.4} parent=1 // pred_fallthru
      _
    %3258 = vsyncpa [#allocation3], 1

// kernel: shadow_model_forward.5
$region0: #{shadow_model_forward.5}
  #allocation0 [shape = 'u32[]', space=smem, size = 0x4, offset = 0x4, fixed_abs, tag = 'smem constant byte address 0x4 - core index']
  #allocation1 [shape = 'u32[144,128]{1,0:T(1,128)}', space=vmem, size = 0x12000, scoped, tag = 'internal scratch']
  %s0 = inlined_call_operand.vmem [shape: bf16[512,512], index: 0, kind: input, shape index: {}]
  %s1 = inlined_call_operand.vmem [shape: bf16[512,128], index: 1, kind: input, shape index: {}]
  %s2 = inlined_call_operand.vmem [shape: bf16[512,128], index: 2, kind: input, shape index: {}]
  %s3 = inlined_call_operand.vmem [shape: f32[512,128], index: 3, kind: output, shape index: {0}]
  %s4 = inlined_call_operand.vmem [shape: f32[512,128], index: 4, kind: output, shape index: {1}]
  %5 = xla_tuple %s3, %s4
  %s6 = sld [smem:[#allocation0]]
  $region38: #{shadow_model_forward.5} parent=0
    _
  %s8 = ssub.s32 1, %s6
  %s9 = scalar_select 0, %s8, %s6
  // Predicated region
  $region2: #{shadow_model_forward.5} parent=0 // pred_check
    _
  $region3: #{shadow_model_forward.5} parent=0 // pred_check_branch
    %11 = sbr.rel (0) target = $region5
  $region4: #{shadow_model_forward.5} parent=0 // pred_region
    _
  $region5: #{shadow_model_forward.5} parent=0 // pred_fallthru
    _
  // Predicated region
  $region6: #{shadow_model_forward.5} parent=0 // pred_check
    _
  $region7: #{shadow_model_forward.5} parent=0 // pred_check_branch
    %13 = sbr.rel (0) target = $region9
  $region8: #{shadow_model_forward.5} parent=0 // pred_region
    _
  $region9: #{shadow_model_forward.5} parent=0 // pred_fallthru
    _
  // Predicated region
  $region10: #{shadow_model_forward.5} parent=0 // pred_check
    _
  $region11: #{shadow_model_forward.5} parent=0 // pred_check_branch
    %15 = sbr.rel (0) target = $region13
  $region12: #{shadow_model_forward.5} parent=0 // pred_region
    _
  $region13: #{shadow_model_forward.5} parent=0 // pred_fallthru
    _
  %p17 = scmp.eq.s32.totalorder 0, 0
  // Predicated region
  $region14: #{shadow_model_forward.5} parent=0 // pred_check
    %p18 = pneg %p17
  $region15: #{shadow_model_forward.5} parent=0 // pred_check_branch
    %20 = sbr.rel (%p18) target = $region17
  $region16: #{shadow_model_forward.5} parent=0 // pred_region
    %21 = vst [vmem:[%s3] sm:$0xff] 0.0
    %22 = vst [vmem:[%s3 + $0x8] sm:$0xff] 0.0
    %23 = vst [vmem:[%s3 + $0x10] sm:$0xff] 0.0
    %24 = vst [vmem:[%s3 + $0x18] sm:$0xff] 0.0
    %25 = vst [vmem:[%s3 + $0x20] sm:$0xff] 0.0
    %26 = vst [vmem:[%s3 + $0x28] sm:$0xff] 0.0
    %27 = vst [vmem:[%s3 + $0x30] sm:$0xff] 0.0
    %28 = vst [vmem:[%s3 + $0x38] sm:$0xff] 0.0
    %29 = vst [vmem:[%s3 + $0x40] sm:$0xff] 0.0
    %30 = vst [vmem:[%s3 + $0x48] sm:$0xff] 0.0
    %31 = vst [vmem:[%s3 + $0x50] sm:$0xff] 0.0
    %32 = vst [vmem:[%s3 + $0x58] sm:$0xff] 0.0
    %33 = vst [vmem:[%s3 + $0x60] sm:$0xff] 0.0
    %34 = vst [vmem:[%s3 + $0x68] sm:$0xff] 0.0
    %35 = vst [vmem:[%s3 + $0x70] sm:$0xff] 0.0
    %36 = vst [vmem:[%s3 + $0x78] sm:$0xff] 0.0
    %37 = vst [vmem:[%s3 + $0x80] sm:$0xff] 0.0
    %38 = vst [vmem:[%s3 + $0x88] sm:$0xff] 0.0
    %39 = vst [vmem:[%s3 + $0x90] sm:$0xff] 0.0
    %40 = vst [vmem:[%s3 + $0x98] sm:$0xff] 0.0
    %41 = vst [vmem:[%s3 + $0xa0] sm:$0xff] 0.0
    %42 = vst [vmem:[%s3 + $0xa8] sm:$0xff] 0.0
    %43 = vst [vmem:[%s3 + $0xb0] sm:$0xff] 0.0
    %44 = vst [vmem:[%s3 + $0xb8] sm:$0xff] 0.0
    %45 = vst [vmem:[%s3 + $0xc0] sm:$0xff] 0.0
    %46 = vst [vmem:[%s3 + $0xc8] sm:$0xff] 0.0
    %47 = vst [vmem:[%s3 + $0xd0] sm:$0xff] 0.0
    %48 = vst [vmem:[%s3 + $0xd8] sm:$0xff] 0.0
    %49 = vst [vmem:[%s3 + $0xe0] sm:$0xff] 0.0
    %50 = vst [vmem:[%s3 + $0xe8] sm:$0xff] 0.0
    %51 = vst [vmem:[%s3 + $0xf0] sm:$0xff] 0.0
    %52 = vst [vmem:[%s3 + $0xf8] sm:$0xff] 0.0
    %53 = vst [vmem:[%s3 + $0x100] sm:$0xff] 0.0
    %54 = vst [vmem:[%s3 + $0x108] sm:$0xff] 0.0
    %55 = vst [vmem:[%s3 + $0x110] sm:$0xff] 0.0
    %56 = vst [vmem:[%s3 + $0x118] sm:$0xff] 0.0
    %57 = vst [vmem:[%s3 + $0x120] sm:$0xff] 0.0
    %58 = vst [vmem:[%s3 + $0x128] sm:$0xff] 0.0
    %59 = vst [vmem:[%s3 + $0x130] sm:$0xff] 0.0
    %60 = vst [vmem:[%s3 + $0x138] sm:$0xff] 0.0
    %61 = vst [vmem:[%s3 + $0x140] sm:$0xff] 0.0
    %62 = vst [vmem:[%s3 + $0x148] sm:$0xff] 0.0
    %63 = vst [vmem:[%s3 + $0x150] sm:$0xff] 0.0
    %64 = vst [vmem:[%s3 + $0x158] sm:$0xff] 0.0
    %65 = vst [vmem:[%s3 + $0x160] sm:$0xff] 0.0
    %66 = vst [vmem:[%s3 + $0x168] sm:$0xff] 0.0
    %67 = vst [vmem:[%s3 + $0x170] sm:$0xff] 0.0
    %68 = vst [vmem:[%s3 + $0x178] sm:$0xff] 0.0
    %69 = vst [vmem:[%s3 + $0x180] sm:$0xff] 0.0
    %70 = vst [vmem:[%s3 + $0x188] sm:$0xff] 0.0
    %71 = vst [vmem:[%s3 + $0x190] sm:$0xff] 0.0
    %72 = vst [vmem:[%s3 + $0x198] sm:$0xff] 0.0
    %73 = vst [vmem:[%s3 + $0x1a0] sm:$0xff] 0.0
    %74 = vst [vmem:[%s3 + $0x1a8] sm:$0xff] 0.0
    %75 = vst [vmem:[%s3 + $0x1b0] sm:$0xff] 0.0
    %76 = vst [vmem:[%s3 + $0x1b8] sm:$0xff] 0.0
    %77 = vst [vmem:[%s3 + $0x1c0] sm:$0xff] 0.0
    %78 = vst [vmem:[%s3 + $0x1c8] sm:$0xff] 0.0
    %79 = vst [vmem:[%s3 + $0x1d0] sm:$0xff] 0.0
    %80 = vst [vmem:[%s3 + $0x1d8] sm:$0xff] 0.0
    %81 = vst [vmem:[%s3 + $0x1e0] sm:$0xff] 0.0
    %82 = vst [vmem:[%s3 + $0x1e8] sm:$0xff] 0.0
    %83 = vst [vmem:[%s3 + $0x1f0] sm:$0xff] 0.0
    %84 = vst [vmem:[%s3 + $0x1f8] sm:$0xff] 0.0
  $region17: #{shadow_model_forward.5} parent=0 // pred_fallthru
    _
  %p85 = scmp.eq.s32.totalorder 0, 0
  %p86 = pnand %p85, %p17
  %p87 = pneg %p86
  // Predicated region
  $region18: #{shadow_model_forward.5} parent=0 // pred_check
    _
  $region19: #{shadow_model_forward.5} parent=0 // pred_check_branch
    %89 = sbr.rel (%p86) target = $region21
  $region20: #{shadow_model_forward.5} parent=0 // pred_region
    %90 = vst [vmem:[%s4] sm:$0xff] 0.0
    %91 = vst [vmem:[%s4 + $0x8] sm:$0xff] 0.0
    %92 = vst [vmem:[%s4 + $0x10] sm:$0xff] 0.0
    %93 = vst [vmem:[%s4 + $0x18] sm:$0xff] 0.0
    %94 = vst [vmem:[%s4 + $0x20] sm:$0xff] 0.0
    %95 = vst [vmem:[%s4 + $0x28] sm:$0xff] 0.0
    %96 = vst [vmem:[%s4 + $0x30] sm:$0xff] 0.0
    %97 = vst [vmem:[%s4 + $0x38] sm:$0xff] 0.0
    %98 = vst [vmem:[%s4 + $0x40] sm:$0xff] 0.0
    %99 = vst [vmem:[%s4 + $0x48] sm:$0xff] 0.0
    %100 = vst [vmem:[%s4 + $0x50] sm:$0xff] 0.0
    %101 = vst [vmem:[%s4 + $0x58] sm:$0xff] 0.0
    %102 = vst [vmem:[%s4 + $0x60] sm:$0xff] 0.0
    %103 = vst [vmem:[%s4 + $0x68] sm:$0xff] 0.0
    %104 = vst [vmem:[%s4 + $0x70] sm:$0xff] 0.0
    %105 = vst [vmem:[%s4 + $0x78] sm:$0xff] 0.0
    %106 = vst [vmem:[%s4 + $0x80] sm:$0xff] 0.0
    %107 = vst [vmem:[%s4 + $0x88] sm:$0xff] 0.0
    %108 = vst [vmem:[%s4 + $0x90] sm:$0xff] 0.0
    %109 = vst [vmem:[%s4 + $0x98] sm:$0xff] 0.0
    %110 = vst [vmem:[%s4 + $0xa0] sm:$0xff] 0.0
    %111 = vst [vmem:[%s4 + $0xa8] sm:$0xff] 0.0
    %112 = vst [vmem:[%s4 + $0xb0] sm:$0xff] 0.0
    %113 = vst [vmem:[%s4 + $0xb8] sm:$0xff] 0.0
    %114 = vst [vmem:[%s4 + $0xc0] sm:$0xff] 0.0
    %115 = vst [vmem:[%s4 + $0xc8] sm:$0xff] 0.0
    %116 = vst [vmem:[%s4 + $0xd0] sm:$0xff] 0.0
    %117 = vst [vmem:[%s4 + $0xd8] sm:$0xff] 0.0
    %118 = vst [vmem:[%s4 + $0xe0] sm:$0xff] 0.0
    %119 = vst [vmem:[%s4 + $0xe8] sm:$0xff] 0.0
    %120 = vst [vmem:[%s4 + $0xf0] sm:$0xff] 0.0
    %121 = vst [vmem:[%s4 + $0xf8] sm:$0xff] 0.0
    %122 = vst [vmem:[%s4 + $0x100] sm:$0xff] 0.0
    %123 = vst [vmem:[%s4 + $0x108] sm:$0xff] 0.0
    %124 = vst [vmem:[%s4 + $0x110] sm:$0xff] 0.0
    %125 = vst [vmem:[%s4 + $0x118] sm:$0xff] 0.0
    %126 = vst [vmem:[%s4 + $0x120] sm:$0xff] 0.0
    %127 = vst [vmem:[%s4 + $0x128] sm:$0xff] 0.0
    %128 = vst [vmem:[%s4 + $0x130] sm:$0xff] 0.0
    %129 = vst [vmem:[%s4 + $0x138] sm:$0xff] 0.0
    %130 = vst [vmem:[%s4 + $0x140] sm:$0xff] 0.0
    %131 = vst [vmem:[%s4 + $0x148] sm:$0xff] 0.0
    %132 = vst [vmem:[%s4 + $0x150] sm:$0xff] 0.0
    %133 = vst [vmem:[%s4 + $0x158] sm:$0xff] 0.0
    %134 = vst [vmem:[%s4 + $0x160] sm:$0xff] 0.0
    %135 = vst [vmem:[%s4 + $0x168] sm:$0xff] 0.0
    %136 = vst [vmem:[%s4 + $0x170] sm:$0xff] 0.0
    %137 = vst [vmem:[%s4 + $0x178] sm:$0xff] 0.0
    %138 = vst [vmem:[%s4 + $0x180] sm:$0xff] 0.0
    %139 = vst [vmem:[%s4 + $0x188] sm:$0xff] 0.0
    %140 = vst [vmem:[%s4 + $0x190] sm:$0xff] 0.0
    %141 = vst [vmem:[%s4 + $0x198] sm:$0xff] 0.0
    %142 = vst [vmem:[%s4 + $0x1a0] sm:$0xff] 0.0
    %143 = vst [vmem:[%s4 + $0x1a8] sm:$0xff] 0.0
    %144 = vst [vmem:[%s4 + $0x1b0] sm:$0xff] 0.0
    %145 = vst [vmem:[%s4 + $0x1b8] sm:$0xff] 0.0
    %146 = vst [vmem:[%s4 + $0x1c0] sm:$0xff] 0.0
    %147 = vst [vmem:[%s4 + $0x1c8] sm:$0xff] 0.0
    %148 = vst [vmem:[%s4 + $0x1d0] sm:$0xff] 0.0
    %149 = vst [vmem:[%s4 + $0x1d8] sm:$0xff] 0.0
    %150 = vst [vmem:[%s4 + $0x1e0] sm:$0xff] 0.0
    %151 = vst [vmem:[%s4 + $0x1e8] sm:$0xff] 0.0
    %152 = vst [vmem:[%s4 + $0x1f0] sm:$0xff] 0.0
    %153 = vst [vmem:[%s4 + $0x1f8] sm:$0xff] 0.0
  $region21: #{shadow_model_forward.5} parent=0 // pred_fallthru
    _
  %v154 = vld [vmem:[%s0] sm:$0xff]
  %v155 = vld [vmem:[%s0 + $0x8] sm:$0xff]
  %v156 = vld [vmem:[%s0 + $0x10] sm:$0xff]
  %v157 = vld [vmem:[%s0 + $0x18] sm:$0xff]
  %v158 = vld [vmem:[%s0 + $0x20] sm:$0xff]
  %v159 = vld [vmem:[%s0 + $0x28] sm:$0xff]
  %v160 = vld [vmem:[%s0 + $0x30] sm:$0xff]
  %v161 = vld [vmem:[%s0 + $0x38] sm:$0xff]
  %v162 = vld [vmem:[%s0 + $0x40] sm:$0xff]
  %v163 = vld [vmem:[%s0 + $0x48] sm:$0xff]
  %v164 = vld [vmem:[%s0 + $0x50] sm:$0xff]
  %v165 = vld [vmem:[%s0 + $0x58] sm:$0xff]
  %v166 = vld [vmem:[%s0 + $0x60] sm:$0xff]
  %v167 = vld [vmem:[%s0 + $0x68] sm:$0xff]
  %v168 = vld [vmem:[%s0 + $0x70] sm:$0xff]
  %v169 = vld [vmem:[%s0 + $0x78] sm:$0xff]
  %v170 = vld [vmem:[%s0 + $0x80] sm:$0xff]
  %v171 = vld [vmem:[%s0 + $0x88] sm:$0xff]
  %v172 = vld [vmem:[%s0 + $0x90] sm:$0xff]
  %v173 = vld [vmem:[%s0 + $0x98] sm:$0xff]
  %v174 = vld [vmem:[%s0 + $0xa0] sm:$0xff]
  %v175 = vld [vmem:[%s0 + $0xa8] sm:$0xff]
  %v176 = vld [vmem:[%s0 + $0xb0] sm:$0xff]
  %v177 = vld [vmem:[%s0 + $0xb8] sm:$0xff]
  %v178 = vld [vmem:[%s0 + $0xc0] sm:$0xff]
  %v179 = vld [vmem:[%s0 + $0xc8] sm:$0xff]
  %v180 = vld [vmem:[%s0 + $0xd0] sm:$0xff]
  %v181 = vld [vmem:[%s0 + $0xd8] sm:$0xff]
  %v182 = vld [vmem:[%s0 + $0xe0] sm:$0xff]
  %v183 = vld [vmem:[%s0 + $0xe8] sm:$0xff]
  %v184 = vld [vmem:[%s0 + $0xf0] sm:$0xff]
  %v185 = vld [vmem:[%s0 + $0xf8] sm:$0xff]
  %v186 = vld [vmem:[%s0 + $0x100] sm:$0xff]
  %v187 = vld [vmem:[%s0 + $0x108] sm:$0xff]
  %v188 = vld [vmem:[%s0 + $0x110] sm:$0xff]
  %v189 = vld [vmem:[%s0 + $0x118] sm:$0xff]
  %v190 = vld [vmem:[%s0 + $0x120] sm:$0xff]
  %v191 = vld [vmem:[%s0 + $0x128] sm:$0xff]
  %v192 = vld [vmem:[%s0 + $0x130] sm:$0xff]
  %v193 = vld [vmem:[%s0 + $0x138] sm:$0xff]
  %v194 = vld [vmem:[%s0 + $0x140] sm:$0xff]
  %v195 = vld [vmem:[%s0 + $0x148] sm:$0xff]
  %v196 = vld [vmem:[%s0 + $0x150] sm:$0xff]
  %v197 = vld [vmem:[%s0 + $0x158] sm:$0xff]
  %v198 = vld [vmem:[%s0 + $0x160] sm:$0xff]
  %v199 = vld [vmem:[%s0 + $0x168] sm:$0xff]
  %v200 = vld [vmem:[%s0 + $0x170] sm:$0xff]
  %v201 = vld [vmem:[%s0 + $0x178] sm:$0xff]
  %v202 = vld [vmem:[%s0 + $0x180] sm:$0xff]
  %v203 = vld [vmem:[%s0 + $0x188] sm:$0xff]
  %v204 = vld [vmem:[%s0 + $0x190] sm:$0xff]
  %v205 = vld [vmem:[%s0 + $0x198] sm:$0xff]
  %v206 = vld [vmem:[%s0 + $0x1a0] sm:$0xff]
  %v207 = vld [vmem:[%s0 + $0x1a8] sm:$0xff]
  %v208 = vld [vmem:[%s0 + $0x1b0] sm:$0xff]
  %v209 = vld [vmem:[%s0 + $0x1b8] sm:$0xff]
  %v210 = vld [vmem:[%s0 + $0x1c0] sm:$0xff]
  %v211 = vld [vmem:[%s0 + $0x1c8] sm:$0xff]
  %v212 = vld [vmem:[%s0 + $0x1d0] sm:$0xff]
  %v213 = vld [vmem:[%s0 + $0x1d8] sm:$0xff]
  %v214 = vld [vmem:[%s0 + $0x1e0] sm:$0xff]
  %v215 = vld [vmem:[%s0 + $0x1e8] sm:$0xff]
  %v216 = vld [vmem:[%s0 + $0x1f0] sm:$0xff]
  %v217 = vld [vmem:[%s0 + $0x1f8] sm:$0xff]
  %v218 = vld [vmem:[%s0 + $0x200] sm:$0xff]
  %v219 = vld [vmem:[%s0 + $0x208] sm:$0xff]
  %v220 = vld [vmem:[%s0 + $0x210] sm:$0xff]
  %v221 = vld [vmem:[%s0 + $0x218] sm:$0xff]
  %v222 = vld [vmem:[%s0 + $0x220] sm:$0xff]
  %v223 = vld [vmem:[%s0 + $0x228] sm:$0xff]
  %v224 = vld [vmem:[%s0 + $0x230] sm:$0xff]
  %v225 = vld [vmem:[%s0 + $0x238] sm:$0xff]
  %v226 = vld [vmem:[%s0 + $0x240] sm:$0xff]
  %v227 = vld [vmem:[%s0 + $0x248] sm:$0xff]
  %v228 = vld [vmem:[%s0 + $0x250] sm:$0xff]
  %v229 = vld [vmem:[%s0 + $0x258] sm:$0xff]
  %v230 = vld [vmem:[%s0 + $0x260] sm:$0xff]
  %v231 = vld [vmem:[%s0 + $0x268] sm:$0xff]
  %v232 = vld [vmem:[%s0 + $0x270] sm:$0xff]
  %v233 = vld [vmem:[%s0 + $0x278] sm:$0xff]
  %v234 = vld [vmem:[%s0 + $0x280] sm:$0xff]
  %v235 = vld [vmem:[%s0 + $0x288] sm:$0xff]
  %v236 = vld [vmem:[%s0 + $0x290] sm:$0xff]
  %v237 = vld [vmem:[%s0 + $0x298] sm:$0xff]
  %v238 = vld [vmem:[%s0 + $0x2a0] sm:$0xff]
  %v239 = vld [vmem:[%s0 + $0x2a8] sm:$0xff]
  %v240 = vld [vmem:[%s0 + $0x2b0] sm:$0xff]
  %v241 = vld [vmem:[%s0 + $0x2b8] sm:$0xff]
  %v242 = vld [vmem:[%s0 + $0x2c0] sm:$0xff]
  %v243 = vld [vmem:[%s0 + $0x2c8] sm:$0xff]
  %v244 = vld [vmem:[%s0 + $0x2d0] sm:$0xff]
  %v245 = vld [vmem:[%s0 + $0x2d8] sm:$0xff]
  %v246 = vld [vmem:[%s0 + $0x2e0] sm:$0xff]
  %v247 = vld [vmem:[%s0 + $0x2e8] sm:$0xff]
  %v248 = vld [vmem:[%s0 + $0x2f0] sm:$0xff]
  %v249 = vld [vmem:[%s0 + $0x2f8] sm:$0xff]
  %v250 = vld [vmem:[%s0 + $0x300] sm:$0xff]
  %v251 = vld [vmem:[%s0 + $0x308] sm:$0xff]
  %v252 = vld [vmem:[%s0 + $0x310] sm:$0xff]
  %v253 = vld [vmem:[%s0 + $0x318] sm:$0xff]
  %v254 = vld [vmem:[%s0 + $0x320] sm:$0xff]
  %v255 = vld [vmem:[%s0 + $0x328] sm:$0xff]
  %v256 = vld [vmem:[%s0 + $0x330] sm:$0xff]
  %v257 = vld [vmem:[%s0 + $0x338] sm:$0xff]
  %v258 = vld [vmem:[%s0 + $0x340] sm:$0xff]
  %v259 = vld [vmem:[%s0 + $0x348] sm:$0xff]
  %v260 = vld [vmem:[%s0 + $0x350] sm:$0xff]
  %v261 = vld [vmem:[%s0 + $0x358] sm:$0xff]
  %v262 = vld [vmem:[%s0 + $0x360] sm:$0xff]
  %v263 = vld [vmem:[%s0 + $0x368] sm:$0xff]
  %v264 = vld [vmem:[%s0 + $0x370] sm:$0xff]
  %v265 = vld [vmem:[%s0 + $0x378] sm:$0xff]
  %v266 = vld [vmem:[%s0 + $0x380] sm:$0xff]
  %v267 = vld [vmem:[%s0 + $0x388] sm:$0xff]
  %v268 = vld [vmem:[%s0 + $0x390] sm:$0xff]
  %v269 = vld [vmem:[%s0 + $0x398] sm:$0xff]
  %v270 = vld [vmem:[%s0 + $0x3a0] sm:$0xff]
  %v271 = vld [vmem:[%s0 + $0x3a8] sm:$0xff]
  %v272 = vld [vmem:[%s0 + $0x3b0] sm:$0xff]
  %v273 = vld [vmem:[%s0 + $0x3b8] sm:$0xff]
  %v274 = vld [vmem:[%s0 + $0x3c0] sm:$0xff]
  %v275 = vld [vmem:[%s0 + $0x3c8] sm:$0xff]
  %v276 = vld [vmem:[%s0 + $0x3d0] sm:$0xff]
  %v277 = vld [vmem:[%s0 + $0x3d8] sm:$0xff]
  %v278 = vld [vmem:[%s0 + $0x3e0] sm:$0xff]
  %v279 = vld [vmem:[%s0 + $0x3e8] sm:$0xff]
  %v280 = vld [vmem:[%s0 + $0x3f0] sm:$0xff]
  %v281 = vld [vmem:[%s0 + $0x3f8] sm:$0xff]
  %s282 = smul.u32 0, 512
  %s283 = sshra.s32 %s282, 3
  %s284 = sand.u32 %s282, 7
  %s285 = smul.addr %s283, 4
  %s286 = scalar_lea.vmem %s2, %s285
  %v287 = vld [vmem:[%s286] sm:$0xf]
  %v288 = vld [vmem:[%s286 + $0x4] sm:$0xf]
  %v289 = vld [vmem:[%s286 + $0x8] sm:$0xf]
  %v290 = vld [vmem:[%s286 + $0xc] sm:$0xf]
  %v291 = vld [vmem:[%s286 + $0x10] sm:$0xf]
  %v292 = vld [vmem:[%s286 + $0x14] sm:$0xf]
  %v293 = vld [vmem:[%s286 + $0x18] sm:$0xf]
  %v294 = vld [vmem:[%s286 + $0x1c] sm:$0xf]
  %v295 = vld [vmem:[%s286 + $0x20] sm:$0xf]
  %v296 = vld [vmem:[%s286 + $0x24] sm:$0xf]
  %v297 = vld [vmem:[%s286 + $0x28] sm:$0xf]
  %v298 = vld [vmem:[%s286 + $0x2c] sm:$0xf]
  %v299 = vld [vmem:[%s286 + $0x30] sm:$0xf]
  %v300 = vld [vmem:[%s286 + $0x34] sm:$0xf]
  %v301 = vld [vmem:[%s286 + $0x38] sm:$0xf]
  %v302 = vld [vmem:[%s286 + $0x3c] sm:$0xf]
  %v303 = vld [vmem:[%s286 + $0x40] sm:$0xf]
  %v304 = vld [vmem:[%s286 + $0x44] sm:$0xf]
  %v305 = vld [vmem:[%s286 + $0x48] sm:$0xf]
  %v306 = vld [vmem:[%s286 + $0x4c] sm:$0xf]
  %v307 = vld [vmem:[%s286 + $0x50] sm:$0xf]
  %v308 = vld [vmem:[%s286 + $0x54] sm:$0xf]
  %v309 = vld [vmem:[%s286 + $0x58] sm:$0xf]
  %v310 = vld [vmem:[%s286 + $0x5c] sm:$0xf]
  %v311 = vld [vmem:[%s286 + $0x60] sm:$0xf]
  %v312 = vld [vmem:[%s286 + $0x64] sm:$0xf]
  %v313 = vld [vmem:[%s286 + $0x68] sm:$0xf]
  %v314 = vld [vmem:[%s286 + $0x6c] sm:$0xf]
  %v315 = vld [vmem:[%s286 + $0x70] sm:$0xf]
  %v316 = vld [vmem:[%s286 + $0x74] sm:$0xf]
  %v317 = vld [vmem:[%s286 + $0x78] sm:$0xf]
  %v318 = vld [vmem:[%s286 + $0x7c] sm:$0xf]
  %v319 = vld [vmem:[%s286 + $0x80] sm:$0xf]
  %v320 = vld [vmem:[%s286 + $0x84] sm:$0xf]
  %v321 = vld [vmem:[%s286 + $0x88] sm:$0xf]
  %v322 = vld [vmem:[%s286 + $0x8c] sm:$0xf]
  %v323 = vld [vmem:[%s286 + $0x90] sm:$0xf]
  %v324 = vld [vmem:[%s286 + $0x94] sm:$0xf]
  %v325 = vld [vmem:[%s286 + $0x98] sm:$0xf]
  %v326 = vld [vmem:[%s286 + $0x9c] sm:$0xf]
  %v327 = vld [vmem:[%s286 + $0xa0] sm:$0xf]
  %v328 = vld [vmem:[%s286 + $0xa4] sm:$0xf]
  %v329 = vld [vmem:[%s286 + $0xa8] sm:$0xf]
  %v330 = vld [vmem:[%s286 + $0xac] sm:$0xf]
  %v331 = vld [vmem:[%s286 + $0xb0] sm:$0xf]
  %v332 = vld [vmem:[%s286 + $0xb4] sm:$0xf]
  %v333 = vld [vmem:[%s286 + $0xb8] sm:$0xf]
  %v334 = vld [vmem:[%s286 + $0xbc] sm:$0xf]
  %v335 = vld [vmem:[%s286 + $0xc0] sm:$0xf]
  %v336 = vld [vmem:[%s286 + $0xc4] sm:$0xf]
  %v337 = vld [vmem:[%s286 + $0xc8] sm:$0xf]
  %v338 = vld [vmem:[%s286 + $0xcc] sm:$0xf]
  %v339 = vld [vmem:[%s286 + $0xd0] sm:$0xf]
  %v340 = vld [vmem:[%s286 + $0xd4] sm:$0xf]
  %v341 = vld [vmem:[%s286 + $0xd8] sm:$0xf]
  %v342 = vld [vmem:[%s286 + $0xdc] sm:$0xf]
  %v343 = vld [vmem:[%s286 + $0xe0] sm:$0xf]
  %v344 = vld [vmem:[%s286 + $0xe4] sm:$0xf]
  %v345 = vld [vmem:[%s286 + $0xe8] sm:$0xf]
  %v346 = vld [vmem:[%s286 + $0xec] sm:$0xf]
  %v347 = vld [vmem:[%s286 + $0xf0] sm:$0xf]
  %v348 = vld [vmem:[%s286 + $0xf4] sm:$0xf]
  %v349 = vld [vmem:[%s286 + $0xf8] sm:$0xf]
  %v350 = vld [vmem:[%s286 + $0xfc] sm:$0xf]
  %v351 = vld [vmem:[%s3] sm:$0xff]
  %v352 = vld [vmem:[%s3 + $0x8] sm:$0xff]
  %v353 = vld [vmem:[%s3 + $0x10] sm:$0xff]
  %v354 = vld [vmem:[%s3 + $0x18] sm:$0xff]
  %v355 = vld [vmem:[%s3 + $0x20] sm:$0xff]
  %v356 = vld [vmem:[%s3 + $0x28] sm:$0xff]
  %v357 = vld [vmem:[%s3 + $0x30] sm:$0xff]
  %v358 = vld [vmem:[%s3 + $0x38] sm:$0xff]
  %v359 = vld [vmem:[%s3 + $0x40] sm:$0xff]
  %v360 = vld [vmem:[%s3 + $0x48] sm:$0xff]
  %v361 = vld [vmem:[%s3 + $0x50] sm:$0xff]
  %v362 = vld [vmem:[%s3 + $0x58] sm:$0xff]
  %v363 = vld [vmem:[%s3 + $0x60] sm:$0xff]
  %v364 = vld [vmem:[%s3 + $0x68] sm:$0xff]
  %v365 = vld [vmem:[%s3 + $0x70] sm:$0xff]
  %v366 = vld [vmem:[%s3 + $0x78] sm:$0xff]
  %v367 = vld [vmem:[%s3 + $0x80] sm:$0xff]
  %v368 = vld [vmem:[%s3 + $0x88] sm:$0xff]
  %v369 = vld [vmem:[%s3 + $0x90] sm:$0xff]
  %v370 = vld [vmem:[%s3 + $0x98] sm:$0xff]
  %v371 = vld [vmem:[%s3 + $0xa0] sm:$0xff]
  %v372 = vld [vmem:[%s3 + $0xa8] sm:$0xff]
  %v373 = vld [vmem:[%s3 + $0xb0] sm:$0xff]
  %v374 = vld [vmem:[%s3 + $0xb8] sm:$0xff]
  %v375 = vld [vmem:[%s3 + $0xc0] sm:$0xff]
  %v376 = vld [vmem:[%s3 + $0xc8] sm:$0xff]
  %v377 = vld [vmem:[%s3 + $0xd0] sm:$0xff]
  %v378 = vld [vmem:[%s3 + $0xd8] sm:$0xff]
  %v379 = vld [vmem:[%s3 + $0xe0] sm:$0xff]
  %v380 = vld [vmem:[%s3 + $0xe8] sm:$0xff]
  %v381 = vld [vmem:[%s3 + $0xf0] sm:$0xff]
  %v382 = vld [vmem:[%s3 + $0xf8] sm:$0xff]
  %v383 = vld [vmem:[%s3 + $0x100] sm:$0xff]
  %v384 = vld [vmem:[%s3 + $0x108] sm:$0xff]
  %v385 = vld [vmem:[%s3 + $0x110] sm:$0xff]
  %v386 = vld [vmem:[%s3 + $0x118] sm:$0xff]
  %v387 = vld [vmem:[%s3 + $0x120] sm:$0xff]
  %v388 = vld [vmem:[%s3 + $0x128] sm:$0xff]
  %v389 = vld [vmem:[%s3 + $0x130] sm:$0xff]
  %v390 = vld [vmem:[%s3 + $0x138] sm:$0xff]
  %v391 = vld [vmem:[%s3 + $0x140] sm:$0xff]
  %v392 = vld [vmem:[%s3 + $0x148] sm:$0xff]
  %v393 = vld [vmem:[%s3 + $0x150] sm:$0xff]
  %v394 = vld [vmem:[%s3 + $0x158] sm:$0xff]
  %v395 = vld [vmem:[%s3 + $0x160] sm:$0xff]
  %v396 = vld [vmem:[%s3 + $0x168] sm:$0xff]
  %v397 = vld [vmem:[%s3 + $0x170] sm:$0xff]
  %v398 = vld [vmem:[%s3 + $0x178] sm:$0xff]
  %v399 = vld [vmem:[%s3 + $0x180] sm:$0xff]
  %v400 = vld [vmem:[%s3 + $0x188] sm:$0xff]
  %v401 = vld [vmem:[%s3 + $0x190] sm:$0xff]
  %v402 = vld [vmem:[%s3 + $0x198] sm:$0xff]
  %v403 = vld [vmem:[%s3 + $0x1a0] sm:$0xff]
  %v404 = vld [vmem:[%s3 + $0x1a8] sm:$0xff]
  %v405 = vld [vmem:[%s3 + $0x1b0] sm:$0xff]
  %v406 = vld [vmem:[%s3 + $0x1b8] sm:$0xff]
  %v407 = vld [vmem:[%s3 + $0x1c0] sm:$0xff]
  %v408 = vld [vmem:[%s3 + $0x1c8] sm:$0xff]
  %v409 = vld [vmem:[%s3 + $0x1d0] sm:$0xff]
  %v410 = vld [vmem:[%s3 + $0x1d8] sm:$0xff]
  %v411 = vld [vmem:[%s3 + $0x1e0] sm:$0xff]
  %v412 = vld [vmem:[%s3 + $0x1e8] sm:$0xff]
  %v413 = vld [vmem:[%s3 + $0x1f0] sm:$0xff]
  %v414 = vld [vmem:[%s3 + $0x1f8] sm:$0xff]
  %v543 = vunpack.c.l.b16 %v154
  %v544 = vunpack.c.h.b16 %v154
  %v545 = vunpack.c.l.b16 %v155
  %v546 = vunpack.c.h.b16 %v155
  %v547 = vunpack.c.l.b16 %v156
  %v548 = vunpack.c.h.b16 %v156
  %v549 = vunpack.c.l.b16 %v157
  %v550 = vunpack.c.h.b16 %v157
  %v551 = vunpack.c.l.b16 %v158
  %v552 = vunpack.c.h.b16 %v158
  %v553 = vunpack.c.l.b16 %v159
  %v554 = vunpack.c.h.b16 %v159
  %v555 = vunpack.c.l.b16 %v160
  %v556 = vunpack.c.h.b16 %v160
  %v557 = vunpack.c.l.b16 %v161
  %v558 = vunpack.c.h.b16 %v161
  %v559 = vunpack.c.l.b16 %v162
  %v560 = vunpack.c.h.b16 %v162
  %v561 = vunpack.c.l.b16 %v163
  %v562 = vunpack.c.h.b16 %v163
  %v563 = vunpack.c.l.b16 %v164
  %v564 = vunpack.c.h.b16 %v164
  %v565 = vunpack.c.l.b16 %v165
  %v566 = vunpack.c.h.b16 %v165
  %v567 = vunpack.c.l.b16 %v166
  %v568 = vunpack.c.h.b16 %v166
  %v569 = vunpack.c.l.b16 %v167
  %v570 = vunpack.c.h.b16 %v167
  %v571 = vunpack.c.l.b16 %v168
  %v572 = vunpack.c.h.b16 %v168
  %v573 = vunpack.c.l.b16 %v169
  %v574 = vunpack.c.h.b16 %v169
  %v575 = vunpack.c.l.b16 %v170
  %v576 = vunpack.c.h.b16 %v170
  %v577 = vunpack.c.l.b16 %v171
  %v578 = vunpack.c.h.b16 %v171
  %v579 = vunpack.c.l.b16 %v172
  %v580 = vunpack.c.h.b16 %v172
  %v581 = vunpack.c.l.b16 %v173
  %v582 = vunpack.c.h.b16 %v173
  %v583 = vunpack.c.l.b16 %v174
  %v584 = vunpack.c.h.b16 %v174
  %v585 = vunpack.c.l.b16 %v175
  %v586 = vunpack.c.h.b16 %v175
  %v587 = vunpack.c.l.b16 %v176
  %v588 = vunpack.c.h.b16 %v176
  %v589 = vunpack.c.l.b16 %v177
  %v590 = vunpack.c.h.b16 %v177
  %v591 = vunpack.c.l.b16 %v178
  %v592 = vunpack.c.h.b16 %v178
  %v593 = vunpack.c.l.b16 %v179
  %v594 = vunpack.c.h.b16 %v179
  %v595 = vunpack.c.l.b16 %v180
  %v596 = vunpack.c.h.b16 %v180
  %v597 = vunpack.c.l.b16 %v181
  %v598 = vunpack.c.h.b16 %v181
  %v599 = vunpack.c.l.b16 %v182
  %v600 = vunpack.c.h.b16 %v182
  %v601 = vunpack.c.l.b16 %v183
  %v602 = vunpack.c.h.b16 %v183
  %v603 = vunpack.c.l.b16 %v184
  %v604 = vunpack.c.h.b16 %v184
  %v605 = vunpack.c.l.b16 %v185
  %v606 = vunpack.c.h.b16 %v185
  %v607 = vunpack.c.l.b16 %v186
  %v608 = vunpack.c.h.b16 %v186
  %v609 = vunpack.c.l.b16 %v187
  %v610 = vunpack.c.h.b16 %v187
  %v611 = vunpack.c.l.b16 %v188
  %v612 = vunpack.c.h.b16 %v188
  %v613 = vunpack.c.l.b16 %v189
  %v614 = vunpack.c.h.b16 %v189
  %v615 = vunpack.c.l.b16 %v190
  %v616 = vunpack.c.h.b16 %v190
  %v617 = vunpack.c.l.b16 %v191
  %v618 = vunpack.c.h.b16 %v191
  %v619 = vunpack.c.l.b16 %v192
  %v620 = vunpack.c.h.b16 %v192
  %v621 = vunpack.c.l.b16 %v193
  %v622 = vunpack.c.h.b16 %v193
  %v623 = vunpack.c.l.b16 %v194
  %v624 = vunpack.c.h.b16 %v194
  %v625 = vunpack.c.l.b16 %v195
  %v626 = vunpack.c.h.b16 %v195
  %v627 = vunpack.c.l.b16 %v196
  %v628 = vunpack.c.h.b16 %v196
  %v629 = vunpack.c.l.b16 %v197
  %v630 = vunpack.c.h.b16 %v197
  %v631 = vunpack.c.l.b16 %v198
  %v632 = vunpack.c.h.b16 %v198
  %v633 = vunpack.c.l.b16 %v199
  %v634 = vunpack.c.h.b16 %v199
  %v635 = vunpack.c.l.b16 %v200
  %v636 = vunpack.c.h.b16 %v200
  %v637 = vunpack.c.l.b16 %v201
  %v638 = vunpack.c.h.b16 %v201
  %v639 = vunpack.c.l.b16 %v202
  %v640 = vunpack.c.h.b16 %v202
  %v641 = vunpack.c.l.b16 %v203
  %v642 = vunpack.c.h.b16 %v203
  %v643 = vunpack.c.l.b16 %v204
  %v644 = vunpack.c.h.b16 %v204
  %v645 = vunpack.c.l.b16 %v205
  %v646 = vunpack.c.h.b16 %v205
  %v647 = vunpack.c.l.b16 %v206
  %v648 = vunpack.c.h.b16 %v206
  %v649 = vunpack.c.l.b16 %v207
  %v650 = vunpack.c.h.b16 %v207
  %v651 = vunpack.c.l.b16 %v208
  %v652 = vunpack.c.h.b16 %v208
  %v653 = vunpack.c.l.b16 %v209
  %v654 = vunpack.c.h.b16 %v209
  %v655 = vunpack.c.l.b16 %v210
  %v656 = vunpack.c.h.b16 %v210
  %v657 = vunpack.c.l.b16 %v211
  %v658 = vunpack.c.h.b16 %v211
  %v659 = vunpack.c.l.b16 %v212
  %v660 = vunpack.c.h.b16 %v212
  %v661 = vunpack.c.l.b16 %v213
  %v662 = vunpack.c.h.b16 %v213
  %v663 = vunpack.c.l.b16 %v214
  %v664 = vunpack.c.h.b16 %v214
  %v665 = vunpack.c.l.b16 %v215
  %v666 = vunpack.c.h.b16 %v215
  %v667 = vunpack.c.l.b16 %v216
  %v668 = vunpack.c.h.b16 %v216
  %v669 = vunpack.c.l.b16 %v217
  %v670 = vunpack.c.h.b16 %v217
  %v671 = vunpack.c.l.b16 %v218
  %v672 = vunpack.c.h.b16 %v218
  %v673 = vunpack.c.l.b16 %v219
  %v674 = vunpack.c.h.b16 %v219
  %v675 = vunpack.c.l.b16 %v220
  %v676 = vunpack.c.h.b16 %v220
  %v677 = vunpack.c.l.b16 %v221
  %v678 = vunpack.c.h.b16 %v221
  %v679 = vunpack.c.l.b16 %v222
  %v680 = vunpack.c.h.b16 %v222
  %v681 = vunpack.c.l.b16 %v223
  %v682 = vunpack.c.h.b16 %v223
  %v683 = vunpack.c.l.b16 %v224
  %v684 = vunpack.c.h.b16 %v224
  %v685 = vunpack.c.l.b16 %v225
  %v686 = vunpack.c.h.b16 %v225
  %v687 = vunpack.c.l.b16 %v226
  %v688 = vunpack.c.h.b16 %v226
  %v689 = vunpack.c.l.b16 %v227
  %v690 = vunpack.c.h.b16 %v227
  %v691 = vunpack.c.l.b16 %v228
  %v692 = vunpack.c.h.b16 %v228
  %v693 = vunpack.c.l.b16 %v229
  %v694 = vunpack.c.h.b16 %v229
  %v695 = vunpack.c.l.b16 %v230
  %v696 = vunpack.c.h.b16 %v230
  %v697 = vunpack.c.l.b16 %v231
  %v698 = vunpack.c.h.b16 %v231
  %v699 = vunpack.c.l.b16 %v232
  %v700 = vunpack.c.h.b16 %v232
  %v701 = vunpack.c.l.b16 %v233
  %v702 = vunpack.c.h.b16 %v233
  %v703 = vunpack.c.l.b16 %v234
  %v704 = vunpack.c.h.b16 %v234
  %v705 = vunpack.c.l.b16 %v235
  %v706 = vunpack.c.h.b16 %v235
  %v707 = vunpack.c.l.b16 %v236
  %v708 = vunpack.c.h.b16 %v236
  %v709 = vunpack.c.l.b16 %v237
  %v710 = vunpack.c.h.b16 %v237
  %v711 = vunpack.c.l.b16 %v238
  %v712 = vunpack.c.h.b16 %v238
  %v713 = vunpack.c.l.b16 %v239
  %v714 = vunpack.c.h.b16 %v239
  %v715 = vunpack.c.l.b16 %v240
  %v716 = vunpack.c.h.b16 %v240
  %v717 = vunpack.c.l.b16 %v241
  %v718 = vunpack.c.h.b16 %v241
  %v719 = vunpack.c.l.b16 %v242
  %v720 = vunpack.c.h.b16 %v242
  %v721 = vunpack.c.l.b16 %v243
  %v722 = vunpack.c.h.b16 %v243
  %v723 = vunpack.c.l.b16 %v244
  %v724 = vunpack.c.h.b16 %v244
  %v725 = vunpack.c.l.b16 %v245
  %v726 = vunpack.c.h.b16 %v245
  %v727 = vunpack.c.l.b16 %v246
  %v728 = vunpack.c.h.b16 %v246
  %v729 = vunpack.c.l.b16 %v247
  %v730 = vunpack.c.h.b16 %v247
  %v731 = vunpack.c.l.b16 %v248
  %v732 = vunpack.c.h.b16 %v248
  %v733 = vunpack.c.l.b16 %v249
  %v734 = vunpack.c.h.b16 %v249
  %v735 = vunpack.c.l.b16 %v250
  %v736 = vunpack.c.h.b16 %v250
  %v737 = vunpack.c.l.b16 %v251
  %v738 = vunpack.c.h.b16 %v251
  %v739 = vunpack.c.l.b16 %v252
  %v740 = vunpack.c.h.b16 %v252
  %v741 = vunpack.c.l.b16 %v253
  %v742 = vunpack.c.h.b16 %v253
  %v743 = vunpack.c.l.b16 %v254
  %v744 = vunpack.c.h.b16 %v254
  %v745 = vunpack.c.l.b16 %v255
  %v746 = vunpack.c.h.b16 %v255
  %v747 = vunpack.c.l.b16 %v256
  %v748 = vunpack.c.h.b16 %v256
  %v749 = vunpack.c.l.b16 %v257
  %v750 = vunpack.c.h.b16 %v257
  %v751 = vunpack.c.l.b16 %v258
  %v752 = vunpack.c.h.b16 %v258
  %v753 = vunpack.c.l.b16 %v259
  %v754 = vunpack.c.h.b16 %v259
  %v755 = vunpack.c.l.b16 %v260
  %v756 = vunpack.c.h.b16 %v260
  %v757 = vunpack.c.l.b16 %v261
  %v758 = vunpack.c.h.b16 %v261
  %v759 = vunpack.c.l.b16 %v262
  %v760 = vunpack.c.h.b16 %v262
  %v761 = vunpack.c.l.b16 %v263
  %v762 = vunpack.c.h.b16 %v263
  %v763 = vunpack.c.l.b16 %v264
  %v764 = vunpack.c.h.b16 %v264
  %v765 = vunpack.c.l.b16 %v265
  %v766 = vunpack.c.h.b16 %v265
  %v767 = vunpack.c.l.b16 %v266
  %v768 = vunpack.c.h.b16 %v266
  %v769 = vunpack.c.l.b16 %v267
  %v770 = vunpack.c.h.b16 %v267
  %v771 = vunpack.c.l.b16 %v268
  %v772 = vunpack.c.h.b16 %v268
  %v773 = vunpack.c.l.b16 %v269
  %v774 = vunpack.c.h.b16 %v269
  %v775 = vunpack.c.l.b16 %v270
  %v776 = vunpack.c.h.b16 %v270
  %v777 = vunpack.c.l.b16 %v271
  %v778 = vunpack.c.h.b16 %v271
  %v779 = vunpack.c.l.b16 %v272
  %v780 = vunpack.c.h.b16 %v272
  %v781 = vunpack.c.l.b16 %v273
  %v782 = vunpack.c.h.b16 %v273
  %v783 = vunpack.c.l.b16 %v274
  %v784 = vunpack.c.h.b16 %v274
  %v785 = vunpack.c.l.b16 %v275
  %v786 = vunpack.c.h.b16 %v275
  %v787 = vunpack.c.l.b16 %v276
  %v788 = vunpack.c.h.b16 %v276
  %v789 = vunpack.c.l.b16 %v277
  %v790 = vunpack.c.h.b16 %v277
  %v791 = vunpack.c.l.b16 %v278
  %v792 = vunpack.c.h.b16 %v278
  %v793 = vunpack.c.l.b16 %v279
  %v794 = vunpack.c.h.b16 %v279
  %v795 = vunpack.c.l.b16 %v280
  %v796 = vunpack.c.h.b16 %v280
  %v797 = vunpack.c.l.b16 %v281
  %v798 = vunpack.c.h.b16 %v281
  %v799 = vpack.c.b16 %v547, %v543
  %v800 = vpack.c.b16 %v548, %v544
  %v801 = vpack.c.b16 %v549, %v545
  %v802 = vpack.c.b16 %v550, %v546
  %v803 = vpack.c.b16 %v555, %v551
  %v804 = vpack.c.b16 %v556, %v552
  %v805 = vpack.c.b16 %v557, %v553
  %v806 = vpack.c.b16 %v558, %v554
  %v807 = vpack.c.b16 %v563, %v559
  %v808 = vpack.c.b16 %v564, %v560
  %v809 = vpack.c.b16 %v565, %v561
  %v810 = vpack.c.b16 %v566, %v562
  %v811 = vpack.c.b16 %v571, %v567
  %v812 = vpack.c.b16 %v572, %v568
  %v813 = vpack.c.b16 %v573, %v569
  %v814 = vpack.c.b16 %v574, %v570
  %v815 = vpack.c.b16 %v579, %v575
  %v816 = vpack.c.b16 %v580, %v576
  %v817 = vpack.c.b16 %v581, %v577
  %v818 = vpack.c.b16 %v582, %v578
  %v819 = vpack.c.b16 %v587, %v583
  %v820 = vpack.c.b16 %v588, %v584
  %v821 = vpack.c.b16 %v589, %v585
  %v822 = vpack.c.b16 %v590, %v586
  %v823 = vpack.c.b16 %v595, %v591
  %v824 = vpack.c.b16 %v596, %v592
  %v825 = vpack.c.b16 %v597, %v593
  %v826 = vpack.c.b16 %v598, %v594
  %v827 = vpack.c.b16 %v603, %v599
  %v828 = vpack.c.b16 %v604, %v600
  %v829 = vpack.c.b16 %v605, %v601
  %v830 = vpack.c.b16 %v606, %v602
  %v831 = vpack.c.b16 %v611, %v607
  %v832 = vpack.c.b16 %v612, %v608
  %v833 = vpack.c.b16 %v613, %v609
  %v834 = vpack.c.b16 %v614, %v610
  %v835 = vpack.c.b16 %v619, %v615
  %v836 = vpack.c.b16 %v620, %v616
  %v837 = vpack.c.b16 %v621, %v617
  %v838 = vpack.c.b16 %v622, %v618
  %v839 = vpack.c.b16 %v627, %v623
  %v840 = vpack.c.b16 %v628, %v624
  %v841 = vpack.c.b16 %v629, %v625
  %v842 = vpack.c.b16 %v630, %v626
  %v843 = vpack.c.b16 %v635, %v631
  %v844 = vpack.c.b16 %v636, %v632
  %v845 = vpack.c.b16 %v637, %v633
  %v846 = vpack.c.b16 %v638, %v634
  %v847 = vpack.c.b16 %v643, %v639
  %v848 = vpack.c.b16 %v644, %v640
  %v849 = vpack.c.b16 %v645, %v641
  %v850 = vpack.c.b16 %v646, %v642
  %v851 = vpack.c.b16 %v651, %v647
  %v852 = vpack.c.b16 %v652, %v648
  %v853 = vpack.c.b16 %v653, %v649
  %v854 = vpack.c.b16 %v654, %v650
  %v855 = vpack.c.b16 %v659, %v655
  %v856 = vpack.c.b16 %v660, %v656
  %v857 = vpack.c.b16 %v661, %v657
  %v858 = vpack.c.b16 %v662, %v658
  %v859 = vpack.c.b16 %v667, %v663
  %v860 = vpack.c.b16 %v668, %v664
  %v861 = vpack.c.b16 %v669, %v665
  %v862 = vpack.c.b16 %v670, %v666
  %v863 = vpack.c.b16 %v675, %v671
  %v864 = vpack.c.b16 %v676, %v672
  %v865 = vpack.c.b16 %v677, %v673
  %v866 = vpack.c.b16 %v678, %v674
  %v867 = vpack.c.b16 %v683, %v679
  %v868 = vpack.c.b16 %v684, %v680
  %v869 = vpack.c.b16 %v685, %v681
  %v870 = vpack.c.b16 %v686, %v682
  %v871 = vpack.c.b16 %v691, %v687
  %v872 = vpack.c.b16 %v692, %v688
  %v873 = vpack.c.b16 %v693, %v689
  %v874 = vpack.c.b16 %v694, %v690
  %v875 = vpack.c.b16 %v699, %v695
  %v876 = vpack.c.b16 %v700, %v696
  %v877 = vpack.c.b16 %v701, %v697
  %v878 = vpack.c.b16 %v702, %v698
  %v879 = vpack.c.b16 %v707, %v703
  %v880 = vpack.c.b16 %v708, %v704
  %v881 = vpack.c.b16 %v709, %v705
  %v882 = vpack.c.b16 %v710, %v706
  %v883 = vpack.c.b16 %v715, %v711
  %v884 = vpack.c.b16 %v716, %v712
  %v885 = vpack.c.b16 %v717, %v713
  %v886 = vpack.c.b16 %v718, %v714
  %v887 = vpack.c.b16 %v723, %v719
  %v888 = vpack.c.b16 %v724, %v720
  %v889 = vpack.c.b16 %v725, %v721
  %v890 = vpack.c.b16 %v726, %v722
  %v891 = vpack.c.b16 %v731, %v727
  %v892 = vpack.c.b16 %v732, %v728
  %v893 = vpack.c.b16 %v733, %v729
  %v894 = vpack.c.b16 %v734, %v730
  %v895 = vpack.c.b16 %v739, %v735
  %v896 = vpack.c.b16 %v740, %v736
  %v897 = vpack.c.b16 %v741, %v737
  %v898 = vpack.c.b16 %v742, %v738
  %v899 = vpack.c.b16 %v747, %v743
  %v900 = vpack.c.b16 %v748, %v744
  %v901 = vpack.c.b16 %v749, %v745
  %v902 = vpack.c.b16 %v750, %v746
  %v903 = vpack.c.b16 %v755, %v751
  %v904 = vpack.c.b16 %v756, %v752
  %v905 = vpack.c.b16 %v757, %v753
  %v906 = vpack.c.b16 %v758, %v754
  %v907 = vpack.c.b16 %v763, %v759
  %v908 = vpack.c.b16 %v764, %v760
  %v909 = vpack.c.b16 %v765, %v761
  %v910 = vpack.c.b16 %v766, %v762
  %v911 = vpack.c.b16 %v771, %v767
  %v912 = vpack.c.b16 %v772, %v768
  %v913 = vpack.c.b16 %v773, %v769
  %v914 = vpack.c.b16 %v774, %v770
  %v915 = vpack.c.b16 %v779, %v775
  %v916 = vpack.c.b16 %v780, %v776
  %v917 = vpack.c.b16 %v781, %v777
  %v918 = vpack.c.b16 %v782, %v778
  %v919 = vpack.c.b16 %v787, %v783
  %v920 = vpack.c.b16 %v788, %v784
  %v921 = vpack.c.b16 %v789, %v785
  %v922 = vpack.c.b16 %v790, %v786
  %v923 = vpack.c.b16 %v795, %v791
  %v924 = vpack.c.b16 %v796, %v792
  %v925 = vpack.c.b16 %v797, %v793
  %v926 = vpack.c.b16 %v798, %v794
  %v1119 = vunpack.c.l.b16 %v287
  %v1120 = vunpack.c.l.b16 %v288
  %v1121 = vunpack.c.l.b16 %v289
  %v1122 = vunpack.c.l.b16 %v290
  %v1123 = vunpack.c.l.b16 %v291
  %v1124 = vunpack.c.l.b16 %v292
  %v1125 = vunpack.c.l.b16 %v293
  %v1126 = vunpack.c.l.b16 %v294
  %v1127 = vunpack.c.l.b16 %v295
  %v1128 = vunpack.c.l.b16 %v296
  %v1129 = vunpack.c.l.b16 %v297
  %v1130 = vunpack.c.l.b16 %v298
  %v1131 = vunpack.c.l.b16 %v299
  %v1132 = vunpack.c.l.b16 %v300
  %v1133 = vunpack.c.l.b16 %v301
  %v1134 = vunpack.c.l.b16 %v302
  %v1135 = vunpack.c.l.b16 %v303
  %v1136 = vunpack.c.l.b16 %v304
  %v1137 = vunpack.c.l.b16 %v305
  %v1138 = vunpack.c.l.b16 %v306
  %v1139 = vunpack.c.l.b16 %v307
  %v1140 = vunpack.c.l.b16 %v308
  %v1141 = vunpack.c.l.b16 %v309
  %v1142 = vunpack.c.l.b16 %v310
  %v1143 = vunpack.c.l.b16 %v311
  %v1144 = vunpack.c.l.b16 %v312
  %v1145 = vunpack.c.l.b16 %v313
  %v1146 = vunpack.c.l.b16 %v314
  %v1147 = vunpack.c.l.b16 %v315
  %v1148 = vunpack.c.l.b16 %v316
  %v1149 = vunpack.c.l.b16 %v317
  %v1150 = vunpack.c.l.b16 %v318
  %v1151 = vunpack.c.l.b16 %v319
  %v1152 = vunpack.c.l.b16 %v320
  %v1153 = vunpack.c.l.b16 %v321
  %v1154 = vunpack.c.l.b16 %v322
  %v1155 = vunpack.c.l.b16 %v323
  %v1156 = vunpack.c.l.b16 %v324
  %v1157 = vunpack.c.l.b16 %v325
  %v1158 = vunpack.c.l.b16 %v326
  %v1159 = vunpack.c.l.b16 %v327
  %v1160 = vunpack.c.l.b16 %v328
  %v1161 = vunpack.c.l.b16 %v329
  %v1162 = vunpack.c.l.b16 %v330
  %v1163 = vunpack.c.l.b16 %v331
  %v1164 = vunpack.c.l.b16 %v332
  %v1165 = vunpack.c.l.b16 %v333
  %v1166 = vunpack.c.l.b16 %v334
  %v1167 = vunpack.c.l.b16 %v335
  %v1168 = vunpack.c.l.b16 %v336
  %v1169 = vunpack.c.l.b16 %v337
  %v1170 = vunpack.c.l.b16 %v338
  %v1171 = vunpack.c.l.b16 %v339
  %v1172 = vunpack.c.l.b16 %v340
  %v1173 = vunpack.c.l.b16 %v341
  %v1174 = vunpack.c.l.b16 %v342
  %v1175 = vunpack.c.l.b16 %v343
  %v1176 = vunpack.c.l.b16 %v344
  %v1177 = vunpack.c.l.b16 %v345
  %v1178 = vunpack.c.l.b16 %v346
  %v1179 = vunpack.c.l.b16 %v347
  %v1180 = vunpack.c.l.b16 %v348
  %v1181 = vunpack.c.l.b16 %v349
  %v1182 = vunpack.c.l.b16 %v350
  %v1183 = vpack.c.b16 %v1120, %v1119
  %v1184 = vpack.c.b16 %v1122, %v1121
  %v1185 = vpack.c.b16 %v1124, %v1123
  %v1186 = vpack.c.b16 %v1126, %v1125
  %v1187 = vpack.c.b16 %v1128, %v1127
  %v1188 = vpack.c.b16 %v1130, %v1129
  %v1189 = vpack.c.b16 %v1132, %v1131
  %v1190 = vpack.c.b16 %v1134, %v1133
  %v1191 = vpack.c.b16 %v1136, %v1135
  %v1192 = vpack.c.b16 %v1138, %v1137
  %v1193 = vpack.c.b16 %v1140, %v1139
  %v1194 = vpack.c.b16 %v1142, %v1141
  %v1195 = vpack.c.b16 %v1144, %v1143
  %v1196 = vpack.c.b16 %v1146, %v1145
  %v1197 = vpack.c.b16 %v1148, %v1147
  %v1198 = vpack.c.b16 %v1150, %v1149
  %v1199 = vpack.c.b16 %v1152, %v1151
  %v1200 = vpack.c.b16 %v1154, %v1153
  %v1201 = vpack.c.b16 %v1156, %v1155
  %v1202 = vpack.c.b16 %v1158, %v1157
  %v1203 = vpack.c.b16 %v1160, %v1159
  %v1204 = vpack.c.b16 %v1162, %v1161
  %v1205 = vpack.c.b16 %v1164, %v1163
  %v1206 = vpack.c.b16 %v1166, %v1165
  %v1207 = vpack.c.b16 %v1168, %v1167
  %v1208 = vpack.c.b16 %v1170, %v1169
  %v1209 = vpack.c.b16 %v1172, %v1171
  %v1210 = vpack.c.b16 %v1174, %v1173
  %v1211 = vpack.c.b16 %v1176, %v1175
  %v1212 = vpack.c.b16 %v1178, %v1177
  %v1213 = vpack.c.b16 %v1180, %v1179
  %v1214 = vpack.c.b16 %v1182, %v1181
  %1247 = vmatprep.subr.bf16.mxu0 0
  %1248 = vmatpush1.bf16.msra.mxu0 %v1183
  %1249 = vmatprep.subr.bf16.mxu0 0
  %1250 = vmatpush1.bf16.msra.mxu0 %v1184
  %1251 = vmatprep.subr.bf16.mxu0 0
  %1252 = vmatpush1.bf16.msra.mxu0 %v1185
  %1253 = vmatprep.subr.bf16.mxu0 0
  %1254 = vmatpush1.bf16.msra.mxu0 %v1186
  %1255 = vmatprep.subr.bf16.mxu0 0
  %1256 = vmatpush1.bf16.msra.mxu0 %v1187
  %1257 = vmatprep.subr.bf16.mxu0 0
  %1258 = vmatpush1.bf16.msra.mxu0 %v1188
  %1259 = vmatprep.subr.bf16.mxu0 0
  %1260 = vmatpush1.bf16.msra.mxu0 %v1189
  %1261 = vmatprep.subr.bf16.mxu0 0
  %1262 = vmatpush1.bf16.msra.mxu0 %v1190
  %1263 = vmatprep.subr.bf16.mxu0 0
  %1264 = vmatpush1.bf16.msra.mxu0 %v1191
  %1265 = vmatprep.subr.bf16.mxu0 0
  %1266 = vmatpush1.bf16.msra.mxu0 %v1192
  %1267 = vmatprep.subr.bf16.mxu0 0
  %1268 = vmatpush1.bf16.msra.mxu0 %v1193
  %1269 = vmatprep.subr.bf16.mxu0 0
  %1270 = vmatpush1.bf16.msra.mxu0 %v1194
  %1271 = vmatprep.subr.bf16.mxu0 0
  %1272 = vmatpush1.bf16.msra.mxu0 %v1195
  %1273 = vmatprep.subr.bf16.mxu0 0
  %1274 = vmatpush1.bf16.msra.mxu0 %v1196
  %1275 = vmatprep.subr.bf16.mxu0 0
  %1276 = vmatpush1.bf16.msra.mxu0 %v1197
  %1277 = vmatprep.subr.bf16.mxu0 0
  %1278 = vmatpush1.bf16.msra.mxu0 %v1198
  %1279 = vmatprep.mubr.bf16.mxu0 %v800
  %1280 = vmatmul.mubr.bf16.gmra.mrb[0].mxu0 %v799
  %v1281 = vpop.f32.mrb[0].mxu0
  %v1282 = vadd.f32 0.0, %v1281
  %v1283 = vpop.f32.mrb[0].mxu0
  %v1284 = vpop.f32.mrb[0].mxu0
  %v1285 = vadd.f32 0.0, %v1284
  %v1286 = vpop.f32.mrb[0].mxu0
  %1287 = vmatprep.mubr.bf16.mxu0 %v804
  %1288 = vmatmul.mubr.bf16.gmra.mrb[0].mxu0 %v803
  %v1289 = vpop.f32.mrb[0].mxu0
  %v1290 = vadd.f32 0.0, %v1289
  %v1291 = vpop.f32.mrb[0].mxu0
  %v1292 = vpop.f32.mrb[0].mxu0
  %v1293 = vadd.f32 0.0, %v1292
  %v1294 = vpop.f32.mrb[0].mxu0
  %1295 = vmatprep.mubr.bf16.mxu0 %v808
  %1296 = vmatmul.mubr.bf16.gmra.mrb[0].mxu0 %v807
  %v1297 = vpop.f32.mrb[0].mxu0
  %v1298 = vadd.f32 0.0, %v1297
  %v1299 = vpop.f32.mrb[0].mxu0
  %v1300 = vpop.f32.mrb[0].mxu0
  %v1301 = vadd.f32 0.0, %v1300
  %v1302 = vpop.f32.mrb[0].mxu0
  %1303 = vmatprep.mubr.bf16.mxu0 %v812
  %1304 = vmatmul.mubr.bf16.gmra.mrb[0].mxu0 %v811
  %v1305 = vpop.f32.mrb[0].mxu0
  %v1306 = vadd.f32 0.0, %v1305
  %v1307 = vpop.f32.mrb[0].mxu0
  %v1308 = vpop.f32.mrb[0].mxu0
  %v1309 = vadd.f32 0.0, %v1308
  %v1310 = vpop.f32.mrb[0].mxu0
  %1311 = vmatprep.mubr.bf16.mxu0 %v816
  %1312 = vmatmul.mubr.bf16.gmra.mrb[0].mxu0 %v815
  %v1313 = vpop.f32.mrb[0].mxu0
  %v1314 = vadd.f32 0.0, %v1313
  %v1315 = vpop.f32.mrb[0].mxu0
  %v1316 = vpop.f32.mrb[0].mxu0
  %v1317 = vadd.f32 0.0, %v1316
  %v1318 = vpop.f32.mrb[0].mxu0
  %1319 = vmatprep.mubr.bf16.mxu0 %v820
  %1320 = vmatmul.mubr.bf16.gmra.mrb[0].mxu0 %v819
  %v1321 = vpop.f32.mrb[0].mxu0
  %v1322 = vadd.f32 0.0, %v1321
  %v1323 = vpop.f32.mrb[0].mxu0
  %v1324 = vpop.f32.mrb[0].mxu0
  %v1325 = vadd.f32 0.0, %v1324
  %v1326 = vpop.f32.mrb[0].mxu0
  %1327 = vmatprep.mubr.bf16.mxu0 %v824
  %1328 = vmatmul.mubr.bf16.gmra.mrb[0].mxu0 %v823
  %v1329 = vpop.f32.mrb[0].mxu0
  %v1330 = vadd.f32 0.0, %v1329
  %v1331 = vpop.f32.mrb[0].mxu0
  %v1332 = vpop.f32.mrb[0].mxu0
  %v1333 = vadd.f32 0.0, %v1332
  %v1334 = vpop.f32.mrb[0].mxu0
  %1335 = vmatprep.mubr.bf16.mxu0 %v828
  %1336 = vmatmul.mubr.bf16.gmra.mrb[0].mxu0 %v827
  %v1337 = vpop.f32.mrb[0].mxu0
  %v1338 = vadd.f32 0.0, %v1337
  %v1339 = vpop.f32.mrb[0].mxu0
  %v1340 = vpop.f32.mrb[0].mxu0
  %v1341 = vadd.f32 0.0, %v1340
  %v1342 = vpop.f32.mrb[0].mxu0
  %1343 = vmatprep.mubr.bf16.mxu0 %v832
  %1344 = vmatmul.mubr.bf16.gmra.mrb[0].mxu0 %v831
  %v1345 = vpop.f32.mrb[0].mxu0
  %v1346 = vadd.f32 0.0, %v1345
  %v1347 = vpop.f32.mrb[0].mxu0
  %v1348 = vpop.f32.mrb[0].mxu0
  %v1349 = vadd.f32 0.0, %v1348
  %v1350 = vpop.f32.mrb[0].mxu0
  %1351 = vmatprep.mubr.bf16.mxu0 %v836
  %1352 = vmatmul.mubr.bf16.gmra.mrb[0].mxu0 %v835
  %v1353 = vpop.f32.mrb[0].mxu0
  %v1354 = vadd.f32 0.0, %v1353
  %v1355 = vpop.f32.mrb[0].mxu0
  %v1356 = vpop.f32.mrb[0].mxu0
  %v1357 = vadd.f32 0.0, %v1356
  %v1358 = vpop.f32.mrb[0].mxu0
  %1359 = vmatprep.mubr.bf16.mxu0 %v840
  %1360 = vmatmul.mubr.bf16.gmra.mrb[0].mxu0 %v839
  %v1361 = vpop.f32.mrb[0].mxu0
  %v1362 = vadd.f32 0.0, %v1361
  %v1363 = vpop.f32.mrb[0].mxu0
  %v1364 = vpop.f32.mrb[0].mxu0
  %v1365 = vadd.f32 0.0, %v1364
  %v1366 = vpop.f32.mrb[0].mxu0
  %1367 = vmatprep.mubr.bf16.mxu0 %v844
  %1368 = vmatmul.mubr.bf16.gmra.mrb[0].mxu0 %v843
  %v1369 = vpop.f32.mrb[0].mxu0
  %v1370 = vadd.f32 0.0, %v1369
  %v1371 = vpop.f32.mrb[0].mxu0
  %v1372 = vpop.f32.mrb[0].mxu0
  %v1373 = vadd.f32 0.0, %v1372
  %v1374 = vpop.f32.mrb[0].mxu0
  %1375 = vmatprep.mubr.bf16.mxu0 %v848
  %1376 = vmatmul.mubr.bf16.gmra.mrb[0].mxu0 %v847
  %v1377 = vpop.f32.mrb[0].mxu0
  %v1378 = vadd.f32 0.0, %v1377
  %v1379 = vpop.f32.mrb[0].mxu0
  %v1380 = vpop.f32.mrb[0].mxu0
  %v1381 = vadd.f32 0.0, %v1380
  %v1382 = vpop.f32.mrb[0].mxu0
  %1383 = vmatprep.mubr.bf16.mxu0 %v852
  %1384 = vmatmul.mubr.bf16.gmra.mrb[0].mxu0 %v851
  %v1385 = vpop.f32.mrb[0].mxu0
  %v1386 = vadd.f32 0.0, %v1385
  %v1387 = vpop.f32.mrb[0].mxu0
  %v1388 = vpop.f32.mrb[0].mxu0
  %v1389 = vadd.f32 0.0, %v1388
  %v1390 = vpop.f32.mrb[0].mxu0
  %1391 = vmatprep.mubr.bf16.mxu0 %v856
  %1392 = vmatmul.mubr.bf16.gmra.mrb[0].mxu0 %v855
  %v1393 = vpop.f32.mrb[0].mxu0
  %v1394 = vadd.f32 0.0, %v1393
  %v1395 = vpop.f32.mrb[0].mxu0
  %v1396 = vpop.f32.mrb[0].mxu0
  %v1397 = vadd.f32 0.0, %v1396
  %v1398 = vpop.f32.mrb[0].mxu0
  %1399 = vmatprep.mubr.bf16.mxu0 %v860
  %1400 = vmatmul.mubr.bf16.gmra.mrb[0].mxu0 %v859
  %v1401 = vpop.f32.mrb[0].mxu0
  %v1402 = vadd.f32 0.0, %v1401
  %v1403 = vpop.f32.mrb[0].mxu0
  %v1404 = vpop.f32.mrb[0].mxu0
  %v1405 = vadd.f32 0.0, %v1404
  %v1406 = vpop.f32.mrb[0].mxu0
  %1407 = vmatprep.mubr.bf16.mxu0 %v864
  %1408 = vmatmul.mubr.bf16.gmra.mrb[0].mxu0 %v863
  %v1409 = vpop.f32.mrb[0].mxu0
  %v1410 = vadd.f32 0.0, %v1409
  %v1411 = vpop.f32.mrb[0].mxu0
  %v1412 = vpop.f32.mrb[0].mxu0
  %v1413 = vadd.f32 0.0, %v1412
  %v1414 = vpop.f32.mrb[0].mxu0
  %1415 = vmatprep.mubr.bf16.mxu0 %v868
  %1416 = vmatmul.mubr.bf16.gmra.mrb[0].mxu0 %v867
  %v1417 = vpop.f32.mrb[0].mxu0
  %v1418 = vadd.f32 0.0, %v1417
  %v1419 = vpop.f32.mrb[0].mxu0
  %v1420 = vpop.f32.mrb[0].mxu0
  %v1421 = vadd.f32 0.0, %v1420
  %v1422 = vpop.f32.mrb[0].mxu0
  %1423 = vmatprep.mubr.bf16.mxu0 %v872
  %1424 = vmatmul.mubr.bf16.gmra.mrb[0].mxu0 %v871
  %v1425 = vpop.f32.mrb[0].mxu0
  %v1426 = vadd.f32 0.0, %v1425
  %v1427 = vpop.f32.mrb[0].mxu0
  %v1428 = vpop.f32.mrb[0].mxu0
  %v1429 = vadd.f32 0.0, %v1428
  %v1430 = vpop.f32.mrb[0].mxu0
  %1431 = vmatprep.mubr.bf16.mxu0 %v876
  %1432 = vmatmul.mubr.bf16.gmra.mrb[0].mxu0 %v875
  %v1433 = vpop.f32.mrb[0].mxu0
  %v1434 = vadd.f32 0.0, %v1433
  %v1435 = vpop.f32.mrb[0].mxu0
  %v1436 = vpop.f32.mrb[0].mxu0
  %v1437 = vadd.f32 0.0, %v1436
  %v1438 = vpop.f32.mrb[0].mxu0
  %1439 = vmatprep.mubr.bf16.mxu0 %v880
  %1440 = vmatmul.mubr.bf16.gmra.mrb[0].mxu0 %v879
  %v1441 = vpop.f32.mrb[0].mxu0
  %v1442 = vadd.f32 0.0, %v1441
  %v1443 = vpop.f32.mrb[0].mxu0
  %v1444 = vpop.f32.mrb[0].mxu0
  %v1445 = vadd.f32 0.0, %v1444
  %v1446 = vpop.f32.mrb[0].mxu0
  %1447 = vmatprep.mubr.bf16.mxu0 %v884
  %1448 = vmatmul.mubr.bf16.gmra.mrb[0].mxu0 %v883
  %v1449 = vpop.f32.mrb[0].mxu0
  %v1450 = vadd.f32 0.0, %v1449
  %v1451 = vpop.f32.mrb[0].mxu0
  %v1452 = vpop.f32.mrb[0].mxu0
  %v1453 = vadd.f32 0.0, %v1452
  %v1454 = vpop.f32.mrb[0].mxu0
  %1455 = vmatprep.mubr.bf16.mxu0 %v888
  %1456 = vmatmul.mubr.bf16.gmra.mrb[0].mxu0 %v887
  %v1457 = vpop.f32.mrb[0].mxu0
  %v1458 = vadd.f32 0.0, %v1457
  %v1459 = vpop.f32.mrb[0].mxu0
  %v1460 = vpop.f32.mrb[0].mxu0
  %v1461 = vadd.f32 0.0, %v1460
  %v1462 = vpop.f32.mrb[0].mxu0
  %1463 = vmatprep.mubr.bf16.mxu0 %v892
  %1464 = vmatmul.mubr.bf16.gmra.mrb[0].mxu0 %v891
  %v1465 = vpop.f32.mrb[0].mxu0
  %v1466 = vadd.f32 0.0, %v1465
  %v1467 = vpop.f32.mrb[0].mxu0
  %v1468 = vpop.f32.mrb[0].mxu0
  %v1469 = vadd.f32 0.0, %v1468
  %v1470 = vpop.f32.mrb[0].mxu0
  %1471 = vmatprep.mubr.bf16.mxu0 %v896
  %1472 = vmatmul.mubr.bf16.gmra.mrb[0].mxu0 %v895
  %v1473 = vpop.f32.mrb[0].mxu0
  %v1474 = vadd.f32 0.0, %v1473
  %v1475 = vpop.f32.mrb[0].mxu0
  %v1476 = vpop.f32.mrb[0].mxu0
  %v1477 = vadd.f32 0.0, %v1476
  %v1478 = vpop.f32.mrb[0].mxu0
  %1479 = vmatprep.mubr.bf16.mxu0 %v900
  %1480 = vmatmul.mubr.bf16.gmra.mrb[0].mxu0 %v899
  %v1481 = vpop.f32.mrb[0].mxu0
  %v1482 = vadd.f32 0.0, %v1481
  %v1483 = vpop.f32.mrb[0].mxu0
  %v1484 = vpop.f32.mrb[0].mxu0
  %v1485 = vadd.f32 0.0, %v1484
  %v1486 = vpop.f32.mrb[0].mxu0
  %1487 = vmatprep.mubr.bf16.mxu0 %v904
  %1488 = vmatmul.mubr.bf16.gmra.mrb[0].mxu0 %v903
  %v1489 = vpop.f32.mrb[0].mxu0
  %v1490 = vadd.f32 0.0, %v1489
  %v1491 = vpop.f32.mrb[0].mxu0
  %v1492 = vpop.f32.mrb[0].mxu0
  %v1493 = vadd.f32 0.0, %v1492
  %v1494 = vpop.f32.mrb[0].mxu0
  %1495 = vmatprep.mubr.bf16.mxu0 %v908
  %1496 = vmatmul.mubr.bf16.gmra.mrb[0].mxu0 %v907
  %v1497 = vpop.f32.mrb[0].mxu0
  %v1498 = vadd.f32 0.0, %v1497
  %v1499 = vpop.f32.mrb[0].mxu0
  %v1500 = vpop.f32.mrb[0].mxu0
  %v1501 = vadd.f32 0.0, %v1500
  %v1502 = vpop.f32.mrb[0].mxu0
  %1503 = vmatprep.mubr.bf16.mxu0 %v912
  %1504 = vmatmul.mubr.bf16.gmra.mrb[0].mxu0 %v911
  %v1505 = vpop.f32.mrb[0].mxu0
  %v1506 = vadd.f32 0.0, %v1505
  %v1507 = vpop.f32.mrb[0].mxu0
  %v1508 = vpop.f32.mrb[0].mxu0
  %v1509 = vadd.f32 0.0, %v1508
  %v1510 = vpop.f32.mrb[0].mxu0
  %1511 = vmatprep.mubr.bf16.mxu0 %v916
  %1512 = vmatmul.mubr.bf16.gmra.mrb[0].mxu0 %v915
  %v1513 = vpop.f32.mrb[0].mxu0
  %v1514 = vadd.f32 0.0, %v1513
  %v1515 = vpop.f32.mrb[0].mxu0
  %v1516 = vpop.f32.mrb[0].mxu0
  %v1517 = vadd.f32 0.0, %v1516
  %v1518 = vpop.f32.mrb[0].mxu0
  %1519 = vmatprep.mubr.bf16.mxu0 %v920
  %1520 = vmatmul.mubr.bf16.gmra.mrb[0].mxu0 %v919
  %v1521 = vpop.f32.mrb[0].mxu0
  %v1522 = vadd.f32 0.0, %v1521
  %v1523 = vpop.f32.mrb[0].mxu0
  %v1524 = vpop.f32.mrb[0].mxu0
  %v1525 = vadd.f32 0.0, %v1524
  %v1526 = vpop.f32.mrb[0].mxu0
  %1527 = vmatprep.mubr.bf16.mxu0 %v924
  %1528 = vmatmul.mubr.bf16.gmra.mrb[0].mxu0 %v923
  %v1529 = vpop.f32.mrb[0].mxu0
  %v1530 = vadd.f32 0.0, %v1529
  %v1531 = vpop.f32.mrb[0].mxu0
  %v1532 = vpop.f32.mrb[0].mxu0
  %v1533 = vadd.f32 0.0, %v1532
  %v1534 = vpop.f32.mrb[0].mxu0
  %1535 = vdwg.mxu0
  %1536 = vmatprep.subr.bf16.mxu0 0
  %1537 = vmatpush1.bf16.msra.mxu0 %v1199
  %1538 = vmatprep.subr.bf16.mxu0 0
  %1539 = vmatpush1.bf16.msra.mxu0 %v1200
  %1540 = vmatprep.subr.bf16.mxu0 0
  %1541 = vmatpush1.bf16.msra.mxu0 %v1201
  %1542 = vmatprep.subr.bf16.mxu0 0
  %1543 = vmatpush1.bf16.msra.mxu0 %v1202
  %1544 = vmatprep.subr.bf16.mxu0 0
  %1545 = vmatpush1.bf16.msra.mxu0 %v1203
  %1546 = vmatprep.subr.bf16.mxu0 0
  %1547 = vmatpush1.bf16.msra.mxu0 %v1204
  %1548 = vmatprep.subr.bf16.mxu0 0
  %1549 = vmatpush1.bf16.msra.mxu0 %v1205
  %1550 = vmatprep.subr.bf16.mxu0 0
  %1551 = vmatpush1.bf16.msra.mxu0 %v1206
  %1552 = vmatprep.subr.bf16.mxu0 0
  %1553 = vmatpush1.bf16.msra.mxu0 %v1207
  %1554 = vmatprep.subr.bf16.mxu0 0
  %1555 = vmatpush1.bf16.msra.mxu0 %v1208
  %1556 = vmatprep.subr.bf16.mxu0 0
  %1557 = vmatpush1.bf16.msra.mxu0 %v1209
  %1558 = vmatprep.subr.bf16.mxu0 0
  %1559 = vmatpush1.bf16.msra.mxu0 %v1210
  %1560 = vmatprep.subr.bf16.mxu0 0
  %1561 = vmatpush1.bf16.msra.mxu0 %v1211
  %1562 = vmatprep.subr.bf16.mxu0 0
  %1563 = vmatpush1.bf16.msra.mxu0 %v1212
  %1564 = vmatprep.subr.bf16.mxu0 0
  %1565 = vmatpush1.bf16.msra.mxu0 %v1213
  %1566 = vmatprep.subr.bf16.mxu0 0
  %1567 = vmatpush1.bf16.msra.mxu0 %v1214
  %1568 = vmatprep.mubr.bf16.mxu0 %v802
  %1569 = vmatmul.mubr.bf16.gmra.mrb[0].mxu0 %v801
  %v1570 = vpop.f32.mrb[0].mxu0
  %v1571 = vadd.f32 %v1282, %v1570
  %v1572 = vpop.f32.mrb[0].mxu0
  %v1573 = vpop.f32.mrb[0].mxu0
  %v1574 = vadd.f32 %v1285, %v1573
  %v1575 = vpop.f32.mrb[0].mxu0
  %1576 = vmatprep.mubr.bf16.mxu0 %v806
  %1577 = vmatmul.mubr.bf16.gmra.mrb[0].mxu0 %v805
  %v1578 = vpop.f32.mrb[0].mxu0
  %v1579 = vadd.f32 %v1290, %v1578
  %v1580 = vpop.f32.mrb[0].mxu0
  %v1581 = vpop.f32.mrb[0].mxu0
  %v1582 = vadd.f32 %v1293, %v1581
  %v1583 = vpop.f32.mrb[0].mxu0
  %1584 = vmatprep.mubr.bf16.mxu0 %v810
  %1585 = vmatmul.mubr.bf16.gmra.mrb[0].mxu0 %v809
  %v1586 = vpop.f32.mrb[0].mxu0
  %v1587 = vadd.f32 %v1298, %v1586
  %v1588 = vpop.f32.mrb[0].mxu0
  %v1589 = vpop.f32.mrb[0].mxu0
  %v1590 = vadd.f32 %v1301, %v1589
  %v1591 = vpop.f32.mrb[0].mxu0
  %1592 = vmatprep.mubr.bf16.mxu0 %v814
  %1593 = vmatmul.mubr.bf16.gmra.mrb[0].mxu0 %v813
  %v1594 = vpop.f32.mrb[0].mxu0
  %v1595 = vadd.f32 %v1306, %v1594
  %v1596 = vpop.f32.mrb[0].mxu0
  %v1597 = vpop.f32.mrb[0].mxu0
  %v1598 = vadd.f32 %v1309, %v1597
  %v1599 = vpop.f32.mrb[0].mxu0
  %1600 = vmatprep.mubr.bf16.mxu0 %v818
  %1601 = vmatmul.mubr.bf16.gmra.mrb[0].mxu0 %v817
  %v1602 = vpop.f32.mrb[0].mxu0
  %v1603 = vadd.f32 %v1314, %v1602
  %v1604 = vpop.f32.mrb[0].mxu0
  %v1605 = vpop.f32.mrb[0].mxu0
  %v1606 = vadd.f32 %v1317, %v1605
  %v1607 = vpop.f32.mrb[0].mxu0
  %1608 = vmatprep.mubr.bf16.mxu0 %v822
  %1609 = vmatmul.mubr.bf16.gmra.mrb[0].mxu0 %v821
  %v1610 = vpop.f32.mrb[0].mxu0
  %v1611 = vadd.f32 %v1322, %v1610
  %v1612 = vpop.f32.mrb[0].mxu0
  %v1613 = vpop.f32.mrb[0].mxu0
  %v1614 = vadd.f32 %v1325, %v1613
  %v1615 = vpop.f32.mrb[0].mxu0
  %1616 = vmatprep.mubr.bf16.mxu0 %v826
  %1617 = vmatmul.mubr.bf16.gmra.mrb[0].mxu0 %v825
  %v1618 = vpop.f32.mrb[0].mxu0
  %v1619 = vadd.f32 %v1330, %v1618
  %v1620 = vpop.f32.mrb[0].mxu0
  %v1621 = vpop.f32.mrb[0].mxu0
  %v1622 = vadd.f32 %v1333, %v1621
  %v1623 = vpop.f32.mrb[0].mxu0
  %1624 = vmatprep.mubr.bf16.mxu0 %v830
  %1625 = vmatmul.mubr.bf16.gmra.mrb[0].mxu0 %v829
  %v1626 = vpop.f32.mrb[0].mxu0
  %v1627 = vadd.f32 %v1338, %v1626
  %v1628 = vpop.f32.mrb[0].mxu0
  %v1629 = vpop.f32.mrb[0].mxu0
  %v1630 = vadd.f32 %v1341, %v1629
  %v1631 = vpop.f32.mrb[0].mxu0
  %1632 = vmatprep.mubr.bf16.mxu0 %v834
  %1633 = vmatmul.mubr.bf16.gmra.mrb[0].mxu0 %v833
  %v1634 = vpop.f32.mrb[0].mxu0
  %v1635 = vadd.f32 %v1346, %v1634
  %v1636 = vpop.f32.mrb[0].mxu0
  %v1637 = vpop.f32.mrb[0].mxu0
  %v1638 = vadd.f32 %v1349, %v1637
  %v1639 = vpop.f32.mrb[0].mxu0
  %1640 = vmatprep.mubr.bf16.mxu0 %v838
  %1641 = vmatmul.mubr.bf16.gmra.mrb[0].mxu0 %v837
  %v1642 = vpop.f32.mrb[0].mxu0
  %v1643 = vadd.f32 %v1354, %v1642
  %v1644 = vpop.f32.mrb[0].mxu0
  %v1645 = vpop.f32.mrb[0].mxu0
  %v1646 = vadd.f32 %v1357, %v1645
  %v1647 = vpop.f32.mrb[0].mxu0
  %1648 = vmatprep.mubr.bf16.mxu0 %v842
  %1649 = vmatmul.mubr.bf16.gmra.mrb[0].mxu0 %v841
  %v1650 = vpop.f32.mrb[0].mxu0
  %v1651 = vadd.f32 %v1362, %v1650
  %v1652 = vpop.f32.mrb[0].mxu0
  %v1653 = vpop.f32.mrb[0].mxu0
  %v1654 = vadd.f32 %v1365, %v1653
  %v1655 = vpop.f32.mrb[0].mxu0
  %1656 = vmatprep.mubr.bf16.mxu0 %v846
  %1657 = vmatmul.mubr.bf16.gmra.mrb[0].mxu0 %v845
  %v1658 = vpop.f32.mrb[0].mxu0
  %v1659 = vadd.f32 %v1370, %v1658
  %v1660 = vpop.f32.mrb[0].mxu0
  %v1661 = vpop.f32.mrb[0].mxu0
  %v1662 = vadd.f32 %v1373, %v1661
  %v1663 = vpop.f32.mrb[0].mxu0
  %1664 = vmatprep.mubr.bf16.mxu0 %v850
  %1665 = vmatmul.mubr.bf16.gmra.mrb[0].mxu0 %v849
  %v1666 = vpop.f32.mrb[0].mxu0
  %v1667 = vadd.f32 %v1378, %v1666
  %v1668 = vpop.f32.mrb[0].mxu0
  %v1669 = vpop.f32.mrb[0].mxu0
  %v1670 = vadd.f32 %v1381, %v1669
  %v1671 = vpop.f32.mrb[0].mxu0
  %1672 = vmatprep.mubr.bf16.mxu0 %v854
  %1673 = vmatmul.mubr.bf16.gmra.mrb[0].mxu0 %v853
  %v1674 = vpop.f32.mrb[0].mxu0
  %v1675 = vadd.f32 %v1386, %v1674
  %v1676 = vpop.f32.mrb[0].mxu0
  %v1677 = vpop.f32.mrb[0].mxu0
  %v1678 = vadd.f32 %v1389, %v1677
  %v1679 = vpop.f32.mrb[0].mxu0
  %1680 = vmatprep.mubr.bf16.mxu0 %v858
  %1681 = vmatmul.mubr.bf16.gmra.mrb[0].mxu0 %v857
  %v1682 = vpop.f32.mrb[0].mxu0
  %v1683 = vadd.f32 %v1394, %v1682
  %v1684 = vpop.f32.mrb[0].mxu0
  %v1685 = vpop.f32.mrb[0].mxu0
  %v1686 = vadd.f32 %v1397, %v1685
  %v1687 = vpop.f32.mrb[0].mxu0
  %1688 = vmatprep.mubr.bf16.mxu0 %v862
  %1689 = vmatmul.mubr.bf16.gmra.mrb[0].mxu0 %v861
  %v1690 = vpop.f32.mrb[0].mxu0
  %v1691 = vadd.f32 %v1402, %v1690
  %v1692 = vpop.f32.mrb[0].mxu0
  %v1693 = vpop.f32.mrb[0].mxu0
  %v1694 = vadd.f32 %v1405, %v1693
  %v1695 = vpop.f32.mrb[0].mxu0
  %1696 = vmatprep.mubr.bf16.mxu0 %v866
  %1697 = vmatmul.mubr.bf16.gmra.mrb[0].mxu0 %v865
  %v1698 = vpop.f32.mrb[0].mxu0
  %v1699 = vadd.f32 %v1410, %v1698
  %v1700 = vpop.f32.mrb[0].mxu0
  %v1701 = vpop.f32.mrb[0].mxu0
  %v1702 = vadd.f32 %v1413, %v1701
  %v1703 = vpop.f32.mrb[0].mxu0
  %1704 = vmatprep.mubr.bf16.mxu0 %v870
  %1705 = vmatmul.mubr.bf16.gmra.mrb[0].mxu0 %v869
  %v1706 = vpop.f32.mrb[0].mxu0
  %v1707 = vadd.f32 %v1418, %v1706
  %v1708 = vpop.f32.mrb[0].mxu0
  %v1709 = vpop.f32.mrb[0].mxu0
  %v1710 = vadd.f32 %v1421, %v1709
  %v1711 = vpop.f32.mrb[0].mxu0
  %1712 = vmatprep.mubr.bf16.mxu0 %v874
  %1713 = vmatmul.mubr.bf16.gmra.mrb[0].mxu0 %v873
  %v1714 = vpop.f32.mrb[0].mxu0
  %v1715 = vadd.f32 %v1426, %v1714
  %v1716 = vpop.f32.mrb[0].mxu0
  %v1717 = vpop.f32.mrb[0].mxu0
  %v1718 = vadd.f32 %v1429, %v1717
  %v1719 = vpop.f32.mrb[0].mxu0
  %1720 = vmatprep.mubr.bf16.mxu0 %v878
  %1721 = vmatmul.mubr.bf16.gmra.mrb[0].mxu0 %v877
  %v1722 = vpop.f32.mrb[0].mxu0
  %v1723 = vadd.f32 %v1434, %v1722
  %v1724 = vpop.f32.mrb[0].mxu0
  %v1725 = vpop.f32.mrb[0].mxu0
  %v1726 = vadd.f32 %v1437, %v1725
  %v1727 = vpop.f32.mrb[0].mxu0
  %1728 = vmatprep.mubr.bf16.mxu0 %v882
  %1729 = vmatmul.mubr.bf16.gmra.mrb[0].mxu0 %v881
  %v1730 = vpop.f32.mrb[0].mxu0
  %v1731 = vadd.f32 %v1442, %v1730
  %v1732 = vpop.f32.mrb[0].mxu0
  %v1733 = vpop.f32.mrb[0].mxu0
  %v1734 = vadd.f32 %v1445, %v1733
  %v1735 = vpop.f32.mrb[0].mxu0
  %1736 = vmatprep.mubr.bf16.mxu0 %v886
  %1737 = vmatmul.mubr.bf16.gmra.mrb[0].mxu0 %v885
  %v1738 = vpop.f32.mrb[0].mxu0
  %v1739 = vadd.f32 %v1450, %v1738
  %v1740 = vpop.f32.mrb[0].mxu0
  %v1741 = vpop.f32.mrb[0].mxu0
  %v1742 = vadd.f32 %v1453, %v1741
  %v1743 = vpop.f32.mrb[0].mxu0
  %1744 = vmatprep.mubr.bf16.mxu0 %v890
  %1745 = vmatmul.mubr.bf16.gmra.mrb[0].mxu0 %v889
  %v1746 = vpop.f32.mrb[0].mxu0
  %v1747 = vadd.f32 %v1458, %v1746
  %v1748 = vpop.f32.mrb[0].mxu0
  %v1749 = vpop.f32.mrb[0].mxu0
  %v1750 = vadd.f32 %v1461, %v1749
  %v1751 = vpop.f32.mrb[0].mxu0
  %1752 = vmatprep.mubr.bf16.mxu0 %v894
  %1753 = vmatmul.mubr.bf16.gmra.mrb[0].mxu0 %v893
  %v1754 = vpop.f32.mrb[0].mxu0
  %v1755 = vadd.f32 %v1466, %v1754
  %v1756 = vpop.f32.mrb[0].mxu0
  %v1757 = vpop.f32.mrb[0].mxu0
  %v1758 = vadd.f32 %v1469, %v1757
  %v1759 = vpop.f32.mrb[0].mxu0
  %1760 = vmatprep.mubr.bf16.mxu0 %v898
  %1761 = vmatmul.mubr.bf16.gmra.mrb[0].mxu0 %v897
  %v1762 = vpop.f32.mrb[0].mxu0
  %v1763 = vadd.f32 %v1474, %v1762
  %v1764 = vpop.f32.mrb[0].mxu0
  %v1765 = vpop.f32.mrb[0].mxu0
  %v1766 = vadd.f32 %v1477, %v1765
  %v1767 = vpop.f32.mrb[0].mxu0
  %1768 = vmatprep.mubr.bf16.mxu0 %v902
  %1769 = vmatmul.mubr.bf16.gmra.mrb[0].mxu0 %v901
  %v1770 = vpop.f32.mrb[0].mxu0
  %v1771 = vadd.f32 %v1482, %v1770
  %v1772 = vpop.f32.mrb[0].mxu0
  %v1773 = vpop.f32.mrb[0].mxu0
  %v1774 = vadd.f32 %v1485, %v1773
  %v1775 = vpop.f32.mrb[0].mxu0
  %1776 = vmatprep.mubr.bf16.mxu0 %v906
  %1777 = vmatmul.mubr.bf16.gmra.mrb[0].mxu0 %v905
  %v1778 = vpop.f32.mrb[0].mxu0
  %v1779 = vadd.f32 %v1490, %v1778
  %v1780 = vpop.f32.mrb[0].mxu0
  %v1781 = vpop.f32.mrb[0].mxu0
  %v1782 = vadd.f32 %v1493, %v1781
  %v1783 = vpop.f32.mrb[0].mxu0
  %1784 = vmatprep.mubr.bf16.mxu0 %v910
  %1785 = vmatmul.mubr.bf16.gmra.mrb[0].mxu0 %v909
  %v1786 = vpop.f32.mrb[0].mxu0
  %v1787 = vadd.f32 %v1498, %v1786
  %v1788 = vpop.f32.mrb[0].mxu0
  %v1789 = vpop.f32.mrb[0].mxu0
  %v1790 = vadd.f32 %v1501, %v1789
  %v1791 = vpop.f32.mrb[0].mxu0
  %1792 = vmatprep.mubr.bf16.mxu0 %v914
  %1793 = vmatmul.mubr.bf16.gmra.mrb[0].mxu0 %v913
  %v1794 = vpop.f32.mrb[0].mxu0
  %v1795 = vadd.f32 %v1506, %v1794
  %v1796 = vpop.f32.mrb[0].mxu0
  %v1797 = vpop.f32.mrb[0].mxu0
  %v1798 = vadd.f32 %v1509, %v1797
  %v1799 = vpop.f32.mrb[0].mxu0
  %1800 = vmatprep.mubr.bf16.mxu0 %v918
  %1801 = vmatmul.mubr.bf16.gmra.mrb[0].mxu0 %v917
  %v1802 = vpop.f32.mrb[0].mxu0
  %v1803 = vadd.f32 %v1514, %v1802
  %v1804 = vpop.f32.mrb[0].mxu0
  %v1805 = vpop.f32.mrb[0].mxu0
  %v1806 = vadd.f32 %v1517, %v1805
  %v1807 = vpop.f32.mrb[0].mxu0
  %1808 = vmatprep.mubr.bf16.mxu0 %v922
  %1809 = vmatmul.mubr.bf16.gmra.mrb[0].mxu0 %v921
  %v1810 = vpop.f32.mrb[0].mxu0
  %v1811 = vadd.f32 %v1522, %v1810
  %v1812 = vpop.f32.mrb[0].mxu0
  %v1813 = vpop.f32.mrb[0].mxu0
  %v1814 = vadd.f32 %v1525, %v1813
  %v1815 = vpop.f32.mrb[0].mxu0
  %1816 = vmatprep.mubr.bf16.mxu0 %v926
  %1817 = vmatmul.mubr.bf16.gmra.mrb[0].mxu0 %v925
  %v1818 = vpop.f32.mrb[0].mxu0
  %v1819 = vadd.f32 %v1530, %v1818
  %v1820 = vpop.f32.mrb[0].mxu0
  %v1821 = vpop.f32.mrb[0].mxu0
  %v1822 = vadd.f32 %v1533, %v1821
  %v1823 = vpop.f32.mrb[0].mxu0
  %1824 = vdwg.mxu0
  %v1825 = vadd.f32 %v351, %v1571
  %v1826 = vadd.f32 %v352, %v1574
  %v1827 = vadd.f32 %v353, %v1579
  %v1828 = vadd.f32 %v354, %v1582
  %v1829 = vadd.f32 %v355, %v1587
  %v1830 = vadd.f32 %v356, %v1590
  %v1831 = vadd.f32 %v357, %v1595
  %v1832 = vadd.f32 %v358, %v1598
  %v1833 = vadd.f32 %v359, %v1603
  %v1834 = vadd.f32 %v360, %v1606
  %v1835 = vadd.f32 %v361, %v1611
  %v1836 = vadd.f32 %v362, %v1614
  %v1837 = vadd.f32 %v363, %v1619
  %v1838 = vadd.f32 %v364, %v1622
  %v1839 = vadd.f32 %v365, %v1627
  %v1840 = vadd.f32 %v366, %v1630
  %v1841 = vadd.f32 %v367, %v1635
  %v1842 = vadd.f32 %v368, %v1638
  %v1843 = vadd.f32 %v369, %v1643
  %v1844 = vadd.f32 %v370, %v1646
  %v1845 = vadd.f32 %v371, %v1651
  %v1846 = vadd.f32 %v372, %v1654
  %v1847 = vadd.f32 %v373, %v1659
  %v1848 = vadd.f32 %v374, %v1662
  %v1849 = vadd.f32 %v375, %v1667
  %v1850 = vadd.f32 %v376, %v1670
  %v1851 = vadd.f32 %v377, %v1675
  %v1852 = vadd.f32 %v378, %v1678
  %v1853 = vadd.f32 %v379, %v1683
  %v1854 = vadd.f32 %v380, %v1686
  %v1855 = vadd.f32 %v381, %v1691
  %v1856 = vadd.f32 %v382, %v1694
  %v1857 = vadd.f32 %v383, %v1699
  %v1858 = vadd.f32 %v384, %v1702
  %v1859 = vadd.f32 %v385, %v1707
  %v1860 = vadd.f32 %v386, %v1710
  %v1861 = vadd.f32 %v387, %v1715
  %v1862 = vadd.f32 %v388, %v1718
  %v1863 = vadd.f32 %v389, %v1723
  %v1864 = vadd.f32 %v390, %v1726
  %v1865 = vadd.f32 %v391, %v1731
  %v1866 = vadd.f32 %v392, %v1734
  %v1867 = vadd.f32 %v393, %v1739
  %v1868 = vadd.f32 %v394, %v1742
  %v1869 = vadd.f32 %v395, %v1747
  %v1870 = vadd.f32 %v396, %v1750
  %v1871 = vadd.f32 %v397, %v1755
  %v1872 = vadd.f32 %v398, %v1758
  %v1873 = vadd.f32 %v399, %v1763
  %v1874 = vadd.f32 %v400, %v1766
  %v1875 = vadd.f32 %v401, %v1771
  %v1876 = vadd.f32 %v402, %v1774
  %v1877 = vadd.f32 %v403, %v1779
  %v1878 = vadd.f32 %v404, %v1782
  %v1879 = vadd.f32 %v405, %v1787
  %v1880 = vadd.f32 %v406, %v1790
  %v1881 = vadd.f32 %v407, %v1795
  %v1882 = vadd.f32 %v408, %v1798
  %v1883 = vadd.f32 %v409, %v1803
  %v1884 = vadd.f32 %v410, %v1806
  %v1885 = vadd.f32 %v411, %v1811
  %v1886 = vadd.f32 %v412, %v1814
  %v1887 = vadd.f32 %v413, %v1819
  %v1888 = vadd.f32 %v414, %v1822
  %1889 = vst [vmem:[%s3] sm:$0xff] %v1825
  %1890 = vst [vmem:[%s3 + $0x8] sm:$0xff] %v1826
  %1891 = vst [vmem:[%s3 + $0x10] sm:$0xff] %v1827
  %1892 = vst [vmem:[%s3 + $0x18] sm:$0xff] %v1828
  %1893 = vst [vmem:[%s3 + $0x20] sm:$0xff] %v1829
  %1894 = vst [vmem:[%s3 + $0x28] sm:$0xff] %v1830
  %1895 = vst [vmem:[%s3 + $0x30] sm:$0xff] %v1831
  %1896 = vst [vmem:[%s3 + $0x38] sm:$0xff] %v1832
  %1897 = vst [vmem:[%s3 + $0x40] sm:$0xff] %v1833
  %1898 = vst [vmem:[%s3 + $0x48] sm:$0xff] %v1834
  %1899 = vst [vmem:[%s3 + $0x50] sm:$0xff] %v1835
  %1900 = vst [vmem:[%s3 + $0x58] sm:$0xff] %v1836
  %1901 = vst [vmem:[%s3 + $0x60] sm:$0xff] %v1837
  %1902 = vst [vmem:[%s3 + $0x68] sm:$0xff] %v1838
  %1903 = vst [vmem:[%s3 + $0x70] sm:$0xff] %v1839
  %1904 = vst [vmem:[%s3 + $0x78] sm:$0xff] %v1840
  %1905 = vst [vmem:[%s3 + $0x80] sm:$0xff] %v1841
  %1906 = vst [vmem:[%s3 + $0x88] sm:$0xff] %v1842
  %1907 = vst [vmem:[%s3 + $0x90] sm:$0xff] %v1843
  %1908 = vst [vmem:[%s3 + $0x98] sm:$0xff] %v1844
  %1909 = vst [vmem:[%s3 + $0xa0] sm:$0xff] %v1845
  %1910 = vst [vmem:[%s3 + $0xa8] sm:$0xff] %v1846
  %1911 = vst [vmem:[%s3 + $0xb0] sm:$0xff] %v1847
  %1912 = vst [vmem:[%s3 + $0xb8] sm:$0xff] %v1848
  %1913 = vst [vmem:[%s3 + $0xc0] sm:$0xff] %v1849
  %1914 = vst [vmem:[%s3 + $0xc8] sm:$0xff] %v1850
  %1915 = vst [vmem:[%s3 + $0xd0] sm:$0xff] %v1851
  %1916 = vst [vmem:[%s3 + $0xd8] sm:$0xff] %v1852
  %1917 = vst [vmem:[%s3 + $0xe0] sm:$0xff] %v1853
  %1918 = vst [vmem:[%s3 + $0xe8] sm:$0xff] %v1854
  %1919 = vst [vmem:[%s3 + $0xf0] sm:$0xff] %v1855
  %1920 = vst [vmem:[%s3 + $0xf8] sm:$0xff] %v1856
  %1921 = vst [vmem:[%s3 + $0x100] sm:$0xff] %v1857
  %1922 = vst [vmem:[%s3 + $0x108] sm:$0xff] %v1858
  %1923 = vst [vmem:[%s3 + $0x110] sm:$0xff] %v1859
  %1924 = vst [vmem:[%s3 + $0x118] sm:$0xff] %v1860
  %1925 = vst [vmem:[%s3 + $0x120] sm:$0xff] %v1861
  %1926 = vst [vmem:[%s3 + $0x128] sm:$0xff] %v1862
  %1927 = vst [vmem:[%s3 + $0x130] sm:$0xff] %v1863
  %1928 = vst [vmem:[%s3 + $0x138] sm:$0xff] %v1864
  %1929 = vst [vmem:[%s3 + $0x140] sm:$0xff] %v1865
  %1930 = vst [vmem:[%s3 + $0x148] sm:$0xff] %v1866
  %1931 = vst [vmem:[%s3 + $0x150] sm:$0xff] %v1867
  %1932 = vst [vmem:[%s3 + $0x158] sm:$0xff] %v1868
  %1933 = vst [vmem:[%s3 + $0x160] sm:$0xff] %v1869
  %1934 = vst [vmem:[%s3 + $0x168] sm:$0xff] %v1870
  %1935 = vst [vmem:[%s3 + $0x170] sm:$0xff] %v1871
  %1936 = vst [vmem:[%s3 + $0x178] sm:$0xff] %v1872
  %1937 = vst [vmem:[%s3 + $0x180] sm:$0xff] %v1873
  %1938 = vst [vmem:[%s3 + $0x188] sm:$0xff] %v1874
  %1939 = vst [vmem:[%s3 + $0x190] sm:$0xff] %v1875
  %1940 = vst [vmem:[%s3 + $0x198] sm:$0xff] %v1876
  %1941 = vst [vmem:[%s3 + $0x1a0] sm:$0xff] %v1877
  %1942 = vst [vmem:[%s3 + $0x1a8] sm:$0xff] %v1878
  %1943 = vst [vmem:[%s3 + $0x1b0] sm:$0xff] %v1879
  %1944 = vst [vmem:[%s3 + $0x1b8] sm:$0xff] %v1880
  %1945 = vst [vmem:[%s3 + $0x1c0] sm:$0xff] %v1881
  %1946 = vst [vmem:[%s3 + $0x1c8] sm:$0xff] %v1882
  %1947 = vst [vmem:[%s3 + $0x1d0] sm:$0xff] %v1883
  %1948 = vst [vmem:[%s3 + $0x1d8] sm:$0xff] %v1884
  %1949 = vst [vmem:[%s3 + $0x1e0] sm:$0xff] %v1885
  %1950 = vst [vmem:[%s3 + $0x1e8] sm:$0xff] %v1886
  %1951 = vst [vmem:[%s3 + $0x1f0] sm:$0xff] %v1887
  %1952 = vst [vmem:[%s3 + $0x1f8] sm:$0xff] %v1888
  %v1953 = vld [vmem:[%s1] sm:$0xf]
  %v1954 = vld [vmem:[%s1 + $0x4] sm:$0xf]
  %v1955 = vld [vmem:[%s1 + $0x8] sm:$0xf]
  %v1956 = vld [vmem:[%s1 + $0xc] sm:$0xf]
  %v1957 = vld [vmem:[%s1 + $0x10] sm:$0xf]
  %v1958 = vld [vmem:[%s1 + $0x14] sm:$0xf]
  %v1959 = vld [vmem:[%s1 + $0x18] sm:$0xf]
  %v1960 = vld [vmem:[%s1 + $0x1c] sm:$0xf]
  %v1961 = vld [vmem:[%s1 + $0x20] sm:$0xf]
  %v1962 = vld [vmem:[%s1 + $0x24] sm:$0xf]
  %v1963 = vld [vmem:[%s1 + $0x28] sm:$0xf]
  %v1964 = vld [vmem:[%s1 + $0x2c] sm:$0xf]
  %v1965 = vld [vmem:[%s1 + $0x30] sm:$0xf]
  %v1966 = vld [vmem:[%s1 + $0x34] sm:$0xf]
  %v1967 = vld [vmem:[%s1 + $0x38] sm:$0xf]
  %v1968 = vld [vmem:[%s1 + $0x3c] sm:$0xf]
  %v1969 = vld [vmem:[%s1 + $0x40] sm:$0xf]
  %v1970 = vld [vmem:[%s1 + $0x44] sm:$0xf]
  %v1971 = vld [vmem:[%s1 + $0x48] sm:$0xf]
  %v1972 = vld [vmem:[%s1 + $0x4c] sm:$0xf]
  %v1973 = vld [vmem:[%s1 + $0x50] sm:$0xf]
  %v1974 = vld [vmem:[%s1 + $0x54] sm:$0xf]
  %v1975 = vld [vmem:[%s1 + $0x58] sm:$0xf]
  %v1976 = vld [vmem:[%s1 + $0x5c] sm:$0xf]
  %v1977 = vld [vmem:[%s1 + $0x60] sm:$0xf]
  %v1978 = vld [vmem:[%s1 + $0x64] sm:$0xf]
  %v1979 = vld [vmem:[%s1 + $0x68] sm:$0xf]
  %v1980 = vld [vmem:[%s1 + $0x6c] sm:$0xf]
  %v1981 = vld [vmem:[%s1 + $0x70] sm:$0xf]
  %v1982 = vld [vmem:[%s1 + $0x74] sm:$0xf]
  %v1983 = vld [vmem:[%s1 + $0x78] sm:$0xf]
  %v1984 = vld [vmem:[%s1 + $0x7c] sm:$0xf]
  %v1985 = vld [vmem:[%s1 + $0x80] sm:$0xf]
  %v1986 = vld [vmem:[%s1 + $0x84] sm:$0xf]
  %v1987 = vld [vmem:[%s1 + $0x88] sm:$0xf]
  %v1988 = vld [vmem:[%s1 + $0x8c] sm:$0xf]
  %v1989 = vld [vmem:[%s1 + $0x90] sm:$0xf]
  %v1990 = vld [vmem:[%s1 + $0x94] sm:$0xf]
  %v1991 = vld [vmem:[%s1 + $0x98] sm:$0xf]
  %v1992 = vld [vmem:[%s1 + $0x9c] sm:$0xf]
  %v1993 = vld [vmem:[%s1 + $0xa0] sm:$0xf]
  %v1994 = vld [vmem:[%s1 + $0xa4] sm:$0xf]
  %v1995 = vld [vmem:[%s1 + $0xa8] sm:$0xf]
  %v1996 = vld [vmem:[%s1 + $0xac] sm:$0xf]
  %v1997 = vld [vmem:[%s1 + $0xb0] sm:$0xf]
  %v1998 = vld [vmem:[%s1 + $0xb4] sm:$0xf]
  %v1999 = vld [vmem:[%s1 + $0xb8] sm:$0xf]
  %v2000 = vld [vmem:[%s1 + $0xbc] sm:$0xf]
  %v2001 = vld [vmem:[%s1 + $0xc0] sm:$0xf]
  %v2002 = vld [vmem:[%s1 + $0xc4] sm:$0xf]
  %v2003 = vld [vmem:[%s1 + $0xc8] sm:$0xf]
  %v2004 = vld [vmem:[%s1 + $0xcc] sm:$0xf]
  %v2005 = vld [vmem:[%s1 + $0xd0] sm:$0xf]
  %v2006 = vld [vmem:[%s1 + $0xd4] sm:$0xf]
  %v2007 = vld [vmem:[%s1 + $0xd8] sm:$0xf]
  %v2008 = vld [vmem:[%s1 + $0xdc] sm:$0xf]
  %v2009 = vld [vmem:[%s1 + $0xe0] sm:$0xf]
  %v2010 = vld [vmem:[%s1 + $0xe4] sm:$0xf]
  %v2011 = vld [vmem:[%s1 + $0xe8] sm:$0xf]
  %v2012 = vld [vmem:[%s1 + $0xec] sm:$0xf]
  %v2013 = vld [vmem:[%s1 + $0xf0] sm:$0xf]
  %v2014 = vld [vmem:[%s1 + $0xf4] sm:$0xf]
  %v2015 = vld [vmem:[%s1 + $0xf8] sm:$0xf]
  %v2016 = vld [vmem:[%s1 + $0xfc] sm:$0xf]
  %2017 = vxpose.xlu0.c.b16.start [1/8] %v799, 128
  %2018 = vxpose.xlu0.c.b16.cont [2/8] %v803, 128
  %2019 = vxpose.xlu0.c.b16.cont [3/8] %v807, 128
  %2020 = vxpose.xlu0.c.b16.cont [4/8] %v811, 128
  %2021 = vxpose.xlu0.c.b16.cont [5/8] %v815, 128
  %2022 = vxpose.xlu0.c.b16.cont [6/8] %v819, 128
  %2023 = vxpose.xlu0.c.b16.cont [7/8] %v823, 128
  %2024 = vxpose.xlu0.c.b16.end [8/8] %v827, 128
  %v2025 = vpop.trf.xlu0
  %v2026 = vpop.trf.xlu0
  %v2027 = vpop.trf.xlu0
  %v2028 = vpop.trf.xlu0
  %v2029 = vpop.trf.xlu0
  %v2030 = vpop.trf.xlu0
  %v2031 = vpop.trf.xlu0
  %v2032 = vpop.trf.xlu0
  %2033 = vxpose.xlu0.c.b16.start [1/8] %v800, 128
  %2034 = vxpose.xlu0.c.b16.cont [2/8] %v804, 128
  %2035 = vxpose.xlu0.c.b16.cont [3/8] %v808, 128
  %2036 = vxpose.xlu0.c.b16.cont [4/8] %v812, 128
  %2037 = vxpose.xlu0.c.b16.cont [5/8] %v816, 128
  %2038 = vxpose.xlu0.c.b16.cont [6/8] %v820, 128
  %2039 = vxpose.xlu0.c.b16.cont [7/8] %v824, 128
  %2040 = vxpose.xlu0.c.b16.end [8/8] %v828, 128
  %v2041 = vpop.trf.xlu0
  %v2042 = vpop.trf.xlu0
  %v2043 = vpop.trf.xlu0
  %v2044 = vpop.trf.xlu0
  %v2045 = vpop.trf.xlu0
  %v2046 = vpop.trf.xlu0
  %v2047 = vpop.trf.xlu0
  %v2048 = vpop.trf.xlu0
  %2049 = vxpose.xlu0.c.b16.start [1/8] %v801, 128
  %2050 = vxpose.xlu0.c.b16.cont [2/8] %v805, 128
  %2051 = vxpose.xlu0.c.b16.cont [3/8] %v809, 128
  %2052 = vxpose.xlu0.c.b16.cont [4/8] %v813, 128
  %2053 = vxpose.xlu0.c.b16.cont [5/8] %v817, 128
  %2054 = vxpose.xlu0.c.b16.cont [6/8] %v821, 128
  %2055 = vxpose.xlu0.c.b16.cont [7/8] %v825, 128
  %2056 = vxpose.xlu0.c.b16.end [8/8] %v829, 128
  %v2057 = vpop.trf.xlu0
  %v2058 = vpop.trf.xlu0
  %v2059 = vpop.trf.xlu0
  %v2060 = vpop.trf.xlu0
  %v2061 = vpop.trf.xlu0
  %v2062 = vpop.trf.xlu0
  %v2063 = vpop.trf.xlu0
  %v2064 = vpop.trf.xlu0
  %2065 = vxpose.xlu0.c.b16.start [1/8] %v802, 128
  %2066 = vxpose.xlu0.c.b16.cont [2/8] %v806, 128
  %2067 = vxpose.xlu0.c.b16.cont [3/8] %v810, 128
  %2068 = vxpose.xlu0.c.b16.cont [4/8] %v814, 128
  %2069 = vxpose.xlu0.c.b16.cont [5/8] %v818, 128
  %2070 = vxpose.xlu0.c.b16.cont [6/8] %v822, 128
  %2071 = vxpose.xlu0.c.b16.cont [7/8] %v826, 128
  %2072 = vxpose.xlu0.c.b16.end [8/8] %v830, 128
  %v2073 = vpop.trf.xlu0
  %v2074 = vpop.trf.xlu0
  %v2075 = vpop.trf.xlu0
  %v2076 = vpop.trf.xlu0
  %v2077 = vpop.trf.xlu0
  %v2078 = vpop.trf.xlu0
  %v2079 = vpop.trf.xlu0
  %v2080 = vpop.trf.xlu0
  %2081 = vxpose.xlu0.c.b16.start [1/8] %v831, 128
  %2082 = vxpose.xlu0.c.b16.cont [2/8] %v835, 128
  %2083 = vxpose.xlu0.c.b16.cont [3/8] %v839, 128
  %2084 = vxpose.xlu0.c.b16.cont [4/8] %v843, 128
  %2085 = vxpose.xlu0.c.b16.cont [5/8] %v847, 128
  %2086 = vxpose.xlu0.c.b16.cont [6/8] %v851, 128
  %2087 = vxpose.xlu0.c.b16.cont [7/8] %v855, 128
  %2088 = vxpose.xlu0.c.b16.end [8/8] %v859, 128
  %v2089 = vpop.trf.xlu0
  %v2090 = vpop.trf.xlu0
  %v2091 = vpop.trf.xlu0
  %v2092 = vpop.trf.xlu0
  %v2093 = vpop.trf.xlu0
  %v2094 = vpop.trf.xlu0
  %v2095 = vpop.trf.xlu0
  %v2096 = vpop.trf.xlu0
  %2097 = vxpose.xlu0.c.b16.start [1/8] %v832, 128
  %2098 = vxpose.xlu0.c.b16.cont [2/8] %v836, 128
  %2099 = vxpose.xlu0.c.b16.cont [3/8] %v840, 128
  %2100 = vxpose.xlu0.c.b16.cont [4/8] %v844, 128
  %2101 = vxpose.xlu0.c.b16.cont [5/8] %v848, 128
  %2102 = vxpose.xlu0.c.b16.cont [6/8] %v852, 128
  %2103 = vxpose.xlu0.c.b16.cont [7/8] %v856, 128
  %2104 = vxpose.xlu0.c.b16.end [8/8] %v860, 128
  %v2105 = vpop.trf.xlu0
  %v2106 = vpop.trf.xlu0
  %v2107 = vpop.trf.xlu0
  %v2108 = vpop.trf.xlu0
  %v2109 = vpop.trf.xlu0
  %v2110 = vpop.trf.xlu0
  %v2111 = vpop.trf.xlu0
  %v2112 = vpop.trf.xlu0
  %2113 = vxpose.xlu0.c.b16.start [1/8] %v833, 128
  %2114 = vxpose.xlu0.c.b16.cont [2/8] %v837, 128
  %2115 = vxpose.xlu0.c.b16.cont [3/8] %v841, 128
  %2116 = vxpose.xlu0.c.b16.cont [4/8] %v845, 128
  %2117 = vxpose.xlu0.c.b16.cont [5/8] %v849, 128
  %2118 = vxpose.xlu0.c.b16.cont [6/8] %v853, 128
  %2119 = vxpose.xlu0.c.b16.cont [7/8] %v857, 128
  %2120 = vxpose.xlu0.c.b16.end [8/8] %v861, 128
  %v2121 = vpop.trf.xlu0
  %v2122 = vpop.trf.xlu0
  %v2123 = vpop.trf.xlu0
  %v2124 = vpop.trf.xlu0
  %v2125 = vpop.trf.xlu0
  %v2126 = vpop.trf.xlu0
  %v2127 = vpop.trf.xlu0
  %v2128 = vpop.trf.xlu0
  %2129 = vxpose.xlu0.c.b16.start [1/8] %v834, 128
  %2130 = vxpose.xlu0.c.b16.cont [2/8] %v838, 128
  %2131 = vxpose.xlu0.c.b16.cont [3/8] %v842, 128
  %2132 = vxpose.xlu0.c.b16.cont [4/8] %v846, 128
  %2133 = vxpose.xlu0.c.b16.cont [5/8] %v850, 128
  %2134 = vxpose.xlu0.c.b16.cont [6/8] %v854, 128
  %2135 = vxpose.xlu0.c.b16.cont [7/8] %v858, 128
  %2136 = vxpose.xlu0.c.b16.end [8/8] %v862, 128
  %v2137 = vpop.trf.xlu0
  %v2138 = vpop.trf.xlu0
  %v2139 = vpop.trf.xlu0
  %v2140 = vpop.trf.xlu0
  %v2141 = vpop.trf.xlu0
  %v2142 = vpop.trf.xlu0
  %v2143 = vpop.trf.xlu0
  %v2144 = vpop.trf.xlu0
  %2145 = vxpose.xlu0.c.b16.start [1/8] %v863, 128
  %2146 = vxpose.xlu0.c.b16.cont [2/8] %v867, 128
  %2147 = vxpose.xlu0.c.b16.cont [3/8] %v871, 128
  %2148 = vxpose.xlu0.c.b16.cont [4/8] %v875, 128
  %2149 = vxpose.xlu0.c.b16.cont [5/8] %v879, 128
  %2150 = vxpose.xlu0.c.b16.cont [6/8] %v883, 128
  %2151 = vxpose.xlu0.c.b16.cont [7/8] %v887, 128
  %2152 = vxpose.xlu0.c.b16.end [8/8] %v891, 128
  %v2153 = vpop.trf.xlu0
  %v2154 = vpop.trf.xlu0
  %v2155 = vpop.trf.xlu0
  %v2156 = vpop.trf.xlu0
  %v2157 = vpop.trf.xlu0
  %v2158 = vpop.trf.xlu0
  %v2159 = vpop.trf.xlu0
  %v2160 = vpop.trf.xlu0
  %2161 = vxpose.xlu0.c.b16.start [1/8] %v864, 128
  %2162 = vxpose.xlu0.c.b16.cont [2/8] %v868, 128
  %2163 = vxpose.xlu0.c.b16.cont [3/8] %v872, 128
  %2164 = vxpose.xlu0.c.b16.cont [4/8] %v876, 128
  %2165 = vxpose.xlu0.c.b16.cont [5/8] %v880, 128
  %2166 = vxpose.xlu0.c.b16.cont [6/8] %v884, 128
  %2167 = vxpose.xlu0.c.b16.cont [7/8] %v888, 128
  %2168 = vxpose.xlu0.c.b16.end [8/8] %v892, 128
  %v2169 = vpop.trf.xlu0
  %v2170 = vpop.trf.xlu0
  %v2171 = vpop.trf.xlu0
  %v2172 = vpop.trf.xlu0
  %v2173 = vpop.trf.xlu0
  %v2174 = vpop.trf.xlu0
  %v2175 = vpop.trf.xlu0
  %v2176 = vpop.trf.xlu0
  %2177 = vxpose.xlu0.c.b16.start [1/8] %v865, 128
  %2178 = vxpose.xlu0.c.b16.cont [2/8] %v869, 128
  %2179 = vxpose.xlu0.c.b16.cont [3/8] %v873, 128
  %2180 = vxpose.xlu0.c.b16.cont [4/8] %v877, 128
  %2181 = vxpose.xlu0.c.b16.cont [5/8] %v881, 128
  %2182 = vxpose.xlu0.c.b16.cont [6/8] %v885, 128
  %2183 = vxpose.xlu0.c.b16.cont [7/8] %v889, 128
  %2184 = vxpose.xlu0.c.b16.end [8/8] %v893, 128
  %v2185 = vpop.trf.xlu0
  %v2186 = vpop.trf.xlu0
  %v2187 = vpop.trf.xlu0
  %v2188 = vpop.trf.xlu0
  %v2189 = vpop.trf.xlu0
  %v2190 = vpop.trf.xlu0
  %v2191 = vpop.trf.xlu0
  %v2192 = vpop.trf.xlu0
  %2193 = vxpose.xlu0.c.b16.start [1/8] %v866, 128
  %2194 = vxpose.xlu0.c.b16.cont [2/8] %v870, 128
  %2195 = vxpose.xlu0.c.b16.cont [3/8] %v874, 128
  %2196 = vxpose.xlu0.c.b16.cont [4/8] %v878, 128
  %2197 = vxpose.xlu0.c.b16.cont [5/8] %v882, 128
  %2198 = vxpose.xlu0.c.b16.cont [6/8] %v886, 128
  %2199 = vxpose.xlu0.c.b16.cont [7/8] %v890, 128
  %2200 = vxpose.xlu0.c.b16.end [8/8] %v894, 128
  %v2201 = vpop.trf.xlu0
  %v2202 = vpop.trf.xlu0
  %v2203 = vpop.trf.xlu0
  %v2204 = vpop.trf.xlu0
  %v2205 = vpop.trf.xlu0
  %v2206 = vpop.trf.xlu0
  %v2207 = vpop.trf.xlu0
  %v2208 = vpop.trf.xlu0
  %2209 = vxpose.xlu0.c.b16.start [1/8] %v895, 128
  %2210 = vxpose.xlu0.c.b16.cont [2/8] %v899, 128
  %2211 = vxpose.xlu0.c.b16.cont [3/8] %v903, 128
  %2212 = vxpose.xlu0.c.b16.cont [4/8] %v907, 128
  %2213 = vxpose.xlu0.c.b16.cont [5/8] %v911, 128
  %2214 = vxpose.xlu0.c.b16.cont [6/8] %v915, 128
  %2215 = vxpose.xlu0.c.b16.cont [7/8] %v919, 128
  %2216 = vxpose.xlu0.c.b16.end [8/8] %v923, 128
  %v2217 = vpop.trf.xlu0
  %v2218 = vpop.trf.xlu0
  %v2219 = vpop.trf.xlu0
  %v2220 = vpop.trf.xlu0
  %v2221 = vpop.trf.xlu0
  %v2222 = vpop.trf.xlu0
  %v2223 = vpop.trf.xlu0
  %v2224 = vpop.trf.xlu0
  %2225 = vxpose.xlu0.c.b16.start [1/8] %v896, 128
  %2226 = vxpose.xlu0.c.b16.cont [2/8] %v900, 128
  %2227 = vxpose.xlu0.c.b16.cont [3/8] %v904, 128
  %2228 = vxpose.xlu0.c.b16.cont [4/8] %v908, 128
  %2229 = vxpose.xlu0.c.b16.cont [5/8] %v912, 128
  %2230 = vxpose.xlu0.c.b16.cont [6/8] %v916, 128
  %2231 = vxpose.xlu0.c.b16.cont [7/8] %v920, 128
  %2232 = vxpose.xlu0.c.b16.end [8/8] %v924, 128
  %v2233 = vpop.trf.xlu0
  %v2234 = vpop.trf.xlu0
  %v2235 = vpop.trf.xlu0
  %v2236 = vpop.trf.xlu0
  %v2237 = vpop.trf.xlu0
  %v2238 = vpop.trf.xlu0
  %v2239 = vpop.trf.xlu0
  %v2240 = vpop.trf.xlu0
  %2241 = vxpose.xlu0.c.b16.start [1/8] %v897, 128
  %2242 = vxpose.xlu0.c.b16.cont [2/8] %v901, 128
  %2243 = vxpose.xlu0.c.b16.cont [3/8] %v905, 128
  %2244 = vxpose.xlu0.c.b16.cont [4/8] %v909, 128
  %2245 = vxpose.xlu0.c.b16.cont [5/8] %v913, 128
  %2246 = vxpose.xlu0.c.b16.cont [6/8] %v917, 128
  %2247 = vxpose.xlu0.c.b16.cont [7/8] %v921, 128
  %2248 = vxpose.xlu0.c.b16.end [8/8] %v925, 128
  %v2249 = vpop.trf.xlu0
  %v2250 = vpop.trf.xlu0
  %v2251 = vpop.trf.xlu0
  %v2252 = vpop.trf.xlu0
  %v2253 = vpop.trf.xlu0
  %v2254 = vpop.trf.xlu0
  %v2255 = vpop.trf.xlu0
  %v2256 = vpop.trf.xlu0
  %2257 = vxpose.xlu0.c.b16.start [1/8] %v898, 128
  %2258 = vxpose.xlu0.c.b16.cont [2/8] %v902, 128
  %2259 = vxpose.xlu0.c.b16.cont [3/8] %v906, 128
  %2260 = vxpose.xlu0.c.b16.cont [4/8] %v910, 128
  %2261 = vxpose.xlu0.c.b16.cont [5/8] %v914, 128
  %2262 = vxpose.xlu0.c.b16.cont [6/8] %v918, 128
  %2263 = vxpose.xlu0.c.b16.cont [7/8] %v922, 128
  %2264 = vxpose.xlu0.c.b16.end [8/8] %v926, 128
  %v2265 = vpop.trf.xlu0
  %v2266 = vpop.trf.xlu0
  %v2267 = vpop.trf.xlu0
  %v2268 = vpop.trf.xlu0
  %v2269 = vpop.trf.xlu0
  %v2270 = vpop.trf.xlu0
  %v2271 = vpop.trf.xlu0
  %v2272 = vpop.trf.xlu0
  %v2337 = vunpack.c.l.b16 %v1953
  %v2338 = vunpack.c.l.b16 %v1954
  %v2339 = vunpack.c.l.b16 %v1955
  %v2340 = vunpack.c.l.b16 %v1956
  %v2341 = vunpack.c.l.b16 %v1957
  %v2342 = vunpack.c.l.b16 %v1958
  %v2343 = vunpack.c.l.b16 %v1959
  %v2344 = vunpack.c.l.b16 %v1960
  %v2345 = vunpack.c.l.b16 %v1961
  %v2346 = vunpack.c.l.b16 %v1962
  %v2347 = vunpack.c.l.b16 %v1963
  %v2348 = vunpack.c.l.b16 %v1964
  %v2349 = vunpack.c.l.b16 %v1965
  %v2350 = vunpack.c.l.b16 %v1966
  %v2351 = vunpack.c.l.b16 %v1967
  %v2352 = vunpack.c.l.b16 %v1968
  %v2353 = vunpack.c.l.b16 %v1969
  %v2354 = vunpack.c.l.b16 %v1970
  %v2355 = vunpack.c.l.b16 %v1971
  %v2356 = vunpack.c.l.b16 %v1972
  %v2357 = vunpack.c.l.b16 %v1973
  %v2358 = vunpack.c.l.b16 %v1974
  %v2359 = vunpack.c.l.b16 %v1975
  %v2360 = vunpack.c.l.b16 %v1976
  %v2361 = vunpack.c.l.b16 %v1977
  %v2362 = vunpack.c.l.b16 %v1978
  %v2363 = vunpack.c.l.b16 %v1979
  %v2364 = vunpack.c.l.b16 %v1980
  %v2365 = vunpack.c.l.b16 %v1981
  %v2366 = vunpack.c.l.b16 %v1982
  %v2367 = vunpack.c.l.b16 %v1983
  %v2368 = vunpack.c.l.b16 %v1984
  %v2369 = vunpack.c.l.b16 %v1985
  %v2370 = vunpack.c.l.b16 %v1986
  %v2371 = vunpack.c.l.b16 %v1987
  %v2372 = vunpack.c.l.b16 %v1988
  %v2373 = vunpack.c.l.b16 %v1989
  %v2374 = vunpack.c.l.b16 %v1990
  %v2375 = vunpack.c.l.b16 %v1991
  %v2376 = vunpack.c.l.b16 %v1992
  %v2377 = vunpack.c.l.b16 %v1993
  %v2378 = vunpack.c.l.b16 %v1994
  %v2379 = vunpack.c.l.b16 %v1995
  %v2380 = vunpack.c.l.b16 %v1996
  %v2381 = vunpack.c.l.b16 %v1997
  %v2382 = vunpack.c.l.b16 %v1998
  %v2383 = vunpack.c.l.b16 %v1999
  %v2384 = vunpack.c.l.b16 %v2000
  %v2385 = vunpack.c.l.b16 %v2001
  %v2386 = vunpack.c.l.b16 %v2002
  %v2387 = vunpack.c.l.b16 %v2003
  %v2388 = vunpack.c.l.b16 %v2004
  %v2389 = vunpack.c.l.b16 %v2005
  %v2390 = vunpack.c.l.b16 %v2006
  %v2391 = vunpack.c.l.b16 %v2007
  %v2392 = vunpack.c.l.b16 %v2008
  %v2393 = vunpack.c.l.b16 %v2009
  %v2394 = vunpack.c.l.b16 %v2010
  %v2395 = vunpack.c.l.b16 %v2011
  %v2396 = vunpack.c.l.b16 %v2012
  %v2397 = vunpack.c.l.b16 %v2013
  %v2398 = vunpack.c.l.b16 %v2014
  %v2399 = vunpack.c.l.b16 %v2015
  %v2400 = vunpack.c.l.b16 %v2016
  %v2401 = vpack.c.b16 %v2338, %v2337
  %v2402 = vpack.c.b16 %v2340, %v2339
  %v2403 = vpack.c.b16 %v2342, %v2341
  %v2404 = vpack.c.b16 %v2344, %v2343
  %v2405 = vpack.c.b16 %v2346, %v2345
  %v2406 = vpack.c.b16 %v2348, %v2347
  %v2407 = vpack.c.b16 %v2350, %v2349
  %v2408 = vpack.c.b16 %v2352, %v2351
  %v2409 = vpack.c.b16 %v2354, %v2353
  %v2410 = vpack.c.b16 %v2356, %v2355
  %v2411 = vpack.c.b16 %v2358, %v2357
  %v2412 = vpack.c.b16 %v2360, %v2359
  %v2413 = vpack.c.b16 %v2362, %v2361
  %v2414 = vpack.c.b16 %v2364, %v2363
  %v2415 = vpack.c.b16 %v2366, %v2365
  %v2416 = vpack.c.b16 %v2368, %v2367
  %v2417 = vpack.c.b16 %v2370, %v2369
  %v2418 = vpack.c.b16 %v2372, %v2371
  %v2419 = vpack.c.b16 %v2374, %v2373
  %v2420 = vpack.c.b16 %v2376, %v2375
  %v2421 = vpack.c.b16 %v2378, %v2377
  %v2422 = vpack.c.b16 %v2380, %v2379
  %v2423 = vpack.c.b16 %v2382, %v2381
  %v2424 = vpack.c.b16 %v2384, %v2383
  %v2425 = vpack.c.b16 %v2386, %v2385
  %v2426 = vpack.c.b16 %v2388, %v2387
  %v2427 = vpack.c.b16 %v2390, %v2389
  %v2428 = vpack.c.b16 %v2392, %v2391
  %v2429 = vpack.c.b16 %v2394, %v2393
  %v2430 = vpack.c.b16 %v2396, %v2395
  %v2431 = vpack.c.b16 %v2398, %v2397
  %v2432 = vpack.c.b16 %v2400, %v2399
  %2465 = vmatprep.subr.bf16.mxu0 0
  %2466 = vmatpush1.bf16.msra.mxu0 %v2401
  %2467 = vmatprep.subr.bf16.mxu0 0
  %2468 = vmatpush1.bf16.msra.mxu0 %v2402
  %2469 = vmatprep.subr.bf16.mxu0 0
  %2470 = vmatpush1.bf16.msra.mxu0 %v2403
  %2471 = vmatprep.subr.bf16.mxu0 0
  %2472 = vmatpush1.bf16.msra.mxu0 %v2404
  %2473 = vmatprep.subr.bf16.mxu0 0
  %2474 = vmatpush1.bf16.msra.mxu0 %v2405
  %2475 = vmatprep.subr.bf16.mxu0 0
  %2476 = vmatpush1.bf16.msra.mxu0 %v2406
  %2477 = vmatprep.subr.bf16.mxu0 0
  %2478 = vmatpush1.bf16.msra.mxu0 %v2407
  %2479 = vmatprep.subr.bf16.mxu0 0
  %2480 = vmatpush1.bf16.msra.mxu0 %v2408
  %2481 = vmatprep.subr.bf16.mxu0 0
  %2482 = vmatpush1.bf16.msra.mxu0 %v2409
  %2483 = vmatprep.subr.bf16.mxu0 0
  %2484 = vmatpush1.bf16.msra.mxu0 %v2410
  %2485 = vmatprep.subr.bf16.mxu0 0
  %2486 = vmatpush1.bf16.msra.mxu0 %v2411
  %2487 = vmatprep.subr.bf16.mxu0 0
  %2488 = vmatpush1.bf16.msra.mxu0 %v2412
  %2489 = vmatprep.subr.bf16.mxu0 0
  %2490 = vmatpush1.bf16.msra.mxu0 %v2413
  %2491 = vmatprep.subr.bf16.mxu0 0
  %2492 = vmatpush1.bf16.msra.mxu0 %v2414
  %2493 = vmatprep.subr.bf16.mxu0 0
  %2494 = vmatpush1.bf16.msra.mxu0 %v2415
  %2495 = vmatprep.subr.bf16.mxu0 0
  %2496 = vmatpush1.bf16.msra.mxu0 %v2416
  %2497 = vmatprep.mubr.bf16.mxu0 %v2089
  %2498 = vmatmul.mubr.bf16.gmra.mrb[0].mxu0 %v2025
  %v2499 = vpop.f32.mrb[0].mxu0
  %v2500 = vadd.f32 0.0, %v2499
  %v2501 = vpop.f32.mrb[0].mxu0
  %v2502 = vpop.f32.mrb[0].mxu0
  %v2503 = vadd.f32 0.0, %v2502
  %v2504 = vpop.f32.mrb[0].mxu0
  %2505 = vmatprep.mubr.bf16.mxu0 %v2090
  %2506 = vmatmul.mubr.bf16.gmra.mrb[0].mxu0 %v2026
  %v2507 = vpop.f32.mrb[0].mxu0
  %v2508 = vadd.f32 0.0, %v2507
  %v2509 = vpop.f32.mrb[0].mxu0
  %v2510 = vpop.f32.mrb[0].mxu0
  %v2511 = vadd.f32 0.0, %v2510
  %v2512 = vpop.f32.mrb[0].mxu0
  %2513 = vmatprep.mubr.bf16.mxu0 %v2091
  %2514 = vmatmul.mubr.bf16.gmra.mrb[0].mxu0 %v2027
  %v2515 = vpop.f32.mrb[0].mxu0
  %v2516 = vadd.f32 0.0, %v2515
  %v2517 = vpop.f32.mrb[0].mxu0
  %v2518 = vpop.f32.mrb[0].mxu0
  %v2519 = vadd.f32 0.0, %v2518
  %v2520 = vpop.f32.mrb[0].mxu0
  %2521 = vmatprep.mubr.bf16.mxu0 %v2092
  %2522 = vmatmul.mubr.bf16.gmra.mrb[0].mxu0 %v2028
  %v2523 = vpop.f32.mrb[0].mxu0
  %v2524 = vadd.f32 0.0, %v2523
  %v2525 = vpop.f32.mrb[0].mxu0
  %v2526 = vpop.f32.mrb[0].mxu0
  %v2527 = vadd.f32 0.0, %v2526
  %v2528 = vpop.f32.mrb[0].mxu0
  %2529 = vmatprep.mubr.bf16.mxu0 %v2093
  %2530 = vmatmul.mubr.bf16.gmra.mrb[0].mxu0 %v2029
  %v2531 = vpop.f32.mrb[0].mxu0
  %v2532 = vadd.f32 0.0, %v2531
  %v2533 = vpop.f32.mrb[0].mxu0
  %v2534 = vpop.f32.mrb[0].mxu0
  %v2535 = vadd.f32 0.0, %v2534
  %v2536 = vpop.f32.mrb[0].mxu0
  %2537 = vmatprep.mubr.bf16.mxu0 %v2094
  %2538 = vmatmul.mubr.bf16.gmra.mrb[0].mxu0 %v2030
  %v2539 = vpop.f32.mrb[0].mxu0
  %v2540 = vadd.f32 0.0, %v2539
  %v2541 = vpop.f32.mrb[0].mxu0
  %v2542 = vpop.f32.mrb[0].mxu0
  %v2543 = vadd.f32 0.0, %v2542
  %v2544 = vpop.f32.mrb[0].mxu0
  %2545 = vmatprep.mubr.bf16.mxu0 %v2095
  %2546 = vmatmul.mubr.bf16.gmra.mrb[0].mxu0 %v2031
  %v2547 = vpop.f32.mrb[0].mxu0
  %v2548 = vadd.f32 0.0, %v2547
  %v2549 = vpop.f32.mrb[0].mxu0
  %v2550 = vpop.f32.mrb[0].mxu0
  %v2551 = vadd.f32 0.0, %v2550
  %v2552 = vpop.f32.mrb[0].mxu0
  %2553 = vmatprep.mubr.bf16.mxu0 %v2096
  %2554 = vmatmul.mubr.bf16.gmra.mrb[0].mxu0 %v2032
  %v2555 = vpop.f32.mrb[0].mxu0
  %v2556 = vadd.f32 0.0, %v2555
  %v2557 = vpop.f32.mrb[0].mxu0
  %v2558 = vpop.f32.mrb[0].mxu0
  %v2559 = vadd.f32 0.0, %v2558
  %v2560 = vpop.f32.mrb[0].mxu0
  %2561 = vmatprep.mubr.bf16.mxu0 %v2105
  %2562 = vmatmul.mubr.bf16.gmra.mrb[0].mxu0 %v2041
  %v2563 = vpop.f32.mrb[0].mxu0
  %v2564 = vadd.f32 0.0, %v2563
  %v2565 = vpop.f32.mrb[0].mxu0
  %v2566 = vpop.f32.mrb[0].mxu0
  %v2567 = vadd.f32 0.0, %v2566
  %v2568 = vpop.f32.mrb[0].mxu0
  %2569 = vmatprep.mubr.bf16.mxu0 %v2106
  %2570 = vmatmul.mubr.bf16.gmra.mrb[0].mxu0 %v2042
  %v2571 = vpop.f32.mrb[0].mxu0
  %v2572 = vadd.f32 0.0, %v2571
  %v2573 = vpop.f32.mrb[0].mxu0
  %v2574 = vpop.f32.mrb[0].mxu0
  %v2575 = vadd.f32 0.0, %v2574
  %v2576 = vpop.f32.mrb[0].mxu0
  %2577 = vmatprep.mubr.bf16.mxu0 %v2107
  %2578 = vmatmul.mubr.bf16.gmra.mrb[0].mxu0 %v2043
  %v2579 = vpop.f32.mrb[0].mxu0
  %v2580 = vadd.f32 0.0, %v2579
  %v2581 = vpop.f32.mrb[0].mxu0
  %v2582 = vpop.f32.mrb[0].mxu0
  %v2583 = vadd.f32 0.0, %v2582
  %v2584 = vpop.f32.mrb[0].mxu0
  %2585 = vmatprep.mubr.bf16.mxu0 %v2108
  %2586 = vmatmul.mubr.bf16.gmra.mrb[0].mxu0 %v2044
  %v2587 = vpop.f32.mrb[0].mxu0
  %v2588 = vadd.f32 0.0, %v2587
  %v2589 = vpop.f32.mrb[0].mxu0
  %v2590 = vpop.f32.mrb[0].mxu0
  %v2591 = vadd.f32 0.0, %v2590
  %v2592 = vpop.f32.mrb[0].mxu0
  %2593 = vmatprep.mubr.bf16.mxu0 %v2109
  %2594 = vmatmul.mubr.bf16.gmra.mrb[0].mxu0 %v2045
  %v2595 = vpop.f32.mrb[0].mxu0
  %v2596 = vadd.f32 0.0, %v2595
  %v2597 = vpop.f32.mrb[0].mxu0
  %v2598 = vpop.f32.mrb[0].mxu0
  %v2599 = vadd.f32 0.0, %v2598
  %v2600 = vpop.f32.mrb[0].mxu0
  %2601 = vmatprep.mubr.bf16.mxu0 %v2110
  %2602 = vmatmul.mubr.bf16.gmra.mrb[0].mxu0 %v2046
  %v2603 = vpop.f32.mrb[0].mxu0
  %v2604 = vadd.f32 0.0, %v2603
  %v2605 = vpop.f32.mrb[0].mxu0
  %v2606 = vpop.f32.mrb[0].mxu0
  %v2607 = vadd.f32 0.0, %v2606
  %v2608 = vpop.f32.mrb[0].mxu0
  %2609 = vmatprep.mubr.bf16.mxu0 %v2111
  %2610 = vmatmul.mubr.bf16.gmra.mrb[0].mxu0 %v2047
  %v2611 = vpop.f32.mrb[0].mxu0
  %v2612 = vadd.f32 0.0, %v2611
  %v2613 = vpop.f32.mrb[0].mxu0
  %v2614 = vpop.f32.mrb[0].mxu0
  %v2615 = vadd.f32 0.0, %v2614
  %v2616 = vpop.f32.mrb[0].mxu0
  %2617 = vmatprep.mubr.bf16.mxu0 %v2112
  %2618 = vmatmul.mubr.bf16.gmra.mrb[0].mxu0 %v2048
  %v2619 = vpop.f32.mrb[0].mxu0
  %v2620 = vadd.f32 0.0, %v2619
  %v2621 = vpop.f32.mrb[0].mxu0
  %v2622 = vpop.f32.mrb[0].mxu0
  %v2623 = vadd.f32 0.0, %v2622
  %v2624 = vpop.f32.mrb[0].mxu0
  %2625 = vmatprep.mubr.bf16.mxu0 %v2121
  %2626 = vmatmul.mubr.bf16.gmra.mrb[0].mxu0 %v2057
  %v2627 = vpop.f32.mrb[0].mxu0
  %v2628 = vadd.f32 0.0, %v2627
  %v2629 = vpop.f32.mrb[0].mxu0
  %v2630 = vpop.f32.mrb[0].mxu0
  %v2631 = vadd.f32 0.0, %v2630
  %v2632 = vpop.f32.mrb[0].mxu0
  %2633 = vmatprep.mubr.bf16.mxu0 %v2122
  %2634 = vmatmul.mubr.bf16.gmra.mrb[0].mxu0 %v2058
  %v2635 = vpop.f32.mrb[0].mxu0
  %v2636 = vadd.f32 0.0, %v2635
  %v2637 = vpop.f32.mrb[0].mxu0
  %v2638 = vpop.f32.mrb[0].mxu0
  %v2639 = vadd.f32 0.0, %v2638
  %v2640 = vpop.f32.mrb[0].mxu0
  %2641 = vmatprep.mubr.bf16.mxu0 %v2123
  %2642 = vmatmul.mubr.bf16.gmra.mrb[0].mxu0 %v2059
  %v2643 = vpop.f32.mrb[0].mxu0
  %v2644 = vadd.f32 0.0, %v2643
  %v2645 = vpop.f32.mrb[0].mxu0
  %v2646 = vpop.f32.mrb[0].mxu0
  %v2647 = vadd.f32 0.0, %v2646
  %v2648 = vpop.f32.mrb[0].mxu0
  %2649 = vmatprep.mubr.bf16.mxu0 %v2124
  %2650 = vmatmul.mubr.bf16.gmra.mrb[0].mxu0 %v2060
  %v2651 = vpop.f32.mrb[0].mxu0
  %v2652 = vadd.f32 0.0, %v2651
  %v2653 = vpop.f32.mrb[0].mxu0
  %v2654 = vpop.f32.mrb[0].mxu0
  %v2655 = vadd.f32 0.0, %v2654
  %v2656 = vpop.f32.mrb[0].mxu0
  %2657 = vmatprep.mubr.bf16.mxu0 %v2125
  %2658 = vmatmul.mubr.bf16.gmra.mrb[0].mxu0 %v2061
  %v2659 = vpop.f32.mrb[0].mxu0
  %v2660 = vadd.f32 0.0, %v2659
  %v2661 = vpop.f32.mrb[0].mxu0
  %v2662 = vpop.f32.mrb[0].mxu0
  %v2663 = vadd.f32 0.0, %v2662
  %v2664 = vpop.f32.mrb[0].mxu0
  %2665 = vmatprep.mubr.bf16.mxu0 %v2126
  %2666 = vmatmul.mubr.bf16.gmra.mrb[0].mxu0 %v2062
  %v2667 = vpop.f32.mrb[0].mxu0
  %v2668 = vadd.f32 0.0, %v2667
  %v2669 = vpop.f32.mrb[0].mxu0
  %v2670 = vpop.f32.mrb[0].mxu0
  %v2671 = vadd.f32 0.0, %v2670
  %v2672 = vpop.f32.mrb[0].mxu0
  %2673 = vmatprep.mubr.bf16.mxu0 %v2127
  %2674 = vmatmul.mubr.bf16.gmra.mrb[0].mxu0 %v2063
  %v2675 = vpop.f32.mrb[0].mxu0
  %v2676 = vadd.f32 0.0, %v2675
  %v2677 = vpop.f32.mrb[0].mxu0
  %v2678 = vpop.f32.mrb[0].mxu0
  %v2679 = vadd.f32 0.0, %v2678
  %v2680 = vpop.f32.mrb[0].mxu0
  %2681 = vmatprep.mubr.bf16.mxu0 %v2128
  %2682 = vmatmul.mubr.bf16.gmra.mrb[0].mxu0 %v2064
  %v2683 = vpop.f32.mrb[0].mxu0
  %v2684 = vadd.f32 0.0, %v2683
  %v2685 = vpop.f32.mrb[0].mxu0
  %v2686 = vpop.f32.mrb[0].mxu0
  %v2687 = vadd.f32 0.0, %v2686
  %v2688 = vpop.f32.mrb[0].mxu0
  %2689 = vmatprep.mubr.bf16.mxu0 %v2137
  %2690 = vmatmul.mubr.bf16.gmra.mrb[0].mxu0 %v2073
  %v2691 = vpop.f32.mrb[0].mxu0
  %v2692 = vadd.f32 0.0, %v2691
  %v2693 = vpop.f32.mrb[0].mxu0
  %v2694 = vpop.f32.mrb[0].mxu0
  %v2695 = vadd.f32 0.0, %v2694
  %v2696 = vpop.f32.mrb[0].mxu0
  %2697 = vmatprep.mubr.bf16.mxu0 %v2138
  %2698 = vmatmul.mubr.bf16.gmra.mrb[0].mxu0 %v2074
  %v2699 = vpop.f32.mrb[0].mxu0
  %v2700 = vadd.f32 0.0, %v2699
  %v2701 = vpop.f32.mrb[0].mxu0
  %v2702 = vpop.f32.mrb[0].mxu0
  %v2703 = vadd.f32 0.0, %v2702
  %v2704 = vpop.f32.mrb[0].mxu0
  %2705 = vmatprep.mubr.bf16.mxu0 %v2139
  %2706 = vmatmul.mubr.bf16.gmra.mrb[0].mxu0 %v2075
  %v2707 = vpop.f32.mrb[0].mxu0
  %v2708 = vadd.f32 0.0, %v2707
  %v2709 = vpop.f32.mrb[0].mxu0
  %v2710 = vpop.f32.mrb[0].mxu0
  %v2711 = vadd.f32 0.0, %v2710
  %v2712 = vpop.f32.mrb[0].mxu0
  %2713 = vmatprep.mubr.bf16.mxu0 %v2140
  %2714 = vmatmul.mubr.bf16.gmra.mrb[0].mxu0 %v2076
  %v2715 = vpop.f32.mrb[0].mxu0
  %v2716 = vadd.f32 0.0, %v2715
  %v2717 = vpop.f32.mrb[0].mxu0
  %v2718 = vpop.f32.mrb[0].mxu0
  %v2719 = vadd.f32 0.0, %v2718
  %v2720 = vpop.f32.mrb[0].mxu0
  %2721 = vmatprep.mubr.bf16.mxu0 %v2141
  %2722 = vmatmul.mubr.bf16.gmra.mrb[0].mxu0 %v2077
  %v2723 = vpop.f32.mrb[0].mxu0
  %v2724 = vadd.f32 0.0, %v2723
  %v2725 = vpop.f32.mrb[0].mxu0
  %v2726 = vpop.f32.mrb[0].mxu0
  %v2727 = vadd.f32 0.0, %v2726
  %v2728 = vpop.f32.mrb[0].mxu0
  %2729 = vmatprep.mubr.bf16.mxu0 %v2142
  %2730 = vmatmul.mubr.bf16.gmra.mrb[0].mxu0 %v2078
  %v2731 = vpop.f32.mrb[0].mxu0
  %v2732 = vadd.f32 0.0, %v2731
  %v2733 = vpop.f32.mrb[0].mxu0
  %v2734 = vpop.f32.mrb[0].mxu0
  %v2735 = vadd.f32 0.0, %v2734
  %v2736 = vpop.f32.mrb[0].mxu0
  %2737 = vmatprep.mubr.bf16.mxu0 %v2143
  %2738 = vmatmul.mubr.bf16.gmra.mrb[0].mxu0 %v2079
  %v2739 = vpop.f32.mrb[0].mxu0
  %v2740 = vadd.f32 0.0, %v2739
  %v2741 = vpop.f32.mrb[0].mxu0
  %v2742 = vpop.f32.mrb[0].mxu0
  %v2743 = vadd.f32 0.0, %v2742
  %v2744 = vpop.f32.mrb[0].mxu0
  %2745 = vmatprep.mubr.bf16.mxu0 %v2144
  %2746 = vmatmul.mubr.bf16.gmra.mrb[0].mxu0 %v2080
  %v2747 = vpop.f32.mrb[0].mxu0
  %v2748 = vadd.f32 0.0, %v2747
  %v2749 = vpop.f32.mrb[0].mxu0
  %v2750 = vpop.f32.mrb[0].mxu0
  %v2751 = vadd.f32 0.0, %v2750
  %v2752 = vpop.f32.mrb[0].mxu0
  %2753 = vdwg.mxu0
  %2754 = vmatprep.subr.bf16.mxu0 0
  %2755 = vmatpush1.bf16.msra.mxu0 %v2417
  %2756 = vmatprep.subr.bf16.mxu0 0
  %2757 = vmatpush1.bf16.msra.mxu0 %v2418
  %2758 = vmatprep.subr.bf16.mxu0 0
  %2759 = vmatpush1.bf16.msra.mxu0 %v2419
  %2760 = vmatprep.subr.bf16.mxu0 0
  %2761 = vmatpush1.bf16.msra.mxu0 %v2420
  %2762 = vmatprep.subr.bf16.mxu0 0
  %2763 = vmatpush1.bf16.msra.mxu0 %v2421
  %2764 = vmatprep.subr.bf16.mxu0 0
  %2765 = vmatpush1.bf16.msra.mxu0 %v2422
  %2766 = vmatprep.subr.bf16.mxu0 0
  %2767 = vmatpush1.bf16.msra.mxu0 %v2423
  %2768 = vmatprep.subr.bf16.mxu0 0
  %2769 = vmatpush1.bf16.msra.mxu0 %v2424
  %2770 = vmatprep.subr.bf16.mxu0 0
  %2771 = vmatpush1.bf16.msra.mxu0 %v2425
  %2772 = vmatprep.subr.bf16.mxu0 0
  %2773 = vmatpush1.bf16.msra.mxu0 %v2426
  %2774 = vmatprep.subr.bf16.mxu0 0
  %2775 = vmatpush1.bf16.msra.mxu0 %v2427
  %2776 = vmatprep.subr.bf16.mxu0 0
  %2777 = vmatpush1.bf16.msra.mxu0 %v2428
  %2778 = vmatprep.subr.bf16.mxu0 0
  %2779 = vmatpush1.bf16.msra.mxu0 %v2429
  %2780 = vmatprep.subr.bf16.mxu0 0
  %2781 = vmatpush1.bf16.msra.mxu0 %v2430
  %2782 = vmatprep.subr.bf16.mxu0 0
  %2783 = vmatpush1.bf16.msra.mxu0 %v2431
  %2784 = vmatprep.subr.bf16.mxu0 0
  %2785 = vmatpush1.bf16.msra.mxu0 %v2432
  %2786 = vmatprep.mubr.bf16.mxu0 %v2217
  %2787 = vmatmul.mubr.bf16.gmra.mrb[0].mxu0 %v2153
  %v2788 = vpop.f32.mrb[0].mxu0
  %v2789 = vadd.f32 %v2500, %v2788
  %v2790 = vpop.f32.mrb[0].mxu0
  %v2791 = vpop.f32.mrb[0].mxu0
  %v2792 = vadd.f32 %v2503, %v2791
  %v2793 = vpop.f32.mrb[0].mxu0
  %2794 = vmatprep.mubr.bf16.mxu0 %v2218
  %2795 = vmatmul.mubr.bf16.gmra.mrb[0].mxu0 %v2154
  %v2796 = vpop.f32.mrb[0].mxu0
  %v2797 = vadd.f32 %v2508, %v2796
  %v2798 = vpop.f32.mrb[0].mxu0
  %v2799 = vpop.f32.mrb[0].mxu0
  %v2800 = vadd.f32 %v2511, %v2799
  %v2801 = vpop.f32.mrb[0].mxu0
  %2802 = vmatprep.mubr.bf16.mxu0 %v2219
  %2803 = vmatmul.mubr.bf16.gmra.mrb[0].mxu0 %v2155
  %v2804 = vpop.f32.mrb[0].mxu0
  %v2805 = vadd.f32 %v2516, %v2804
  %v2806 = vpop.f32.mrb[0].mxu0
  %v2807 = vpop.f32.mrb[0].mxu0
  %v2808 = vadd.f32 %v2519, %v2807
  %v2809 = vpop.f32.mrb[0].mxu0
  %2810 = vmatprep.mubr.bf16.mxu0 %v2220
  %2811 = vmatmul.mubr.bf16.gmra.mrb[0].mxu0 %v2156
  %v2812 = vpop.f32.mrb[0].mxu0
  %v2813 = vadd.f32 %v2524, %v2812
  %v2814 = vpop.f32.mrb[0].mxu0
  %v2815 = vpop.f32.mrb[0].mxu0
  %v2816 = vadd.f32 %v2527, %v2815
  %v2817 = vpop.f32.mrb[0].mxu0
  %2818 = vmatprep.mubr.bf16.mxu0 %v2221
  %2819 = vmatmul.mubr.bf16.gmra.mrb[0].mxu0 %v2157
  %v2820 = vpop.f32.mrb[0].mxu0
  %v2821 = vadd.f32 %v2532, %v2820
  %v2822 = vpop.f32.mrb[0].mxu0
  %v2823 = vpop.f32.mrb[0].mxu0
  %v2824 = vadd.f32 %v2535, %v2823
  %v2825 = vpop.f32.mrb[0].mxu0
  %2826 = vmatprep.mubr.bf16.mxu0 %v2222
  %2827 = vmatmul.mubr.bf16.gmra.mrb[0].mxu0 %v2158
  %v2828 = vpop.f32.mrb[0].mxu0
  %v2829 = vadd.f32 %v2540, %v2828
  %v2830 = vpop.f32.mrb[0].mxu0
  %v2831 = vpop.f32.mrb[0].mxu0
  %v2832 = vadd.f32 %v2543, %v2831
  %v2833 = vpop.f32.mrb[0].mxu0
  %2834 = vmatprep.mubr.bf16.mxu0 %v2223
  %2835 = vmatmul.mubr.bf16.gmra.mrb[0].mxu0 %v2159
  %v2836 = vpop.f32.mrb[0].mxu0
  %v2837 = vadd.f32 %v2548, %v2836
  %v2838 = vpop.f32.mrb[0].mxu0
  %v2839 = vpop.f32.mrb[0].mxu0
  %v2840 = vadd.f32 %v2551, %v2839
  %v2841 = vpop.f32.mrb[0].mxu0
  %2842 = vmatprep.mubr.bf16.mxu0 %v2224
  %2843 = vmatmul.mubr.bf16.gmra.mrb[0].mxu0 %v2160
  %v2844 = vpop.f32.mrb[0].mxu0
  %v2845 = vadd.f32 %v2556, %v2844
  %v2846 = vpop.f32.mrb[0].mxu0
  %v2847 = vpop.f32.mrb[0].mxu0
  %v2848 = vadd.f32 %v2559, %v2847
  %v2849 = vpop.f32.mrb[0].mxu0
  %2850 = vmatprep.mubr.bf16.mxu0 %v2233
  %2851 = vmatmul.mubr.bf16.gmra.mrb[0].mxu0 %v2169
  %v2852 = vpop.f32.mrb[0].mxu0
  %v2853 = vadd.f32 %v2564, %v2852
  %v2854 = vpop.f32.mrb[0].mxu0
  %v2855 = vpop.f32.mrb[0].mxu0
  %v2856 = vadd.f32 %v2567, %v2855
  %v2857 = vpop.f32.mrb[0].mxu0
  %2858 = vmatprep.mubr.bf16.mxu0 %v2234
  %2859 = vmatmul.mubr.bf16.gmra.mrb[0].mxu0 %v2170
  %v2860 = vpop.f32.mrb[0].mxu0
  %v2861 = vadd.f32 %v2572, %v2860
  %v2862 = vpop.f32.mrb[0].mxu0
  %v2863 = vpop.f32.mrb[0].mxu0
  %v2864 = vadd.f32 %v2575, %v2863
  %v2865 = vpop.f32.mrb[0].mxu0
  %2866 = vmatprep.mubr.bf16.mxu0 %v2235
  %2867 = vmatmul.mubr.bf16.gmra.mrb[0].mxu0 %v2171
  %v2868 = vpop.f32.mrb[0].mxu0
  %v2869 = vadd.f32 %v2580, %v2868
  %v2870 = vpop.f32.mrb[0].mxu0
  %v2871 = vpop.f32.mrb[0].mxu0
  %v2872 = vadd.f32 %v2583, %v2871
  %v2873 = vpop.f32.mrb[0].mxu0
  %2874 = vmatprep.mubr.bf16.mxu0 %v2236
  %2875 = vmatmul.mubr.bf16.gmra.mrb[0].mxu0 %v2172
  %v2876 = vpop.f32.mrb[0].mxu0
  %v2877 = vadd.f32 %v2588, %v2876
  %v2878 = vpop.f32.mrb[0].mxu0
  %v2879 = vpop.f32.mrb[0].mxu0
  %v2880 = vadd.f32 %v2591, %v2879
  %v2881 = vpop.f32.mrb[0].mxu0
  %2882 = vmatprep.mubr.bf16.mxu0 %v2237
  %2883 = vmatmul.mubr.bf16.gmra.mrb[0].mxu0 %v2173
  %v2884 = vpop.f32.mrb[0].mxu0
  %v2885 = vadd.f32 %v2596, %v2884
  %v2886 = vpop.f32.mrb[0].mxu0
  %v2887 = vpop.f32.mrb[0].mxu0
  %v2888 = vadd.f32 %v2599, %v2887
  %v2889 = vpop.f32.mrb[0].mxu0
  %2890 = vmatprep.mubr.bf16.mxu0 %v2238
  %2891 = vmatmul.mubr.bf16.gmra.mrb[0].mxu0 %v2174
  %v2892 = vpop.f32.mrb[0].mxu0
  %v2893 = vadd.f32 %v2604, %v2892
  %v2894 = vpop.f32.mrb[0].mxu0
  %v2895 = vpop.f32.mrb[0].mxu0
  %v2896 = vadd.f32 %v2607, %v2895
  %v2897 = vpop.f32.mrb[0].mxu0
  %2898 = vmatprep.mubr.bf16.mxu0 %v2239
  %2899 = vmatmul.mubr.bf16.gmra.mrb[0].mxu0 %v2175
  %v2900 = vpop.f32.mrb[0].mxu0
  %v2901 = vadd.f32 %v2612, %v2900
  %v2902 = vpop.f32.mrb[0].mxu0
  %v2903 = vpop.f32.mrb[0].mxu0
  %v2904 = vadd.f32 %v2615, %v2903
  %v2905 = vpop.f32.mrb[0].mxu0
  %2906 = vmatprep.mubr.bf16.mxu0 %v2240
  %2907 = vmatmul.mubr.bf16.gmra.mrb[0].mxu0 %v2176
  %v2908 = vpop.f32.mrb[0].mxu0
  %v2909 = vadd.f32 %v2620, %v2908
  %v2910 = vpop.f32.mrb[0].mxu0
  %v2911 = vpop.f32.mrb[0].mxu0
  %v2912 = vadd.f32 %v2623, %v2911
  %v2913 = vpop.f32.mrb[0].mxu0
  %2914 = vmatprep.mubr.bf16.mxu0 %v2249
  %2915 = vmatmul.mubr.bf16.gmra.mrb[0].mxu0 %v2185
  %v2916 = vpop.f32.mrb[0].mxu0
  %v2917 = vadd.f32 %v2628, %v2916
  %v2918 = vpop.f32.mrb[0].mxu0
  %v2919 = vpop.f32.mrb[0].mxu0
  %v2920 = vadd.f32 %v2631, %v2919
  %v2921 = vpop.f32.mrb[0].mxu0
  %2922 = vmatprep.mubr.bf16.mxu0 %v2250
  %2923 = vmatmul.mubr.bf16.gmra.mrb[0].mxu0 %v2186
  %v2924 = vpop.f32.mrb[0].mxu0
  %v2925 = vadd.f32 %v2636, %v2924
  %v2926 = vpop.f32.mrb[0].mxu0
  %v2927 = vpop.f32.mrb[0].mxu0
  %v2928 = vadd.f32 %v2639, %v2927
  %v2929 = vpop.f32.mrb[0].mxu0
  %2930 = vmatprep.mubr.bf16.mxu0 %v2251
  %2931 = vmatmul.mubr.bf16.gmra.mrb[0].mxu0 %v2187
  %v2932 = vpop.f32.mrb[0].mxu0
  %v2933 = vadd.f32 %v2644, %v2932
  %v2934 = vpop.f32.mrb[0].mxu0
  %v2935 = vpop.f32.mrb[0].mxu0
  %v2936 = vadd.f32 %v2647, %v2935
  %v2937 = vpop.f32.mrb[0].mxu0
  %2938 = vmatprep.mubr.bf16.mxu0 %v2252
  %2939 = vmatmul.mubr.bf16.gmra.mrb[0].mxu0 %v2188
  %v2940 = vpop.f32.mrb[0].mxu0
  %v2941 = vadd.f32 %v2652, %v2940
  %v2942 = vpop.f32.mrb[0].mxu0
  %v2943 = vpop.f32.mrb[0].mxu0
  %v2944 = vadd.f32 %v2655, %v2943
  %v2945 = vpop.f32.mrb[0].mxu0
  %2946 = vmatprep.mubr.bf16.mxu0 %v2253
  %2947 = vmatmul.mubr.bf16.gmra.mrb[0].mxu0 %v2189
  %v2948 = vpop.f32.mrb[0].mxu0
  %v2949 = vadd.f32 %v2660, %v2948
  %v2950 = vpop.f32.mrb[0].mxu0
  %v2951 = vpop.f32.mrb[0].mxu0
  %v2952 = vadd.f32 %v2663, %v2951
  %v2953 = vpop.f32.mrb[0].mxu0
  %2954 = vmatprep.mubr.bf16.mxu0 %v2254
  %2955 = vmatmul.mubr.bf16.gmra.mrb[0].mxu0 %v2190
  %v2956 = vpop.f32.mrb[0].mxu0
  %v2957 = vadd.f32 %v2668, %v2956
  %v2958 = vpop.f32.mrb[0].mxu0
  %v2959 = vpop.f32.mrb[0].mxu0
  %v2960 = vadd.f32 %v2671, %v2959
  %v2961 = vpop.f32.mrb[0].mxu0
  %2962 = vmatprep.mubr.bf16.mxu0 %v2255
  %2963 = vmatmul.mubr.bf16.gmra.mrb[0].mxu0 %v2191
  %v2964 = vpop.f32.mrb[0].mxu0
  %v2965 = vadd.f32 %v2676, %v2964
  %v2966 = vpop.f32.mrb[0].mxu0
  %v2967 = vpop.f32.mrb[0].mxu0
  %v2968 = vadd.f32 %v2679, %v2967
  %v2969 = vpop.f32.mrb[0].mxu0
  %2970 = vmatprep.mubr.bf16.mxu0 %v2256
  %2971 = vmatmul.mubr.bf16.gmra.mrb[0].mxu0 %v2192
  %v2972 = vpop.f32.mrb[0].mxu0
  %v2973 = vadd.f32 %v2684, %v2972
  %v2974 = vpop.f32.mrb[0].mxu0
  %v2975 = vpop.f32.mrb[0].mxu0
  %v2976 = vadd.f32 %v2687, %v2975
  %v2977 = vpop.f32.mrb[0].mxu0
  %2978 = vmatprep.mubr.bf16.mxu0 %v2265
  %2979 = vmatmul.mubr.bf16.gmra.mrb[0].mxu0 %v2201
  %v2980 = vpop.f32.mrb[0].mxu0
  %v2981 = vadd.f32 %v2692, %v2980
  %v2982 = vpop.f32.mrb[0].mxu0
  %v2983 = vpop.f32.mrb[0].mxu0
  %v2984 = vadd.f32 %v2695, %v2983
  %v2985 = vpop.f32.mrb[0].mxu0
  %2986 = vmatprep.mubr.bf16.mxu0 %v2266
  %2987 = vmatmul.mubr.bf16.gmra.mrb[0].mxu0 %v2202
  %v2988 = vpop.f32.mrb[0].mxu0
  %v2989 = vadd.f32 %v2700, %v2988
  %v2990 = vpop.f32.mrb[0].mxu0
  %v2991 = vpop.f32.mrb[0].mxu0
  %v2992 = vadd.f32 %v2703, %v2991
  %v2993 = vpop.f32.mrb[0].mxu0
  %2994 = vmatprep.mubr.bf16.mxu0 %v2267
  %2995 = vmatmul.mubr.bf16.gmra.mrb[0].mxu0 %v2203
  %v2996 = vpop.f32.mrb[0].mxu0
  %v2997 = vadd.f32 %v2708, %v2996
  %v2998 = vpop.f32.mrb[0].mxu0
  %v2999 = vpop.f32.mrb[0].mxu0
  %v3000 = vadd.f32 %v2711, %v2999
  %v3001 = vpop.f32.mrb[0].mxu0
  %3002 = vmatprep.mubr.bf16.mxu0 %v2268
  %3003 = vmatmul.mubr.bf16.gmra.mrb[0].mxu0 %v2204
  %v3004 = vpop.f32.mrb[0].mxu0
  %v3005 = vadd.f32 %v2716, %v3004
  %v3006 = vpop.f32.mrb[0].mxu0
  %v3007 = vpop.f32.mrb[0].mxu0
  %v3008 = vadd.f32 %v2719, %v3007
  %v3009 = vpop.f32.mrb[0].mxu0
  %3010 = vmatprep.mubr.bf16.mxu0 %v2269
  %3011 = vmatmul.mubr.bf16.gmra.mrb[0].mxu0 %v2205
  %v3012 = vpop.f32.mrb[0].mxu0
  %v3013 = vadd.f32 %v2724, %v3012
  %v3014 = vpop.f32.mrb[0].mxu0
  %v3015 = vpop.f32.mrb[0].mxu0
  %v3016 = vadd.f32 %v2727, %v3015
  %v3017 = vpop.f32.mrb[0].mxu0
  %3018 = vmatprep.mubr.bf16.mxu0 %v2270
  %3019 = vmatmul.mubr.bf16.gmra.mrb[0].mxu0 %v2206
  %v3020 = vpop.f32.mrb[0].mxu0
  %v3021 = vadd.f32 %v2732, %v3020
  %v3022 = vpop.f32.mrb[0].mxu0
  %v3023 = vpop.f32.mrb[0].mxu0
  %v3024 = vadd.f32 %v2735, %v3023
  %v3025 = vpop.f32.mrb[0].mxu0
  %3026 = vmatprep.mubr.bf16.mxu0 %v2271
  %3027 = vmatmul.mubr.bf16.gmra.mrb[0].mxu0 %v2207
  %v3028 = vpop.f32.mrb[0].mxu0
  %v3029 = vadd.f32 %v2740, %v3028
  %v3030 = vpop.f32.mrb[0].mxu0
  %v3031 = vpop.f32.mrb[0].mxu0
  %v3032 = vadd.f32 %v2743, %v3031
  %v3033 = vpop.f32.mrb[0].mxu0
  %3034 = vmatprep.mubr.bf16.mxu0 %v2272
  %3035 = vmatmul.mubr.bf16.gmra.mrb[0].mxu0 %v2208
  %v3036 = vpop.f32.mrb[0].mxu0
  %v3037 = vadd.f32 %v2748, %v3036
  %v3038 = vpop.f32.mrb[0].mxu0
  %v3039 = vpop.f32.mrb[0].mxu0
  %v3040 = vadd.f32 %v2751, %v3039
  %v3041 = vpop.f32.mrb[0].mxu0
  %3042 = vdwg.mxu0
  %s3043 = scalar_lea.vmem %s4, %s282
  %v3044 = vld [vmem:[%s3043] sm:$0xff]
  %v3045 = vld [vmem:[%s3043 + $0x8] sm:$0xff]
  %v3046 = vld [vmem:[%s3043 + $0x10] sm:$0xff]
  %v3047 = vld [vmem:[%s3043 + $0x18] sm:$0xff]
  %v3048 = vld [vmem:[%s3043 + $0x20] sm:$0xff]
  %v3049 = vld [vmem:[%s3043 + $0x28] sm:$0xff]
  %v3050 = vld [vmem:[%s3043 + $0x30] sm:$0xff]
  %v3051 = vld [vmem:[%s3043 + $0x38] sm:$0xff]
  %v3052 = vld [vmem:[%s3043 + $0x40] sm:$0xff]
  %v3053 = vld [vmem:[%s3043 + $0x48] sm:$0xff]
  %v3054 = vld [vmem:[%s3043 + $0x50] sm:$0xff]
  %v3055 = vld [vmem:[%s3043 + $0x58] sm:$0xff]
  %v3056 = vld [vmem:[%s3043 + $0x60] sm:$0xff]
  %v3057 = vld [vmem:[%s3043 + $0x68] sm:$0xff]
  %v3058 = vld [vmem:[%s3043 + $0x70] sm:$0xff]
  %v3059 = vld [vmem:[%s3043 + $0x78] sm:$0xff]
  %v3060 = vld [vmem:[%s3043 + $0x80] sm:$0xff]
  %v3061 = vld [vmem:[%s3043 + $0x88] sm:$0xff]
  %v3062 = vld [vmem:[%s3043 + $0x90] sm:$0xff]
  %v3063 = vld [vmem:[%s3043 + $0x98] sm:$0xff]
  %v3064 = vld [vmem:[%s3043 + $0xa0] sm:$0xff]
  %v3065 = vld [vmem:[%s3043 + $0xa8] sm:$0xff]
  %v3066 = vld [vmem:[%s3043 + $0xb0] sm:$0xff]
  %v3067 = vld [vmem:[%s3043 + $0xb8] sm:$0xff]
  %v3068 = vld [vmem:[%s3043 + $0xc0] sm:$0xff]
  %v3069 = vld [vmem:[%s3043 + $0xc8] sm:$0xff]
  %v3070 = vld [vmem:[%s3043 + $0xd0] sm:$0xff]
  %v3071 = vld [vmem:[%s3043 + $0xd8] sm:$0xff]
  %v3072 = vld [vmem:[%s3043 + $0xe0] sm:$0xff]
  %v3073 = vld [vmem:[%s3043 + $0xe8] sm:$0xff]
  %v3074 = vld [vmem:[%s3043 + $0xf0] sm:$0xff]
  %v3075 = vld [vmem:[%s3043 + $0xf8] sm:$0xff]
  %v3076 = vld [vmem:[%s3043 + $0x100] sm:$0xff]
  %v3077 = vld [vmem:[%s3043 + $0x108] sm:$0xff]
  %v3078 = vld [vmem:[%s3043 + $0x110] sm:$0xff]
  %v3079 = vld [vmem:[%s3043 + $0x118] sm:$0xff]
  %v3080 = vld [vmem:[%s3043 + $0x120] sm:$0xff]
  %v3081 = vld [vmem:[%s3043 + $0x128] sm:$0xff]
  %v3082 = vld [vmem:[%s3043 + $0x130] sm:$0xff]
  %v3083 = vld [vmem:[%s3043 + $0x138] sm:$0xff]
  %v3084 = vld [vmem:[%s3043 + $0x140] sm:$0xff]
  %v3085 = vld [vmem:[%s3043 + $0x148] sm:$0xff]
  %v3086 = vld [vmem:[%s3043 + $0x150] sm:$0xff]
  %v3087 = vld [vmem:[%s3043 + $0x158] sm:$0xff]
  %v3088 = vld [vmem:[%s3043 + $0x160] sm:$0xff]
  %v3089 = vld [vmem:[%s3043 + $0x168] sm:$0xff]
  %v3090 = vld [vmem:[%s3043 + $0x170] sm:$0xff]
  %v3091 = vld [vmem:[%s3043 + $0x178] sm:$0xff]
  %v3092 = vld [vmem:[%s3043 + $0x180] sm:$0xff]
  %v3093 = vld [vmem:[%s3043 + $0x188] sm:$0xff]
  %v3094 = vld [vmem:[%s3043 + $0x190] sm:$0xff]
  %v3095 = vld [vmem:[%s3043 + $0x198] sm:$0xff]
  %v3096 = vld [vmem:[%s3043 + $0x1a0] sm:$0xff]
  %v3097 = vld [vmem:[%s3043 + $0x1a8] sm:$0xff]
  %v3098 = vld [vmem:[%s3043 + $0x1b0] sm:$0xff]
  %v3099 = vld [vmem:[%s3043 + $0x1b8] sm:$0xff]
  %v3100 = vld [vmem:[%s3043 + $0x1c0] sm:$0xff]
  %v3101 = vld [vmem:[%s3043 + $0x1c8] sm:$0xff]
  %v3102 = vld [vmem:[%s3043 + $0x1d0] sm:$0xff]
  %v3103 = vld [vmem:[%s3043 + $0x1d8] sm:$0xff]
  %v3104 = vld [vmem:[%s3043 + $0x1e0] sm:$0xff]
  %v3105 = vld [vmem:[%s3043 + $0x1e8] sm:$0xff]
  %v3106 = vld [vmem:[%s3043 + $0x1f0] sm:$0xff]
  %v3107 = vld [vmem:[%s3043 + $0x1f8] sm:$0xff]
  %v3108 = vadd.f32 %v3044, %v2789
  %v3109 = vadd.f32 %v3045, %v2792
  %v3110 = vadd.f32 %v3046, %v2797
  %v3111 = vadd.f32 %v3047, %v2800
  %v3112 = vadd.f32 %v3048, %v2805
  %v3113 = vadd.f32 %v3049, %v2808
  %v3114 = vadd.f32 %v3050, %v2813
  %v3115 = vadd.f32 %v3051, %v2816
  %v3116 = vadd.f32 %v3052, %v2821
  %v3117 = vadd.f32 %v3053, %v2824
  %v3118 = vadd.f32 %v3054, %v2829
  %v3119 = vadd.f32 %v3055, %v2832
  %v3120 = vadd.f32 %v3056, %v2837
  %v3121 = vadd.f32 %v3057, %v2840
  %v3122 = vadd.f32 %v3058, %v2845
  %v3123 = vadd.f32 %v3059, %v2848
  %v3124 = vadd.f32 %v3060, %v2853
  %v3125 = vadd.f32 %v3061, %v2856
  %v3126 = vadd.f32 %v3062, %v2861
  %v3127 = vadd.f32 %v3063, %v2864
  %v3128 = vadd.f32 %v3064, %v2869
  %v3129 = vadd.f32 %v3065, %v2872
  %v3130 = vadd.f32 %v3066, %v2877
  %v3131 = vadd.f32 %v3067, %v2880
  %v3132 = vadd.f32 %v3068, %v2885
  %v3133 = vadd.f32 %v3069, %v2888
  %v3134 = vadd.f32 %v3070, %v2893
  %v3135 = vadd.f32 %v3071, %v2896
  %v3136 = vadd.f32 %v3072, %v2901
  %v3137 = vadd.f32 %v3073, %v2904
  %v3138 = vadd.f32 %v3074, %v2909
  %v3139 = vadd.f32 %v3075, %v2912
  %v3140 = vadd.f32 %v3076, %v2917
  %v3141 = vadd.f32 %v3077, %v2920
  %v3142 = vadd.f32 %v3078, %v2925
  %v3143 = vadd.f32 %v3079, %v2928
  %v3144 = vadd.f32 %v3080, %v2933
  %v3145 = vadd.f32 %v3081, %v2936
  %v3146 = vadd.f32 %v3082, %v2941
  %v3147 = vadd.f32 %v3083, %v2944
  %v3148 = vadd.f32 %v3084, %v2949
  %v3149 = vadd.f32 %v3085, %v2952
  %v3150 = vadd.f32 %v3086, %v2957
  %v3151 = vadd.f32 %v3087, %v2960
  %v3152 = vadd.f32 %v3088, %v2965
  %v3153 = vadd.f32 %v3089, %v2968
  %v3154 = vadd.f32 %v3090, %v2973
  %v3155 = vadd.f32 %v3091, %v2976
  %v3156 = vadd.f32 %v3092, %v2981
  %v3157 = vadd.f32 %v3093, %v2984
  %v3158 = vadd.f32 %v3094, %v2989
  %v3159 = vadd.f32 %v3095, %v2992
  %v3160 = vadd.f32 %v3096, %v2997
  %v3161 = vadd.f32 %v3097, %v3000
  %v3162 = vadd.f32 %v3098, %v3005
  %v3163 = vadd.f32 %v3099, %v3008
  %v3164 = vadd.f32 %v3100, %v3013
  %v3165 = vadd.f32 %v3101, %v3016
  %v3166 = vadd.f32 %v3102, %v3021
  %v3167 = vadd.f32 %v3103, %v3024
  %v3168 = vadd.f32 %v3104, %v3029
  %v3169 = vadd.f32 %v3105, %v3032
  %v3170 = vadd.f32 %v3106, %v3037
  %v3171 = vadd.f32 %v3107, %v3040
  %3172 = vst [vmem:[%s3043] sm:$0xff] %v3108
  %3173 = vst [vmem:[%s3043 + $0x8] sm:$0xff] %v3109
  %3174 = vst [vmem:[%s3043 + $0x10] sm:$0xff] %v3110
  %3175 = vst [vmem:[%s3043 + $0x18] sm:$0xff] %v3111
  %3176 = vst [vmem:[%s3043 + $0x20] sm:$0xff] %v3112
  %3177 = vst [vmem:[%s3043 + $0x28] sm:$0xff] %v3113
  %3178 = vst [vmem:[%s3043 + $0x30] sm:$0xff] %v3114
  %3179 = vst [vmem:[%s3043 + $0x38] sm:$0xff] %v3115
  %3180 = vst [vmem:[%s3043 + $0x40] sm:$0xff] %v3116
  %3181 = vst [vmem:[%s3043 + $0x48] sm:$0xff] %v3117
  %3182 = vst [vmem:[%s3043 + $0x50] sm:$0xff] %v3118
  %3183 = vst [vmem:[%s3043 + $0x58] sm:$0xff] %v3119
  %3184 = vst [vmem:[%s3043 + $0x60] sm:$0xff] %v3120
  %3185 = vst [vmem:[%s3043 + $0x68] sm:$0xff] %v3121
  %3186 = vst [vmem:[%s3043 + $0x70] sm:$0xff] %v3122
  %3187 = vst [vmem:[%s3043 + $0x78] sm:$0xff] %v3123
  %3188 = vst [vmem:[%s3043 + $0x80] sm:$0xff] %v3124
  %3189 = vst [vmem:[%s3043 + $0x88] sm:$0xff] %v3125
  %3190 = vst [vmem:[%s3043 + $0x90] sm:$0xff] %v3126
  %3191 = vst [vmem:[%s3043 + $0x98] sm:$0xff] %v3127
  %3192 = vst [vmem:[%s3043 + $0xa0] sm:$0xff] %v3128
  %3193 = vst [vmem:[%s3043 + $0xa8] sm:$0xff] %v3129
  %3194 = vst [vmem:[%s3043 + $0xb0] sm:$0xff] %v3130
  %3195 = vst [vmem:[%s3043 + $0xb8] sm:$0xff] %v3131
  %3196 = vst [vmem:[%s3043 + $0xc0] sm:$0xff] %v3132
  %3197 = vst [vmem:[%s3043 + $0xc8] sm:$0xff] %v3133
  %3198 = vst [vmem:[%s3043 + $0xd0] sm:$0xff] %v3134
  %3199 = vst [vmem:[%s3043 + $0xd8] sm:$0xff] %v3135
  %3200 = vst [vmem:[%s3043 + $0xe0] sm:$0xff] %v3136
  %3201 = vst [vmem:[%s3043 + $0xe8] sm:$0xff] %v3137
  %3202 = vst [vmem:[%s3043 + $0xf0] sm:$0xff] %v3138
  %3203 = vst [vmem:[%s3043 + $0xf8] sm:$0xff] %v3139
  %3204 = vst [vmem:[%s3043 + $0x100] sm:$0xff] %v3140
  %3205 = vst [vmem:[%s3043 + $0x108] sm:$0xff] %v3141
  %3206 = vst [vmem:[%s3043 + $0x110] sm:$0xff] %v3142
  %3207 = vst [vmem:[%s3043 + $0x118] sm:$0xff] %v3143
  %3208 = vst [vmem:[%s3043 + $0x120] sm:$0xff] %v3144
  %3209 = vst [vmem:[%s3043 + $0x128] sm:$0xff] %v3145
  %3210 = vst [vmem:[%s3043 + $0x130] sm:$0xff] %v3146
  %3211 = vst [vmem:[%s3043 + $0x138] sm:$0xff] %v3147
  %3212 = vst [vmem:[%s3043 + $0x140] sm:$0xff] %v3148
  %3213 = vst [vmem:[%s3043 + $0x148] sm:$0xff] %v3149
  %3214 = vst [vmem:[%s3043 + $0x150] sm:$0xff] %v3150
  %3215 = vst [vmem:[%s3043 + $0x158] sm:$0xff] %v3151
  %3216 = vst [vmem:[%s3043 + $0x160] sm:$0xff] %v3152
  %3217 = vst [vmem:[%s3043 + $0x168] sm:$0xff] %v3153
  %3218 = vst [vmem:[%s3043 + $0x170] sm:$0xff] %v3154
  %3219 = vst [vmem:[%s3043 + $0x178] sm:$0xff] %v3155
  %3220 = vst [vmem:[%s3043 + $0x180] sm:$0xff] %v3156
  %3221 = vst [vmem:[%s3043 + $0x188] sm:$0xff] %v3157
  %3222 = vst [vmem:[%s3043 + $0x190] sm:$0xff] %v3158
  %3223 = vst [vmem:[%s3043 + $0x198] sm:$0xff] %v3159
  %3224 = vst [vmem:[%s3043 + $0x1a0] sm:$0xff] %v3160
  %3225 = vst [vmem:[%s3043 + $0x1a8] sm:$0xff] %v3161
  %3226 = vst [vmem:[%s3043 + $0x1b0] sm:$0xff] %v3162
  %3227 = vst [vmem:[%s3043 + $0x1b8] sm:$0xff] %v3163
  %3228 = vst [vmem:[%s3043 + $0x1c0] sm:$0xff] %v3164
  %3229 = vst [vmem:[%s3043 + $0x1c8] sm:$0xff] %v3165
  %3230 = vst [vmem:[%s3043 + $0x1d0] sm:$0xff] %v3166
  %3231 = vst [vmem:[%s3043 + $0x1d8] sm:$0xff] %v3167
  %3232 = vst [vmem:[%s3043 + $0x1e0] sm:$0xff] %v3168
  %3233 = vst [vmem:[%s3043 + $0x1e8] sm:$0xff] %v3169
  %3234 = vst [vmem:[%s3043 + $0x1f0] sm:$0xff] %v3170
  %3235 = vst [vmem:[%s3043 + $0x1f8] sm:$0xff] %v3171
  // Predicated region
  $region22: #{shadow_model_forward.5} parent=0 // pred_check
    _
  $region23: #{shadow_model_forward.5} parent=0 // pred_check_branch
    %3237 = sbr.rel (0) target = $region25
  $region24: #{shadow_model_forward.5} parent=0 // pred_region
    _
  $region25: #{shadow_model_forward.5} parent=0 // pred_fallthru
    _
  // Predicated region
  $region26: #{shadow_model_forward.5} parent=0 // pred_check
    _
  $region27: #{shadow_model_forward.5} parent=0 // pred_check_branch
    %3239 = sbr.rel (0) target = $region29
  $region28: #{shadow_model_forward.5} parent=0 // pred_region
    _
  $region29: #{shadow_model_forward.5} parent=0 // pred_fallthru
    _
  // Predicated region
  $region30: #{shadow_model_forward.5} parent=0 // pred_check
    _
  $region31: #{shadow_model_forward.5} parent=0 // pred_check_branch
    %3241 = sbr.rel (0) target = $region33
  $region32: #{shadow_model_forward.5} parent=0 // pred_region
    _
  $region33: #{shadow_model_forward.5} parent=0 // pred_fallthru
    _
  // Predicated region
  $region34: #{shadow_model_forward.5} parent=0 // pred_check
    _
  $region35: #{shadow_model_forward.5} parent=0 // pred_check_branch
    %3243 = sbr.rel (0) target = $region37
  $region36: #{shadow_model_forward.5} parent=0 // pred_region
    _
  $region37: #{shadow_model_forward.5} parent=0 // pred_fallthru
    _

// kernel: shadow_model_forward.3
$region0: #{shadow_model_forward.3}
  #allocation0 [shape = 'u32[]', space=smem, size = 0x4, offset = 0x4, fixed_abs, tag = 'smem constant byte address 0x4 - core index']
  #allocation1 [shape = 'u32[144,128]{1,0:T(1,128)}', space=vmem, size = 0x12000, scoped, tag = 'internal scratch']
  #allocation2 [shape = 'bf16[512,128]{1,0:T(16,128)(2,1)}', space=vmem, size = 0x20000, scoped, tag = 'scratch operand']
  %s0 = inlined_call_operand.vmem [shape: bf16[512,512], index: 0, kind: input, shape index: {}]
  %s1 = inlined_call_operand.vmem [shape: f32[512,128], index: 1, kind: input, shape index: {}]
  %s2 = inlined_call_operand.vmem [shape: f32[512,128], index: 2, kind: output, shape index: {}]
  %s3 = sld [smem:[#allocation0]]
  $region18: #{shadow_model_forward.3} parent=0
    _
  %s5 = ssub.s32 1, %s3
  %s6 = scalar_select 0, %s5, %s3
  // Predicated region
  $region2: #{shadow_model_forward.3} parent=0 // pred_check
    _
  $region3: #{shadow_model_forward.3} parent=0 // pred_check_branch
    %8 = sbr.rel (0) target = $region5
  $region4: #{shadow_model_forward.3} parent=0 // pred_region
    _
  $region5: #{shadow_model_forward.3} parent=0 // pred_fallthru
    _
  // Predicated region
  $region6: #{shadow_model_forward.3} parent=0 // pred_check
    _
  $region7: #{shadow_model_forward.3} parent=0 // pred_check_branch
    %10 = sbr.rel (0) target = $region9
  $region8: #{shadow_model_forward.3} parent=0 // pred_region
    _
  $region9: #{shadow_model_forward.3} parent=0 // pred_fallthru
    _
  %v12 = vld [vmem:[%s1] sm:$0xff]
  %v13 = vld [vmem:[%s1 + $0x8] sm:$0xff]
  %v14 = vld [vmem:[%s1 + $0x10] sm:$0xff]
  %v15 = vld [vmem:[%s1 + $0x18] sm:$0xff]
  %v16 = vld [vmem:[%s1 + $0x20] sm:$0xff]
  %v17 = vld [vmem:[%s1 + $0x28] sm:$0xff]
  %v18 = vld [vmem:[%s1 + $0x30] sm:$0xff]
  %v19 = vld [vmem:[%s1 + $0x38] sm:$0xff]
  %v20 = vld [vmem:[%s1 + $0x40] sm:$0xff]
  %v21 = vld [vmem:[%s1 + $0x48] sm:$0xff]
  %v22 = vld [vmem:[%s1 + $0x50] sm:$0xff]
  %v23 = vld [vmem:[%s1 + $0x58] sm:$0xff]
  %v24 = vld [vmem:[%s1 + $0x60] sm:$0xff]
  %v25 = vld [vmem:[%s1 + $0x68] sm:$0xff]
  %v26 = vld [vmem:[%s1 + $0x70] sm:$0xff]
  %v27 = vld [vmem:[%s1 + $0x78] sm:$0xff]
  %v28 = vld [vmem:[%s1 + $0x80] sm:$0xff]
  %v29 = vld [vmem:[%s1 + $0x88] sm:$0xff]
  %v30 = vld [vmem:[%s1 + $0x90] sm:$0xff]
  %v31 = vld [vmem:[%s1 + $0x98] sm:$0xff]
  %v32 = vld [vmem:[%s1 + $0xa0] sm:$0xff]
  %v33 = vld [vmem:[%s1 + $0xa8] sm:$0xff]
  %v34 = vld [vmem:[%s1 + $0xb0] sm:$0xff]
  %v35 = vld [vmem:[%s1 + $0xb8] sm:$0xff]
  %v36 = vld [vmem:[%s1 + $0xc0] sm:$0xff]
  %v37 = vld [vmem:[%s1 + $0xc8] sm:$0xff]
  %v38 = vld [vmem:[%s1 + $0xd0] sm:$0xff]
  %v39 = vld [vmem:[%s1 + $0xd8] sm:$0xff]
  %v40 = vld [vmem:[%s1 + $0xe0] sm:$0xff]
  %v41 = vld [vmem:[%s1 + $0xe8] sm:$0xff]
  %v42 = vld [vmem:[%s1 + $0xf0] sm:$0xff]
  %v43 = vld [vmem:[%s1 + $0xf8] sm:$0xff]
  %v44 = vld [vmem:[%s1 + $0x100] sm:$0xff]
  %v45 = vld [vmem:[%s1 + $0x108] sm:$0xff]
  %v46 = vld [vmem:[%s1 + $0x110] sm:$0xff]
  %v47 = vld [vmem:[%s1 + $0x118] sm:$0xff]
  %v48 = vld [vmem:[%s1 + $0x120] sm:$0xff]
  %v49 = vld [vmem:[%s1 + $0x128] sm:$0xff]
  %v50 = vld [vmem:[%s1 + $0x130] sm:$0xff]
  %v51 = vld [vmem:[%s1 + $0x138] sm:$0xff]
  %v52 = vld [vmem:[%s1 + $0x140] sm:$0xff]
  %v53 = vld [vmem:[%s1 + $0x148] sm:$0xff]
  %v54 = vld [vmem:[%s1 + $0x150] sm:$0xff]
  %v55 = vld [vmem:[%s1 + $0x158] sm:$0xff]
  %v56 = vld [vmem:[%s1 + $0x160] sm:$0xff]
  %v57 = vld [vmem:[%s1 + $0x168] sm:$0xff]
  %v58 = vld [vmem:[%s1 + $0x170] sm:$0xff]
  %v59 = vld [vmem:[%s1 + $0x178] sm:$0xff]
  %v60 = vld [vmem:[%s1 + $0x180] sm:$0xff]
  %v61 = vld [vmem:[%s1 + $0x188] sm:$0xff]
  %v62 = vld [vmem:[%s1 + $0x190] sm:$0xff]
  %v63 = vld [vmem:[%s1 + $0x198] sm:$0xff]
  %v64 = vld [vmem:[%s1 + $0x1a0] sm:$0xff]
  %v65 = vld [vmem:[%s1 + $0x1a8] sm:$0xff]
  %v66 = vld [vmem:[%s1 + $0x1b0] sm:$0xff]
  %v67 = vld [vmem:[%s1 + $0x1b8] sm:$0xff]
  %v68 = vld [vmem:[%s1 + $0x1c0] sm:$0xff]
  %v69 = vld [vmem:[%s1 + $0x1c8] sm:$0xff]
  %v70 = vld [vmem:[%s1 + $0x1d0] sm:$0xff]
  %v71 = vld [vmem:[%s1 + $0x1d8] sm:$0xff]
  %v72 = vld [vmem:[%s1 + $0x1e0] sm:$0xff]
  %v73 = vld [vmem:[%s1 + $0x1e8] sm:$0xff]
  %v74 = vld [vmem:[%s1 + $0x1f0] sm:$0xff]
  %v75 = vld [vmem:[%s1 + $0x1f8] sm:$0xff]
  %76 = vst [vmem:[%s2] sm:$0xff] %v12
  %77 = vst [vmem:[%s2 + $0x8] sm:$0xff] %v13
  %78 = vst [vmem:[%s2 + $0x10] sm:$0xff] %v14
  %79 = vst [vmem:[%s2 + $0x18] sm:$0xff] %v15
  %80 = vst [vmem:[%s2 + $0x20] sm:$0xff] %v16
  %81 = vst [vmem:[%s2 + $0x28] sm:$0xff] %v17
  %82 = vst [vmem:[%s2 + $0x30] sm:$0xff] %v18
  %83 = vst [vmem:[%s2 + $0x38] sm:$0xff] %v19
  %84 = vst [vmem:[%s2 + $0x40] sm:$0xff] %v20
  %85 = vst [vmem:[%s2 + $0x48] sm:$0xff] %v21
  %86 = vst [vmem:[%s2 + $0x50] sm:$0xff] %v22
  %87 = vst [vmem:[%s2 + $0x58] sm:$0xff] %v23
  %88 = vst [vmem:[%s2 + $0x60] sm:$0xff] %v24
  %89 = vst [vmem:[%s2 + $0x68] sm:$0xff] %v25
  %90 = vst [vmem:[%s2 + $0x70] sm:$0xff] %v26
  %91 = vst [vmem:[%s2 + $0x78] sm:$0xff] %v27
  %92 = vst [vmem:[%s2 + $0x80] sm:$0xff] %v28
  %93 = vst [vmem:[%s2 + $0x88] sm:$0xff] %v29
  %94 = vst [vmem:[%s2 + $0x90] sm:$0xff] %v30
  %95 = vst [vmem:[%s2 + $0x98] sm:$0xff] %v31
  %96 = vst [vmem:[%s2 + $0xa0] sm:$0xff] %v32
  %97 = vst [vmem:[%s2 + $0xa8] sm:$0xff] %v33
  %98 = vst [vmem:[%s2 + $0xb0] sm:$0xff] %v34
  %99 = vst [vmem:[%s2 + $0xb8] sm:$0xff] %v35
  %100 = vst [vmem:[%s2 + $0xc0] sm:$0xff] %v36
  %101 = vst [vmem:[%s2 + $0xc8] sm:$0xff] %v37
  %102 = vst [vmem:[%s2 + $0xd0] sm:$0xff] %v38
  %103 = vst [vmem:[%s2 + $0xd8] sm:$0xff] %v39
  %104 = vst [vmem:[%s2 + $0xe0] sm:$0xff] %v40
  %105 = vst [vmem:[%s2 + $0xe8] sm:$0xff] %v41
  %106 = vst [vmem:[%s2 + $0xf0] sm:$0xff] %v42
  %107 = vst [vmem:[%s2 + $0xf8] sm:$0xff] %v43
  %108 = vst [vmem:[%s2 + $0x100] sm:$0xff] %v44
  %109 = vst [vmem:[%s2 + $0x108] sm:$0xff] %v45
  %110 = vst [vmem:[%s2 + $0x110] sm:$0xff] %v46
  %111 = vst [vmem:[%s2 + $0x118] sm:$0xff] %v47
  %112 = vst [vmem:[%s2 + $0x120] sm:$0xff] %v48
  %113 = vst [vmem:[%s2 + $0x128] sm:$0xff] %v49
  %114 = vst [vmem:[%s2 + $0x130] sm:$0xff] %v50
  %115 = vst [vmem:[%s2 + $0x138] sm:$0xff] %v51
  %116 = vst [vmem:[%s2 + $0x140] sm:$0xff] %v52
  %117 = vst [vmem:[%s2 + $0x148] sm:$0xff] %v53
  %118 = vst [vmem:[%s2 + $0x150] sm:$0xff] %v54
  %119 = vst [vmem:[%s2 + $0x158] sm:$0xff] %v55
  %120 = vst [vmem:[%s2 + $0x160] sm:$0xff] %v56
  %121 = vst [vmem:[%s2 + $0x168] sm:$0xff] %v57
  %122 = vst [vmem:[%s2 + $0x170] sm:$0xff] %v58
  %123 = vst [vmem:[%s2 + $0x178] sm:$0xff] %v59
  %124 = vst [vmem:[%s2 + $0x180] sm:$0xff] %v60
  %125 = vst [vmem:[%s2 + $0x188] sm:$0xff] %v61
  %126 = vst [vmem:[%s2 + $0x190] sm:$0xff] %v62
  %127 = vst [vmem:[%s2 + $0x198] sm:$0xff] %v63
  %128 = vst [vmem:[%s2 + $0x1a0] sm:$0xff] %v64
  %129 = vst [vmem:[%s2 + $0x1a8] sm:$0xff] %v65
  %130 = vst [vmem:[%s2 + $0x1b0] sm:$0xff] %v66
  %131 = vst [vmem:[%s2 + $0x1b8] sm:$0xff] %v67
  %132 = vst [vmem:[%s2 + $0x1c0] sm:$0xff] %v68
  %133 = vst [vmem:[%s2 + $0x1c8] sm:$0xff] %v69
  %134 = vst [vmem:[%s2 + $0x1d0] sm:$0xff] %v70
  %135 = vst [vmem:[%s2 + $0x1d8] sm:$0xff] %v71
  %136 = vst [vmem:[%s2 + $0x1e0] sm:$0xff] %v72
  %137 = vst [vmem:[%s2 + $0x1e8] sm:$0xff] %v73
  %138 = vst [vmem:[%s2 + $0x1f0] sm:$0xff] %v74
  %139 = vst [vmem:[%s2 + $0x1f8] sm:$0xff] %v75
  %v140 = vld [vmem:[%s1] sm:$0xff]
  %v141 = vld [vmem:[%s1 + $0x8] sm:$0xff]
  %v142 = vld [vmem:[%s1 + $0x10] sm:$0xff]
  %v143 = vld [vmem:[%s1 + $0x18] sm:$0xff]
  %v144 = vld [vmem:[%s1 + $0x20] sm:$0xff]
  %v145 = vld [vmem:[%s1 + $0x28] sm:$0xff]
  %v146 = vld [vmem:[%s1 + $0x30] sm:$0xff]
  %v147 = vld [vmem:[%s1 + $0x38] sm:$0xff]
  %v148 = vld [vmem:[%s1 + $0x40] sm:$0xff]
  %v149 = vld [vmem:[%s1 + $0x48] sm:$0xff]
  %v150 = vld [vmem:[%s1 + $0x50] sm:$0xff]
  %v151 = vld [vmem:[%s1 + $0x58] sm:$0xff]
  %v152 = vld [vmem:[%s1 + $0x60] sm:$0xff]
  %v153 = vld [vmem:[%s1 + $0x68] sm:$0xff]
  %v154 = vld [vmem:[%s1 + $0x70] sm:$0xff]
  %v155 = vld [vmem:[%s1 + $0x78] sm:$0xff]
  %v156 = vld [vmem:[%s1 + $0x80] sm:$0xff]
  %v157 = vld [vmem:[%s1 + $0x88] sm:$0xff]
  %v158 = vld [vmem:[%s1 + $0x90] sm:$0xff]
  %v159 = vld [vmem:[%s1 + $0x98] sm:$0xff]
  %v160 = vld [vmem:[%s1 + $0xa0] sm:$0xff]
  %v161 = vld [vmem:[%s1 + $0xa8] sm:$0xff]
  %v162 = vld [vmem:[%s1 + $0xb0] sm:$0xff]
  %v163 = vld [vmem:[%s1 + $0xb8] sm:$0xff]
  %v164 = vld [vmem:[%s1 + $0xc0] sm:$0xff]
  %v165 = vld [vmem:[%s1 + $0xc8] sm:$0xff]
  %v166 = vld [vmem:[%s1 + $0xd0] sm:$0xff]
  %v167 = vld [vmem:[%s1 + $0xd8] sm:$0xff]
  %v168 = vld [vmem:[%s1 + $0xe0] sm:$0xff]
  %v169 = vld [vmem:[%s1 + $0xe8] sm:$0xff]
  %v170 = vld [vmem:[%s1 + $0xf0] sm:$0xff]
  %v171 = vld [vmem:[%s1 + $0xf8] sm:$0xff]
  %v172 = vld [vmem:[%s1 + $0x100] sm:$0xff]
  %v173 = vld [vmem:[%s1 + $0x108] sm:$0xff]
  %v174 = vld [vmem:[%s1 + $0x110] sm:$0xff]
  %v175 = vld [vmem:[%s1 + $0x118] sm:$0xff]
  %v176 = vld [vmem:[%s1 + $0x120] sm:$0xff]
  %v177 = vld [vmem:[%s1 + $0x128] sm:$0xff]
  %v178 = vld [vmem:[%s1 + $0x130] sm:$0xff]
  %v179 = vld [vmem:[%s1 + $0x138] sm:$0xff]
  %v180 = vld [vmem:[%s1 + $0x140] sm:$0xff]
  %v181 = vld [vmem:[%s1 + $0x148] sm:$0xff]
  %v182 = vld [vmem:[%s1 + $0x150] sm:$0xff]
  %v183 = vld [vmem:[%s1 + $0x158] sm:$0xff]
  %v184 = vld [vmem:[%s1 + $0x160] sm:$0xff]
  %v185 = vld [vmem:[%s1 + $0x168] sm:$0xff]
  %v186 = vld [vmem:[%s1 + $0x170] sm:$0xff]
  %v187 = vld [vmem:[%s1 + $0x178] sm:$0xff]
  %v188 = vld [vmem:[%s1 + $0x180] sm:$0xff]
  %v189 = vld [vmem:[%s1 + $0x188] sm:$0xff]
  %v190 = vld [vmem:[%s1 + $0x190] sm:$0xff]
  %v191 = vld [vmem:[%s1 + $0x198] sm:$0xff]
  %v192 = vld [vmem:[%s1 + $0x1a0] sm:$0xff]
  %v193 = vld [vmem:[%s1 + $0x1a8] sm:$0xff]
  %v194 = vld [vmem:[%s1 + $0x1b0] sm:$0xff]
  %v195 = vld [vmem:[%s1 + $0x1b8] sm:$0xff]
  %v196 = vld [vmem:[%s1 + $0x1c0] sm:$0xff]
  %v197 = vld [vmem:[%s1 + $0x1c8] sm:$0xff]
  %v198 = vld [vmem:[%s1 + $0x1d0] sm:$0xff]
  %v199 = vld [vmem:[%s1 + $0x1d8] sm:$0xff]
  %v200 = vld [vmem:[%s1 + $0x1e0] sm:$0xff]
  %v201 = vld [vmem:[%s1 + $0x1e8] sm:$0xff]
  %v202 = vld [vmem:[%s1 + $0x1f0] sm:$0xff]
  %v203 = vld [vmem:[%s1 + $0x1f8] sm:$0xff]
  %v204 = vpack.c.bf16 %v141, %v140
  %v205 = vpack.c.bf16 %v143, %v142
  %v206 = vpack.c.bf16 %v145, %v144
  %v207 = vpack.c.bf16 %v147, %v146
  %v208 = vpack.c.bf16 %v149, %v148
  %v209 = vpack.c.bf16 %v151, %v150
  %v210 = vpack.c.bf16 %v153, %v152
  %v211 = vpack.c.bf16 %v155, %v154
  %v212 = vpack.c.bf16 %v157, %v156
  %v213 = vpack.c.bf16 %v159, %v158
  %v214 = vpack.c.bf16 %v161, %v160
  %v215 = vpack.c.bf16 %v163, %v162
  %v216 = vpack.c.bf16 %v165, %v164
  %v217 = vpack.c.bf16 %v167, %v166
  %v218 = vpack.c.bf16 %v169, %v168
  %v219 = vpack.c.bf16 %v171, %v170
  %v220 = vpack.c.bf16 %v173, %v172
  %v221 = vpack.c.bf16 %v175, %v174
  %v222 = vpack.c.bf16 %v177, %v176
  %v223 = vpack.c.bf16 %v179, %v178
  %v224 = vpack.c.bf16 %v181, %v180
  %v225 = vpack.c.bf16 %v183, %v182
  %v226 = vpack.c.bf16 %v185, %v184
  %v227 = vpack.c.bf16 %v187, %v186
  %v228 = vpack.c.bf16 %v189, %v188
  %v229 = vpack.c.bf16 %v191, %v190
  %v230 = vpack.c.bf16 %v193, %v192
  %v231 = vpack.c.bf16 %v195, %v194
  %v232 = vpack.c.bf16 %v197, %v196
  %v233 = vpack.c.bf16 %v199, %v198
  %v234 = vpack.c.bf16 %v201, %v200
  %v235 = vpack.c.bf16 %v203, %v202
  %236 = vst [vmem:[#allocation2] sm:$0xff] %v204
  %237 = vst [vmem:[#allocation2 + $0x8] sm:$0xff] %v205
  %238 = vst [vmem:[#allocation2 + $0x10] sm:$0xff] %v206
  %239 = vst [vmem:[#allocation2 + $0x18] sm:$0xff] %v207
  %240 = vst [vmem:[#allocation2 + $0x20] sm:$0xff] %v208
  %241 = vst [vmem:[#allocation2 + $0x28] sm:$0xff] %v209
  %242 = vst [vmem:[#allocation2 + $0x30] sm:$0xff] %v210
  %243 = vst [vmem:[#allocation2 + $0x38] sm:$0xff] %v211
  %244 = vst [vmem:[#allocation2 + $0x40] sm:$0xff] %v212
  %245 = vst [vmem:[#allocation2 + $0x48] sm:$0xff] %v213
  %246 = vst [vmem:[#allocation2 + $0x50] sm:$0xff] %v214
  %247 = vst [vmem:[#allocation2 + $0x58] sm:$0xff] %v215
  %248 = vst [vmem:[#allocation2 + $0x60] sm:$0xff] %v216
  %249 = vst [vmem:[#allocation2 + $0x68] sm:$0xff] %v217
  %250 = vst [vmem:[#allocation2 + $0x70] sm:$0xff] %v218
  %251 = vst [vmem:[#allocation2 + $0x78] sm:$0xff] %v219
  %252 = vst [vmem:[#allocation2 + $0x80] sm:$0xff] %v220
  %253 = vst [vmem:[#allocation2 + $0x88] sm:$0xff] %v221
  %254 = vst [vmem:[#allocation2 + $0x90] sm:$0xff] %v222
  %255 = vst [vmem:[#allocation2 + $0x98] sm:$0xff] %v223
  %256 = vst [vmem:[#allocation2 + $0xa0] sm:$0xff] %v224
  %257 = vst [vmem:[#allocation2 + $0xa8] sm:$0xff] %v225
  %258 = vst [vmem:[#allocation2 + $0xb0] sm:$0xff] %v226
  %259 = vst [vmem:[#allocation2 + $0xb8] sm:$0xff] %v227
  %260 = vst [vmem:[#allocation2 + $0xc0] sm:$0xff] %v228
  %261 = vst [vmem:[#allocation2 + $0xc8] sm:$0xff] %v229
  %262 = vst [vmem:[#allocation2 + $0xd0] sm:$0xff] %v230
  %263 = vst [vmem:[#allocation2 + $0xd8] sm:$0xff] %v231
  %264 = vst [vmem:[#allocation2 + $0xe0] sm:$0xff] %v232
  %265 = vst [vmem:[#allocation2 + $0xe8] sm:$0xff] %v233
  %266 = vst [vmem:[#allocation2 + $0xf0] sm:$0xff] %v234
  %267 = vst [vmem:[#allocation2 + $0xf8] sm:$0xff] %v235
  %v268 = vld [vmem:[%s0] sm:$0xff]
  %v269 = vld [vmem:[%s0 + $0x8] sm:$0xff]
  %v270 = vld [vmem:[%s0 + $0x10] sm:$0xff]
  %v271 = vld [vmem:[%s0 + $0x18] sm:$0xff]
  %v272 = vld [vmem:[%s0 + $0x20] sm:$0xff]
  %v273 = vld [vmem:[%s0 + $0x28] sm:$0xff]
  %v274 = vld [vmem:[%s0 + $0x30] sm:$0xff]
  %v275 = vld [vmem:[%s0 + $0x38] sm:$0xff]
  %v276 = vld [vmem:[%s0 + $0x40] sm:$0xff]
  %v277 = vld [vmem:[%s0 + $0x48] sm:$0xff]
  %v278 = vld [vmem:[%s0 + $0x50] sm:$0xff]
  %v279 = vld [vmem:[%s0 + $0x58] sm:$0xff]
  %v280 = vld [vmem:[%s0 + $0x60] sm:$0xff]
  %v281 = vld [vmem:[%s0 + $0x68] sm:$0xff]
  %v282 = vld [vmem:[%s0 + $0x70] sm:$0xff]
  %v283 = vld [vmem:[%s0 + $0x78] sm:$0xff]
  %v284 = vld [vmem:[%s0 + $0x80] sm:$0xff]
  %v285 = vld [vmem:[%s0 + $0x88] sm:$0xff]
  %v286 = vld [vmem:[%s0 + $0x90] sm:$0xff]
  %v287 = vld [vmem:[%s0 + $0x98] sm:$0xff]
  %v288 = vld [vmem:[%s0 + $0xa0] sm:$0xff]
  %v289 = vld [vmem:[%s0 + $0xa8] sm:$0xff]
  %v290 = vld [vmem:[%s0 + $0xb0] sm:$0xff]
  %v291 = vld [vmem:[%s0 + $0xb8] sm:$0xff]
  %v292 = vld [vmem:[%s0 + $0xc0] sm:$0xff]
  %v293 = vld [vmem:[%s0 + $0xc8] sm:$0xff]
  %v294 = vld [vmem:[%s0 + $0xd0] sm:$0xff]
  %v295 = vld [vmem:[%s0 + $0xd8] sm:$0xff]
  %v296 = vld [vmem:[%s0 + $0xe0] sm:$0xff]
  %v297 = vld [vmem:[%s0 + $0xe8] sm:$0xff]
  %v298 = vld [vmem:[%s0 + $0xf0] sm:$0xff]
  %v299 = vld [vmem:[%s0 + $0xf8] sm:$0xff]
  %v300 = vld [vmem:[%s0 + $0x100] sm:$0xff]
  %v301 = vld [vmem:[%s0 + $0x108] sm:$0xff]
  %v302 = vld [vmem:[%s0 + $0x110] sm:$0xff]
  %v303 = vld [vmem:[%s0 + $0x118] sm:$0xff]
  %v304 = vld [vmem:[%s0 + $0x120] sm:$0xff]
  %v305 = vld [vmem:[%s0 + $0x128] sm:$0xff]
  %v306 = vld [vmem:[%s0 + $0x130] sm:$0xff]
  %v307 = vld [vmem:[%s0 + $0x138] sm:$0xff]
  %v308 = vld [vmem:[%s0 + $0x140] sm:$0xff]
  %v309 = vld [vmem:[%s0 + $0x148] sm:$0xff]
  %v310 = vld [vmem:[%s0 + $0x150] sm:$0xff]
  %v311 = vld [vmem:[%s0 + $0x158] sm:$0xff]
  %v312 = vld [vmem:[%s0 + $0x160] sm:$0xff]
  %v313 = vld [vmem:[%s0 + $0x168] sm:$0xff]
  %v314 = vld [vmem:[%s0 + $0x170] sm:$0xff]
  %v315 = vld [vmem:[%s0 + $0x178] sm:$0xff]
  %v316 = vld [vmem:[%s0 + $0x180] sm:$0xff]
  %v317 = vld [vmem:[%s0 + $0x188] sm:$0xff]
  %v318 = vld [vmem:[%s0 + $0x190] sm:$0xff]
  %v319 = vld [vmem:[%s0 + $0x198] sm:$0xff]
  %v320 = vld [vmem:[%s0 + $0x1a0] sm:$0xff]
  %v321 = vld [vmem:[%s0 + $0x1a8] sm:$0xff]
  %v322 = vld [vmem:[%s0 + $0x1b0] sm:$0xff]
  %v323 = vld [vmem:[%s0 + $0x1b8] sm:$0xff]
  %v324 = vld [vmem:[%s0 + $0x1c0] sm:$0xff]
  %v325 = vld [vmem:[%s0 + $0x1c8] sm:$0xff]
  %v326 = vld [vmem:[%s0 + $0x1d0] sm:$0xff]
  %v327 = vld [vmem:[%s0 + $0x1d8] sm:$0xff]
  %v328 = vld [vmem:[%s0 + $0x1e0] sm:$0xff]
  %v329 = vld [vmem:[%s0 + $0x1e8] sm:$0xff]
  %v330 = vld [vmem:[%s0 + $0x1f0] sm:$0xff]
  %v331 = vld [vmem:[%s0 + $0x1f8] sm:$0xff]
  %v332 = vld [vmem:[%s0 + $0x200] sm:$0xff]
  %v333 = vld [vmem:[%s0 + $0x208] sm:$0xff]
  %v334 = vld [vmem:[%s0 + $0x210] sm:$0xff]
  %v335 = vld [vmem:[%s0 + $0x218] sm:$0xff]
  %v336 = vld [vmem:[%s0 + $0x220] sm:$0xff]
  %v337 = vld [vmem:[%s0 + $0x228] sm:$0xff]
  %v338 = vld [vmem:[%s0 + $0x230] sm:$0xff]
  %v339 = vld [vmem:[%s0 + $0x238] sm:$0xff]
  %v340 = vld [vmem:[%s0 + $0x240] sm:$0xff]
  %v341 = vld [vmem:[%s0 + $0x248] sm:$0xff]
  %v342 = vld [vmem:[%s0 + $0x250] sm:$0xff]
  %v343 = vld [vmem:[%s0 + $0x258] sm:$0xff]
  %v344 = vld [vmem:[%s0 + $0x260] sm:$0xff]
  %v345 = vld [vmem:[%s0 + $0x268] sm:$0xff]
  %v346 = vld [vmem:[%s0 + $0x270] sm:$0xff]
  %v347 = vld [vmem:[%s0 + $0x278] sm:$0xff]
  %v348 = vld [vmem:[%s0 + $0x280] sm:$0xff]
  %v349 = vld [vmem:[%s0 + $0x288] sm:$0xff]
  %v350 = vld [vmem:[%s0 + $0x290] sm:$0xff]
  %v351 = vld [vmem:[%s0 + $0x298] sm:$0xff]
  %v352 = vld [vmem:[%s0 + $0x2a0] sm:$0xff]
  %v353 = vld [vmem:[%s0 + $0x2a8] sm:$0xff]
  %v354 = vld [vmem:[%s0 + $0x2b0] sm:$0xff]
  %v355 = vld [vmem:[%s0 + $0x2b8] sm:$0xff]
  %v356 = vld [vmem:[%s0 + $0x2c0] sm:$0xff]
  %v357 = vld [vmem:[%s0 + $0x2c8] sm:$0xff]
  %v358 = vld [vmem:[%s0 + $0x2d0] sm:$0xff]
  %v359 = vld [vmem:[%s0 + $0x2d8] sm:$0xff]
  %v360 = vld [vmem:[%s0 + $0x2e0] sm:$0xff]
  %v361 = vld [vmem:[%s0 + $0x2e8] sm:$0xff]
  %v362 = vld [vmem:[%s0 + $0x2f0] sm:$0xff]
  %v363 = vld [vmem:[%s0 + $0x2f8] sm:$0xff]
  %v364 = vld [vmem:[%s0 + $0x300] sm:$0xff]
  %v365 = vld [vmem:[%s0 + $0x308] sm:$0xff]
  %v366 = vld [vmem:[%s0 + $0x310] sm:$0xff]
  %v367 = vld [vmem:[%s0 + $0x318] sm:$0xff]
  %v368 = vld [vmem:[%s0 + $0x320] sm:$0xff]
  %v369 = vld [vmem:[%s0 + $0x328] sm:$0xff]
  %v370 = vld [vmem:[%s0 + $0x330] sm:$0xff]
  %v371 = vld [vmem:[%s0 + $0x338] sm:$0xff]
  %v372 = vld [vmem:[%s0 + $0x340] sm:$0xff]
  %v373 = vld [vmem:[%s0 + $0x348] sm:$0xff]
  %v374 = vld [vmem:[%s0 + $0x350] sm:$0xff]
  %v375 = vld [vmem:[%s0 + $0x358] sm:$0xff]
  %v376 = vld [vmem:[%s0 + $0x360] sm:$0xff]
  %v377 = vld [vmem:[%s0 + $0x368] sm:$0xff]
  %v378 = vld [vmem:[%s0 + $0x370] sm:$0xff]
  %v379 = vld [vmem:[%s0 + $0x378] sm:$0xff]
  %v380 = vld [vmem:[%s0 + $0x380] sm:$0xff]
  %v381 = vld [vmem:[%s0 + $0x388] sm:$0xff]
  %v382 = vld [vmem:[%s0 + $0x390] sm:$0xff]
  %v383 = vld [vmem:[%s0 + $0x398] sm:$0xff]
  %v384 = vld [vmem:[%s0 + $0x3a0] sm:$0xff]
  %v385 = vld [vmem:[%s0 + $0x3a8] sm:$0xff]
  %v386 = vld [vmem:[%s0 + $0x3b0] sm:$0xff]
  %v387 = vld [vmem:[%s0 + $0x3b8] sm:$0xff]
  %v388 = vld [vmem:[%s0 + $0x3c0] sm:$0xff]
  %v389 = vld [vmem:[%s0 + $0x3c8] sm:$0xff]
  %v390 = vld [vmem:[%s0 + $0x3d0] sm:$0xff]
  %v391 = vld [vmem:[%s0 + $0x3d8] sm:$0xff]
  %v392 = vld [vmem:[%s0 + $0x3e0] sm:$0xff]
  %v393 = vld [vmem:[%s0 + $0x3e8] sm:$0xff]
  %v394 = vld [vmem:[%s0 + $0x3f0] sm:$0xff]
  %v395 = vld [vmem:[%s0 + $0x3f8] sm:$0xff]
  %v396 = vld [vmem:[#allocation2] sm:$0xff]
  %v397 = vld [vmem:[#allocation2 + $0x8] sm:$0xff]
  %v398 = vld [vmem:[#allocation2 + $0x10] sm:$0xff]
  %v399 = vld [vmem:[#allocation2 + $0x18] sm:$0xff]
  %v400 = vld [vmem:[#allocation2 + $0x20] sm:$0xff]
  %v401 = vld [vmem:[#allocation2 + $0x28] sm:$0xff]
  %v402 = vld [vmem:[#allocation2 + $0x30] sm:$0xff]
  %v403 = vld [vmem:[#allocation2 + $0x38] sm:$0xff]
  %v404 = vld [vmem:[#allocation2 + $0x40] sm:$0xff]
  %v405 = vld [vmem:[#allocation2 + $0x48] sm:$0xff]
  %v406 = vld [vmem:[#allocation2 + $0x50] sm:$0xff]
  %v407 = vld [vmem:[#allocation2 + $0x58] sm:$0xff]
  %v408 = vld [vmem:[#allocation2 + $0x60] sm:$0xff]
  %v409 = vld [vmem:[#allocation2 + $0x68] sm:$0xff]
  %v410 = vld [vmem:[#allocation2 + $0x70] sm:$0xff]
  %v411 = vld [vmem:[#allocation2 + $0x78] sm:$0xff]
  %v412 = vld [vmem:[#allocation2 + $0x80] sm:$0xff]
  %v413 = vld [vmem:[#allocation2 + $0x88] sm:$0xff]
  %v414 = vld [vmem:[#allocation2 + $0x90] sm:$0xff]
  %v415 = vld [vmem:[#allocation2 + $0x98] sm:$0xff]
  %v416 = vld [vmem:[#allocation2 + $0xa0] sm:$0xff]
  %v417 = vld [vmem:[#allocation2 + $0xa8] sm:$0xff]
  %v418 = vld [vmem:[#allocation2 + $0xb0] sm:$0xff]
  %v419 = vld [vmem:[#allocation2 + $0xb8] sm:$0xff]
  %v420 = vld [vmem:[#allocation2 + $0xc0] sm:$0xff]
  %v421 = vld [vmem:[#allocation2 + $0xc8] sm:$0xff]
  %v422 = vld [vmem:[#allocation2 + $0xd0] sm:$0xff]
  %v423 = vld [vmem:[#allocation2 + $0xd8] sm:$0xff]
  %v424 = vld [vmem:[#allocation2 + $0xe0] sm:$0xff]
  %v425 = vld [vmem:[#allocation2 + $0xe8] sm:$0xff]
  %v426 = vld [vmem:[#allocation2 + $0xf0] sm:$0xff]
  %v427 = vld [vmem:[#allocation2 + $0xf8] sm:$0xff]
  %v556 = vunpack.c.l.b16 %v268
  %v557 = vunpack.c.h.b16 %v268
  %v558 = vunpack.c.l.b16 %v269
  %v559 = vunpack.c.h.b16 %v269
  %v560 = vunpack.c.l.b16 %v270
  %v561 = vunpack.c.h.b16 %v270
  %v562 = vunpack.c.l.b16 %v271
  %v563 = vunpack.c.h.b16 %v271
  %v564 = vunpack.c.l.b16 %v272
  %v565 = vunpack.c.h.b16 %v272
  %v566 = vunpack.c.l.b16 %v273
  %v567 = vunpack.c.h.b16 %v273
  %v568 = vunpack.c.l.b16 %v274
  %v569 = vunpack.c.h.b16 %v274
  %v570 = vunpack.c.l.b16 %v275
  %v571 = vunpack.c.h.b16 %v275
  %v572 = vunpack.c.l.b16 %v276
  %v573 = vunpack.c.h.b16 %v276
  %v574 = vunpack.c.l.b16 %v277
  %v575 = vunpack.c.h.b16 %v277
  %v576 = vunpack.c.l.b16 %v278
  %v577 = vunpack.c.h.b16 %v278
  %v578 = vunpack.c.l.b16 %v279
  %v579 = vunpack.c.h.b16 %v279
  %v580 = vunpack.c.l.b16 %v280
  %v581 = vunpack.c.h.b16 %v280
  %v582 = vunpack.c.l.b16 %v281
  %v583 = vunpack.c.h.b16 %v281
  %v584 = vunpack.c.l.b16 %v282
  %v585 = vunpack.c.h.b16 %v282
  %v586 = vunpack.c.l.b16 %v283
  %v587 = vunpack.c.h.b16 %v283
  %v588 = vunpack.c.l.b16 %v284
  %v589 = vunpack.c.h.b16 %v284
  %v590 = vunpack.c.l.b16 %v285
  %v591 = vunpack.c.h.b16 %v285
  %v592 = vunpack.c.l.b16 %v286
  %v593 = vunpack.c.h.b16 %v286
  %v594 = vunpack.c.l.b16 %v287
  %v595 = vunpack.c.h.b16 %v287
  %v596 = vunpack.c.l.b16 %v288
  %v597 = vunpack.c.h.b16 %v288
  %v598 = vunpack.c.l.b16 %v289
  %v599 = vunpack.c.h.b16 %v289
  %v600 = vunpack.c.l.b16 %v290
  %v601 = vunpack.c.h.b16 %v290
  %v602 = vunpack.c.l.b16 %v291
  %v603 = vunpack.c.h.b16 %v291
  %v604 = vunpack.c.l.b16 %v292
  %v605 = vunpack.c.h.b16 %v292
  %v606 = vunpack.c.l.b16 %v293
  %v607 = vunpack.c.h.b16 %v293
  %v608 = vunpack.c.l.b16 %v294
  %v609 = vunpack.c.h.b16 %v294
  %v610 = vunpack.c.l.b16 %v295
  %v611 = vunpack.c.h.b16 %v295
  %v612 = vunpack.c.l.b16 %v296
  %v613 = vunpack.c.h.b16 %v296
  %v614 = vunpack.c.l.b16 %v297
  %v615 = vunpack.c.h.b16 %v297
  %v616 = vunpack.c.l.b16 %v298
  %v617 = vunpack.c.h.b16 %v298
  %v618 = vunpack.c.l.b16 %v299
  %v619 = vunpack.c.h.b16 %v299
  %v620 = vunpack.c.l.b16 %v300
  %v621 = vunpack.c.h.b16 %v300
  %v622 = vunpack.c.l.b16 %v301
  %v623 = vunpack.c.h.b16 %v301
  %v624 = vunpack.c.l.b16 %v302
  %v625 = vunpack.c.h.b16 %v302
  %v626 = vunpack.c.l.b16 %v303
  %v627 = vunpack.c.h.b16 %v303
  %v628 = vunpack.c.l.b16 %v304
  %v629 = vunpack.c.h.b16 %v304
  %v630 = vunpack.c.l.b16 %v305
  %v631 = vunpack.c.h.b16 %v305
  %v632 = vunpack.c.l.b16 %v306
  %v633 = vunpack.c.h.b16 %v306
  %v634 = vunpack.c.l.b16 %v307
  %v635 = vunpack.c.h.b16 %v307
  %v636 = vunpack.c.l.b16 %v308
  %v637 = vunpack.c.h.b16 %v308
  %v638 = vunpack.c.l.b16 %v309
  %v639 = vunpack.c.h.b16 %v309
  %v640 = vunpack.c.l.b16 %v310
  %v641 = vunpack.c.h.b16 %v310
  %v642 = vunpack.c.l.b16 %v311
  %v643 = vunpack.c.h.b16 %v311
  %v644 = vunpack.c.l.b16 %v312
  %v645 = vunpack.c.h.b16 %v312
  %v646 = vunpack.c.l.b16 %v313
  %v647 = vunpack.c.h.b16 %v313
  %v648 = vunpack.c.l.b16 %v314
  %v649 = vunpack.c.h.b16 %v314
  %v650 = vunpack.c.l.b16 %v315
  %v651 = vunpack.c.h.b16 %v315
  %v652 = vunpack.c.l.b16 %v316
  %v653 = vunpack.c.h.b16 %v316
  %v654 = vunpack.c.l.b16 %v317
  %v655 = vunpack.c.h.b16 %v317
  %v656 = vunpack.c.l.b16 %v318
  %v657 = vunpack.c.h.b16 %v318
  %v658 = vunpack.c.l.b16 %v319
  %v659 = vunpack.c.h.b16 %v319
  %v660 = vunpack.c.l.b16 %v320
  %v661 = vunpack.c.h.b16 %v320
  %v662 = vunpack.c.l.b16 %v321
  %v663 = vunpack.c.h.b16 %v321
  %v664 = vunpack.c.l.b16 %v322
  %v665 = vunpack.c.h.b16 %v322
  %v666 = vunpack.c.l.b16 %v323
  %v667 = vunpack.c.h.b16 %v323
  %v668 = vunpack.c.l.b16 %v324
  %v669 = vunpack.c.h.b16 %v324
  %v670 = vunpack.c.l.b16 %v325
  %v671 = vunpack.c.h.b16 %v325
  %v672 = vunpack.c.l.b16 %v326
  %v673 = vunpack.c.h.b16 %v326
  %v674 = vunpack.c.l.b16 %v327
  %v675 = vunpack.c.h.b16 %v327
  %v676 = vunpack.c.l.b16 %v328
  %v677 = vunpack.c.h.b16 %v328
  %v678 = vunpack.c.l.b16 %v329
  %v679 = vunpack.c.h.b16 %v329
  %v680 = vunpack.c.l.b16 %v330
  %v681 = vunpack.c.h.b16 %v330
  %v682 = vunpack.c.l.b16 %v331
  %v683 = vunpack.c.h.b16 %v331
  %v684 = vunpack.c.l.b16 %v332
  %v685 = vunpack.c.h.b16 %v332
  %v686 = vunpack.c.l.b16 %v333
  %v687 = vunpack.c.h.b16 %v333
  %v688 = vunpack.c.l.b16 %v334
  %v689 = vunpack.c.h.b16 %v334
  %v690 = vunpack.c.l.b16 %v335
  %v691 = vunpack.c.h.b16 %v335
  %v692 = vunpack.c.l.b16 %v336
  %v693 = vunpack.c.h.b16 %v336
  %v694 = vunpack.c.l.b16 %v337
  %v695 = vunpack.c.h.b16 %v337
  %v696 = vunpack.c.l.b16 %v338
  %v697 = vunpack.c.h.b16 %v338
  %v698 = vunpack.c.l.b16 %v339
  %v699 = vunpack.c.h.b16 %v339
  %v700 = vunpack.c.l.b16 %v340
  %v701 = vunpack.c.h.b16 %v340
  %v702 = vunpack.c.l.b16 %v341
  %v703 = vunpack.c.h.b16 %v341
  %v704 = vunpack.c.l.b16 %v342
  %v705 = vunpack.c.h.b16 %v342
  %v706 = vunpack.c.l.b16 %v343
  %v707 = vunpack.c.h.b16 %v343
  %v708 = vunpack.c.l.b16 %v344
  %v709 = vunpack.c.h.b16 %v344
  %v710 = vunpack.c.l.b16 %v345
  %v711 = vunpack.c.h.b16 %v345
  %v712 = vunpack.c.l.b16 %v346
  %v713 = vunpack.c.h.b16 %v346
  %v714 = vunpack.c.l.b16 %v347
  %v715 = vunpack.c.h.b16 %v347
  %v716 = vunpack.c.l.b16 %v348
  %v717 = vunpack.c.h.b16 %v348
  %v718 = vunpack.c.l.b16 %v349
  %v719 = vunpack.c.h.b16 %v349
  %v720 = vunpack.c.l.b16 %v350
  %v721 = vunpack.c.h.b16 %v350
  %v722 = vunpack.c.l.b16 %v351
  %v723 = vunpack.c.h.b16 %v351
  %v724 = vunpack.c.l.b16 %v352
  %v725 = vunpack.c.h.b16 %v352
  %v726 = vunpack.c.l.b16 %v353
  %v727 = vunpack.c.h.b16 %v353
  %v728 = vunpack.c.l.b16 %v354
  %v729 = vunpack.c.h.b16 %v354
  %v730 = vunpack.c.l.b16 %v355
  %v731 = vunpack.c.h.b16 %v355
  %v732 = vunpack.c.l.b16 %v356
  %v733 = vunpack.c.h.b16 %v356
  %v734 = vunpack.c.l.b16 %v357
  %v735 = vunpack.c.h.b16 %v357
  %v736 = vunpack.c.l.b16 %v358
  %v737 = vunpack.c.h.b16 %v358
  %v738 = vunpack.c.l.b16 %v359
  %v739 = vunpack.c.h.b16 %v359
  %v740 = vunpack.c.l.b16 %v360
  %v741 = vunpack.c.h.b16 %v360
  %v742 = vunpack.c.l.b16 %v361
  %v743 = vunpack.c.h.b16 %v361
  %v744 = vunpack.c.l.b16 %v362
  %v745 = vunpack.c.h.b16 %v362
  %v746 = vunpack.c.l.b16 %v363
  %v747 = vunpack.c.h.b16 %v363
  %v748 = vunpack.c.l.b16 %v364
  %v749 = vunpack.c.h.b16 %v364
  %v750 = vunpack.c.l.b16 %v365
  %v751 = vunpack.c.h.b16 %v365
  %v752 = vunpack.c.l.b16 %v366
  %v753 = vunpack.c.h.b16 %v366
  %v754 = vunpack.c.l.b16 %v367
  %v755 = vunpack.c.h.b16 %v367
  %v756 = vunpack.c.l.b16 %v368
  %v757 = vunpack.c.h.b16 %v368
  %v758 = vunpack.c.l.b16 %v369
  %v759 = vunpack.c.h.b16 %v369
  %v760 = vunpack.c.l.b16 %v370
  %v761 = vunpack.c.h.b16 %v370
  %v762 = vunpack.c.l.b16 %v371
  %v763 = vunpack.c.h.b16 %v371
  %v764 = vunpack.c.l.b16 %v372
  %v765 = vunpack.c.h.b16 %v372
  %v766 = vunpack.c.l.b16 %v373
  %v767 = vunpack.c.h.b16 %v373
  %v768 = vunpack.c.l.b16 %v374
  %v769 = vunpack.c.h.b16 %v374
  %v770 = vunpack.c.l.b16 %v375
  %v771 = vunpack.c.h.b16 %v375
  %v772 = vunpack.c.l.b16 %v376
  %v773 = vunpack.c.h.b16 %v376
  %v774 = vunpack.c.l.b16 %v377
  %v775 = vunpack.c.h.b16 %v377
  %v776 = vunpack.c.l.b16 %v378
  %v777 = vunpack.c.h.b16 %v378
  %v778 = vunpack.c.l.b16 %v379
  %v779 = vunpack.c.h.b16 %v379
  %v780 = vunpack.c.l.b16 %v380
  %v781 = vunpack.c.h.b16 %v380
  %v782 = vunpack.c.l.b16 %v381
  %v783 = vunpack.c.h.b16 %v381
  %v784 = vunpack.c.l.b16 %v382
  %v785 = vunpack.c.h.b16 %v382
  %v786 = vunpack.c.l.b16 %v383
  %v787 = vunpack.c.h.b16 %v383
  %v788 = vunpack.c.l.b16 %v384
  %v789 = vunpack.c.h.b16 %v384
  %v790 = vunpack.c.l.b16 %v385
  %v791 = vunpack.c.h.b16 %v385
  %v792 = vunpack.c.l.b16 %v386
  %v793 = vunpack.c.h.b16 %v386
  %v794 = vunpack.c.l.b16 %v387
  %v795 = vunpack.c.h.b16 %v387
  %v796 = vunpack.c.l.b16 %v388
  %v797 = vunpack.c.h.b16 %v388
  %v798 = vunpack.c.l.b16 %v389
  %v799 = vunpack.c.h.b16 %v389
  %v800 = vunpack.c.l.b16 %v390
  %v801 = vunpack.c.h.b16 %v390
  %v802 = vunpack.c.l.b16 %v391
  %v803 = vunpack.c.h.b16 %v391
  %v804 = vunpack.c.l.b16 %v392
  %v805 = vunpack.c.h.b16 %v392
  %v806 = vunpack.c.l.b16 %v393
  %v807 = vunpack.c.h.b16 %v393
  %v808 = vunpack.c.l.b16 %v394
  %v809 = vunpack.c.h.b16 %v394
  %v810 = vunpack.c.l.b16 %v395
  %v811 = vunpack.c.h.b16 %v395
  %v812 = vpack.c.b16 %v560, %v556
  %v813 = vpack.c.b16 %v561, %v557
  %v814 = vpack.c.b16 %v562, %v558
  %v815 = vpack.c.b16 %v563, %v559
  %v816 = vpack.c.b16 %v568, %v564
  %v817 = vpack.c.b16 %v569, %v565
  %v818 = vpack.c.b16 %v570, %v566
  %v819 = vpack.c.b16 %v571, %v567
  %v820 = vpack.c.b16 %v576, %v572
  %v821 = vpack.c.b16 %v577, %v573
  %v822 = vpack.c.b16 %v578, %v574
  %v823 = vpack.c.b16 %v579, %v575
  %v824 = vpack.c.b16 %v584, %v580
  %v825 = vpack.c.b16 %v585, %v581
  %v826 = vpack.c.b16 %v586, %v582
  %v827 = vpack.c.b16 %v587, %v583
  %v828 = vpack.c.b16 %v592, %v588
  %v829 = vpack.c.b16 %v593, %v589
  %v830 = vpack.c.b16 %v594, %v590
  %v831 = vpack.c.b16 %v595, %v591
  %v832 = vpack.c.b16 %v600, %v596
  %v833 = vpack.c.b16 %v601, %v597
  %v834 = vpack.c.b16 %v602, %v598
  %v835 = vpack.c.b16 %v603, %v599
  %v836 = vpack.c.b16 %v608, %v604
  %v837 = vpack.c.b16 %v609, %v605
  %v838 = vpack.c.b16 %v610, %v606
  %v839 = vpack.c.b16 %v611, %v607
  %v840 = vpack.c.b16 %v616, %v612
  %v841 = vpack.c.b16 %v617, %v613
  %v842 = vpack.c.b16 %v618, %v614
  %v843 = vpack.c.b16 %v619, %v615
  %v844 = vpack.c.b16 %v624, %v620
  %v845 = vpack.c.b16 %v625, %v621
  %v846 = vpack.c.b16 %v626, %v622
  %v847 = vpack.c.b16 %v627, %v623
  %v848 = vpack.c.b16 %v632, %v628
  %v849 = vpack.c.b16 %v633, %v629
  %v850 = vpack.c.b16 %v634, %v630
  %v851 = vpack.c.b16 %v635, %v631
  %v852 = vpack.c.b16 %v640, %v636
  %v853 = vpack.c.b16 %v641, %v637
  %v854 = vpack.c.b16 %v642, %v638
  %v855 = vpack.c.b16 %v643, %v639
  %v856 = vpack.c.b16 %v648, %v644
  %v857 = vpack.c.b16 %v649, %v645
  %v858 = vpack.c.b16 %v650, %v646
  %v859 = vpack.c.b16 %v651, %v647
  %v860 = vpack.c.b16 %v656, %v652
  %v861 = vpack.c.b16 %v657, %v653
  %v862 = vpack.c.b16 %v658, %v654
  %v863 = vpack.c.b16 %v659, %v655
  %v864 = vpack.c.b16 %v664, %v660
  %v865 = vpack.c.b16 %v665, %v661
  %v866 = vpack.c.b16 %v666, %v662
  %v867 = vpack.c.b16 %v667, %v663
  %v868 = vpack.c.b16 %v672, %v668
  %v869 = vpack.c.b16 %v673, %v669
  %v870 = vpack.c.b16 %v674, %v670
  %v871 = vpack.c.b16 %v675, %v671
  %v872 = vpack.c.b16 %v680, %v676
  %v873 = vpack.c.b16 %v681, %v677
  %v874 = vpack.c.b16 %v682, %v678
  %v875 = vpack.c.b16 %v683, %v679
  %v876 = vpack.c.b16 %v688, %v684
  %v877 = vpack.c.b16 %v689, %v685
  %v878 = vpack.c.b16 %v690, %v686
  %v879 = vpack.c.b16 %v691, %v687
  %v880 = vpack.c.b16 %v696, %v692
  %v881 = vpack.c.b16 %v697, %v693
  %v882 = vpack.c.b16 %v698, %v694
  %v883 = vpack.c.b16 %v699, %v695
  %v884 = vpack.c.b16 %v704, %v700
  %v885 = vpack.c.b16 %v705, %v701
  %v886 = vpack.c.b16 %v706, %v702
  %v887 = vpack.c.b16 %v707, %v703
  %v888 = vpack.c.b16 %v712, %v708
  %v889 = vpack.c.b16 %v713, %v709
  %v890 = vpack.c.b16 %v714, %v710
  %v891 = vpack.c.b16 %v715, %v711
  %v892 = vpack.c.b16 %v720, %v716
  %v893 = vpack.c.b16 %v721, %v717
  %v894 = vpack.c.b16 %v722, %v718
  %v895 = vpack.c.b16 %v723, %v719
  %v896 = vpack.c.b16 %v728, %v724
  %v897 = vpack.c.b16 %v729, %v725
  %v898 = vpack.c.b16 %v730, %v726
  %v899 = vpack.c.b16 %v731, %v727
  %v900 = vpack.c.b16 %v736, %v732
  %v901 = vpack.c.b16 %v737, %v733
  %v902 = vpack.c.b16 %v738, %v734
  %v903 = vpack.c.b16 %v739, %v735
  %v904 = vpack.c.b16 %v744, %v740
  %v905 = vpack.c.b16 %v745, %v741
  %v906 = vpack.c.b16 %v746, %v742
  %v907 = vpack.c.b16 %v747, %v743
  %v908 = vpack.c.b16 %v752, %v748
  %v909 = vpack.c.b16 %v753, %v749
  %v910 = vpack.c.b16 %v754, %v750
  %v911 = vpack.c.b16 %v755, %v751
  %v912 = vpack.c.b16 %v760, %v756
  %v913 = vpack.c.b16 %v761, %v757
  %v914 = vpack.c.b16 %v762, %v758
  %v915 = vpack.c.b16 %v763, %v759
  %v916 = vpack.c.b16 %v768, %v764
  %v917 = vpack.c.b16 %v769, %v765
  %v918 = vpack.c.b16 %v770, %v766
  %v919 = vpack.c.b16 %v771, %v767
  %v920 = vpack.c.b16 %v776, %v772
  %v921 = vpack.c.b16 %v777, %v773
  %v922 = vpack.c.b16 %v778, %v774
  %v923 = vpack.c.b16 %v779, %v775
  %v924 = vpack.c.b16 %v784, %v780
  %v925 = vpack.c.b16 %v785, %v781
  %v926 = vpack.c.b16 %v786, %v782
  %v927 = vpack.c.b16 %v787, %v783
  %v928 = vpack.c.b16 %v792, %v788
  %v929 = vpack.c.b16 %v793, %v789
  %v930 = vpack.c.b16 %v794, %v790
  %v931 = vpack.c.b16 %v795, %v791
  %v932 = vpack.c.b16 %v800, %v796
  %v933 = vpack.c.b16 %v801, %v797
  %v934 = vpack.c.b16 %v802, %v798
  %v935 = vpack.c.b16 %v803, %v799
  %v936 = vpack.c.b16 %v808, %v804
  %v937 = vpack.c.b16 %v809, %v805
  %v938 = vpack.c.b16 %v810, %v806
  %v939 = vpack.c.b16 %v811, %v807
  %1068 = vmatprep.subr.bf16.mxu0 0
  %1069 = vmatpush1.bf16.msra.mxu0 %v396
  %1070 = vmatprep.subr.bf16.mxu0 0
  %1071 = vmatpush1.bf16.msra.mxu0 %v397
  %1072 = vmatprep.subr.bf16.mxu0 0
  %1073 = vmatpush1.bf16.msra.mxu0 %v398
  %1074 = vmatprep.subr.bf16.mxu0 0
  %1075 = vmatpush1.bf16.msra.mxu0 %v399
  %1076 = vmatprep.subr.bf16.mxu0 0
  %1077 = vmatpush1.bf16.msra.mxu0 %v400
  %1078 = vmatprep.subr.bf16.mxu0 0
  %1079 = vmatpush1.bf16.msra.mxu0 %v401
  %1080 = vmatprep.subr.bf16.mxu0 0
  %1081 = vmatpush1.bf16.msra.mxu0 %v402
  %1082 = vmatprep.subr.bf16.mxu0 0
  %1083 = vmatpush1.bf16.msra.mxu0 %v403
  %1084 = vmatprep.subr.bf16.mxu0 0
  %1085 = vmatpush1.bf16.msra.mxu0 %v404
  %1086 = vmatprep.subr.bf16.mxu0 0
  %1087 = vmatpush1.bf16.msra.mxu0 %v405
  %1088 = vmatprep.subr.bf16.mxu0 0
  %1089 = vmatpush1.bf16.msra.mxu0 %v406
  %1090 = vmatprep.subr.bf16.mxu0 0
  %1091 = vmatpush1.bf16.msra.mxu0 %v407
  %1092 = vmatprep.subr.bf16.mxu0 0
  %1093 = vmatpush1.bf16.msra.mxu0 %v408
  %1094 = vmatprep.subr.bf16.mxu0 0
  %1095 = vmatpush1.bf16.msra.mxu0 %v409
  %1096 = vmatprep.subr.bf16.mxu0 0
  %1097 = vmatpush1.bf16.msra.mxu0 %v410
  %1098 = vmatprep.subr.bf16.mxu0 0
  %1099 = vmatpush1.bf16.msra.mxu0 %v411
  %1100 = vmatprep.mubr.bf16.mxu0 %v813
  %1101 = vmatmul.mubr.bf16.gmra.mrb[0].mxu0 %v812
  %v1102 = vpop.f32.mrb[0].mxu0
  %v1103 = vadd.f32 0.0, %v1102
  %v1104 = vpop.f32.mrb[0].mxu0
  %v1105 = vpop.f32.mrb[0].mxu0
  %v1106 = vadd.f32 0.0, %v1105
  %v1107 = vpop.f32.mrb[0].mxu0
  %1108 = vmatprep.mubr.bf16.mxu0 %v817
  %1109 = vmatmul.mubr.bf16.gmra.mrb[0].mxu0 %v816
  %v1110 = vpop.f32.mrb[0].mxu0
  %v1111 = vadd.f32 0.0, %v1110
  %v1112 = vpop.f32.mrb[0].mxu0
  %v1113 = vpop.f32.mrb[0].mxu0
  %v1114 = vadd.f32 0.0, %v1113
  %v1115 = vpop.f32.mrb[0].mxu0
  %1116 = vmatprep.mubr.bf16.mxu0 %v821
  %1117 = vmatmul.mubr.bf16.gmra.mrb[0].mxu0 %v820
  %v1118 = vpop.f32.mrb[0].mxu0
  %v1119 = vadd.f32 0.0, %v1118
  %v1120 = vpop.f32.mrb[0].mxu0
  %v1121 = vpop.f32.mrb[0].mxu0
  %v1122 = vadd.f32 0.0, %v1121
  %v1123 = vpop.f32.mrb[0].mxu0
  %1124 = vmatprep.mubr.bf16.mxu0 %v825
  %1125 = vmatmul.mubr.bf16.gmra.mrb[0].mxu0 %v824
  %v1126 = vpop.f32.mrb[0].mxu0
  %v1127 = vadd.f32 0.0, %v1126
  %v1128 = vpop.f32.mrb[0].mxu0
  %v1129 = vpop.f32.mrb[0].mxu0
  %v1130 = vadd.f32 0.0, %v1129
  %v1131 = vpop.f32.mrb[0].mxu0
  %1132 = vmatprep.mubr.bf16.mxu0 %v829
  %1133 = vmatmul.mubr.bf16.gmra.mrb[0].mxu0 %v828
  %v1134 = vpop.f32.mrb[0].mxu0
  %v1135 = vadd.f32 0.0, %v1134
  %v1136 = vpop.f32.mrb[0].mxu0
  %v1137 = vpop.f32.mrb[0].mxu0
  %v1138 = vadd.f32 0.0, %v1137
  %v1139 = vpop.f32.mrb[0].mxu0
  %1140 = vmatprep.mubr.bf16.mxu0 %v833
  %1141 = vmatmul.mubr.bf16.gmra.mrb[0].mxu0 %v832
  %v1142 = vpop.f32.mrb[0].mxu0
  %v1143 = vadd.f32 0.0, %v1142
  %v1144 = vpop.f32.mrb[0].mxu0
  %v1145 = vpop.f32.mrb[0].mxu0
  %v1146 = vadd.f32 0.0, %v1145
  %v1147 = vpop.f32.mrb[0].mxu0
  %1148 = vmatprep.mubr.bf16.mxu0 %v837
  %1149 = vmatmul.mubr.bf16.gmra.mrb[0].mxu0 %v836
  %v1150 = vpop.f32.mrb[0].mxu0
  %v1151 = vadd.f32 0.0, %v1150
  %v1152 = vpop.f32.mrb[0].mxu0
  %v1153 = vpop.f32.mrb[0].mxu0
  %v1154 = vadd.f32 0.0, %v1153
  %v1155 = vpop.f32.mrb[0].mxu0
  %1156 = vmatprep.mubr.bf16.mxu0 %v841
  %1157 = vmatmul.mubr.bf16.gmra.mrb[0].mxu0 %v840
  %v1158 = vpop.f32.mrb[0].mxu0
  %v1159 = vadd.f32 0.0, %v1158
  %v1160 = vpop.f32.mrb[0].mxu0
  %v1161 = vpop.f32.mrb[0].mxu0
  %v1162 = vadd.f32 0.0, %v1161
  %v1163 = vpop.f32.mrb[0].mxu0
  %1164 = vmatprep.mubr.bf16.mxu0 %v845
  %1165 = vmatmul.mubr.bf16.gmra.mrb[0].mxu0 %v844
  %v1166 = vpop.f32.mrb[0].mxu0
  %v1167 = vadd.f32 0.0, %v1166
  %v1168 = vpop.f32.mrb[0].mxu0
  %v1169 = vpop.f32.mrb[0].mxu0
  %v1170 = vadd.f32 0.0, %v1169
  %v1171 = vpop.f32.mrb[0].mxu0
  %1172 = vmatprep.mubr.bf16.mxu0 %v849
  %1173 = vmatmul.mubr.bf16.gmra.mrb[0].mxu0 %v848
  %v1174 = vpop.f32.mrb[0].mxu0
  %v1175 = vadd.f32 0.0, %v1174
  %v1176 = vpop.f32.mrb[0].mxu0
  %v1177 = vpop.f32.mrb[0].mxu0
  %v1178 = vadd.f32 0.0, %v1177
  %v1179 = vpop.f32.mrb[0].mxu0
  %1180 = vmatprep.mubr.bf16.mxu0 %v853
  %1181 = vmatmul.mubr.bf16.gmra.mrb[0].mxu0 %v852
  %v1182 = vpop.f32.mrb[0].mxu0
  %v1183 = vadd.f32 0.0, %v1182
  %v1184 = vpop.f32.mrb[0].mxu0
  %v1185 = vpop.f32.mrb[0].mxu0
  %v1186 = vadd.f32 0.0, %v1185
  %v1187 = vpop.f32.mrb[0].mxu0
  %1188 = vmatprep.mubr.bf16.mxu0 %v857
  %1189 = vmatmul.mubr.bf16.gmra.mrb[0].mxu0 %v856
  %v1190 = vpop.f32.mrb[0].mxu0
  %v1191 = vadd.f32 0.0, %v1190
  %v1192 = vpop.f32.mrb[0].mxu0
  %v1193 = vpop.f32.mrb[0].mxu0
  %v1194 = vadd.f32 0.0, %v1193
  %v1195 = vpop.f32.mrb[0].mxu0
  %1196 = vmatprep.mubr.bf16.mxu0 %v861
  %1197 = vmatmul.mubr.bf16.gmra.mrb[0].mxu0 %v860
  %v1198 = vpop.f32.mrb[0].mxu0
  %v1199 = vadd.f32 0.0, %v1198
  %v1200 = vpop.f32.mrb[0].mxu0
  %v1201 = vpop.f32.mrb[0].mxu0
  %v1202 = vadd.f32 0.0, %v1201
  %v1203 = vpop.f32.mrb[0].mxu0
  %1204 = vmatprep.mubr.bf16.mxu0 %v865
  %1205 = vmatmul.mubr.bf16.gmra.mrb[0].mxu0 %v864
  %v1206 = vpop.f32.mrb[0].mxu0
  %v1207 = vadd.f32 0.0, %v1206
  %v1208 = vpop.f32.mrb[0].mxu0
  %v1209 = vpop.f32.mrb[0].mxu0
  %v1210 = vadd.f32 0.0, %v1209
  %v1211 = vpop.f32.mrb[0].mxu0
  %1212 = vmatprep.mubr.bf16.mxu0 %v869
  %1213 = vmatmul.mubr.bf16.gmra.mrb[0].mxu0 %v868
  %v1214 = vpop.f32.mrb[0].mxu0
  %v1215 = vadd.f32 0.0, %v1214
  %v1216 = vpop.f32.mrb[0].mxu0
  %v1217 = vpop.f32.mrb[0].mxu0
  %v1218 = vadd.f32 0.0, %v1217
  %v1219 = vpop.f32.mrb[0].mxu0
  %1220 = vmatprep.mubr.bf16.mxu0 %v873
  %1221 = vmatmul.mubr.bf16.gmra.mrb[0].mxu0 %v872
  %v1222 = vpop.f32.mrb[0].mxu0
  %v1223 = vadd.f32 0.0, %v1222
  %v1224 = vpop.f32.mrb[0].mxu0
  %v1225 = vpop.f32.mrb[0].mxu0
  %v1226 = vadd.f32 0.0, %v1225
  %v1227 = vpop.f32.mrb[0].mxu0
  %1228 = vmatprep.mubr.bf16.mxu0 %v877
  %1229 = vmatmul.mubr.bf16.gmra.mrb[0].mxu0 %v876
  %v1230 = vpop.f32.mrb[0].mxu0
  %v1231 = vadd.f32 0.0, %v1230
  %v1232 = vpop.f32.mrb[0].mxu0
  %v1233 = vpop.f32.mrb[0].mxu0
  %v1234 = vadd.f32 0.0, %v1233
  %v1235 = vpop.f32.mrb[0].mxu0
  %1236 = vmatprep.mubr.bf16.mxu0 %v881
  %1237 = vmatmul.mubr.bf16.gmra.mrb[0].mxu0 %v880
  %v1238 = vpop.f32.mrb[0].mxu0
  %v1239 = vadd.f32 0.0, %v1238
  %v1240 = vpop.f32.mrb[0].mxu0
  %v1241 = vpop.f32.mrb[0].mxu0
  %v1242 = vadd.f32 0.0, %v1241
  %v1243 = vpop.f32.mrb[0].mxu0
  %1244 = vmatprep.mubr.bf16.mxu0 %v885
  %1245 = vmatmul.mubr.bf16.gmra.mrb[0].mxu0 %v884
  %v1246 = vpop.f32.mrb[0].mxu0
  %v1247 = vadd.f32 0.0, %v1246
  %v1248 = vpop.f32.mrb[0].mxu0
  %v1249 = vpop.f32.mrb[0].mxu0
  %v1250 = vadd.f32 0.0, %v1249
  %v1251 = vpop.f32.mrb[0].mxu0
  %1252 = vmatprep.mubr.bf16.mxu0 %v889
  %1253 = vmatmul.mubr.bf16.gmra.mrb[0].mxu0 %v888
  %v1254 = vpop.f32.mrb[0].mxu0
  %v1255 = vadd.f32 0.0, %v1254
  %v1256 = vpop.f32.mrb[0].mxu0
  %v1257 = vpop.f32.mrb[0].mxu0
  %v1258 = vadd.f32 0.0, %v1257
  %v1259 = vpop.f32.mrb[0].mxu0
  %1260 = vmatprep.mubr.bf16.mxu0 %v893
  %1261 = vmatmul.mubr.bf16.gmra.mrb[0].mxu0 %v892
  %v1262 = vpop.f32.mrb[0].mxu0
  %v1263 = vadd.f32 0.0, %v1262
  %v1264 = vpop.f32.mrb[0].mxu0
  %v1265 = vpop.f32.mrb[0].mxu0
  %v1266 = vadd.f32 0.0, %v1265
  %v1267 = vpop.f32.mrb[0].mxu0
  %1268 = vmatprep.mubr.bf16.mxu0 %v897
  %1269 = vmatmul.mubr.bf16.gmra.mrb[0].mxu0 %v896
  %v1270 = vpop.f32.mrb[0].mxu0
  %v1271 = vadd.f32 0.0, %v1270
  %v1272 = vpop.f32.mrb[0].mxu0
  %v1273 = vpop.f32.mrb[0].mxu0
  %v1274 = vadd.f32 0.0, %v1273
  %v1275 = vpop.f32.mrb[0].mxu0
  %1276 = vmatprep.mubr.bf16.mxu0 %v901
  %1277 = vmatmul.mubr.bf16.gmra.mrb[0].mxu0 %v900
  %v1278 = vpop.f32.mrb[0].mxu0
  %v1279 = vadd.f32 0.0, %v1278
  %v1280 = vpop.f32.mrb[0].mxu0
  %v1281 = vpop.f32.mrb[0].mxu0
  %v1282 = vadd.f32 0.0, %v1281
  %v1283 = vpop.f32.mrb[0].mxu0
  %1284 = vmatprep.mubr.bf16.mxu0 %v905
  %1285 = vmatmul.mubr.bf16.gmra.mrb[0].mxu0 %v904
  %v1286 = vpop.f32.mrb[0].mxu0
  %v1287 = vadd.f32 0.0, %v1286
  %v1288 = vpop.f32.mrb[0].mxu0
  %v1289 = vpop.f32.mrb[0].mxu0
  %v1290 = vadd.f32 0.0, %v1289
  %v1291 = vpop.f32.mrb[0].mxu0
  %1292 = vmatprep.mubr.bf16.mxu0 %v909
  %1293 = vmatmul.mubr.bf16.gmra.mrb[0].mxu0 %v908
  %v1294 = vpop.f32.mrb[0].mxu0
  %v1295 = vadd.f32 0.0, %v1294
  %v1296 = vpop.f32.mrb[0].mxu0
  %v1297 = vpop.f32.mrb[0].mxu0
  %v1298 = vadd.f32 0.0, %v1297
  %v1299 = vpop.f32.mrb[0].mxu0
  %1300 = vmatprep.mubr.bf16.mxu0 %v913
  %1301 = vmatmul.mubr.bf16.gmra.mrb[0].mxu0 %v912
  %v1302 = vpop.f32.mrb[0].mxu0
  %v1303 = vadd.f32 0.0, %v1302
  %v1304 = vpop.f32.mrb[0].mxu0
  %v1305 = vpop.f32.mrb[0].mxu0
  %v1306 = vadd.f32 0.0, %v1305
  %v1307 = vpop.f32.mrb[0].mxu0
  %1308 = vmatprep.mubr.bf16.mxu0 %v917
  %1309 = vmatmul.mubr.bf16.gmra.mrb[0].mxu0 %v916
  %v1310 = vpop.f32.mrb[0].mxu0
  %v1311 = vadd.f32 0.0, %v1310
  %v1312 = vpop.f32.mrb[0].mxu0
  %v1313 = vpop.f32.mrb[0].mxu0
  %v1314 = vadd.f32 0.0, %v1313
  %v1315 = vpop.f32.mrb[0].mxu0
  %1316 = vmatprep.mubr.bf16.mxu0 %v921
  %1317 = vmatmul.mubr.bf16.gmra.mrb[0].mxu0 %v920
  %v1318 = vpop.f32.mrb[0].mxu0
  %v1319 = vadd.f32 0.0, %v1318
  %v1320 = vpop.f32.mrb[0].mxu0
  %v1321 = vpop.f32.mrb[0].mxu0
  %v1322 = vadd.f32 0.0, %v1321
  %v1323 = vpop.f32.mrb[0].mxu0
  %1324 = vmatprep.mubr.bf16.mxu0 %v925
  %1325 = vmatmul.mubr.bf16.gmra.mrb[0].mxu0 %v924
  %v1326 = vpop.f32.mrb[0].mxu0
  %v1327 = vadd.f32 0.0, %v1326
  %v1328 = vpop.f32.mrb[0].mxu0
  %v1329 = vpop.f32.mrb[0].mxu0
  %v1330 = vadd.f32 0.0, %v1329
  %v1331 = vpop.f32.mrb[0].mxu0
  %1332 = vmatprep.mubr.bf16.mxu0 %v929
  %1333 = vmatmul.mubr.bf16.gmra.mrb[0].mxu0 %v928
  %v1334 = vpop.f32.mrb[0].mxu0
  %v1335 = vadd.f32 0.0, %v1334
  %v1336 = vpop.f32.mrb[0].mxu0
  %v1337 = vpop.f32.mrb[0].mxu0
  %v1338 = vadd.f32 0.0, %v1337
  %v1339 = vpop.f32.mrb[0].mxu0
  %1340 = vmatprep.mubr.bf16.mxu0 %v933
  %1341 = vmatmul.mubr.bf16.gmra.mrb[0].mxu0 %v932
  %v1342 = vpop.f32.mrb[0].mxu0
  %v1343 = vadd.f32 0.0, %v1342
  %v1344 = vpop.f32.mrb[0].mxu0
  %v1345 = vpop.f32.mrb[0].mxu0
  %v1346 = vadd.f32 0.0, %v1345
  %v1347 = vpop.f32.mrb[0].mxu0
  %1348 = vmatprep.mubr.bf16.mxu0 %v937
  %1349 = vmatmul.mubr.bf16.gmra.mrb[0].mxu0 %v936
  %v1350 = vpop.f32.mrb[0].mxu0
  %v1351 = vadd.f32 0.0, %v1350
  %v1352 = vpop.f32.mrb[0].mxu0
  %v1353 = vpop.f32.mrb[0].mxu0
  %v1354 = vadd.f32 0.0, %v1353
  %v1355 = vpop.f32.mrb[0].mxu0
  %1356 = vdwg.mxu0
  %1357 = vmatprep.subr.bf16.mxu0 0
  %1358 = vmatpush1.bf16.msra.mxu0 %v412
  %1359 = vmatprep.subr.bf16.mxu0 0
  %1360 = vmatpush1.bf16.msra.mxu0 %v413
  %1361 = vmatprep.subr.bf16.mxu0 0
  %1362 = vmatpush1.bf16.msra.mxu0 %v414
  %1363 = vmatprep.subr.bf16.mxu0 0
  %1364 = vmatpush1.bf16.msra.mxu0 %v415
  %1365 = vmatprep.subr.bf16.mxu0 0
  %1366 = vmatpush1.bf16.msra.mxu0 %v416
  %1367 = vmatprep.subr.bf16.mxu0 0
  %1368 = vmatpush1.bf16.msra.mxu0 %v417
  %1369 = vmatprep.subr.bf16.mxu0 0
  %1370 = vmatpush1.bf16.msra.mxu0 %v418
  %1371 = vmatprep.subr.bf16.mxu0 0
  %1372 = vmatpush1.bf16.msra.mxu0 %v419
  %1373 = vmatprep.subr.bf16.mxu0 0
  %1374 = vmatpush1.bf16.msra.mxu0 %v420
  %1375 = vmatprep.subr.bf16.mxu0 0
  %1376 = vmatpush1.bf16.msra.mxu0 %v421
  %1377 = vmatprep.subr.bf16.mxu0 0
  %1378 = vmatpush1.bf16.msra.mxu0 %v422
  %1379 = vmatprep.subr.bf16.mxu0 0
  %1380 = vmatpush1.bf16.msra.mxu0 %v423
  %1381 = vmatprep.subr.bf16.mxu0 0
  %1382 = vmatpush1.bf16.msra.mxu0 %v424
  %1383 = vmatprep.subr.bf16.mxu0 0
  %1384 = vmatpush1.bf16.msra.mxu0 %v425
  %1385 = vmatprep.subr.bf16.mxu0 0
  %1386 = vmatpush1.bf16.msra.mxu0 %v426
  %1387 = vmatprep.subr.bf16.mxu0 0
  %1388 = vmatpush1.bf16.msra.mxu0 %v427
  %1389 = vmatprep.mubr.bf16.mxu0 %v815
  %1390 = vmatmul.mubr.bf16.gmra.mrb[0].mxu0 %v814
  %v1391 = vpop.f32.mrb[0].mxu0
  %v1392 = vadd.f32 %v1103, %v1391
  %v1393 = vpop.f32.mrb[0].mxu0
  %v1394 = vpop.f32.mrb[0].mxu0
  %v1395 = vadd.f32 %v1106, %v1394
  %v1396 = vpop.f32.mrb[0].mxu0
  %1397 = vmatprep.mubr.bf16.mxu0 %v819
  %1398 = vmatmul.mubr.bf16.gmra.mrb[0].mxu0 %v818
  %v1399 = vpop.f32.mrb[0].mxu0
  %v1400 = vadd.f32 %v1111, %v1399
  %v1401 = vpop.f32.mrb[0].mxu0
  %v1402 = vpop.f32.mrb[0].mxu0
  %v1403 = vadd.f32 %v1114, %v1402
  %v1404 = vpop.f32.mrb[0].mxu0
  %1405 = vmatprep.mubr.bf16.mxu0 %v823
  %1406 = vmatmul.mubr.bf16.gmra.mrb[0].mxu0 %v822
  %v1407 = vpop.f32.mrb[0].mxu0
  %v1408 = vadd.f32 %v1119, %v1407
  %v1409 = vpop.f32.mrb[0].mxu0
  %v1410 = vpop.f32.mrb[0].mxu0
  %v1411 = vadd.f32 %v1122, %v1410
  %v1412 = vpop.f32.mrb[0].mxu0
  %1413 = vmatprep.mubr.bf16.mxu0 %v827
  %1414 = vmatmul.mubr.bf16.gmra.mrb[0].mxu0 %v826
  %v1415 = vpop.f32.mrb[0].mxu0
  %v1416 = vadd.f32 %v1127, %v1415
  %v1417 = vpop.f32.mrb[0].mxu0
  %v1418 = vpop.f32.mrb[0].mxu0
  %v1419 = vadd.f32 %v1130, %v1418
  %v1420 = vpop.f32.mrb[0].mxu0
  %1421 = vmatprep.mubr.bf16.mxu0 %v831
  %1422 = vmatmul.mubr.bf16.gmra.mrb[0].mxu0 %v830
  %v1423 = vpop.f32.mrb[0].mxu0
  %v1424 = vadd.f32 %v1135, %v1423
  %v1425 = vpop.f32.mrb[0].mxu0
  %v1426 = vpop.f32.mrb[0].mxu0
  %v1427 = vadd.f32 %v1138, %v1426
  %v1428 = vpop.f32.mrb[0].mxu0
  %1429 = vmatprep.mubr.bf16.mxu0 %v835
  %1430 = vmatmul.mubr.bf16.gmra.mrb[0].mxu0 %v834
  %v1431 = vpop.f32.mrb[0].mxu0
  %v1432 = vadd.f32 %v1143, %v1431
  %v1433 = vpop.f32.mrb[0].mxu0
  %v1434 = vpop.f32.mrb[0].mxu0
  %v1435 = vadd.f32 %v1146, %v1434
  %v1436 = vpop.f32.mrb[0].mxu0
  %1437 = vmatprep.mubr.bf16.mxu0 %v839
  %1438 = vmatmul.mubr.bf16.gmra.mrb[0].mxu0 %v838
  %v1439 = vpop.f32.mrb[0].mxu0
  %v1440 = vadd.f32 %v1151, %v1439
  %v1441 = vpop.f32.mrb[0].mxu0
  %v1442 = vpop.f32.mrb[0].mxu0
  %v1443 = vadd.f32 %v1154, %v1442
  %v1444 = vpop.f32.mrb[0].mxu0
  %1445 = vmatprep.mubr.bf16.mxu0 %v843
  %1446 = vmatmul.mubr.bf16.gmra.mrb[0].mxu0 %v842
  %v1447 = vpop.f32.mrb[0].mxu0
  %v1448 = vadd.f32 %v1159, %v1447
  %v1449 = vpop.f32.mrb[0].mxu0
  %v1450 = vpop.f32.mrb[0].mxu0
  %v1451 = vadd.f32 %v1162, %v1450
  %v1452 = vpop.f32.mrb[0].mxu0
  %1453 = vmatprep.mubr.bf16.mxu0 %v847
  %1454 = vmatmul.mubr.bf16.gmra.mrb[0].mxu0 %v846
  %v1455 = vpop.f32.mrb[0].mxu0
  %v1456 = vadd.f32 %v1167, %v1455
  %v1457 = vpop.f32.mrb[0].mxu0
  %v1458 = vpop.f32.mrb[0].mxu0
  %v1459 = vadd.f32 %v1170, %v1458
  %v1460 = vpop.f32.mrb[0].mxu0
  %1461 = vmatprep.mubr.bf16.mxu0 %v851
  %1462 = vmatmul.mubr.bf16.gmra.mrb[0].mxu0 %v850
  %v1463 = vpop.f32.mrb[0].mxu0
  %v1464 = vadd.f32 %v1175, %v1463
  %v1465 = vpop.f32.mrb[0].mxu0
  %v1466 = vpop.f32.mrb[0].mxu0
  %v1467 = vadd.f32 %v1178, %v1466
  %v1468 = vpop.f32.mrb[0].mxu0
  %1469 = vmatprep.mubr.bf16.mxu0 %v855
  %1470 = vmatmul.mubr.bf16.gmra.mrb[0].mxu0 %v854
  %v1471 = vpop.f32.mrb[0].mxu0
  %v1472 = vadd.f32 %v1183, %v1471
  %v1473 = vpop.f32.mrb[0].mxu0
  %v1474 = vpop.f32.mrb[0].mxu0
  %v1475 = vadd.f32 %v1186, %v1474
  %v1476 = vpop.f32.mrb[0].mxu0
  %1477 = vmatprep.mubr.bf16.mxu0 %v859
  %1478 = vmatmul.mubr.bf16.gmra.mrb[0].mxu0 %v858
  %v1479 = vpop.f32.mrb[0].mxu0
  %v1480 = vadd.f32 %v1191, %v1479
  %v1481 = vpop.f32.mrb[0].mxu0
  %v1482 = vpop.f32.mrb[0].mxu0
  %v1483 = vadd.f32 %v1194, %v1482
  %v1484 = vpop.f32.mrb[0].mxu0
  %1485 = vmatprep.mubr.bf16.mxu0 %v863
  %1486 = vmatmul.mubr.bf16.gmra.mrb[0].mxu0 %v862
  %v1487 = vpop.f32.mrb[0].mxu0
  %v1488 = vadd.f32 %v1199, %v1487
  %v1489 = vpop.f32.mrb[0].mxu0
  %v1490 = vpop.f32.mrb[0].mxu0
  %v1491 = vadd.f32 %v1202, %v1490
  %v1492 = vpop.f32.mrb[0].mxu0
  %1493 = vmatprep.mubr.bf16.mxu0 %v867
  %1494 = vmatmul.mubr.bf16.gmra.mrb[0].mxu0 %v866
  %v1495 = vpop.f32.mrb[0].mxu0
  %v1496 = vadd.f32 %v1207, %v1495
  %v1497 = vpop.f32.mrb[0].mxu0
  %v1498 = vpop.f32.mrb[0].mxu0
  %v1499 = vadd.f32 %v1210, %v1498
  %v1500 = vpop.f32.mrb[0].mxu0
  %1501 = vmatprep.mubr.bf16.mxu0 %v871
  %1502 = vmatmul.mubr.bf16.gmra.mrb[0].mxu0 %v870
  %v1503 = vpop.f32.mrb[0].mxu0
  %v1504 = vadd.f32 %v1215, %v1503
  %v1505 = vpop.f32.mrb[0].mxu0
  %v1506 = vpop.f32.mrb[0].mxu0
  %v1507 = vadd.f32 %v1218, %v1506
  %v1508 = vpop.f32.mrb[0].mxu0
  %1509 = vmatprep.mubr.bf16.mxu0 %v875
  %1510 = vmatmul.mubr.bf16.gmra.mrb[0].mxu0 %v874
  %v1511 = vpop.f32.mrb[0].mxu0
  %v1512 = vadd.f32 %v1223, %v1511
  %v1513 = vpop.f32.mrb[0].mxu0
  %v1514 = vpop.f32.mrb[0].mxu0
  %v1515 = vadd.f32 %v1226, %v1514
  %v1516 = vpop.f32.mrb[0].mxu0
  %1517 = vmatprep.mubr.bf16.mxu0 %v879
  %1518 = vmatmul.mubr.bf16.gmra.mrb[0].mxu0 %v878
  %v1519 = vpop.f32.mrb[0].mxu0
  %v1520 = vadd.f32 %v1231, %v1519
  %v1521 = vpop.f32.mrb[0].mxu0
  %v1522 = vpop.f32.mrb[0].mxu0
  %v1523 = vadd.f32 %v1234, %v1522
  %v1524 = vpop.f32.mrb[0].mxu0
  %1525 = vmatprep.mubr.bf16.mxu0 %v883
  %1526 = vmatmul.mubr.bf16.gmra.mrb[0].mxu0 %v882
  %v1527 = vpop.f32.mrb[0].mxu0
  %v1528 = vadd.f32 %v1239, %v1527
  %v1529 = vpop.f32.mrb[0].mxu0
  %v1530 = vpop.f32.mrb[0].mxu0
  %v1531 = vadd.f32 %v1242, %v1530
  %v1532 = vpop.f32.mrb[0].mxu0
  %1533 = vmatprep.mubr.bf16.mxu0 %v887
  %1534 = vmatmul.mubr.bf16.gmra.mrb[0].mxu0 %v886
  %v1535 = vpop.f32.mrb[0].mxu0
  %v1536 = vadd.f32 %v1247, %v1535
  %v1537 = vpop.f32.mrb[0].mxu0
  %v1538 = vpop.f32.mrb[0].mxu0
  %v1539 = vadd.f32 %v1250, %v1538
  %v1540 = vpop.f32.mrb[0].mxu0
  %1541 = vmatprep.mubr.bf16.mxu0 %v891
  %1542 = vmatmul.mubr.bf16.gmra.mrb[0].mxu0 %v890
  %v1543 = vpop.f32.mrb[0].mxu0
  %v1544 = vadd.f32 %v1255, %v1543
  %v1545 = vpop.f32.mrb[0].mxu0
  %v1546 = vpop.f32.mrb[0].mxu0
  %v1547 = vadd.f32 %v1258, %v1546
  %v1548 = vpop.f32.mrb[0].mxu0
  %1549 = vmatprep.mubr.bf16.mxu0 %v895
  %1550 = vmatmul.mubr.bf16.gmra.mrb[0].mxu0 %v894
  %v1551 = vpop.f32.mrb[0].mxu0
  %v1552 = vadd.f32 %v1263, %v1551
  %v1553 = vpop.f32.mrb[0].mxu0
  %v1554 = vpop.f32.mrb[0].mxu0
  %v1555 = vadd.f32 %v1266, %v1554
  %v1556 = vpop.f32.mrb[0].mxu0
  %1557 = vmatprep.mubr.bf16.mxu0 %v899
  %1558 = vmatmul.mubr.bf16.gmra.mrb[0].mxu0 %v898
  %v1559 = vpop.f32.mrb[0].mxu0
  %v1560 = vadd.f32 %v1271, %v1559
  %v1561 = vpop.f32.mrb[0].mxu0
  %v1562 = vpop.f32.mrb[0].mxu0
  %v1563 = vadd.f32 %v1274, %v1562
  %v1564 = vpop.f32.mrb[0].mxu0
  %1565 = vmatprep.mubr.bf16.mxu0 %v903
  %1566 = vmatmul.mubr.bf16.gmra.mrb[0].mxu0 %v902
  %v1567 = vpop.f32.mrb[0].mxu0
  %v1568 = vadd.f32 %v1279, %v1567
  %v1569 = vpop.f32.mrb[0].mxu0
  %v1570 = vpop.f32.mrb[0].mxu0
  %v1571 = vadd.f32 %v1282, %v1570
  %v1572 = vpop.f32.mrb[0].mxu0
  %1573 = vmatprep.mubr.bf16.mxu0 %v907
  %1574 = vmatmul.mubr.bf16.gmra.mrb[0].mxu0 %v906
  %v1575 = vpop.f32.mrb[0].mxu0
  %v1576 = vadd.f32 %v1287, %v1575
  %v1577 = vpop.f32.mrb[0].mxu0
  %v1578 = vpop.f32.mrb[0].mxu0
  %v1579 = vadd.f32 %v1290, %v1578
  %v1580 = vpop.f32.mrb[0].mxu0
  %1581 = vmatprep.mubr.bf16.mxu0 %v911
  %1582 = vmatmul.mubr.bf16.gmra.mrb[0].mxu0 %v910
  %v1583 = vpop.f32.mrb[0].mxu0
  %v1584 = vadd.f32 %v1295, %v1583
  %v1585 = vpop.f32.mrb[0].mxu0
  %v1586 = vpop.f32.mrb[0].mxu0
  %v1587 = vadd.f32 %v1298, %v1586
  %v1588 = vpop.f32.mrb[0].mxu0
  %1589 = vmatprep.mubr.bf16.mxu0 %v915
  %1590 = vmatmul.mubr.bf16.gmra.mrb[0].mxu0 %v914
  %v1591 = vpop.f32.mrb[0].mxu0
  %v1592 = vadd.f32 %v1303, %v1591
  %v1593 = vpop.f32.mrb[0].mxu0
  %v1594 = vpop.f32.mrb[0].mxu0
  %v1595 = vadd.f32 %v1306, %v1594
  %v1596 = vpop.f32.mrb[0].mxu0
  %1597 = vmatprep.mubr.bf16.mxu0 %v919
  %1598 = vmatmul.mubr.bf16.gmra.mrb[0].mxu0 %v918
  %v1599 = vpop.f32.mrb[0].mxu0
  %v1600 = vadd.f32 %v1311, %v1599
  %v1601 = vpop.f32.mrb[0].mxu0
  %v1602 = vpop.f32.mrb[0].mxu0
  %v1603 = vadd.f32 %v1314, %v1602
  %v1604 = vpop.f32.mrb[0].mxu0
  %1605 = vmatprep.mubr.bf16.mxu0 %v923
  %1606 = vmatmul.mubr.bf16.gmra.mrb[0].mxu0 %v922
  %v1607 = vpop.f32.mrb[0].mxu0
  %v1608 = vadd.f32 %v1319, %v1607
  %v1609 = vpop.f32.mrb[0].mxu0
  %v1610 = vpop.f32.mrb[0].mxu0
  %v1611 = vadd.f32 %v1322, %v1610
  %v1612 = vpop.f32.mrb[0].mxu0
  %1613 = vmatprep.mubr.bf16.mxu0 %v927
  %1614 = vmatmul.mubr.bf16.gmra.mrb[0].mxu0 %v926
  %v1615 = vpop.f32.mrb[0].mxu0
  %v1616 = vadd.f32 %v1327, %v1615
  %v1617 = vpop.f32.mrb[0].mxu0
  %v1618 = vpop.f32.mrb[0].mxu0
  %v1619 = vadd.f32 %v1330, %v1618
  %v1620 = vpop.f32.mrb[0].mxu0
  %1621 = vmatprep.mubr.bf16.mxu0 %v931
  %1622 = vmatmul.mubr.bf16.gmra.mrb[0].mxu0 %v930
  %v1623 = vpop.f32.mrb[0].mxu0
  %v1624 = vadd.f32 %v1335, %v1623
  %v1625 = vpop.f32.mrb[0].mxu0
  %v1626 = vpop.f32.mrb[0].mxu0
  %v1627 = vadd.f32 %v1338, %v1626
  %v1628 = vpop.f32.mrb[0].mxu0
  %1629 = vmatprep.mubr.bf16.mxu0 %v935
  %1630 = vmatmul.mubr.bf16.gmra.mrb[0].mxu0 %v934
  %v1631 = vpop.f32.mrb[0].mxu0
  %v1632 = vadd.f32 %v1343, %v1631
  %v1633 = vpop.f32.mrb[0].mxu0
  %v1634 = vpop.f32.mrb[0].mxu0
  %v1635 = vadd.f32 %v1346, %v1634
  %v1636 = vpop.f32.mrb[0].mxu0
  %1637 = vmatprep.mubr.bf16.mxu0 %v939
  %1638 = vmatmul.mubr.bf16.gmra.mrb[0].mxu0 %v938
  %v1639 = vpop.f32.mrb[0].mxu0
  %v1640 = vadd.f32 %v1351, %v1639
  %v1641 = vpop.f32.mrb[0].mxu0
  %v1642 = vpop.f32.mrb[0].mxu0
  %v1643 = vadd.f32 %v1354, %v1642
  %v1644 = vpop.f32.mrb[0].mxu0
  %1645 = vdwg.mxu0
  %v1646 = vld [vmem:[%s2] sm:$0xff]
  %v1647 = vld [vmem:[%s2 + $0x8] sm:$0xff]
  %v1648 = vld [vmem:[%s2 + $0x10] sm:$0xff]
  %v1649 = vld [vmem:[%s2 + $0x18] sm:$0xff]
  %v1650 = vld [vmem:[%s2 + $0x20] sm:$0xff]
  %v1651 = vld [vmem:[%s2 + $0x28] sm:$0xff]
  %v1652 = vld [vmem:[%s2 + $0x30] sm:$0xff]
  %v1653 = vld [vmem:[%s2 + $0x38] sm:$0xff]
  %v1654 = vld [vmem:[%s2 + $0x40] sm:$0xff]
  %v1655 = vld [vmem:[%s2 + $0x48] sm:$0xff]
  %v1656 = vld [vmem:[%s2 + $0x50] sm:$0xff]
  %v1657 = vld [vmem:[%s2 + $0x58] sm:$0xff]
  %v1658 = vld [vmem:[%s2 + $0x60] sm:$0xff]
  %v1659 = vld [vmem:[%s2 + $0x68] sm:$0xff]
  %v1660 = vld [vmem:[%s2 + $0x70] sm:$0xff]
  %v1661 = vld [vmem:[%s2 + $0x78] sm:$0xff]
  %v1662 = vld [vmem:[%s2 + $0x80] sm:$0xff]
  %v1663 = vld [vmem:[%s2 + $0x88] sm:$0xff]
  %v1664 = vld [vmem:[%s2 + $0x90] sm:$0xff]
  %v1665 = vld [vmem:[%s2 + $0x98] sm:$0xff]
  %v1666 = vld [vmem:[%s2 + $0xa0] sm:$0xff]
  %v1667 = vld [vmem:[%s2 + $0xa8] sm:$0xff]
  %v1668 = vld [vmem:[%s2 + $0xb0] sm:$0xff]
  %v1669 = vld [vmem:[%s2 + $0xb8] sm:$0xff]
  %v1670 = vld [vmem:[%s2 + $0xc0] sm:$0xff]
  %v1671 = vld [vmem:[%s2 + $0xc8] sm:$0xff]
  %v1672 = vld [vmem:[%s2 + $0xd0] sm:$0xff]
  %v1673 = vld [vmem:[%s2 + $0xd8] sm:$0xff]
  %v1674 = vld [vmem:[%s2 + $0xe0] sm:$0xff]
  %v1675 = vld [vmem:[%s2 + $0xe8] sm:$0xff]
  %v1676 = vld [vmem:[%s2 + $0xf0] sm:$0xff]
  %v1677 = vld [vmem:[%s2 + $0xf8] sm:$0xff]
  %v1678 = vld [vmem:[%s2 + $0x100] sm:$0xff]
  %v1679 = vld [vmem:[%s2 + $0x108] sm:$0xff]
  %v1680 = vld [vmem:[%s2 + $0x110] sm:$0xff]
  %v1681 = vld [vmem:[%s2 + $0x118] sm:$0xff]
  %v1682 = vld [vmem:[%s2 + $0x120] sm:$0xff]
  %v1683 = vld [vmem:[%s2 + $0x128] sm:$0xff]
  %v1684 = vld [vmem:[%s2 + $0x130] sm:$0xff]
  %v1685 = vld [vmem:[%s2 + $0x138] sm:$0xff]
  %v1686 = vld [vmem:[%s2 + $0x140] sm:$0xff]
  %v1687 = vld [vmem:[%s2 + $0x148] sm:$0xff]
  %v1688 = vld [vmem:[%s2 + $0x150] sm:$0xff]
  %v1689 = vld [vmem:[%s2 + $0x158] sm:$0xff]
  %v1690 = vld [vmem:[%s2 + $0x160] sm:$0xff]
  %v1691 = vld [vmem:[%s2 + $0x168] sm:$0xff]
  %v1692 = vld [vmem:[%s2 + $0x170] sm:$0xff]
  %v1693 = vld [vmem:[%s2 + $0x178] sm:$0xff]
  %v1694 = vld [vmem:[%s2 + $0x180] sm:$0xff]
  %v1695 = vld [vmem:[%s2 + $0x188] sm:$0xff]
  %v1696 = vld [vmem:[%s2 + $0x190] sm:$0xff]
  %v1697 = vld [vmem:[%s2 + $0x198] sm:$0xff]
  %v1698 = vld [vmem:[%s2 + $0x1a0] sm:$0xff]
  %v1699 = vld [vmem:[%s2 + $0x1a8] sm:$0xff]
  %v1700 = vld [vmem:[%s2 + $0x1b0] sm:$0xff]
  %v1701 = vld [vmem:[%s2 + $0x1b8] sm:$0xff]
  %v1702 = vld [vmem:[%s2 + $0x1c0] sm:$0xff]
  %v1703 = vld [vmem:[%s2 + $0x1c8] sm:$0xff]
  %v1704 = vld [vmem:[%s2 + $0x1d0] sm:$0xff]
  %v1705 = vld [vmem:[%s2 + $0x1d8] sm:$0xff]
  %v1706 = vld [vmem:[%s2 + $0x1e0] sm:$0xff]
  %v1707 = vld [vmem:[%s2 + $0x1e8] sm:$0xff]
  %v1708 = vld [vmem:[%s2 + $0x1f0] sm:$0xff]
  %v1709 = vld [vmem:[%s2 + $0x1f8] sm:$0xff]
  %v1710 = vadd.f32 %v1646, %v1392
  %v1711 = vadd.f32 %v1647, %v1395
  %v1712 = vadd.f32 %v1648, %v1400
  %v1713 = vadd.f32 %v1649, %v1403
  %v1714 = vadd.f32 %v1650, %v1408
  %v1715 = vadd.f32 %v1651, %v1411
  %v1716 = vadd.f32 %v1652, %v1416
  %v1717 = vadd.f32 %v1653, %v1419
  %v1718 = vadd.f32 %v1654, %v1424
  %v1719 = vadd.f32 %v1655, %v1427
  %v1720 = vadd.f32 %v1656, %v1432
  %v1721 = vadd.f32 %v1657, %v1435
  %v1722 = vadd.f32 %v1658, %v1440
  %v1723 = vadd.f32 %v1659, %v1443
  %v1724 = vadd.f32 %v1660, %v1448
  %v1725 = vadd.f32 %v1661, %v1451
  %v1726 = vadd.f32 %v1662, %v1456
  %v1727 = vadd.f32 %v1663, %v1459
  %v1728 = vadd.f32 %v1664, %v1464
  %v1729 = vadd.f32 %v1665, %v1467
  %v1730 = vadd.f32 %v1666, %v1472
  %v1731 = vadd.f32 %v1667, %v1475
  %v1732 = vadd.f32 %v1668, %v1480
  %v1733 = vadd.f32 %v1669, %v1483
  %v1734 = vadd.f32 %v1670, %v1488
  %v1735 = vadd.f32 %v1671, %v1491
  %v1736 = vadd.f32 %v1672, %v1496
  %v1737 = vadd.f32 %v1673, %v1499
  %v1738 = vadd.f32 %v1674, %v1504
  %v1739 = vadd.f32 %v1675, %v1507
  %v1740 = vadd.f32 %v1676, %v1512
  %v1741 = vadd.f32 %v1677, %v1515
  %v1742 = vadd.f32 %v1678, %v1520
  %v1743 = vadd.f32 %v1679, %v1523
  %v1744 = vadd.f32 %v1680, %v1528
  %v1745 = vadd.f32 %v1681, %v1531
  %v1746 = vadd.f32 %v1682, %v1536
  %v1747 = vadd.f32 %v1683, %v1539
  %v1748 = vadd.f32 %v1684, %v1544
  %v1749 = vadd.f32 %v1685, %v1547
  %v1750 = vadd.f32 %v1686, %v1552
  %v1751 = vadd.f32 %v1687, %v1555
  %v1752 = vadd.f32 %v1688, %v1560
  %v1753 = vadd.f32 %v1689, %v1563
  %v1754 = vadd.f32 %v1690, %v1568
  %v1755 = vadd.f32 %v1691, %v1571
  %v1756 = vadd.f32 %v1692, %v1576
  %v1757 = vadd.f32 %v1693, %v1579
  %v1758 = vadd.f32 %v1694, %v1584
  %v1759 = vadd.f32 %v1695, %v1587
  %v1760 = vadd.f32 %v1696, %v1592
  %v1761 = vadd.f32 %v1697, %v1595
  %v1762 = vadd.f32 %v1698, %v1600
  %v1763 = vadd.f32 %v1699, %v1603
  %v1764 = vadd.f32 %v1700, %v1608
  %v1765 = vadd.f32 %v1701, %v1611
  %v1766 = vadd.f32 %v1702, %v1616
  %v1767 = vadd.f32 %v1703, %v1619
  %v1768 = vadd.f32 %v1704, %v1624
  %v1769 = vadd.f32 %v1705, %v1627
  %v1770 = vadd.f32 %v1706, %v1632
  %v1771 = vadd.f32 %v1707, %v1635
  %v1772 = vadd.f32 %v1708, %v1640
  %v1773 = vadd.f32 %v1709, %v1643
  %1774 = vst [vmem:[%s2] sm:$0xff] %v1710
  %1775 = vst [vmem:[%s2 + $0x8] sm:$0xff] %v1711
  %1776 = vst [vmem:[%s2 + $0x10] sm:$0xff] %v1712
  %1777 = vst [vmem:[%s2 + $0x18] sm:$0xff] %v1713
  %1778 = vst [vmem:[%s2 + $0x20] sm:$0xff] %v1714
  %1779 = vst [vmem:[%s2 + $0x28] sm:$0xff] %v1715
  %1780 = vst [vmem:[%s2 + $0x30] sm:$0xff] %v1716
  %1781 = vst [vmem:[%s2 + $0x38] sm:$0xff] %v1717
  %1782 = vst [vmem:[%s2 + $0x40] sm:$0xff] %v1718
  %1783 = vst [vmem:[%s2 + $0x48] sm:$0xff] %v1719
  %1784 = vst [vmem:[%s2 + $0x50] sm:$0xff] %v1720
  %1785 = vst [vmem:[%s2 + $0x58] sm:$0xff] %v1721
  %1786 = vst [vmem:[%s2 + $0x60] sm:$0xff] %v1722
  %1787 = vst [vmem:[%s2 + $0x68] sm:$0xff] %v1723
  %1788 = vst [vmem:[%s2 + $0x70] sm:$0xff] %v1724
  %1789 = vst [vmem:[%s2 + $0x78] sm:$0xff] %v1725
  %1790 = vst [vmem:[%s2 + $0x80] sm:$0xff] %v1726
  %1791 = vst [vmem:[%s2 + $0x88] sm:$0xff] %v1727
  %1792 = vst [vmem:[%s2 + $0x90] sm:$0xff] %v1728
  %1793 = vst [vmem:[%s2 + $0x98] sm:$0xff] %v1729
  %1794 = vst [vmem:[%s2 + $0xa0] sm:$0xff] %v1730
  %1795 = vst [vmem:[%s2 + $0xa8] sm:$0xff] %v1731
  %1796 = vst [vmem:[%s2 + $0xb0] sm:$0xff] %v1732
  %1797 = vst [vmem:[%s2 + $0xb8] sm:$0xff] %v1733
  %1798 = vst [vmem:[%s2 + $0xc0] sm:$0xff] %v1734
  %1799 = vst [vmem:[%s2 + $0xc8] sm:$0xff] %v1735
  %1800 = vst [vmem:[%s2 + $0xd0] sm:$0xff] %v1736
  %1801 = vst [vmem:[%s2 + $0xd8] sm:$0xff] %v1737
  %1802 = vst [vmem:[%s2 + $0xe0] sm:$0xff] %v1738
  %1803 = vst [vmem:[%s2 + $0xe8] sm:$0xff] %v1739
  %1804 = vst [vmem:[%s2 + $0xf0] sm:$0xff] %v1740
  %1805 = vst [vmem:[%s2 + $0xf8] sm:$0xff] %v1741
  %1806 = vst [vmem:[%s2 + $0x100] sm:$0xff] %v1742
  %1807 = vst [vmem:[%s2 + $0x108] sm:$0xff] %v1743
  %1808 = vst [vmem:[%s2 + $0x110] sm:$0xff] %v1744
  %1809 = vst [vmem:[%s2 + $0x118] sm:$0xff] %v1745
  %1810 = vst [vmem:[%s2 + $0x120] sm:$0xff] %v1746
  %1811 = vst [vmem:[%s2 + $0x128] sm:$0xff] %v1747
  %1812 = vst [vmem:[%s2 + $0x130] sm:$0xff] %v1748
  %1813 = vst [vmem:[%s2 + $0x138] sm:$0xff] %v1749
  %1814 = vst [vmem:[%s2 + $0x140] sm:$0xff] %v1750
  %1815 = vst [vmem:[%s2 + $0x148] sm:$0xff] %v1751
  %1816 = vst [vmem:[%s2 + $0x150] sm:$0xff] %v1752
  %1817 = vst [vmem:[%s2 + $0x158] sm:$0xff] %v1753
  %1818 = vst [vmem:[%s2 + $0x160] sm:$0xff] %v1754
  %1819 = vst [vmem:[%s2 + $0x168] sm:$0xff] %v1755
  %1820 = vst [vmem:[%s2 + $0x170] sm:$0xff] %v1756
  %1821 = vst [vmem:[%s2 + $0x178] sm:$0xff] %v1757
  %1822 = vst [vmem:[%s2 + $0x180] sm:$0xff] %v1758
  %1823 = vst [vmem:[%s2 + $0x188] sm:$0xff] %v1759
  %1824 = vst [vmem:[%s2 + $0x190] sm:$0xff] %v1760
  %1825 = vst [vmem:[%s2 + $0x198] sm:$0xff] %v1761
  %1826 = vst [vmem:[%s2 + $0x1a0] sm:$0xff] %v1762
  %1827 = vst [vmem:[%s2 + $0x1a8] sm:$0xff] %v1763
  %1828 = vst [vmem:[%s2 + $0x1b0] sm:$0xff] %v1764
  %1829 = vst [vmem:[%s2 + $0x1b8] sm:$0xff] %v1765
  %1830 = vst [vmem:[%s2 + $0x1c0] sm:$0xff] %v1766
  %1831 = vst [vmem:[%s2 + $0x1c8] sm:$0xff] %v1767
  %1832 = vst [vmem:[%s2 + $0x1d0] sm:$0xff] %v1768
  %1833 = vst [vmem:[%s2 + $0x1d8] sm:$0xff] %v1769
  %1834 = vst [vmem:[%s2 + $0x1e0] sm:$0xff] %v1770
  %1835 = vst [vmem:[%s2 + $0x1e8] sm:$0xff] %v1771
  %1836 = vst [vmem:[%s2 + $0x1f0] sm:$0xff] %v1772
  %1837 = vst [vmem:[%s2 + $0x1f8] sm:$0xff] %v1773
  %v1838 = vpack.c.bf16 %v1395, %v1392
  %v1839 = vpack.c.bf16 %v1403, %v1400
  %v1840 = vpack.c.bf16 %v1411, %v1408
  %v1841 = vpack.c.bf16 %v1419, %v1416
  %v1842 = vpack.c.bf16 %v1427, %v1424
  %v1843 = vpack.c.bf16 %v1435, %v1432
  %v1844 = vpack.c.bf16 %v1443, %v1440
  %v1845 = vpack.c.bf16 %v1451, %v1448
  %v1846 = vpack.c.bf16 %v1459, %v1456
  %v1847 = vpack.c.bf16 %v1467, %v1464
  %v1848 = vpack.c.bf16 %v1475, %v1472
  %v1849 = vpack.c.bf16 %v1483, %v1480
  %v1850 = vpack.c.bf16 %v1491, %v1488
  %v1851 = vpack.c.bf16 %v1499, %v1496
  %v1852 = vpack.c.bf16 %v1507, %v1504
  %v1853 = vpack.c.bf16 %v1515, %v1512
  %v1854 = vpack.c.bf16 %v1523, %v1520
  %v1855 = vpack.c.bf16 %v1531, %v1528
  %v1856 = vpack.c.bf16 %v1539, %v1536
  %v1857 = vpack.c.bf16 %v1547, %v1544
  %v1858 = vpack.c.bf16 %v1555, %v1552
  %v1859 = vpack.c.bf16 %v1563, %v1560
  %v1860 = vpack.c.bf16 %v1571, %v1568
  %v1861 = vpack.c.bf16 %v1579, %v1576
  %v1862 = vpack.c.bf16 %v1587, %v1584
  %v1863 = vpack.c.bf16 %v1595, %v1592
  %v1864 = vpack.c.bf16 %v1603, %v1600
  %v1865 = vpack.c.bf16 %v1611, %v1608
  %v1866 = vpack.c.bf16 %v1619, %v1616
  %v1867 = vpack.c.bf16 %v1627, %v1624
  %v1868 = vpack.c.bf16 %v1635, %v1632
  %v1869 = vpack.c.bf16 %v1643, %v1640
  %1870 = vst [vmem:[#allocation2] sm:$0xff] %v1838
  %1871 = vst [vmem:[#allocation2 + $0x8] sm:$0xff] %v1839
  %1872 = vst [vmem:[#allocation2 + $0x10] sm:$0xff] %v1840
  %1873 = vst [vmem:[#allocation2 + $0x18] sm:$0xff] %v1841
  %1874 = vst [vmem:[#allocation2 + $0x20] sm:$0xff] %v1842
  %1875 = vst [vmem:[#allocation2 + $0x28] sm:$0xff] %v1843
  %1876 = vst [vmem:[#allocation2 + $0x30] sm:$0xff] %v1844
  %1877 = vst [vmem:[#allocation2 + $0x38] sm:$0xff] %v1845
  %1878 = vst [vmem:[#allocation2 + $0x40] sm:$0xff] %v1846
  %1879 = vst [vmem:[#allocation2 + $0x48] sm:$0xff] %v1847
  %1880 = vst [vmem:[#allocation2 + $0x50] sm:$0xff] %v1848
  %1881 = vst [vmem:[#allocation2 + $0x58] sm:$0xff] %v1849
  %1882 = vst [vmem:[#allocation2 + $0x60] sm:$0xff] %v1850
  %1883 = vst [vmem:[#allocation2 + $0x68] sm:$0xff] %v1851
  %1884 = vst [vmem:[#allocation2 + $0x70] sm:$0xff] %v1852
  %1885 = vst [vmem:[#allocation2 + $0x78] sm:$0xff] %v1853
  %1886 = vst [vmem:[#allocation2 + $0x80] sm:$0xff] %v1854
  %1887 = vst [vmem:[#allocation2 + $0x88] sm:$0xff] %v1855
  %1888 = vst [vmem:[#allocation2 + $0x90] sm:$0xff] %v1856
  %1889 = vst [vmem:[#allocation2 + $0x98] sm:$0xff] %v1857
  %1890 = vst [vmem:[#allocation2 + $0xa0] sm:$0xff] %v1858
  %1891 = vst [vmem:[#allocation2 + $0xa8] sm:$0xff] %v1859
  %1892 = vst [vmem:[#allocation2 + $0xb0] sm:$0xff] %v1860
  %1893 = vst [vmem:[#allocation2 + $0xb8] sm:$0xff] %v1861
  %1894 = vst [vmem:[#allocation2 + $0xc0] sm:$0xff] %v1862
  %1895 = vst [vmem:[#allocation2 + $0xc8] sm:$0xff] %v1863
  %1896 = vst [vmem:[#allocation2 + $0xd0] sm:$0xff] %v1864
  %1897 = vst [vmem:[#allocation2 + $0xd8] sm:$0xff] %v1865
  %1898 = vst [vmem:[#allocation2 + $0xe0] sm:$0xff] %v1866
  %1899 = vst [vmem:[#allocation2 + $0xe8] sm:$0xff] %v1867
  %1900 = vst [vmem:[#allocation2 + $0xf0] sm:$0xff] %v1868
  %1901 = vst [vmem:[#allocation2 + $0xf8] sm:$0xff] %v1869
  %v1902 = vld [vmem:[%s0] sm:$0xff]
  %v1903 = vld [vmem:[%s0 + $0x8] sm:$0xff]
  %v1904 = vld [vmem:[%s0 + $0x10] sm:$0xff]
  %v1905 = vld [vmem:[%s0 + $0x18] sm:$0xff]
  %v1906 = vld [vmem:[%s0 + $0x20] sm:$0xff]
  %v1907 = vld [vmem:[%s0 + $0x28] sm:$0xff]
  %v1908 = vld [vmem:[%s0 + $0x30] sm:$0xff]
  %v1909 = vld [vmem:[%s0 + $0x38] sm:$0xff]
  %v1910 = vld [vmem:[%s0 + $0x40] sm:$0xff]
  %v1911 = vld [vmem:[%s0 + $0x48] sm:$0xff]
  %v1912 = vld [vmem:[%s0 + $0x50] sm:$0xff]
  %v1913 = vld [vmem:[%s0 + $0x58] sm:$0xff]
  %v1914 = vld [vmem:[%s0 + $0x60] sm:$0xff]
  %v1915 = vld [vmem:[%s0 + $0x68] sm:$0xff]
  %v1916 = vld [vmem:[%s0 + $0x70] sm:$0xff]
  %v1917 = vld [vmem:[%s0 + $0x78] sm:$0xff]
  %v1918 = vld [vmem:[%s0 + $0x80] sm:$0xff]
  %v1919 = vld [vmem:[%s0 + $0x88] sm:$0xff]
  %v1920 = vld [vmem:[%s0 + $0x90] sm:$0xff]
  %v1921 = vld [vmem:[%s0 + $0x98] sm:$0xff]
  %v1922 = vld [vmem:[%s0 + $0xa0] sm:$0xff]
  %v1923 = vld [vmem:[%s0 + $0xa8] sm:$0xff]
  %v1924 = vld [vmem:[%s0 + $0xb0] sm:$0xff]
  %v1925 = vld [vmem:[%s0 + $0xb8] sm:$0xff]
  %v1926 = vld [vmem:[%s0 + $0xc0] sm:$0xff]
  %v1927 = vld [vmem:[%s0 + $0xc8] sm:$0xff]
  %v1928 = vld [vmem:[%s0 + $0xd0] sm:$0xff]
  %v1929 = vld [vmem:[%s0 + $0xd8] sm:$0xff]
  %v1930 = vld [vmem:[%s0 + $0xe0] sm:$0xff]
  %v1931 = vld [vmem:[%s0 + $0xe8] sm:$0xff]
  %v1932 = vld [vmem:[%s0 + $0xf0] sm:$0xff]
  %v1933 = vld [vmem:[%s0 + $0xf8] sm:$0xff]
  %v1934 = vld [vmem:[%s0 + $0x100] sm:$0xff]
  %v1935 = vld [vmem:[%s0 + $0x108] sm:$0xff]
  %v1936 = vld [vmem:[%s0 + $0x110] sm:$0xff]
  %v1937 = vld [vmem:[%s0 + $0x118] sm:$0xff]
  %v1938 = vld [vmem:[%s0 + $0x120] sm:$0xff]
  %v1939 = vld [vmem:[%s0 + $0x128] sm:$0xff]
  %v1940 = vld [vmem:[%s0 + $0x130] sm:$0xff]
  %v1941 = vld [vmem:[%s0 + $0x138] sm:$0xff]
  %v1942 = vld [vmem:[%s0 + $0x140] sm:$0xff]
  %v1943 = vld [vmem:[%s0 + $0x148] sm:$0xff]
  %v1944 = vld [vmem:[%s0 + $0x150] sm:$0xff]
  %v1945 = vld [vmem:[%s0 + $0x158] sm:$0xff]
  %v1946 = vld [vmem:[%s0 + $0x160] sm:$0xff]
  %v1947 = vld [vmem:[%s0 + $0x168] sm:$0xff]
  %v1948 = vld [vmem:[%s0 + $0x170] sm:$0xff]
  %v1949 = vld [vmem:[%s0 + $0x178] sm:$0xff]
  %v1950 = vld [vmem:[%s0 + $0x180] sm:$0xff]
  %v1951 = vld [vmem:[%s0 + $0x188] sm:$0xff]
  %v1952 = vld [vmem:[%s0 + $0x190] sm:$0xff]
  %v1953 = vld [vmem:[%s0 + $0x198] sm:$0xff]
  %v1954 = vld [vmem:[%s0 + $0x1a0] sm:$0xff]
  %v1955 = vld [vmem:[%s0 + $0x1a8] sm:$0xff]
  %v1956 = vld [vmem:[%s0 + $0x1b0] sm:$0xff]
  %v1957 = vld [vmem:[%s0 + $0x1b8] sm:$0xff]
  %v1958 = vld [vmem:[%s0 + $0x1c0] sm:$0xff]
  %v1959 = vld [vmem:[%s0 + $0x1c8] sm:$0xff]
  %v1960 = vld [vmem:[%s0 + $0x1d0] sm:$0xff]
  %v1961 = vld [vmem:[%s0 + $0x1d8] sm:$0xff]
  %v1962 = vld [vmem:[%s0 + $0x1e0] sm:$0xff]
  %v1963 = vld [vmem:[%s0 + $0x1e8] sm:$0xff]
  %v1964 = vld [vmem:[%s0 + $0x1f0] sm:$0xff]
  %v1965 = vld [vmem:[%s0 + $0x1f8] sm:$0xff]
  %v1966 = vld [vmem:[%s0 + $0x200] sm:$0xff]
  %v1967 = vld [vmem:[%s0 + $0x208] sm:$0xff]
  %v1968 = vld [vmem:[%s0 + $0x210] sm:$0xff]
  %v1969 = vld [vmem:[%s0 + $0x218] sm:$0xff]
  %v1970 = vld [vmem:[%s0 + $0x220] sm:$0xff]
  %v1971 = vld [vmem:[%s0 + $0x228] sm:$0xff]
  %v1972 = vld [vmem:[%s0 + $0x230] sm:$0xff]
  %v1973 = vld [vmem:[%s0 + $0x238] sm:$0xff]
  %v1974 = vld [vmem:[%s0 + $0x240] sm:$0xff]
  %v1975 = vld [vmem:[%s0 + $0x248] sm:$0xff]
  %v1976 = vld [vmem:[%s0 + $0x250] sm:$0xff]
  %v1977 = vld [vmem:[%s0 + $0x258] sm:$0xff]
  %v1978 = vld [vmem:[%s0 + $0x260] sm:$0xff]
  %v1979 = vld [vmem:[%s0 + $0x268] sm:$0xff]
  %v1980 = vld [vmem:[%s0 + $0x270] sm:$0xff]
  %v1981 = vld [vmem:[%s0 + $0x278] sm:$0xff]
  %v1982 = vld [vmem:[%s0 + $0x280] sm:$0xff]
  %v1983 = vld [vmem:[%s0 + $0x288] sm:$0xff]
  %v1984 = vld [vmem:[%s0 + $0x290] sm:$0xff]
  %v1985 = vld [vmem:[%s0 + $0x298] sm:$0xff]
  %v1986 = vld [vmem:[%s0 + $0x2a0] sm:$0xff]
  %v1987 = vld [vmem:[%s0 + $0x2a8] sm:$0xff]
  %v1988 = vld [vmem:[%s0 + $0x2b0] sm:$0xff]
  %v1989 = vld [vmem:[%s0 + $0x2b8] sm:$0xff]
  %v1990 = vld [vmem:[%s0 + $0x2c0] sm:$0xff]
  %v1991 = vld [vmem:[%s0 + $0x2c8] sm:$0xff]
  %v1992 = vld [vmem:[%s0 + $0x2d0] sm:$0xff]
  %v1993 = vld [vmem:[%s0 + $0x2d8] sm:$0xff]
  %v1994 = vld [vmem:[%s0 + $0x2e0] sm:$0xff]
  %v1995 = vld [vmem:[%s0 + $0x2e8] sm:$0xff]
  %v1996 = vld [vmem:[%s0 + $0x2f0] sm:$0xff]
  %v1997 = vld [vmem:[%s0 + $0x2f8] sm:$0xff]
  %v1998 = vld [vmem:[%s0 + $0x300] sm:$0xff]
  %v1999 = vld [vmem:[%s0 + $0x308] sm:$0xff]
  %v2000 = vld [vmem:[%s0 + $0x310] sm:$0xff]
  %v2001 = vld [vmem:[%s0 + $0x318] sm:$0xff]
  %v2002 = vld [vmem:[%s0 + $0x320] sm:$0xff]
  %v2003 = vld [vmem:[%s0 + $0x328] sm:$0xff]
  %v2004 = vld [vmem:[%s0 + $0x330] sm:$0xff]
  %v2005 = vld [vmem:[%s0 + $0x338] sm:$0xff]
  %v2006 = vld [vmem:[%s0 + $0x340] sm:$0xff]
  %v2007 = vld [vmem:[%s0 + $0x348] sm:$0xff]
  %v2008 = vld [vmem:[%s0 + $0x350] sm:$0xff]
  %v2009 = vld [vmem:[%s0 + $0x358] sm:$0xff]
  %v2010 = vld [vmem:[%s0 + $0x360] sm:$0xff]
  %v2011 = vld [vmem:[%s0 + $0x368] sm:$0xff]
  %v2012 = vld [vmem:[%s0 + $0x370] sm:$0xff]
  %v2013 = vld [vmem:[%s0 + $0x378] sm:$0xff]
  %v2014 = vld [vmem:[%s0 + $0x380] sm:$0xff]
  %v2015 = vld [vmem:[%s0 + $0x388] sm:$0xff]
  %v2016 = vld [vmem:[%s0 + $0x390] sm:$0xff]
  %v2017 = vld [vmem:[%s0 + $0x398] sm:$0xff]
  %v2018 = vld [vmem:[%s0 + $0x3a0] sm:$0xff]
  %v2019 = vld [vmem:[%s0 + $0x3a8] sm:$0xff]
  %v2020 = vld [vmem:[%s0 + $0x3b0] sm:$0xff]
  %v2021 = vld [vmem:[%s0 + $0x3b8] sm:$0xff]
  %v2022 = vld [vmem:[%s0 + $0x3c0] sm:$0xff]
  %v2023 = vld [vmem:[%s0 + $0x3c8] sm:$0xff]
  %v2024 = vld [vmem:[%s0 + $0x3d0] sm:$0xff]
  %v2025 = vld [vmem:[%s0 + $0x3d8] sm:$0xff]
  %v2026 = vld [vmem:[%s0 + $0x3e0] sm:$0xff]
  %v2027 = vld [vmem:[%s0 + $0x3e8] sm:$0xff]
  %v2028 = vld [vmem:[%s0 + $0x3f0] sm:$0xff]
  %v2029 = vld [vmem:[%s0 + $0x3f8] sm:$0xff]
  %v2030 = vld [vmem:[#allocation2] sm:$0xff]
  %v2031 = vld [vmem:[#allocation2 + $0x8] sm:$0xff]
  %v2032 = vld [vmem:[#allocation2 + $0x10] sm:$0xff]
  %v2033 = vld [vmem:[#allocation2 + $0x18] sm:$0xff]
  %v2034 = vld [vmem:[#allocation2 + $0x20] sm:$0xff]
  %v2035 = vld [vmem:[#allocation2 + $0x28] sm:$0xff]
  %v2036 = vld [vmem:[#allocation2 + $0x30] sm:$0xff]
  %v2037 = vld [vmem:[#allocation2 + $0x38] sm:$0xff]
  %v2038 = vld [vmem:[#allocation2 + $0x40] sm:$0xff]
  %v2039 = vld [vmem:[#allocation2 + $0x48] sm:$0xff]
  %v2040 = vld [vmem:[#allocation2 + $0x50] sm:$0xff]
  %v2041 = vld [vmem:[#allocation2 + $0x58] sm:$0xff]
  %v2042 = vld [vmem:[#allocation2 + $0x60] sm:$0xff]
  %v2043 = vld [vmem:[#allocation2 + $0x68] sm:$0xff]
  %v2044 = vld [vmem:[#allocation2 + $0x70] sm:$0xff]
  %v2045 = vld [vmem:[#allocation2 + $0x78] sm:$0xff]
  %v2046 = vld [vmem:[#allocation2 + $0x80] sm:$0xff]
  %v2047 = vld [vmem:[#allocation2 + $0x88] sm:$0xff]
  %v2048 = vld [vmem:[#allocation2 + $0x90] sm:$0xff]
  %v2049 = vld [vmem:[#allocation2 + $0x98] sm:$0xff]
  %v2050 = vld [vmem:[#allocation2 + $0xa0] sm:$0xff]
  %v2051 = vld [vmem:[#allocation2 + $0xa8] sm:$0xff]
  %v2052 = vld [vmem:[#allocation2 + $0xb0] sm:$0xff]
  %v2053 = vld [vmem:[#allocation2 + $0xb8] sm:$0xff]
  %v2054 = vld [vmem:[#allocation2 + $0xc0] sm:$0xff]
  %v2055 = vld [vmem:[#allocation2 + $0xc8] sm:$0xff]
  %v2056 = vld [vmem:[#allocation2 + $0xd0] sm:$0xff]
  %v2057 = vld [vmem:[#allocation2 + $0xd8] sm:$0xff]
  %v2058 = vld [vmem:[#allocation2 + $0xe0] sm:$0xff]
  %v2059 = vld [vmem:[#allocation2 + $0xe8] sm:$0xff]
  %v2060 = vld [vmem:[#allocation2 + $0xf0] sm:$0xff]
  %v2061 = vld [vmem:[#allocation2 + $0xf8] sm:$0xff]
  %v2190 = vunpack.c.l.b16 %v1902
  %v2191 = vunpack.c.h.b16 %v1902
  %v2192 = vunpack.c.l.b16 %v1903
  %v2193 = vunpack.c.h.b16 %v1903
  %v2194 = vunpack.c.l.b16 %v1904
  %v2195 = vunpack.c.h.b16 %v1904
  %v2196 = vunpack.c.l.b16 %v1905
  %v2197 = vunpack.c.h.b16 %v1905
  %v2198 = vunpack.c.l.b16 %v1906
  %v2199 = vunpack.c.h.b16 %v1906
  %v2200 = vunpack.c.l.b16 %v1907
  %v2201 = vunpack.c.h.b16 %v1907
  %v2202 = vunpack.c.l.b16 %v1908
  %v2203 = vunpack.c.h.b16 %v1908
  %v2204 = vunpack.c.l.b16 %v1909
  %v2205 = vunpack.c.h.b16 %v1909
  %v2206 = vunpack.c.l.b16 %v1910
  %v2207 = vunpack.c.h.b16 %v1910
  %v2208 = vunpack.c.l.b16 %v1911
  %v2209 = vunpack.c.h.b16 %v1911
  %v2210 = vunpack.c.l.b16 %v1912
  %v2211 = vunpack.c.h.b16 %v1912
  %v2212 = vunpack.c.l.b16 %v1913
  %v2213 = vunpack.c.h.b16 %v1913
  %v2214 = vunpack.c.l.b16 %v1914
  %v2215 = vunpack.c.h.b16 %v1914
  %v2216 = vunpack.c.l.b16 %v1915
  %v2217 = vunpack.c.h.b16 %v1915
  %v2218 = vunpack.c.l.b16 %v1916
  %v2219 = vunpack.c.h.b16 %v1916
  %v2220 = vunpack.c.l.b16 %v1917
  %v2221 = vunpack.c.h.b16 %v1917
  %v2222 = vunpack.c.l.b16 %v1918
  %v2223 = vunpack.c.h.b16 %v1918
  %v2224 = vunpack.c.l.b16 %v1919
  %v2225 = vunpack.c.h.b16 %v1919
  %v2226 = vunpack.c.l.b16 %v1920
  %v2227 = vunpack.c.h.b16 %v1920
  %v2228 = vunpack.c.l.b16 %v1921
  %v2229 = vunpack.c.h.b16 %v1921
  %v2230 = vunpack.c.l.b16 %v1922
  %v2231 = vunpack.c.h.b16 %v1922
  %v2232 = vunpack.c.l.b16 %v1923
  %v2233 = vunpack.c.h.b16 %v1923
  %v2234 = vunpack.c.l.b16 %v1924
  %v2235 = vunpack.c.h.b16 %v1924
  %v2236 = vunpack.c.l.b16 %v1925
  %v2237 = vunpack.c.h.b16 %v1925
  %v2238 = vunpack.c.l.b16 %v1926
  %v2239 = vunpack.c.h.b16 %v1926
  %v2240 = vunpack.c.l.b16 %v1927
  %v2241 = vunpack.c.h.b16 %v1927
  %v2242 = vunpack.c.l.b16 %v1928
  %v2243 = vunpack.c.h.b16 %v1928
  %v2244 = vunpack.c.l.b16 %v1929
  %v2245 = vunpack.c.h.b16 %v1929
  %v2246 = vunpack.c.l.b16 %v1930
  %v2247 = vunpack.c.h.b16 %v1930
  %v2248 = vunpack.c.l.b16 %v1931
  %v2249 = vunpack.c.h.b16 %v1931
  %v2250 = vunpack.c.l.b16 %v1932
  %v2251 = vunpack.c.h.b16 %v1932
  %v2252 = vunpack.c.l.b16 %v1933
  %v2253 = vunpack.c.h.b16 %v1933
  %v2254 = vunpack.c.l.b16 %v1934
  %v2255 = vunpack.c.h.b16 %v1934
  %v2256 = vunpack.c.l.b16 %v1935
  %v2257 = vunpack.c.h.b16 %v1935
  %v2258 = vunpack.c.l.b16 %v1936
  %v2259 = vunpack.c.h.b16 %v1936
  %v2260 = vunpack.c.l.b16 %v1937
  %v2261 = vunpack.c.h.b16 %v1937
  %v2262 = vunpack.c.l.b16 %v1938
  %v2263 = vunpack.c.h.b16 %v1938
  %v2264 = vunpack.c.l.b16 %v1939
  %v2265 = vunpack.c.h.b16 %v1939
  %v2266 = vunpack.c.l.b16 %v1940
  %v2267 = vunpack.c.h.b16 %v1940
  %v2268 = vunpack.c.l.b16 %v1941
  %v2269 = vunpack.c.h.b16 %v1941
  %v2270 = vunpack.c.l.b16 %v1942
  %v2271 = vunpack.c.h.b16 %v1942
  %v2272 = vunpack.c.l.b16 %v1943
  %v2273 = vunpack.c.h.b16 %v1943
  %v2274 = vunpack.c.l.b16 %v1944
  %v2275 = vunpack.c.h.b16 %v1944
  %v2276 = vunpack.c.l.b16 %v1945
  %v2277 = vunpack.c.h.b16 %v1945
  %v2278 = vunpack.c.l.b16 %v1946
  %v2279 = vunpack.c.h.b16 %v1946
  %v2280 = vunpack.c.l.b16 %v1947
  %v2281 = vunpack.c.h.b16 %v1947
  %v2282 = vunpack.c.l.b16 %v1948
  %v2283 = vunpack.c.h.b16 %v1948
  %v2284 = vunpack.c.l.b16 %v1949
  %v2285 = vunpack.c.h.b16 %v1949
  %v2286 = vunpack.c.l.b16 %v1950
  %v2287 = vunpack.c.h.b16 %v1950
  %v2288 = vunpack.c.l.b16 %v1951
  %v2289 = vunpack.c.h.b16 %v1951
  %v2290 = vunpack.c.l.b16 %v1952
  %v2291 = vunpack.c.h.b16 %v1952
  %v2292 = vunpack.c.l.b16 %v1953
  %v2293 = vunpack.c.h.b16 %v1953
  %v2294 = vunpack.c.l.b16 %v1954
  %v2295 = vunpack.c.h.b16 %v1954
  %v2296 = vunpack.c.l.b16 %v1955
  %v2297 = vunpack.c.h.b16 %v1955
  %v2298 = vunpack.c.l.b16 %v1956
  %v2299 = vunpack.c.h.b16 %v1956
  %v2300 = vunpack.c.l.b16 %v1957
  %v2301 = vunpack.c.h.b16 %v1957
  %v2302 = vunpack.c.l.b16 %v1958
  %v2303 = vunpack.c.h.b16 %v1958
  %v2304 = vunpack.c.l.b16 %v1959
  %v2305 = vunpack.c.h.b16 %v1959
  %v2306 = vunpack.c.l.b16 %v1960
  %v2307 = vunpack.c.h.b16 %v1960
  %v2308 = vunpack.c.l.b16 %v1961
  %v2309 = vunpack.c.h.b16 %v1961
  %v2310 = vunpack.c.l.b16 %v1962
  %v2311 = vunpack.c.h.b16 %v1962
  %v2312 = vunpack.c.l.b16 %v1963
  %v2313 = vunpack.c.h.b16 %v1963
  %v2314 = vunpack.c.l.b16 %v1964
  %v2315 = vunpack.c.h.b16 %v1964
  %v2316 = vunpack.c.l.b16 %v1965
  %v2317 = vunpack.c.h.b16 %v1965
  %v2318 = vunpack.c.l.b16 %v1966
  %v2319 = vunpack.c.h.b16 %v1966
  %v2320 = vunpack.c.l.b16 %v1967
  %v2321 = vunpack.c.h.b16 %v1967
  %v2322 = vunpack.c.l.b16 %v1968
  %v2323 = vunpack.c.h.b16 %v1968
  %v2324 = vunpack.c.l.b16 %v1969
  %v2325 = vunpack.c.h.b16 %v1969
  %v2326 = vunpack.c.l.b16 %v1970
  %v2327 = vunpack.c.h.b16 %v1970
  %v2328 = vunpack.c.l.b16 %v1971
  %v2329 = vunpack.c.h.b16 %v1971
  %v2330 = vunpack.c.l.b16 %v1972
  %v2331 = vunpack.c.h.b16 %v1972
  %v2332 = vunpack.c.l.b16 %v1973
  %v2333 = vunpack.c.h.b16 %v1973
  %v2334 = vunpack.c.l.b16 %v1974
  %v2335 = vunpack.c.h.b16 %v1974
  %v2336 = vunpack.c.l.b16 %v1975
  %v2337 = vunpack.c.h.b16 %v1975
  %v2338 = vunpack.c.l.b16 %v1976
  %v2339 = vunpack.c.h.b16 %v1976
  %v2340 = vunpack.c.l.b16 %v1977
  %v2341 = vunpack.c.h.b16 %v1977
  %v2342 = vunpack.c.l.b16 %v1978
  %v2343 = vunpack.c.h.b16 %v1978
  %v2344 = vunpack.c.l.b16 %v1979
  %v2345 = vunpack.c.h.b16 %v1979
  %v2346 = vunpack.c.l.b16 %v1980
  %v2347 = vunpack.c.h.b16 %v1980
  %v2348 = vunpack.c.l.b16 %v1981
  %v2349 = vunpack.c.h.b16 %v1981
  %v2350 = vunpack.c.l.b16 %v1982
  %v2351 = vunpack.c.h.b16 %v1982
  %v2352 = vunpack.c.l.b16 %v1983
  %v2353 = vunpack.c.h.b16 %v1983
  %v2354 = vunpack.c.l.b16 %v1984
  %v2355 = vunpack.c.h.b16 %v1984
  %v2356 = vunpack.c.l.b16 %v1985
  %v2357 = vunpack.c.h.b16 %v1985
  %v2358 = vunpack.c.l.b16 %v1986
  %v2359 = vunpack.c.h.b16 %v1986
  %v2360 = vunpack.c.l.b16 %v1987
  %v2361 = vunpack.c.h.b16 %v1987
  %v2362 = vunpack.c.l.b16 %v1988
  %v2363 = vunpack.c.h.b16 %v1988
  %v2364 = vunpack.c.l.b16 %v1989
  %v2365 = vunpack.c.h.b16 %v1989
  %v2366 = vunpack.c.l.b16 %v1990
  %v2367 = vunpack.c.h.b16 %v1990
  %v2368 = vunpack.c.l.b16 %v1991
  %v2369 = vunpack.c.h.b16 %v1991
  %v2370 = vunpack.c.l.b16 %v1992
  %v2371 = vunpack.c.h.b16 %v1992
  %v2372 = vunpack.c.l.b16 %v1993
  %v2373 = vunpack.c.h.b16 %v1993
  %v2374 = vunpack.c.l.b16 %v1994
  %v2375 = vunpack.c.h.b16 %v1994
  %v2376 = vunpack.c.l.b16 %v1995
  %v2377 = vunpack.c.h.b16 %v1995
  %v2378 = vunpack.c.l.b16 %v1996
  %v2379 = vunpack.c.h.b16 %v1996
  %v2380 = vunpack.c.l.b16 %v1997
  %v2381 = vunpack.c.h.b16 %v1997
  %v2382 = vunpack.c.l.b16 %v1998
  %v2383 = vunpack.c.h.b16 %v1998
  %v2384 = vunpack.c.l.b16 %v1999
  %v2385 = vunpack.c.h.b16 %v1999
  %v2386 = vunpack.c.l.b16 %v2000
  %v2387 = vunpack.c.h.b16 %v2000
  %v2388 = vunpack.c.l.b16 %v2001
  %v2389 = vunpack.c.h.b16 %v2001
  %v2390 = vunpack.c.l.b16 %v2002
  %v2391 = vunpack.c.h.b16 %v2002
  %v2392 = vunpack.c.l.b16 %v2003
  %v2393 = vunpack.c.h.b16 %v2003
  %v2394 = vunpack.c.l.b16 %v2004
  %v2395 = vunpack.c.h.b16 %v2004
  %v2396 = vunpack.c.l.b16 %v2005
  %v2397 = vunpack.c.h.b16 %v2005
  %v2398 = vunpack.c.l.b16 %v2006
  %v2399 = vunpack.c.h.b16 %v2006
  %v2400 = vunpack.c.l.b16 %v2007
  %v2401 = vunpack.c.h.b16 %v2007
  %v2402 = vunpack.c.l.b16 %v2008
  %v2403 = vunpack.c.h.b16 %v2008
  %v2404 = vunpack.c.l.b16 %v2009
  %v2405 = vunpack.c.h.b16 %v2009
  %v2406 = vunpack.c.l.b16 %v2010
  %v2407 = vunpack.c.h.b16 %v2010
  %v2408 = vunpack.c.l.b16 %v2011
  %v2409 = vunpack.c.h.b16 %v2011
  %v2410 = vunpack.c.l.b16 %v2012
  %v2411 = vunpack.c.h.b16 %v2012
  %v2412 = vunpack.c.l.b16 %v2013
  %v2413 = vunpack.c.h.b16 %v2013
  %v2414 = vunpack.c.l.b16 %v2014
  %v2415 = vunpack.c.h.b16 %v2014
  %v2416 = vunpack.c.l.b16 %v2015
  %v2417 = vunpack.c.h.b16 %v2015
  %v2418 = vunpack.c.l.b16 %v2016
  %v2419 = vunpack.c.h.b16 %v2016
  %v2420 = vunpack.c.l.b16 %v2017
  %v2421 = vunpack.c.h.b16 %v2017
  %v2422 = vunpack.c.l.b16 %v2018
  %v2423 = vunpack.c.h.b16 %v2018
  %v2424 = vunpack.c.l.b16 %v2019
  %v2425 = vunpack.c.h.b16 %v2019
  %v2426 = vunpack.c.l.b16 %v2020
  %v2427 = vunpack.c.h.b16 %v2020
  %v2428 = vunpack.c.l.b16 %v2021
  %v2429 = vunpack.c.h.b16 %v2021
  %v2430 = vunpack.c.l.b16 %v2022
  %v2431 = vunpack.c.h.b16 %v2022
  %v2432 = vunpack.c.l.b16 %v2023
  %v2433 = vunpack.c.h.b16 %v2023
  %v2434 = vunpack.c.l.b16 %v2024
  %v2435 = vunpack.c.h.b16 %v2024
  %v2436 = vunpack.c.l.b16 %v2025
  %v2437 = vunpack.c.h.b16 %v2025
  %v2438 = vunpack.c.l.b16 %v2026
  %v2439 = vunpack.c.h.b16 %v2026
  %v2440 = vunpack.c.l.b16 %v2027
  %v2441 = vunpack.c.h.b16 %v2027
  %v2442 = vunpack.c.l.b16 %v2028
  %v2443 = vunpack.c.h.b16 %v2028
  %v2444 = vunpack.c.l.b16 %v2029
  %v2445 = vunpack.c.h.b16 %v2029
  %v2446 = vpack.c.b16 %v2194, %v2190
  %v2447 = vpack.c.b16 %v2195, %v2191
  %v2448 = vpack.c.b16 %v2196, %v2192
  %v2449 = vpack.c.b16 %v2197, %v2193
  %v2450 = vpack.c.b16 %v2202, %v2198
  %v2451 = vpack.c.b16 %v2203, %v2199
  %v2452 = vpack.c.b16 %v2204, %v2200
  %v2453 = vpack.c.b16 %v2205, %v2201
  %v2454 = vpack.c.b16 %v2210, %v2206
  %v2455 = vpack.c.b16 %v2211, %v2207
  %v2456 = vpack.c.b16 %v2212, %v2208
  %v2457 = vpack.c.b16 %v2213, %v2209
  %v2458 = vpack.c.b16 %v2218, %v2214
  %v2459 = vpack.c.b16 %v2219, %v2215
  %v2460 = vpack.c.b16 %v2220, %v2216
  %v2461 = vpack.c.b16 %v2221, %v2217
  %v2462 = vpack.c.b16 %v2226, %v2222
  %v2463 = vpack.c.b16 %v2227, %v2223
  %v2464 = vpack.c.b16 %v2228, %v2224
  %v2465 = vpack.c.b16 %v2229, %v2225
  %v2466 = vpack.c.b16 %v2234, %v2230
  %v2467 = vpack.c.b16 %v2235, %v2231
  %v2468 = vpack.c.b16 %v2236, %v2232
  %v2469 = vpack.c.b16 %v2237, %v2233
  %v2470 = vpack.c.b16 %v2242, %v2238
  %v2471 = vpack.c.b16 %v2243, %v2239
  %v2472 = vpack.c.b16 %v2244, %v2240
  %v2473 = vpack.c.b16 %v2245, %v2241
  %v2474 = vpack.c.b16 %v2250, %v2246
  %v2475 = vpack.c.b16 %v2251, %v2247
  %v2476 = vpack.c.b16 %v2252, %v2248
  %v2477 = vpack.c.b16 %v2253, %v2249
  %v2478 = vpack.c.b16 %v2258, %v2254
  %v2479 = vpack.c.b16 %v2259, %v2255
  %v2480 = vpack.c.b16 %v2260, %v2256
  %v2481 = vpack.c.b16 %v2261, %v2257
  %v2482 = vpack.c.b16 %v2266, %v2262
  %v2483 = vpack.c.b16 %v2267, %v2263
  %v2484 = vpack.c.b16 %v2268, %v2264
  %v2485 = vpack.c.b16 %v2269, %v2265
  %v2486 = vpack.c.b16 %v2274, %v2270
  %v2487 = vpack.c.b16 %v2275, %v2271
  %v2488 = vpack.c.b16 %v2276, %v2272
  %v2489 = vpack.c.b16 %v2277, %v2273
  %v2490 = vpack.c.b16 %v2282, %v2278
  %v2491 = vpack.c.b16 %v2283, %v2279
  %v2492 = vpack.c.b16 %v2284, %v2280
  %v2493 = vpack.c.b16 %v2285, %v2281
  %v2494 = vpack.c.b16 %v2290, %v2286
  %v2495 = vpack.c.b16 %v2291, %v2287
  %v2496 = vpack.c.b16 %v2292, %v2288
  %v2497 = vpack.c.b16 %v2293, %v2289
  %v2498 = vpack.c.b16 %v2298, %v2294
  %v2499 = vpack.c.b16 %v2299, %v2295
  %v2500 = vpack.c.b16 %v2300, %v2296
  %v2501 = vpack.c.b16 %v2301, %v2297
  %v2502 = vpack.c.b16 %v2306, %v2302
  %v2503 = vpack.c.b16 %v2307, %v2303
  %v2504 = vpack.c.b16 %v2308, %v2304
  %v2505 = vpack.c.b16 %v2309, %v2305
  %v2506 = vpack.c.b16 %v2314, %v2310
  %v2507 = vpack.c.b16 %v2315, %v2311
  %v2508 = vpack.c.b16 %v2316, %v2312
  %v2509 = vpack.c.b16 %v2317, %v2313
  %v2510 = vpack.c.b16 %v2322, %v2318
  %v2511 = vpack.c.b16 %v2323, %v2319
  %v2512 = vpack.c.b16 %v2324, %v2320
  %v2513 = vpack.c.b16 %v2325, %v2321
  %v2514 = vpack.c.b16 %v2330, %v2326
  %v2515 = vpack.c.b16 %v2331, %v2327
  %v2516 = vpack.c.b16 %v2332, %v2328
  %v2517 = vpack.c.b16 %v2333, %v2329
  %v2518 = vpack.c.b16 %v2338, %v2334
  %v2519 = vpack.c.b16 %v2339, %v2335
  %v2520 = vpack.c.b16 %v2340, %v2336
  %v2521 = vpack.c.b16 %v2341, %v2337
  %v2522 = vpack.c.b16 %v2346, %v2342
  %v2523 = vpack.c.b16 %v2347, %v2343
  %v2524 = vpack.c.b16 %v2348, %v2344
  %v2525 = vpack.c.b16 %v2349, %v2345
  %v2526 = vpack.c.b16 %v2354, %v2350
  %v2527 = vpack.c.b16 %v2355, %v2351
  %v2528 = vpack.c.b16 %v2356, %v2352
  %v2529 = vpack.c.b16 %v2357, %v2353
  %v2530 = vpack.c.b16 %v2362, %v2358
  %v2531 = vpack.c.b16 %v2363, %v2359
  %v2532 = vpack.c.b16 %v2364, %v2360
  %v2533 = vpack.c.b16 %v2365, %v2361
  %v2534 = vpack.c.b16 %v2370, %v2366
  %v2535 = vpack.c.b16 %v2371, %v2367
  %v2536 = vpack.c.b16 %v2372, %v2368
  %v2537 = vpack.c.b16 %v2373, %v2369
  %v2538 = vpack.c.b16 %v2378, %v2374
  %v2539 = vpack.c.b16 %v2379, %v2375
  %v2540 = vpack.c.b16 %v2380, %v2376
  %v2541 = vpack.c.b16 %v2381, %v2377
  %v2542 = vpack.c.b16 %v2386, %v2382
  %v2543 = vpack.c.b16 %v2387, %v2383
  %v2544 = vpack.c.b16 %v2388, %v2384
  %v2545 = vpack.c.b16 %v2389, %v2385
  %v2546 = vpack.c.b16 %v2394, %v2390
  %v2547 = vpack.c.b16 %v2395, %v2391
  %v2548 = vpack.c.b16 %v2396, %v2392
  %v2549 = vpack.c.b16 %v2397, %v2393
  %v2550 = vpack.c.b16 %v2402, %v2398
  %v2551 = vpack.c.b16 %v2403, %v2399
  %v2552 = vpack.c.b16 %v2404, %v2400
  %v2553 = vpack.c.b16 %v2405, %v2401
  %v2554 = vpack.c.b16 %v2410, %v2406
  %v2555 = vpack.c.b16 %v2411, %v2407
  %v2556 = vpack.c.b16 %v2412, %v2408
  %v2557 = vpack.c.b16 %v2413, %v2409
  %v2558 = vpack.c.b16 %v2418, %v2414
  %v2559 = vpack.c.b16 %v2419, %v2415
  %v2560 = vpack.c.b16 %v2420, %v2416
  %v2561 = vpack.c.b16 %v2421, %v2417
  %v2562 = vpack.c.b16 %v2426, %v2422
  %v2563 = vpack.c.b16 %v2427, %v2423
  %v2564 = vpack.c.b16 %v2428, %v2424
  %v2565 = vpack.c.b16 %v2429, %v2425
  %v2566 = vpack.c.b16 %v2434, %v2430
  %v2567 = vpack.c.b16 %v2435, %v2431
  %v2568 = vpack.c.b16 %v2436, %v2432
  %v2569 = vpack.c.b16 %v2437, %v2433
  %v2570 = vpack.c.b16 %v2442, %v2438
  %v2571 = vpack.c.b16 %v2443, %v2439
  %v2572 = vpack.c.b16 %v2444, %v2440
  %v2573 = vpack.c.b16 %v2445, %v2441
  %2702 = vmatprep.subr.bf16.mxu0 0
  %2703 = vmatpush1.bf16.msra.mxu0 %v2030
  %2704 = vmatprep.subr.bf16.mxu0 0
  %2705 = vmatpush1.bf16.msra.mxu0 %v2031
  %2706 = vmatprep.subr.bf16.mxu0 0
  %2707 = vmatpush1.bf16.msra.mxu0 %v2032
  %2708 = vmatprep.subr.bf16.mxu0 0
  %2709 = vmatpush1.bf16.msra.mxu0 %v2033
  %2710 = vmatprep.subr.bf16.mxu0 0
  %2711 = vmatpush1.bf16.msra.mxu0 %v2034
  %2712 = vmatprep.subr.bf16.mxu0 0
  %2713 = vmatpush1.bf16.msra.mxu0 %v2035
  %2714 = vmatprep.subr.bf16.mxu0 0
  %2715 = vmatpush1.bf16.msra.mxu0 %v2036
  %2716 = vmatprep.subr.bf16.mxu0 0
  %2717 = vmatpush1.bf16.msra.mxu0 %v2037
  %2718 = vmatprep.subr.bf16.mxu0 0
  %2719 = vmatpush1.bf16.msra.mxu0 %v2038
  %2720 = vmatprep.subr.bf16.mxu0 0
  %2721 = vmatpush1.bf16.msra.mxu0 %v2039
  %2722 = vmatprep.subr.bf16.mxu0 0
  %2723 = vmatpush1.bf16.msra.mxu0 %v2040
  %2724 = vmatprep.subr.bf16.mxu0 0
  %2725 = vmatpush1.bf16.msra.mxu0 %v2041
  %2726 = vmatprep.subr.bf16.mxu0 0
  %2727 = vmatpush1.bf16.msra.mxu0 %v2042
  %2728 = vmatprep.subr.bf16.mxu0 0
  %2729 = vmatpush1.bf16.msra.mxu0 %v2043
  %2730 = vmatprep.subr.bf16.mxu0 0
  %2731 = vmatpush1.bf16.msra.mxu0 %v2044
  %2732 = vmatprep.subr.bf16.mxu0 0
  %2733 = vmatpush1.bf16.msra.mxu0 %v2045
  %2734 = vmatprep.mubr.bf16.mxu0 %v2447
  %2735 = vmatmul.mubr.bf16.gmra.mrb[0].mxu0 %v2446
  %v2736 = vpop.f32.mrb[0].mxu0
  %v2737 = vadd.f32 0.0, %v2736
  %v2738 = vpop.f32.mrb[0].mxu0
  %v2739 = vpop.f32.mrb[0].mxu0
  %v2740 = vadd.f32 0.0, %v2739
  %v2741 = vpop.f32.mrb[0].mxu0
  %2742 = vmatprep.mubr.bf16.mxu0 %v2451
  %2743 = vmatmul.mubr.bf16.gmra.mrb[0].mxu0 %v2450
  %v2744 = vpop.f32.mrb[0].mxu0
  %v2745 = vadd.f32 0.0, %v2744
  %v2746 = vpop.f32.mrb[0].mxu0
  %v2747 = vpop.f32.mrb[0].mxu0
  %v2748 = vadd.f32 0.0, %v2747
  %v2749 = vpop.f32.mrb[0].mxu0
  %2750 = vmatprep.mubr.bf16.mxu0 %v2455
  %2751 = vmatmul.mubr.bf16.gmra.mrb[0].mxu0 %v2454
  %v2752 = vpop.f32.mrb[0].mxu0
  %v2753 = vadd.f32 0.0, %v2752
  %v2754 = vpop.f32.mrb[0].mxu0
  %v2755 = vpop.f32.mrb[0].mxu0
  %v2756 = vadd.f32 0.0, %v2755
  %v2757 = vpop.f32.mrb[0].mxu0
  %2758 = vmatprep.mubr.bf16.mxu0 %v2459
  %2759 = vmatmul.mubr.bf16.gmra.mrb[0].mxu0 %v2458
  %v2760 = vpop.f32.mrb[0].mxu0
  %v2761 = vadd.f32 0.0, %v2760
  %v2762 = vpop.f32.mrb[0].mxu0
  %v2763 = vpop.f32.mrb[0].mxu0
  %v2764 = vadd.f32 0.0, %v2763
  %v2765 = vpop.f32.mrb[0].mxu0
  %2766 = vmatprep.mubr.bf16.mxu0 %v2463
  %2767 = vmatmul.mubr.bf16.gmra.mrb[0].mxu0 %v2462
  %v2768 = vpop.f32.mrb[0].mxu0
  %v2769 = vadd.f32 0.0, %v2768
  %v2770 = vpop.f32.mrb[0].mxu0
  %v2771 = vpop.f32.mrb[0].mxu0
  %v2772 = vadd.f32 0.0, %v2771
  %v2773 = vpop.f32.mrb[0].mxu0
  %2774 = vmatprep.mubr.bf16.mxu0 %v2467
  %2775 = vmatmul.mubr.bf16.gmra.mrb[0].mxu0 %v2466
  %v2776 = vpop.f32.mrb[0].mxu0
  %v2777 = vadd.f32 0.0, %v2776
  %v2778 = vpop.f32.mrb[0].mxu0
  %v2779 = vpop.f32.mrb[0].mxu0
  %v2780 = vadd.f32 0.0, %v2779
  %v2781 = vpop.f32.mrb[0].mxu0
  %2782 = vmatprep.mubr.bf16.mxu0 %v2471
  %2783 = vmatmul.mubr.bf16.gmra.mrb[0].mxu0 %v2470
  %v2784 = vpop.f32.mrb[0].mxu0
  %v2785 = vadd.f32 0.0, %v2784
  %v2786 = vpop.f32.mrb[0].mxu0
  %v2787 = vpop.f32.mrb[0].mxu0
  %v2788 = vadd.f32 0.0, %v2787
  %v2789 = vpop.f32.mrb[0].mxu0
  %2790 = vmatprep.mubr.bf16.mxu0 %v2475
  %2791 = vmatmul.mubr.bf16.gmra.mrb[0].mxu0 %v2474
  %v2792 = vpop.f32.mrb[0].mxu0
  %v2793 = vadd.f32 0.0, %v2792
  %v2794 = vpop.f32.mrb[0].mxu0
  %v2795 = vpop.f32.mrb[0].mxu0
  %v2796 = vadd.f32 0.0, %v2795
  %v2797 = vpop.f32.mrb[0].mxu0
  %2798 = vmatprep.mubr.bf16.mxu0 %v2479
  %2799 = vmatmul.mubr.bf16.gmra.mrb[0].mxu0 %v2478
  %v2800 = vpop.f32.mrb[0].mxu0
  %v2801 = vadd.f32 0.0, %v2800
  %v2802 = vpop.f32.mrb[0].mxu0
  %v2803 = vpop.f32.mrb[0].mxu0
  %v2804 = vadd.f32 0.0, %v2803
  %v2805 = vpop.f32.mrb[0].mxu0
  %2806 = vmatprep.mubr.bf16.mxu0 %v2483
  %2807 = vmatmul.mubr.bf16.gmra.mrb[0].mxu0 %v2482
  %v2808 = vpop.f32.mrb[0].mxu0
  %v2809 = vadd.f32 0.0, %v2808
  %v2810 = vpop.f32.mrb[0].mxu0
  %v2811 = vpop.f32.mrb[0].mxu0
  %v2812 = vadd.f32 0.0, %v2811
  %v2813 = vpop.f32.mrb[0].mxu0
  %2814 = vmatprep.mubr.bf16.mxu0 %v2487
  %2815 = vmatmul.mubr.bf16.gmra.mrb[0].mxu0 %v2486
  %v2816 = vpop.f32.mrb[0].mxu0
  %v2817 = vadd.f32 0.0, %v2816
  %v2818 = vpop.f32.mrb[0].mxu0
  %v2819 = vpop.f32.mrb[0].mxu0
  %v2820 = vadd.f32 0.0, %v2819
  %v2821 = vpop.f32.mrb[0].mxu0
  %2822 = vmatprep.mubr.bf16.mxu0 %v2491
  %2823 = vmatmul.mubr.bf16.gmra.mrb[0].mxu0 %v2490
  %v2824 = vpop.f32.mrb[0].mxu0
  %v2825 = vadd.f32 0.0, %v2824
  %v2826 = vpop.f32.mrb[0].mxu0
  %v2827 = vpop.f32.mrb[0].mxu0
  %v2828 = vadd.f32 0.0, %v2827
  %v2829 = vpop.f32.mrb[0].mxu0
  %2830 = vmatprep.mubr.bf16.mxu0 %v2495
  %2831 = vmatmul.mubr.bf16.gmra.mrb[0].mxu0 %v2494
  %v2832 = vpop.f32.mrb[0].mxu0
  %v2833 = vadd.f32 0.0, %v2832
  %v2834 = vpop.f32.mrb[0].mxu0
  %v2835 = vpop.f32.mrb[0].mxu0
  %v2836 = vadd.f32 0.0, %v2835
  %v2837 = vpop.f32.mrb[0].mxu0
  %2838 = vmatprep.mubr.bf16.mxu0 %v2499
  %2839 = vmatmul.mubr.bf16.gmra.mrb[0].mxu0 %v2498
  %v2840 = vpop.f32.mrb[0].mxu0
  %v2841 = vadd.f32 0.0, %v2840
  %v2842 = vpop.f32.mrb[0].mxu0
  %v2843 = vpop.f32.mrb[0].mxu0
  %v2844 = vadd.f32 0.0, %v2843
  %v2845 = vpop.f32.mrb[0].mxu0
  %2846 = vmatprep.mubr.bf16.mxu0 %v2503
  %2847 = vmatmul.mubr.bf16.gmra.mrb[0].mxu0 %v2502
  %v2848 = vpop.f32.mrb[0].mxu0
  %v2849 = vadd.f32 0.0, %v2848
  %v2850 = vpop.f32.mrb[0].mxu0
  %v2851 = vpop.f32.mrb[0].mxu0
  %v2852 = vadd.f32 0.0, %v2851
  %v2853 = vpop.f32.mrb[0].mxu0
  %2854 = vmatprep.mubr.bf16.mxu0 %v2507
  %2855 = vmatmul.mubr.bf16.gmra.mrb[0].mxu0 %v2506
  %v2856 = vpop.f32.mrb[0].mxu0
  %v2857 = vadd.f32 0.0, %v2856
  %v2858 = vpop.f32.mrb[0].mxu0
  %v2859 = vpop.f32.mrb[0].mxu0
  %v2860 = vadd.f32 0.0, %v2859
  %v2861 = vpop.f32.mrb[0].mxu0
  %2862 = vmatprep.mubr.bf16.mxu0 %v2511
  %2863 = vmatmul.mubr.bf16.gmra.mrb[0].mxu0 %v2510
  %v2864 = vpop.f32.mrb[0].mxu0
  %v2865 = vadd.f32 0.0, %v2864
  %v2866 = vpop.f32.mrb[0].mxu0
  %v2867 = vpop.f32.mrb[0].mxu0
  %v2868 = vadd.f32 0.0, %v2867
  %v2869 = vpop.f32.mrb[0].mxu0
  %2870 = vmatprep.mubr.bf16.mxu0 %v2515
  %2871 = vmatmul.mubr.bf16.gmra.mrb[0].mxu0 %v2514
  %v2872 = vpop.f32.mrb[0].mxu0
  %v2873 = vadd.f32 0.0, %v2872
  %v2874 = vpop.f32.mrb[0].mxu0
  %v2875 = vpop.f32.mrb[0].mxu0
  %v2876 = vadd.f32 0.0, %v2875
  %v2877 = vpop.f32.mrb[0].mxu0
  %2878 = vmatprep.mubr.bf16.mxu0 %v2519
  %2879 = vmatmul.mubr.bf16.gmra.mrb[0].mxu0 %v2518
  %v2880 = vpop.f32.mrb[0].mxu0
  %v2881 = vadd.f32 0.0, %v2880
  %v2882 = vpop.f32.mrb[0].mxu0
  %v2883 = vpop.f32.mrb[0].mxu0
  %v2884 = vadd.f32 0.0, %v2883
  %v2885 = vpop.f32.mrb[0].mxu0
  %2886 = vmatprep.mubr.bf16.mxu0 %v2523
  %2887 = vmatmul.mubr.bf16.gmra.mrb[0].mxu0 %v2522
  %v2888 = vpop.f32.mrb[0].mxu0
  %v2889 = vadd.f32 0.0, %v2888
  %v2890 = vpop.f32.mrb[0].mxu0
  %v2891 = vpop.f32.mrb[0].mxu0
  %v2892 = vadd.f32 0.0, %v2891
  %v2893 = vpop.f32.mrb[0].mxu0
  %2894 = vmatprep.mubr.bf16.mxu0 %v2527
  %2895 = vmatmul.mubr.bf16.gmra.mrb[0].mxu0 %v2526
  %v2896 = vpop.f32.mrb[0].mxu0
  %v2897 = vadd.f32 0.0, %v2896
  %v2898 = vpop.f32.mrb[0].mxu0
  %v2899 = vpop.f32.mrb[0].mxu0
  %v2900 = vadd.f32 0.0, %v2899
  %v2901 = vpop.f32.mrb[0].mxu0
  %2902 = vmatprep.mubr.bf16.mxu0 %v2531
  %2903 = vmatmul.mubr.bf16.gmra.mrb[0].mxu0 %v2530
  %v2904 = vpop.f32.mrb[0].mxu0
  %v2905 = vadd.f32 0.0, %v2904
  %v2906 = vpop.f32.mrb[0].mxu0
  %v2907 = vpop.f32.mrb[0].mxu0
  %v2908 = vadd.f32 0.0, %v2907
  %v2909 = vpop.f32.mrb[0].mxu0
  %2910 = vmatprep.mubr.bf16.mxu0 %v2535
  %2911 = vmatmul.mubr.bf16.gmra.mrb[0].mxu0 %v2534
  %v2912 = vpop.f32.mrb[0].mxu0
  %v2913 = vadd.f32 0.0, %v2912
  %v2914 = vpop.f32.mrb[0].mxu0
  %v2915 = vpop.f32.mrb[0].mxu0
  %v2916 = vadd.f32 0.0, %v2915
  %v2917 = vpop.f32.mrb[0].mxu0
  %2918 = vmatprep.mubr.bf16.mxu0 %v2539
  %2919 = vmatmul.mubr.bf16.gmra.mrb[0].mxu0 %v2538
  %v2920 = vpop.f32.mrb[0].mxu0
  %v2921 = vadd.f32 0.0, %v2920
  %v2922 = vpop.f32.mrb[0].mxu0
  %v2923 = vpop.f32.mrb[0].mxu0
  %v2924 = vadd.f32 0.0, %v2923
  %v2925 = vpop.f32.mrb[0].mxu0
  %2926 = vmatprep.mubr.bf16.mxu0 %v2543
  %2927 = vmatmul.mubr.bf16.gmra.mrb[0].mxu0 %v2542
  %v2928 = vpop.f32.mrb[0].mxu0
  %v2929 = vadd.f32 0.0, %v2928
  %v2930 = vpop.f32.mrb[0].mxu0
  %v2931 = vpop.f32.mrb[0].mxu0
  %v2932 = vadd.f32 0.0, %v2931
  %v2933 = vpop.f32.mrb[0].mxu0
  %2934 = vmatprep.mubr.bf16.mxu0 %v2547
  %2935 = vmatmul.mubr.bf16.gmra.mrb[0].mxu0 %v2546
  %v2936 = vpop.f32.mrb[0].mxu0
  %v2937 = vadd.f32 0.0, %v2936
  %v2938 = vpop.f32.mrb[0].mxu0
  %v2939 = vpop.f32.mrb[0].mxu0
  %v2940 = vadd.f32 0.0, %v2939
  %v2941 = vpop.f32.mrb[0].mxu0
  %2942 = vmatprep.mubr.bf16.mxu0 %v2551
  %2943 = vmatmul.mubr.bf16.gmra.mrb[0].mxu0 %v2550
  %v2944 = vpop.f32.mrb[0].mxu0
  %v2945 = vadd.f32 0.0, %v2944
  %v2946 = vpop.f32.mrb[0].mxu0
  %v2947 = vpop.f32.mrb[0].mxu0
  %v2948 = vadd.f32 0.0, %v2947
  %v2949 = vpop.f32.mrb[0].mxu0
  %2950 = vmatprep.mubr.bf16.mxu0 %v2555
  %2951 = vmatmul.mubr.bf16.gmra.mrb[0].mxu0 %v2554
  %v2952 = vpop.f32.mrb[0].mxu0
  %v2953 = vadd.f32 0.0, %v2952
  %v2954 = vpop.f32.mrb[0].mxu0
  %v2955 = vpop.f32.mrb[0].mxu0
  %v2956 = vadd.f32 0.0, %v2955
  %v2957 = vpop.f32.mrb[0].mxu0
  %2958 = vmatprep.mubr.bf16.mxu0 %v2559
  %2959 = vmatmul.mubr.bf16.gmra.mrb[0].mxu0 %v2558
  %v2960 = vpop.f32.mrb[0].mxu0
  %v2961 = vadd.f32 0.0, %v2960
  %v2962 = vpop.f32.mrb[0].mxu0
  %v2963 = vpop.f32.mrb[0].mxu0
  %v2964 = vadd.f32 0.0, %v2963
  %v2965 = vpop.f32.mrb[0].mxu0
  %2966 = vmatprep.mubr.bf16.mxu0 %v2563
  %2967 = vmatmul.mubr.bf16.gmra.mrb[0].mxu0 %v2562
  %v2968 = vpop.f32.mrb[0].mxu0
  %v2969 = vadd.f32 0.0, %v2968
  %v2970 = vpop.f32.mrb[0].mxu0
  %v2971 = vpop.f32.mrb[0].mxu0
  %v2972 = vadd.f32 0.0, %v2971
  %v2973 = vpop.f32.mrb[0].mxu0
  %2974 = vmatprep.mubr.bf16.mxu0 %v2567
  %2975 = vmatmul.mubr.bf16.gmra.mrb[0].mxu0 %v2566
  %v2976 = vpop.f32.mrb[0].mxu0
  %v2977 = vadd.f32 0.0, %v2976
  %v2978 = vpop.f32.mrb[0].mxu0
  %v2979 = vpop.f32.mrb[0].mxu0
  %v2980 = vadd.f32 0.0, %v2979
  %v2981 = vpop.f32.mrb[0].mxu0
  %2982 = vmatprep.mubr.bf16.mxu0 %v2571
  %2983 = vmatmul.mubr.bf16.gmra.mrb[0].mxu0 %v2570
  %v2984 = vpop.f32.mrb[0].mxu0
  %v2985 = vadd.f32 0.0, %v2984
  %v2986 = vpop.f32.mrb[0].mxu0
  %v2987 = vpop.f32.mrb[0].mxu0
  %v2988 = vadd.f32 0.0, %v2987
  %v2989 = vpop.f32.mrb[0].mxu0
  %2990 = vdwg.mxu0
  %2991 = vmatprep.subr.bf16.mxu0 0
  %2992 = vmatpush1.bf16.msra.mxu0 %v2046
  %2993 = vmatprep.subr.bf16.mxu0 0
  %2994 = vmatpush1.bf16.msra.mxu0 %v2047
  %2995 = vmatprep.subr.bf16.mxu0 0
  %2996 = vmatpush1.bf16.msra.mxu0 %v2048
  %2997 = vmatprep.subr.bf16.mxu0 0
  %2998 = vmatpush1.bf16.msra.mxu0 %v2049
  %2999 = vmatprep.subr.bf16.mxu0 0
  %3000 = vmatpush1.bf16.msra.mxu0 %v2050
  %3001 = vmatprep.subr.bf16.mxu0 0
  %3002 = vmatpush1.bf16.msra.mxu0 %v2051
  %3003 = vmatprep.subr.bf16.mxu0 0
  %3004 = vmatpush1.bf16.msra.mxu0 %v2052
  %3005 = vmatprep.subr.bf16.mxu0 0
  %3006 = vmatpush1.bf16.msra.mxu0 %v2053
  %3007 = vmatprep.subr.bf16.mxu0 0
  %3008 = vmatpush1.bf16.msra.mxu0 %v2054
  %3009 = vmatprep.subr.bf16.mxu0 0
  %3010 = vmatpush1.bf16.msra.mxu0 %v2055
  %3011 = vmatprep.subr.bf16.mxu0 0
  %3012 = vmatpush1.bf16.msra.mxu0 %v2056
  %3013 = vmatprep.subr.bf16.mxu0 0
  %3014 = vmatpush1.bf16.msra.mxu0 %v2057
  %3015 = vmatprep.subr.bf16.mxu0 0
  %3016 = vmatpush1.bf16.msra.mxu0 %v2058
  %3017 = vmatprep.subr.bf16.mxu0 0
  %3018 = vmatpush1.bf16.msra.mxu0 %v2059
  %3019 = vmatprep.subr.bf16.mxu0 0
  %3020 = vmatpush1.bf16.msra.mxu0 %v2060
  %3021 = vmatprep.subr.bf16.mxu0 0
  %3022 = vmatpush1.bf16.msra.mxu0 %v2061
  %3023 = vmatprep.mubr.bf16.mxu0 %v2449
  %3024 = vmatmul.mubr.bf16.gmra.mrb[0].mxu0 %v2448
  %v3025 = vpop.f32.mrb[0].mxu0
  %v3026 = vadd.f32 %v2737, %v3025
  %v3027 = vpop.f32.mrb[0].mxu0
  %v3028 = vpop.f32.mrb[0].mxu0
  %v3029 = vadd.f32 %v2740, %v3028
  %v3030 = vpop.f32.mrb[0].mxu0
  %3031 = vmatprep.mubr.bf16.mxu0 %v2453
  %3032 = vmatmul.mubr.bf16.gmra.mrb[0].mxu0 %v2452
  %v3033 = vpop.f32.mrb[0].mxu0
  %v3034 = vadd.f32 %v2745, %v3033
  %v3035 = vpop.f32.mrb[0].mxu0
  %v3036 = vpop.f32.mrb[0].mxu0
  %v3037 = vadd.f32 %v2748, %v3036
  %v3038 = vpop.f32.mrb[0].mxu0
  %3039 = vmatprep.mubr.bf16.mxu0 %v2457
  %3040 = vmatmul.mubr.bf16.gmra.mrb[0].mxu0 %v2456
  %v3041 = vpop.f32.mrb[0].mxu0
  %v3042 = vadd.f32 %v2753, %v3041
  %v3043 = vpop.f32.mrb[0].mxu0
  %v3044 = vpop.f32.mrb[0].mxu0
  %v3045 = vadd.f32 %v2756, %v3044
  %v3046 = vpop.f32.mrb[0].mxu0
  %3047 = vmatprep.mubr.bf16.mxu0 %v2461
  %3048 = vmatmul.mubr.bf16.gmra.mrb[0].mxu0 %v2460
  %v3049 = vpop.f32.mrb[0].mxu0
  %v3050 = vadd.f32 %v2761, %v3049
  %v3051 = vpop.f32.mrb[0].mxu0
  %v3052 = vpop.f32.mrb[0].mxu0
  %v3053 = vadd.f32 %v2764, %v3052
  %v3054 = vpop.f32.mrb[0].mxu0
  %3055 = vmatprep.mubr.bf16.mxu0 %v2465
  %3056 = vmatmul.mubr.bf16.gmra.mrb[0].mxu0 %v2464
  %v3057 = vpop.f32.mrb[0].mxu0
  %v3058 = vadd.f32 %v2769, %v3057
  %v3059 = vpop.f32.mrb[0].mxu0
  %v3060 = vpop.f32.mrb[0].mxu0
  %v3061 = vadd.f32 %v2772, %v3060
  %v3062 = vpop.f32.mrb[0].mxu0
  %3063 = vmatprep.mubr.bf16.mxu0 %v2469
  %3064 = vmatmul.mubr.bf16.gmra.mrb[0].mxu0 %v2468
  %v3065 = vpop.f32.mrb[0].mxu0
  %v3066 = vadd.f32 %v2777, %v3065
  %v3067 = vpop.f32.mrb[0].mxu0
  %v3068 = vpop.f32.mrb[0].mxu0
  %v3069 = vadd.f32 %v2780, %v3068
  %v3070 = vpop.f32.mrb[0].mxu0
  %3071 = vmatprep.mubr.bf16.mxu0 %v2473
  %3072 = vmatmul.mubr.bf16.gmra.mrb[0].mxu0 %v2472
  %v3073 = vpop.f32.mrb[0].mxu0
  %v3074 = vadd.f32 %v2785, %v3073
  %v3075 = vpop.f32.mrb[0].mxu0
  %v3076 = vpop.f32.mrb[0].mxu0
  %v3077 = vadd.f32 %v2788, %v3076
  %v3078 = vpop.f32.mrb[0].mxu0
  %3079 = vmatprep.mubr.bf16.mxu0 %v2477
  %3080 = vmatmul.mubr.bf16.gmra.mrb[0].mxu0 %v2476
  %v3081 = vpop.f32.mrb[0].mxu0
  %v3082 = vadd.f32 %v2793, %v3081
  %v3083 = vpop.f32.mrb[0].mxu0
  %v3084 = vpop.f32.mrb[0].mxu0
  %v3085 = vadd.f32 %v2796, %v3084
  %v3086 = vpop.f32.mrb[0].mxu0
  %3087 = vmatprep.mubr.bf16.mxu0 %v2481
  %3088 = vmatmul.mubr.bf16.gmra.mrb[0].mxu0 %v2480
  %v3089 = vpop.f32.mrb[0].mxu0
  %v3090 = vadd.f32 %v2801, %v3089
  %v3091 = vpop.f32.mrb[0].mxu0
  %v3092 = vpop.f32.mrb[0].mxu0
  %v3093 = vadd.f32 %v2804, %v3092
  %v3094 = vpop.f32.mrb[0].mxu0
  %3095 = vmatprep.mubr.bf16.mxu0 %v2485
  %3096 = vmatmul.mubr.bf16.gmra.mrb[0].mxu0 %v2484
  %v3097 = vpop.f32.mrb[0].mxu0
  %v3098 = vadd.f32 %v2809, %v3097
  %v3099 = vpop.f32.mrb[0].mxu0
  %v3100 = vpop.f32.mrb[0].mxu0
  %v3101 = vadd.f32 %v2812, %v3100
  %v3102 = vpop.f32.mrb[0].mxu0
  %3103 = vmatprep.mubr.bf16.mxu0 %v2489
  %3104 = vmatmul.mubr.bf16.gmra.mrb[0].mxu0 %v2488
  %v3105 = vpop.f32.mrb[0].mxu0
  %v3106 = vadd.f32 %v2817, %v3105
  %v3107 = vpop.f32.mrb[0].mxu0
  %v3108 = vpop.f32.mrb[0].mxu0
  %v3109 = vadd.f32 %v2820, %v3108
  %v3110 = vpop.f32.mrb[0].mxu0
  %3111 = vmatprep.mubr.bf16.mxu0 %v2493
  %3112 = vmatmul.mubr.bf16.gmra.mrb[0].mxu0 %v2492
  %v3113 = vpop.f32.mrb[0].mxu0
  %v3114 = vadd.f32 %v2825, %v3113
  %v3115 = vpop.f32.mrb[0].mxu0
  %v3116 = vpop.f32.mrb[0].mxu0
  %v3117 = vadd.f32 %v2828, %v3116
  %v3118 = vpop.f32.mrb[0].mxu0
  %3119 = vmatprep.mubr.bf16.mxu0 %v2497
  %3120 = vmatmul.mubr.bf16.gmra.mrb[0].mxu0 %v2496
  %v3121 = vpop.f32.mrb[0].mxu0
  %v3122 = vadd.f32 %v2833, %v3121
  %v3123 = vpop.f32.mrb[0].mxu0
  %v3124 = vpop.f32.mrb[0].mxu0
  %v3125 = vadd.f32 %v2836, %v3124
  %v3126 = vpop.f32.mrb[0].mxu0
  %3127 = vmatprep.mubr.bf16.mxu0 %v2501
  %3128 = vmatmul.mubr.bf16.gmra.mrb[0].mxu0 %v2500
  %v3129 = vpop.f32.mrb[0].mxu0
  %v3130 = vadd.f32 %v2841, %v3129
  %v3131 = vpop.f32.mrb[0].mxu0
  %v3132 = vpop.f32.mrb[0].mxu0
  %v3133 = vadd.f32 %v2844, %v3132
  %v3134 = vpop.f32.mrb[0].mxu0
  %3135 = vmatprep.mubr.bf16.mxu0 %v2505
  %3136 = vmatmul.mubr.bf16.gmra.mrb[0].mxu0 %v2504
  %v3137 = vpop.f32.mrb[0].mxu0
  %v3138 = vadd.f32 %v2849, %v3137
  %v3139 = vpop.f32.mrb[0].mxu0
  %v3140 = vpop.f32.mrb[0].mxu0
  %v3141 = vadd.f32 %v2852, %v3140
  %v3142 = vpop.f32.mrb[0].mxu0
  %3143 = vmatprep.mubr.bf16.mxu0 %v2509
  %3144 = vmatmul.mubr.bf16.gmra.mrb[0].mxu0 %v2508
  %v3145 = vpop.f32.mrb[0].mxu0
  %v3146 = vadd.f32 %v2857, %v3145
  %v3147 = vpop.f32.mrb[0].mxu0
  %v3148 = vpop.f32.mrb[0].mxu0
  %v3149 = vadd.f32 %v2860, %v3148
  %v3150 = vpop.f32.mrb[0].mxu0
  %3151 = vmatprep.mubr.bf16.mxu0 %v2513
  %3152 = vmatmul.mubr.bf16.gmra.mrb[0].mxu0 %v2512
  %v3153 = vpop.f32.mrb[0].mxu0
  %v3154 = vadd.f32 %v2865, %v3153
  %v3155 = vpop.f32.mrb[0].mxu0
  %v3156 = vpop.f32.mrb[0].mxu0
  %v3157 = vadd.f32 %v2868, %v3156
  %v3158 = vpop.f32.mrb[0].mxu0
  %3159 = vmatprep.mubr.bf16.mxu0 %v2517
  %3160 = vmatmul.mubr.bf16.gmra.mrb[0].mxu0 %v2516
  %v3161 = vpop.f32.mrb[0].mxu0
  %v3162 = vadd.f32 %v2873, %v3161
  %v3163 = vpop.f32.mrb[0].mxu0
  %v3164 = vpop.f32.mrb[0].mxu0
  %v3165 = vadd.f32 %v2876, %v3164
  %v3166 = vpop.f32.mrb[0].mxu0
  %3167 = vmatprep.mubr.bf16.mxu0 %v2521
  %3168 = vmatmul.mubr.bf16.gmra.mrb[0].mxu0 %v2520
  %v3169 = vpop.f32.mrb[0].mxu0
  %v3170 = vadd.f32 %v2881, %v3169
  %v3171 = vpop.f32.mrb[0].mxu0
  %v3172 = vpop.f32.mrb[0].mxu0
  %v3173 = vadd.f32 %v2884, %v3172
  %v3174 = vpop.f32.mrb[0].mxu0
  %3175 = vmatprep.mubr.bf16.mxu0 %v2525
  %3176 = vmatmul.mubr.bf16.gmra.mrb[0].mxu0 %v2524
  %v3177 = vpop.f32.mrb[0].mxu0
  %v3178 = vadd.f32 %v2889, %v3177
  %v3179 = vpop.f32.mrb[0].mxu0
  %v3180 = vpop.f32.mrb[0].mxu0
  %v3181 = vadd.f32 %v2892, %v3180
  %v3182 = vpop.f32.mrb[0].mxu0
  %3183 = vmatprep.mubr.bf16.mxu0 %v2529
  %3184 = vmatmul.mubr.bf16.gmra.mrb[0].mxu0 %v2528
  %v3185 = vpop.f32.mrb[0].mxu0
  %v3186 = vadd.f32 %v2897, %v3185
  %v3187 = vpop.f32.mrb[0].mxu0
  %v3188 = vpop.f32.mrb[0].mxu0
  %v3189 = vadd.f32 %v2900, %v3188
  %v3190 = vpop.f32.mrb[0].mxu0
  %3191 = vmatprep.mubr.bf16.mxu0 %v2533
  %3192 = vmatmul.mubr.bf16.gmra.mrb[0].mxu0 %v2532
  %v3193 = vpop.f32.mrb[0].mxu0
  %v3194 = vadd.f32 %v2905, %v3193
  %v3195 = vpop.f32.mrb[0].mxu0
  %v3196 = vpop.f32.mrb[0].mxu0
  %v3197 = vadd.f32 %v2908, %v3196
  %v3198 = vpop.f32.mrb[0].mxu0
  %3199 = vmatprep.mubr.bf16.mxu0 %v2537
  %3200 = vmatmul.mubr.bf16.gmra.mrb[0].mxu0 %v2536
  %v3201 = vpop.f32.mrb[0].mxu0
  %v3202 = vadd.f32 %v2913, %v3201
  %v3203 = vpop.f32.mrb[0].mxu0
  %v3204 = vpop.f32.mrb[0].mxu0
  %v3205 = vadd.f32 %v2916, %v3204
  %v3206 = vpop.f32.mrb[0].mxu0
  %3207 = vmatprep.mubr.bf16.mxu0 %v2541
  %3208 = vmatmul.mubr.bf16.gmra.mrb[0].mxu0 %v2540
  %v3209 = vpop.f32.mrb[0].mxu0
  %v3210 = vadd.f32 %v2921, %v3209
  %v3211 = vpop.f32.mrb[0].mxu0
  %v3212 = vpop.f32.mrb[0].mxu0
  %v3213 = vadd.f32 %v2924, %v3212
  %v3214 = vpop.f32.mrb[0].mxu0
  %3215 = vmatprep.mubr.bf16.mxu0 %v2545
  %3216 = vmatmul.mubr.bf16.gmra.mrb[0].mxu0 %v2544
  %v3217 = vpop.f32.mrb[0].mxu0
  %v3218 = vadd.f32 %v2929, %v3217
  %v3219 = vpop.f32.mrb[0].mxu0
  %v3220 = vpop.f32.mrb[0].mxu0
  %v3221 = vadd.f32 %v2932, %v3220
  %v3222 = vpop.f32.mrb[0].mxu0
  %3223 = vmatprep.mubr.bf16.mxu0 %v2549
  %3224 = vmatmul.mubr.bf16.gmra.mrb[0].mxu0 %v2548
  %v3225 = vpop.f32.mrb[0].mxu0
  %v3226 = vadd.f32 %v2937, %v3225
  %v3227 = vpop.f32.mrb[0].mxu0
  %v3228 = vpop.f32.mrb[0].mxu0
  %v3229 = vadd.f32 %v2940, %v3228
  %v3230 = vpop.f32.mrb[0].mxu0
  %3231 = vmatprep.mubr.bf16.mxu0 %v2553
  %3232 = vmatmul.mubr.bf16.gmra.mrb[0].mxu0 %v2552
  %v3233 = vpop.f32.mrb[0].mxu0
  %v3234 = vadd.f32 %v2945, %v3233
  %v3235 = vpop.f32.mrb[0].mxu0
  %v3236 = vpop.f32.mrb[0].mxu0
  %v3237 = vadd.f32 %v2948, %v3236
  %v3238 = vpop.f32.mrb[0].mxu0
  %3239 = vmatprep.mubr.bf16.mxu0 %v2557
  %3240 = vmatmul.mubr.bf16.gmra.mrb[0].mxu0 %v2556
  %v3241 = vpop.f32.mrb[0].mxu0
  %v3242 = vadd.f32 %v2953, %v3241
  %v3243 = vpop.f32.mrb[0].mxu0
  %v3244 = vpop.f32.mrb[0].mxu0
  %v3245 = vadd.f32 %v2956, %v3244
  %v3246 = vpop.f32.mrb[0].mxu0
  %3247 = vmatprep.mubr.bf16.mxu0 %v2561
  %3248 = vmatmul.mubr.bf16.gmra.mrb[0].mxu0 %v2560
  %v3249 = vpop.f32.mrb[0].mxu0
  %v3250 = vadd.f32 %v2961, %v3249
  %v3251 = vpop.f32.mrb[0].mxu0
  %v3252 = vpop.f32.mrb[0].mxu0
  %v3253 = vadd.f32 %v2964, %v3252
  %v3254 = vpop.f32.mrb[0].mxu0
  %3255 = vmatprep.mubr.bf16.mxu0 %v2565
  %3256 = vmatmul.mubr.bf16.gmra.mrb[0].mxu0 %v2564
  %v3257 = vpop.f32.mrb[0].mxu0
  %v3258 = vadd.f32 %v2969, %v3257
  %v3259 = vpop.f32.mrb[0].mxu0
  %v3260 = vpop.f32.mrb[0].mxu0
  %v3261 = vadd.f32 %v2972, %v3260
  %v3262 = vpop.f32.mrb[0].mxu0
  %3263 = vmatprep.mubr.bf16.mxu0 %v2569
  %3264 = vmatmul.mubr.bf16.gmra.mrb[0].mxu0 %v2568
  %v3265 = vpop.f32.mrb[0].mxu0
  %v3266 = vadd.f32 %v2977, %v3265
  %v3267 = vpop.f32.mrb[0].mxu0
  %v3268 = vpop.f32.mrb[0].mxu0
  %v3269 = vadd.f32 %v2980, %v3268
  %v3270 = vpop.f32.mrb[0].mxu0
  %3271 = vmatprep.mubr.bf16.mxu0 %v2573
  %3272 = vmatmul.mubr.bf16.gmra.mrb[0].mxu0 %v2572
  %v3273 = vpop.f32.mrb[0].mxu0
  %v3274 = vadd.f32 %v2985, %v3273
  %v3275 = vpop.f32.mrb[0].mxu0
  %v3276 = vpop.f32.mrb[0].mxu0
  %v3277 = vadd.f32 %v2988, %v3276
  %v3278 = vpop.f32.mrb[0].mxu0
  %3279 = vdwg.mxu0
  %v3280 = vld [vmem:[%s2] sm:$0xff]
  %v3281 = vld [vmem:[%s2 + $0x8] sm:$0xff]
  %v3282 = vld [vmem:[%s2 + $0x10] sm:$0xff]
  %v3283 = vld [vmem:[%s2 + $0x18] sm:$0xff]
  %v3284 = vld [vmem:[%s2 + $0x20] sm:$0xff]
  %v3285 = vld [vmem:[%s2 + $0x28] sm:$0xff]
  %v3286 = vld [vmem:[%s2 + $0x30] sm:$0xff]
  %v3287 = vld [vmem:[%s2 + $0x38] sm:$0xff]
  %v3288 = vld [vmem:[%s2 + $0x40] sm:$0xff]
  %v3289 = vld [vmem:[%s2 + $0x48] sm:$0xff]
  %v3290 = vld [vmem:[%s2 + $0x50] sm:$0xff]
  %v3291 = vld [vmem:[%s2 + $0x58] sm:$0xff]
  %v3292 = vld [vmem:[%s2 + $0x60] sm:$0xff]
  %v3293 = vld [vmem:[%s2 + $0x68] sm:$0xff]
  %v3294 = vld [vmem:[%s2 + $0x70] sm:$0xff]
  %v3295 = vld [vmem:[%s2 + $0x78] sm:$0xff]
  %v3296 = vld [vmem:[%s2 + $0x80] sm:$0xff]
  %v3297 = vld [vmem:[%s2 + $0x88] sm:$0xff]
  %v3298 = vld [vmem:[%s2 + $0x90] sm:$0xff]
  %v3299 = vld [vmem:[%s2 + $0x98] sm:$0xff]
  %v3300 = vld [vmem:[%s2 + $0xa0] sm:$0xff]
  %v3301 = vld [vmem:[%s2 + $0xa8] sm:$0xff]
  %v3302 = vld [vmem:[%s2 + $0xb0] sm:$0xff]
  %v3303 = vld [vmem:[%s2 + $0xb8] sm:$0xff]
  %v3304 = vld [vmem:[%s2 + $0xc0] sm:$0xff]
  %v3305 = vld [vmem:[%s2 + $0xc8] sm:$0xff]
  %v3306 = vld [vmem:[%s2 + $0xd0] sm:$0xff]
  %v3307 = vld [vmem:[%s2 + $0xd8] sm:$0xff]
  %v3308 = vld [vmem:[%s2 + $0xe0] sm:$0xff]
  %v3309 = vld [vmem:[%s2 + $0xe8] sm:$0xff]
  %v3310 = vld [vmem:[%s2 + $0xf0] sm:$0xff]
  %v3311 = vld [vmem:[%s2 + $0xf8] sm:$0xff]
  %v3312 = vld [vmem:[%s2 + $0x100] sm:$0xff]
  %v3313 = vld [vmem:[%s2 + $0x108] sm:$0xff]
  %v3314 = vld [vmem:[%s2 + $0x110] sm:$0xff]
  %v3315 = vld [vmem:[%s2 + $0x118] sm:$0xff]
  %v3316 = vld [vmem:[%s2 + $0x120] sm:$0xff]
  %v3317 = vld [vmem:[%s2 + $0x128] sm:$0xff]
  %v3318 = vld [vmem:[%s2 + $0x130] sm:$0xff]
  %v3319 = vld [vmem:[%s2 + $0x138] sm:$0xff]
  %v3320 = vld [vmem:[%s2 + $0x140] sm:$0xff]
  %v3321 = vld [vmem:[%s2 + $0x148] sm:$0xff]
  %v3322 = vld [vmem:[%s2 + $0x150] sm:$0xff]
  %v3323 = vld [vmem:[%s2 + $0x158] sm:$0xff]
  %v3324 = vld [vmem:[%s2 + $0x160] sm:$0xff]
  %v3325 = vld [vmem:[%s2 + $0x168] sm:$0xff]
  %v3326 = vld [vmem:[%s2 + $0x170] sm:$0xff]
  %v3327 = vld [vmem:[%s2 + $0x178] sm:$0xff]
  %v3328 = vld [vmem:[%s2 + $0x180] sm:$0xff]
  %v3329 = vld [vmem:[%s2 + $0x188] sm:$0xff]
  %v3330 = vld [vmem:[%s2 + $0x190] sm:$0xff]
  %v3331 = vld [vmem:[%s2 + $0x198] sm:$0xff]
  %v3332 = vld [vmem:[%s2 + $0x1a0] sm:$0xff]
  %v3333 = vld [vmem:[%s2 + $0x1a8] sm:$0xff]
  %v3334 = vld [vmem:[%s2 + $0x1b0] sm:$0xff]
  %v3335 = vld [vmem:[%s2 + $0x1b8] sm:$0xff]
  %v3336 = vld [vmem:[%s2 + $0x1c0] sm:$0xff]
  %v3337 = vld [vmem:[%s2 + $0x1c8] sm:$0xff]
  %v3338 = vld [vmem:[%s2 + $0x1d0] sm:$0xff]
  %v3339 = vld [vmem:[%s2 + $0x1d8] sm:$0xff]
  %v3340 = vld [vmem:[%s2 + $0x1e0] sm:$0xff]
  %v3341 = vld [vmem:[%s2 + $0x1e8] sm:$0xff]
  %v3342 = vld [vmem:[%s2 + $0x1f0] sm:$0xff]
  %v3343 = vld [vmem:[%s2 + $0x1f8] sm:$0xff]
  %v3344 = vadd.f32 %v3280, %v3026
  %v3345 = vadd.f32 %v3281, %v3029
  %v3346 = vadd.f32 %v3282, %v3034
  %v3347 = vadd.f32 %v3283, %v3037
  %v3348 = vadd.f32 %v3284, %v3042
  %v3349 = vadd.f32 %v3285, %v3045
  %v3350 = vadd.f32 %v3286, %v3050
  %v3351 = vadd.f32 %v3287, %v3053
  %v3352 = vadd.f32 %v3288, %v3058
  %v3353 = vadd.f32 %v3289, %v3061
  %v3354 = vadd.f32 %v3290, %v3066
  %v3355 = vadd.f32 %v3291, %v3069
  %v3356 = vadd.f32 %v3292, %v3074
  %v3357 = vadd.f32 %v3293, %v3077
  %v3358 = vadd.f32 %v3294, %v3082
  %v3359 = vadd.f32 %v3295, %v3085
  %v3360 = vadd.f32 %v3296, %v3090
  %v3361 = vadd.f32 %v3297, %v3093
  %v3362 = vadd.f32 %v3298, %v3098
  %v3363 = vadd.f32 %v3299, %v3101
  %v3364 = vadd.f32 %v3300, %v3106
  %v3365 = vadd.f32 %v3301, %v3109
  %v3366 = vadd.f32 %v3302, %v3114
  %v3367 = vadd.f32 %v3303, %v3117
  %v3368 = vadd.f32 %v3304, %v3122
  %v3369 = vadd.f32 %v3305, %v3125
  %v3370 = vadd.f32 %v3306, %v3130
  %v3371 = vadd.f32 %v3307, %v3133
  %v3372 = vadd.f32 %v3308, %v3138
  %v3373 = vadd.f32 %v3309, %v3141
  %v3374 = vadd.f32 %v3310, %v3146
  %v3375 = vadd.f32 %v3311, %v3149
  %v3376 = vadd.f32 %v3312, %v3154
  %v3377 = vadd.f32 %v3313, %v3157
  %v3378 = vadd.f32 %v3314, %v3162
  %v3379 = vadd.f32 %v3315, %v3165
  %v3380 = vadd.f32 %v3316, %v3170
  %v3381 = vadd.f32 %v3317, %v3173
  %v3382 = vadd.f32 %v3318, %v3178
  %v3383 = vadd.f32 %v3319, %v3181
  %v3384 = vadd.f32 %v3320, %v3186
  %v3385 = vadd.f32 %v3321, %v3189
  %v3386 = vadd.f32 %v3322, %v3194
  %v3387 = vadd.f32 %v3323, %v3197
  %v3388 = vadd.f32 %v3324, %v3202
  %v3389 = vadd.f32 %v3325, %v3205
  %v3390 = vadd.f32 %v3326, %v3210
  %v3391 = vadd.f32 %v3327, %v3213
  %v3392 = vadd.f32 %v3328, %v3218
  %v3393 = vadd.f32 %v3329, %v3221
  %v3394 = vadd.f32 %v3330, %v3226
  %v3395 = vadd.f32 %v3331, %v3229
  %v3396 = vadd.f32 %v3332, %v3234
  %v3397 = vadd.f32 %v3333, %v3237
  %v3398 = vadd.f32 %v3334, %v3242
  %v3399 = vadd.f32 %v3335, %v3245
  %v3400 = vadd.f32 %v3336, %v3250
  %v3401 = vadd.f32 %v3337, %v3253
  %v3402 = vadd.f32 %v3338, %v3258
  %v3403 = vadd.f32 %v3339, %v3261
  %v3404 = vadd.f32 %v3340, %v3266
  %v3405 = vadd.f32 %v3341, %v3269
  %v3406 = vadd.f32 %v3342, %v3274
  %v3407 = vadd.f32 %v3343, %v3277
  %3408 = vst [vmem:[%s2] sm:$0xff] %v3344
  %3409 = vst [vmem:[%s2 + $0x8] sm:$0xff] %v3345
  %3410 = vst [vmem:[%s2 + $0x10] sm:$0xff] %v3346
  %3411 = vst [vmem:[%s2 + $0x18] sm:$0xff] %v3347
  %3412 = vst [vmem:[%s2 + $0x20] sm:$0xff] %v3348
  %3413 = vst [vmem:[%s2 + $0x28] sm:$0xff] %v3349
  %3414 = vst [vmem:[%s2 + $0x30] sm:$0xff] %v3350
  %3415 = vst [vmem:[%s2 + $0x38] sm:$0xff] %v3351
  %3416 = vst [vmem:[%s2 + $0x40] sm:$0xff] %v3352
  %3417 = vst [vmem:[%s2 + $0x48] sm:$0xff] %v3353
  %3418 = vst [vmem:[%s2 + $0x50] sm:$0xff] %v3354
  %3419 = vst [vmem:[%s2 + $0x58] sm:$0xff] %v3355
  %3420 = vst [vmem:[%s2 + $0x60] sm:$0xff] %v3356
  %3421 = vst [vmem:[%s2 + $0x68] sm:$0xff] %v3357
  %3422 = vst [vmem:[%s2 + $0x70] sm:$0xff] %v3358
  %3423 = vst [vmem:[%s2 + $0x78] sm:$0xff] %v3359
  %3424 = vst [vmem:[%s2 + $0x80] sm:$0xff] %v3360
  %3425 = vst [vmem:[%s2 + $0x88] sm:$0xff] %v3361
  %3426 = vst [vmem:[%s2 + $0x90] sm:$0xff] %v3362
  %3427 = vst [vmem:[%s2 + $0x98] sm:$0xff] %v3363
  %3428 = vst [vmem:[%s2 + $0xa0] sm:$0xff] %v3364
  %3429 = vst [vmem:[%s2 + $0xa8] sm:$0xff] %v3365
  %3430 = vst [vmem:[%s2 + $0xb0] sm:$0xff] %v3366
  %3431 = vst [vmem:[%s2 + $0xb8] sm:$0xff] %v3367
  %3432 = vst [vmem:[%s2 + $0xc0] sm:$0xff] %v3368
  %3433 = vst [vmem:[%s2 + $0xc8] sm:$0xff] %v3369
  %3434 = vst [vmem:[%s2 + $0xd0] sm:$0xff] %v3370
  %3435 = vst [vmem:[%s2 + $0xd8] sm:$0xff] %v3371
  %3436 = vst [vmem:[%s2 + $0xe0] sm:$0xff] %v3372
  %3437 = vst [vmem:[%s2 + $0xe8] sm:$0xff] %v3373
  %3438 = vst [vmem:[%s2 + $0xf0] sm:$0xff] %v3374
  %3439 = vst [vmem:[%s2 + $0xf8] sm:$0xff] %v3375
  %3440 = vst [vmem:[%s2 + $0x100] sm:$0xff] %v3376
  %3441 = vst [vmem:[%s2 + $0x108] sm:$0xff] %v3377
  %3442 = vst [vmem:[%s2 + $0x110] sm:$0xff] %v3378
  %3443 = vst [vmem:[%s2 + $0x118] sm:$0xff] %v3379
  %3444 = vst [vmem:[%s2 + $0x120] sm:$0xff] %v3380
  %3445 = vst [vmem:[%s2 + $0x128] sm:$0xff] %v3381
  %3446 = vst [vmem:[%s2 + $0x130] sm:$0xff] %v3382
  %3447 = vst [vmem:[%s2 + $0x138] sm:$0xff] %v3383
  %3448 = vst [vmem:[%s2 + $0x140] sm:$0xff] %v3384
  %3449 = vst [vmem:[%s2 + $0x148] sm:$0xff] %v3385
  %3450 = vst [vmem:[%s2 + $0x150] sm:$0xff] %v3386
  %3451 = vst [vmem:[%s2 + $0x158] sm:$0xff] %v3387
  %3452 = vst [vmem:[%s2 + $0x160] sm:$0xff] %v3388
  %3453 = vst [vmem:[%s2 + $0x168] sm:$0xff] %v3389
  %3454 = vst [vmem:[%s2 + $0x170] sm:$0xff] %v3390
  %3455 = vst [vmem:[%s2 + $0x178] sm:$0xff] %v3391
  %3456 = vst [vmem:[%s2 + $0x180] sm:$0xff] %v3392
  %3457 = vst [vmem:[%s2 + $0x188] sm:$0xff] %v3393
  %3458 = vst [vmem:[%s2 + $0x190] sm:$0xff] %v3394
  %3459 = vst [vmem:[%s2 + $0x198] sm:$0xff] %v3395
  %3460 = vst [vmem:[%s2 + $0x1a0] sm:$0xff] %v3396
  %3461 = vst [vmem:[%s2 + $0x1a8] sm:$0xff] %v3397
  %3462 = vst [vmem:[%s2 + $0x1b0] sm:$0xff] %v3398
  %3463 = vst [vmem:[%s2 + $0x1b8] sm:$0xff] %v3399
  %3464 = vst [vmem:[%s2 + $0x1c0] sm:$0xff] %v3400
  %3465 = vst [vmem:[%s2 + $0x1c8] sm:$0xff] %v3401
  %3466 = vst [vmem:[%s2 + $0x1d0] sm:$0xff] %v3402
  %3467 = vst [vmem:[%s2 + $0x1d8] sm:$0xff] %v3403
  %3468 = vst [vmem:[%s2 + $0x1e0] sm:$0xff] %v3404
  %3469 = vst [vmem:[%s2 + $0x1e8] sm:$0xff] %v3405
  %3470 = vst [vmem:[%s2 + $0x1f0] sm:$0xff] %v3406
  %3471 = vst [vmem:[%s2 + $0x1f8] sm:$0xff] %v3407
  %v3472 = vpack.c.bf16 %v3029, %v3026
  %v3473 = vpack.c.bf16 %v3037, %v3034
  %v3474 = vpack.c.bf16 %v3045, %v3042
  %v3475 = vpack.c.bf16 %v3053, %v3050
  %v3476 = vpack.c.bf16 %v3061, %v3058
  %v3477 = vpack.c.bf16 %v3069, %v3066
  %v3478 = vpack.c.bf16 %v3077, %v3074
  %v3479 = vpack.c.bf16 %v3085, %v3082
  %v3480 = vpack.c.bf16 %v3093, %v3090
  %v3481 = vpack.c.bf16 %v3101, %v3098
  %v3482 = vpack.c.bf16 %v3109, %v3106
  %v3483 = vpack.c.bf16 %v3117, %v3114
  %v3484 = vpack.c.bf16 %v3125, %v3122
  %v3485 = vpack.c.bf16 %v3133, %v3130
  %v3486 = vpack.c.bf16 %v3141, %v3138
  %v3487 = vpack.c.bf16 %v3149, %v3146
  %v3488 = vpack.c.bf16 %v3157, %v3154
  %v3489 = vpack.c.bf16 %v3165, %v3162
  %v3490 = vpack.c.bf16 %v3173, %v3170
  %v3491 = vpack.c.bf16 %v3181, %v3178
  %v3492 = vpack.c.bf16 %v3189, %v3186
  %v3493 = vpack.c.bf16 %v3197, %v3194
  %v3494 = vpack.c.bf16 %v3205, %v3202
  %v3495 = vpack.c.bf16 %v3213, %v3210
  %v3496 = vpack.c.bf16 %v3221, %v3218
  %v3497 = vpack.c.bf16 %v3229, %v3226
  %v3498 = vpack.c.bf16 %v3237, %v3234
  %v3499 = vpack.c.bf16 %v3245, %v3242
  %v3500 = vpack.c.bf16 %v3253, %v3250
  %v3501 = vpack.c.bf16 %v3261, %v3258
  %v3502 = vpack.c.bf16 %v3269, %v3266
  %v3503 = vpack.c.bf16 %v3277, %v3274
  %3504 = vst [vmem:[#allocation2] sm:$0xff] %v3472
  %3505 = vst [vmem:[#allocation2 + $0x8] sm:$0xff] %v3473
  %3506 = vst [vmem:[#allocation2 + $0x10] sm:$0xff] %v3474
  %3507 = vst [vmem:[#allocation2 + $0x18] sm:$0xff] %v3475
  %3508 = vst [vmem:[#allocation2 + $0x20] sm:$0xff] %v3476
  %3509 = vst [vmem:[#allocation2 + $0x28] sm:$0xff] %v3477
  %3510 = vst [vmem:[#allocation2 + $0x30] sm:$0xff] %v3478
  %3511 = vst [vmem:[#allocation2 + $0x38] sm:$0xff] %v3479
  %3512 = vst [vmem:[#allocation2 + $0x40] sm:$0xff] %v3480
  %3513 = vst [vmem:[#allocation2 + $0x48] sm:$0xff] %v3481
  %3514 = vst [vmem:[#allocation2 + $0x50] sm:$0xff] %v3482
  %3515 = vst [vmem:[#allocation2 + $0x58] sm:$0xff] %v3483
  %3516 = vst [vmem:[#allocation2 + $0x60] sm:$0xff] %v3484
  %3517 = vst [vmem:[#allocation2 + $0x68] sm:$0xff] %v3485
  %3518 = vst [vmem:[#allocation2 + $0x70] sm:$0xff] %v3486
  %3519 = vst [vmem:[#allocation2 + $0x78] sm:$0xff] %v3487
  %3520 = vst [vmem:[#allocation2 + $0x80] sm:$0xff] %v3488
  %3521 = vst [vmem:[#allocation2 + $0x88] sm:$0xff] %v3489
  %3522 = vst [vmem:[#allocation2 + $0x90] sm:$0xff] %v3490
  %3523 = vst [vmem:[#allocation2 + $0x98] sm:$0xff] %v3491
  %3524 = vst [vmem:[#allocation2 + $0xa0] sm:$0xff] %v3492
  %3525 = vst [vmem:[#allocation2 + $0xa8] sm:$0xff] %v3493
  %3526 = vst [vmem:[#allocation2 + $0xb0] sm:$0xff] %v3494
  %3527 = vst [vmem:[#allocation2 + $0xb8] sm:$0xff] %v3495
  %3528 = vst [vmem:[#allocation2 + $0xc0] sm:$0xff] %v3496
  %3529 = vst [vmem:[#allocation2 + $0xc8] sm:$0xff] %v3497
  %3530 = vst [vmem:[#allocation2 + $0xd0] sm:$0xff] %v3498
  %3531 = vst [vmem:[#allocation2 + $0xd8] sm:$0xff] %v3499
  %3532 = vst [vmem:[#allocation2 + $0xe0] sm:$0xff] %v3500
  %3533 = vst [vmem:[#allocation2 + $0xe8] sm:$0xff] %v3501
  %3534 = vst [vmem:[#allocation2 + $0xf0] sm:$0xff] %v3502
  %3535 = vst [vmem:[#allocation2 + $0xf8] sm:$0xff] %v3503
  %v3536 = vld [vmem:[%s2] sm:$0xff]
  %v3537 = vld [vmem:[%s2 + $0x8] sm:$0xff]
  %v3538 = vld [vmem:[%s2 + $0x10] sm:$0xff]
  %v3539 = vld [vmem:[%s2 + $0x18] sm:$0xff]
  %v3540 = vld [vmem:[%s2 + $0x20] sm:$0xff]
  %v3541 = vld [vmem:[%s2 + $0x28] sm:$0xff]
  %v3542 = vld [vmem:[%s2 + $0x30] sm:$0xff]
  %v3543 = vld [vmem:[%s2 + $0x38] sm:$0xff]
  %v3544 = vld [vmem:[%s2 + $0x40] sm:$0xff]
  %v3545 = vld [vmem:[%s2 + $0x48] sm:$0xff]
  %v3546 = vld [vmem:[%s2 + $0x50] sm:$0xff]
  %v3547 = vld [vmem:[%s2 + $0x58] sm:$0xff]
  %v3548 = vld [vmem:[%s2 + $0x60] sm:$0xff]
  %v3549 = vld [vmem:[%s2 + $0x68] sm:$0xff]
  %v3550 = vld [vmem:[%s2 + $0x70] sm:$0xff]
  %v3551 = vld [vmem:[%s2 + $0x78] sm:$0xff]
  %v3552 = vld [vmem:[%s2 + $0x80] sm:$0xff]
  %v3553 = vld [vmem:[%s2 + $0x88] sm:$0xff]
  %v3554 = vld [vmem:[%s2 + $0x90] sm:$0xff]
  %v3555 = vld [vmem:[%s2 + $0x98] sm:$0xff]
  %v3556 = vld [vmem:[%s2 + $0xa0] sm:$0xff]
  %v3557 = vld [vmem:[%s2 + $0xa8] sm:$0xff]
  %v3558 = vld [vmem:[%s2 + $0xb0] sm:$0xff]
  %v3559 = vld [vmem:[%s2 + $0xb8] sm:$0xff]
  %v3560 = vld [vmem:[%s2 + $0xc0] sm:$0xff]
  %v3561 = vld [vmem:[%s2 + $0xc8] sm:$0xff]
  %v3562 = vld [vmem:[%s2 + $0xd0] sm:$0xff]
  %v3563 = vld [vmem:[%s2 + $0xd8] sm:$0xff]
  %v3564 = vld [vmem:[%s2 + $0xe0] sm:$0xff]
  %v3565 = vld [vmem:[%s2 + $0xe8] sm:$0xff]
  %v3566 = vld [vmem:[%s2 + $0xf0] sm:$0xff]
  %v3567 = vld [vmem:[%s2 + $0xf8] sm:$0xff]
  %v3568 = vld [vmem:[%s2 + $0x100] sm:$0xff]
  %v3569 = vld [vmem:[%s2 + $0x108] sm:$0xff]
  %v3570 = vld [vmem:[%s2 + $0x110] sm:$0xff]
  %v3571 = vld [vmem:[%s2 + $0x118] sm:$0xff]
  %v3572 = vld [vmem:[%s2 + $0x120] sm:$0xff]
  %v3573 = vld [vmem:[%s2 + $0x128] sm:$0xff]
  %v3574 = vld [vmem:[%s2 + $0x130] sm:$0xff]
  %v3575 = vld [vmem:[%s2 + $0x138] sm:$0xff]
  %v3576 = vld [vmem:[%s2 + $0x140] sm:$0xff]
  %v3577 = vld [vmem:[%s2 + $0x148] sm:$0xff]
  %v3578 = vld [vmem:[%s2 + $0x150] sm:$0xff]
  %v3579 = vld [vmem:[%s2 + $0x158] sm:$0xff]
  %v3580 = vld [vmem:[%s2 + $0x160] sm:$0xff]
  %v3581 = vld [vmem:[%s2 + $0x168] sm:$0xff]
  %v3582 = vld [vmem:[%s2 + $0x170] sm:$0xff]
  %v3583 = vld [vmem:[%s2 + $0x178] sm:$0xff]
  %v3584 = vld [vmem:[%s2 + $0x180] sm:$0xff]
  %v3585 = vld [vmem:[%s2 + $0x188] sm:$0xff]
  %v3586 = vld [vmem:[%s2 + $0x190] sm:$0xff]
  %v3587 = vld [vmem:[%s2 + $0x198] sm:$0xff]
  %v3588 = vld [vmem:[%s2 + $0x1a0] sm:$0xff]
  %v3589 = vld [vmem:[%s2 + $0x1a8] sm:$0xff]
  %v3590 = vld [vmem:[%s2 + $0x1b0] sm:$0xff]
  %v3591 = vld [vmem:[%s2 + $0x1b8] sm:$0xff]
  %v3592 = vld [vmem:[%s2 + $0x1c0] sm:$0xff]
  %v3593 = vld [vmem:[%s2 + $0x1c8] sm:$0xff]
  %v3594 = vld [vmem:[%s2 + $0x1d0] sm:$0xff]
  %v3595 = vld [vmem:[%s2 + $0x1d8] sm:$0xff]
  %v3596 = vld [vmem:[%s2 + $0x1e0] sm:$0xff]
  %v3597 = vld [vmem:[%s2 + $0x1e8] sm:$0xff]
  %v3598 = vld [vmem:[%s2 + $0x1f0] sm:$0xff]
  %v3599 = vld [vmem:[%s2 + $0x1f8] sm:$0xff]
  %v3600 = vmul.f32 %v3536, 0.33333334
  %v3601 = vmul.f32 %v3537, 0.33333334
  %v3602 = vmul.f32 %v3538, 0.33333334
  %v3603 = vmul.f32 %v3539, 0.33333334
  %v3604 = vmul.f32 %v3540, 0.33333334
  %v3605 = vmul.f32 %v3541, 0.33333334
  %v3606 = vmul.f32 %v3542, 0.33333334
  %v3607 = vmul.f32 %v3543, 0.33333334
  %v3608 = vmul.f32 %v3544, 0.33333334
  %v3609 = vmul.f32 %v3545, 0.33333334
  %v3610 = vmul.f32 %v3546, 0.33333334
  %v3611 = vmul.f32 %v3547, 0.33333334
  %v3612 = vmul.f32 %v3548, 0.33333334
  %v3613 = vmul.f32 %v3549, 0.33333334
  %v3614 = vmul.f32 %v3550, 0.33333334
  %v3615 = vmul.f32 %v3551, 0.33333334
  %v3616 = vmul.f32 %v3552, 0.33333334
  %v3617 = vmul.f32 %v3553, 0.33333334
  %v3618 = vmul.f32 %v3554, 0.33333334
  %v3619 = vmul.f32 %v3555, 0.33333334
  %v3620 = vmul.f32 %v3556, 0.33333334
  %v3621 = vmul.f32 %v3557, 0.33333334
  %v3622 = vmul.f32 %v3558, 0.33333334
  %v3623 = vmul.f32 %v3559, 0.33333334
  %v3624 = vmul.f32 %v3560, 0.33333334
  %v3625 = vmul.f32 %v3561, 0.33333334
  %v3626 = vmul.f32 %v3562, 0.33333334
  %v3627 = vmul.f32 %v3563, 0.33333334
  %v3628 = vmul.f32 %v3564, 0.33333334
  %v3629 = vmul.f32 %v3565, 0.33333334
  %v3630 = vmul.f32 %v3566, 0.33333334
  %v3631 = vmul.f32 %v3567, 0.33333334
  %v3632 = vmul.f32 %v3568, 0.33333334
  %v3633 = vmul.f32 %v3569, 0.33333334
  %v3634 = vmul.f32 %v3570, 0.33333334
  %v3635 = vmul.f32 %v3571, 0.33333334
  %v3636 = vmul.f32 %v3572, 0.33333334
  %v3637 = vmul.f32 %v3573, 0.33333334
  %v3638 = vmul.f32 %v3574, 0.33333334
  %v3639 = vmul.f32 %v3575, 0.33333334
  %v3640 = vmul.f32 %v3576, 0.33333334
  %v3641 = vmul.f32 %v3577, 0.33333334
  %v3642 = vmul.f32 %v3578, 0.33333334
  %v3643 = vmul.f32 %v3579, 0.33333334
  %v3644 = vmul.f32 %v3580, 0.33333334
  %v3645 = vmul.f32 %v3581, 0.33333334
  %v3646 = vmul.f32 %v3582, 0.33333334
  %v3647 = vmul.f32 %v3583, 0.33333334
  %v3648 = vmul.f32 %v3584, 0.33333334
  %v3649 = vmul.f32 %v3585, 0.33333334
  %v3650 = vmul.f32 %v3586, 0.33333334
  %v3651 = vmul.f32 %v3587, 0.33333334
  %v3652 = vmul.f32 %v3588, 0.33333334
  %v3653 = vmul.f32 %v3589, 0.33333334
  %v3654 = vmul.f32 %v3590, 0.33333334
  %v3655 = vmul.f32 %v3591, 0.33333334
  %v3656 = vmul.f32 %v3592, 0.33333334
  %v3657 = vmul.f32 %v3593, 0.33333334
  %v3658 = vmul.f32 %v3594, 0.33333334
  %v3659 = vmul.f32 %v3595, 0.33333334
  %v3660 = vmul.f32 %v3596, 0.33333334
  %v3661 = vmul.f32 %v3597, 0.33333334
  %v3662 = vmul.f32 %v3598, 0.33333334
  %v3663 = vmul.f32 %v3599, 0.33333334
  %3664 = vst [vmem:[%s2] sm:$0xff] %v3600
  %3665 = vst [vmem:[%s2 + $0x8] sm:$0xff] %v3601
  %3666 = vst [vmem:[%s2 + $0x10] sm:$0xff] %v3602
  %3667 = vst [vmem:[%s2 + $0x18] sm:$0xff] %v3603
  %3668 = vst [vmem:[%s2 + $0x20] sm:$0xff] %v3604
  %3669 = vst [vmem:[%s2 + $0x28] sm:$0xff] %v3605
  %3670 = vst [vmem:[%s2 + $0x30] sm:$0xff] %v3606
  %3671 = vst [vmem:[%s2 + $0x38] sm:$0xff] %v3607
  %3672 = vst [vmem:[%s2 + $0x40] sm:$0xff] %v3608
  %3673 = vst [vmem:[%s2 + $0x48] sm:$0xff] %v3609
  %3674 = vst [vmem:[%s2 + $0x50] sm:$0xff] %v3610
  %3675 = vst [vmem:[%s2 + $0x58] sm:$0xff] %v3611
  %3676 = vst [vmem:[%s2 + $0x60] sm:$0xff] %v3612
  %3677 = vst [vmem:[%s2 + $0x68] sm:$0xff] %v3613
  %3678 = vst [vmem:[%s2 + $0x70] sm:$0xff] %v3614
  %3679 = vst [vmem:[%s2 + $0x78] sm:$0xff] %v3615
  %3680 = vst [vmem:[%s2 + $0x80] sm:$0xff] %v3616
  %3681 = vst [vmem:[%s2 + $0x88] sm:$0xff] %v3617
  %3682 = vst [vmem:[%s2 + $0x90] sm:$0xff] %v3618
  %3683 = vst [vmem:[%s2 + $0x98] sm:$0xff] %v3619
  %3684 = vst [vmem:[%s2 + $0xa0] sm:$0xff] %v3620
  %3685 = vst [vmem:[%s2 + $0xa8] sm:$0xff] %v3621
  %3686 = vst [vmem:[%s2 + $0xb0] sm:$0xff] %v3622
  %3687 = vst [vmem:[%s2 + $0xb8] sm:$0xff] %v3623
  %3688 = vst [vmem:[%s2 + $0xc0] sm:$0xff] %v3624
  %3689 = vst [vmem:[%s2 + $0xc8] sm:$0xff] %v3625
  %3690 = vst [vmem:[%s2 + $0xd0] sm:$0xff] %v3626
  %3691 = vst [vmem:[%s2 + $0xd8] sm:$0xff] %v3627
  %3692 = vst [vmem:[%s2 + $0xe0] sm:$0xff] %v3628
  %3693 = vst [vmem:[%s2 + $0xe8] sm:$0xff] %v3629
  %3694 = vst [vmem:[%s2 + $0xf0] sm:$0xff] %v3630
  %3695 = vst [vmem:[%s2 + $0xf8] sm:$0xff] %v3631
  %3696 = vst [vmem:[%s2 + $0x100] sm:$0xff] %v3632
  %3697 = vst [vmem:[%s2 + $0x108] sm:$0xff] %v3633
  %3698 = vst [vmem:[%s2 + $0x110] sm:$0xff] %v3634
  %3699 = vst [vmem:[%s2 + $0x118] sm:$0xff] %v3635
  %3700 = vst [vmem:[%s2 + $0x120] sm:$0xff] %v3636
  %3701 = vst [vmem:[%s2 + $0x128] sm:$0xff] %v3637
  %3702 = vst [vmem:[%s2 + $0x130] sm:$0xff] %v3638
  %3703 = vst [vmem:[%s2 + $0x138] sm:$0xff] %v3639
  %3704 = vst [vmem:[%s2 + $0x140] sm:$0xff] %v3640
  %3705 = vst [vmem:[%s2 + $0x148] sm:$0xff] %v3641
  %3706 = vst [vmem:[%s2 + $0x150] sm:$0xff] %v3642
  %3707 = vst [vmem:[%s2 + $0x158] sm:$0xff] %v3643
  %3708 = vst [vmem:[%s2 + $0x160] sm:$0xff] %v3644
  %3709 = vst [vmem:[%s2 + $0x168] sm:$0xff] %v3645
  %3710 = vst [vmem:[%s2 + $0x170] sm:$0xff] %v3646
  %3711 = vst [vmem:[%s2 + $0x178] sm:$0xff] %v3647
  %3712 = vst [vmem:[%s2 + $0x180] sm:$0xff] %v3648
  %3713 = vst [vmem:[%s2 + $0x188] sm:$0xff] %v3649
  %3714 = vst [vmem:[%s2 + $0x190] sm:$0xff] %v3650
  %3715 = vst [vmem:[%s2 + $0x198] sm:$0xff] %v3651
  %3716 = vst [vmem:[%s2 + $0x1a0] sm:$0xff] %v3652
  %3717 = vst [vmem:[%s2 + $0x1a8] sm:$0xff] %v3653
  %3718 = vst [vmem:[%s2 + $0x1b0] sm:$0xff] %v3654
  %3719 = vst [vmem:[%s2 + $0x1b8] sm:$0xff] %v3655
  %3720 = vst [vmem:[%s2 + $0x1c0] sm:$0xff] %v3656
  %3721 = vst [vmem:[%s2 + $0x1c8] sm:$0xff] %v3657
  %3722 = vst [vmem:[%s2 + $0x1d0] sm:$0xff] %v3658
  %3723 = vst [vmem:[%s2 + $0x1d8] sm:$0xff] %v3659
  %3724 = vst [vmem:[%s2 + $0x1e0] sm:$0xff] %v3660
  %3725 = vst [vmem:[%s2 + $0x1e8] sm:$0xff] %v3661
  %3726 = vst [vmem:[%s2 + $0x1f0] sm:$0xff] %v3662
  %3727 = vst [vmem:[%s2 + $0x1f8] sm:$0xff] %v3663
  // Predicated region
  $region10: #{shadow_model_forward.3} parent=0 // pred_check
    _
  $region11: #{shadow_model_forward.3} parent=0 // pred_check_branch
    %3729 = sbr.rel (0) target = $region13
  $region12: #{shadow_model_forward.3} parent=0 // pred_region
    _
  $region13: #{shadow_model_forward.3} parent=0 // pred_fallthru
    _
  // Predicated region
  $region14: #{shadow_model_forward.3} parent=0 // pred_check
    _
  $region15: #{shadow_model_forward.3} parent=0 // pred_check_branch
    %3731 = sbr.rel (0) target = $region17
  $region16: #{shadow_model_forward.3} parent=0 // pred_region
    _
  $region17: #{shadow_model_forward.3} parent=0 // pred_fallthru
    _

</llo_original>
